<compile_context>
chip_gen: v6e
topology: v6e:2x2x1
jax: 0.10.0
libtpu: 0.0.40
codegen_flags: <defaults>
</compile_context>

<pallas_src>
import functools

import jax
import jax.numpy as jnp
from jax.experimental import pallas as pl
from jax.experimental.pallas import tpu as pltpu

LEAKY_SLOPE = 0.01  # nn.LeakyReLU() default

REDUCED_FACE_EMB_LEN = 16
EMOTION_LEN = 7
E_LEN = REDUCED_FACE_EMB_LEN + EMOTION_LEN  # 23

# Static layer configuration (cin, cout, k, stride, pad).  Kept OUT of the
# jitted params pytree so pad widths / strides stay concrete Python ints.
FORMANT_CFG = [
    (2, 72, 3, 2, 1),
    (72, 108, 3, 2, 1),
    (108, 162, 3, 2, 1),
    (162, 243, 3, 2, 1),
    (243, 256, 4, 4, 1),
    (256, 256, 4, 2, 0),
]
ARTIC_CFG = [(256 + E_LEN, 256, 3, 2, p) for p in (2, 2, 1, 1, 1)]


def _round_up(x, m):
    return (x + m - 1) // m * m


# ----------------------------------------------------------------------------
# Pallas kernel: fused matmul + bias + activation
# ----------------------------------------------------------------------------
def _mm_act_kernel(a_ref, w_ref, bias_ref, o_ref, *, act):
    # bf16 operands, f32 accumulation on the MXU.
    acc = jnp.dot(a_ref[...], w_ref[...], preferred_element_type=jnp.float32)
    acc = acc + bias_ref[...]  # (1, Np) broadcasts over rows
    if act == "leaky":
        acc = jnp.maximum(acc, LEAKY_SLOPE * acc)
    elif act == "tanh":
        acc = jnp.tanh(acc)
    o_ref[...] = acc


def pallas_linear(a, w_p, b_p, n_out, act="none"):
    """act(a @ W + b) with W/b already in padded kernel layout.

    a:   (M, K) f32 activations (padded+cast to bf16 here).
    w_p: (Kp, Np) bf16, pre-padded / pre-transposed at init.
    b_p: (1, Np)  f32, pre-padded at init.
    Returns (M, n_out) f32.
    """
    M, K = a.shape
    Kp, Np = w_p.shape
    assert K <= Kp

    if M > 512:
        TM = 512
        Mp = _round_up(M, TM)
    else:
        TM = Mp = _round_up(M, 16)

    a_p = jnp.pad(a, ((0, Mp - M), (0, Kp - K))).astype(jnp.bfloat16)

    out = pl.pallas_call(
        functools.partial(_mm_act_kernel, act=act),
        out_shape=jax.ShapeDtypeStruct((Mp, Np), jnp.float32),
        grid=(Mp // TM,),
        in_specs=[
            pl.BlockSpec((TM, Kp), lambda i: (i, 0)),
            pl.BlockSpec((Kp, Np), lambda i: (0, 0)),
            pl.BlockSpec((1, Np), lambda i: (0, 0)),
        ],
        out_specs=pl.BlockSpec((TM, Np), lambda i: (i, 0)),
        compiler_params=pltpu.CompilerParams(
            dimension_semantics=("parallel",)),
    )(a_p, w_p, b_p)
    return out[:M, :n_out]


# ----------------------------------------------------------------------------
# Conv2d lowered to strided-slice im2col + Pallas matmul (channels-last)
# ----------------------------------------------------------------------------
def conv2d_h(x, w_p, b_p, cfg, act="leaky"):
    """Conv2d kernel (kh,1), stride (s,1), pad (p,0). x is NHWC."""
    _, cout, kh, s, p = cfg
    B, H, W, C = x.shape
    xp = jnp.pad(x, ((0, 0), (p, p), (0, 0), (0, 0)))
    Hout = (H + 2 * p - kh) // s + 1
    # kh static strided slices, concatenated along the channel axis.
    taps = [xp[:, t:t + s * (Hout - 1) + 1:s, :, :] for t in range(kh)]
    a = jnp.concatenate(taps, axis=-1).reshape(B * Hout * W, kh * C)
    y = pallas_linear(a, w_p, b_p, cout, act=act)
    return y.reshape(B, Hout, W, cout)


def conv2d_w(x, w_p, b_p, cfg, act="leaky"):
    """Conv2d kernel (1,kw), stride (1,s), pad (0,p). x is NHWC."""
    _, cout, kw, s, p = cfg
    B, H, W, C = x.shape
    xp = jnp.pad(x, ((0, 0), (0, 0), (p, p), (0, 0)))
    Wout = (W + 2 * p - kw) // s + 1
    taps = [xp[:, :, t:t + s * (Wout - 1) + 1:s, :] for t in range(kw)]
    a = jnp.concatenate(taps, axis=-1).reshape(B * H * Wout, kw * C)
    y = pallas_linear(a, w_p, b_p, cout, act=act)
    return y.reshape(B, H, Wout, cout)


# ----------------------------------------------------------------------------
# Parameter init (deterministic) in pre-padded / pre-transposed kernel layout
# ----------------------------------------------------------------------------
def _prep_matmul_weights(w2d, b):
    # w2d: (K, N) f32, b: (N,) f32  ->  bf16 (Kp,Np) weight + f32 (1,Np) bias.
    K, N = w2d.shape
    Kp, Np = _round_up(K, 128), _round_up(N, 128)
    w_p = jnp.pad(w2d, ((0, Kp - K), (0, Np - N))).astype(jnp.bfloat16)
    b_p = jnp.pad(b, (0, Np - N)).astype(jnp.float32).reshape(1, Np)
    return {"w": w_p, "b": b_p}


def _prep_conv(key, cin, cout, k):
    k1, k2 = jax.random.split(key)
    fan_in = cin * k
    scale = 1.0 / jnp.sqrt(jnp.float32(fan_in))
    w = jax.random.uniform(k1, (cout, cin, k), minval=-scale, maxval=scale,
                           dtype=jnp.float32)
    b = jax.random.uniform(k2, (cout,), minval=-scale, maxval=scale,
                           dtype=jnp.float32)
    # im2col K ordering is (tap, channel) -> weight rows must match.
    w2d = jnp.transpose(w, (2, 1, 0)).reshape(k * cin, cout)
    return _prep_matmul_weights(w2d, b)


def _prep_linear(key, in_f, out_f, zero_bias=True):
    k1, k2 = jax.random.split(key)
    scale = 1.0 / jnp.sqrt(jnp.float32(in_f))
    w = jax.random.normal(k1, (out_f, in_f), dtype=jnp.float32) * scale
    if zero_bias:
        b = jnp.zeros((out_f,), jnp.float32)
    else:
        b = jax.random.uniform(k2, (out_f,), minval=-scale, maxval=scale,
                               dtype=jnp.float32)
    return _prep_matmul_weights(w.T, b)


def init_params(key):
    keys = jax.random.split(key, len(FORMANT_CFG) + len(ARTIC_CFG) + 3)
    ki = 0
    params = {"formant": [], "artic": []}
    for (cin, cout, k, _s, _p) in FORMANT_CFG:
        params["formant"].append(_prep_conv(keys[ki], cin, cout, k)); ki += 1
    for (cin, cout, k, _s, _p) in ARTIC_CFG:
        params["artic"].append(_prep_conv(keys[ki], cin, cout, k)); ki += 1
    # NOTE: the PyTorch reference zero-initializes fc2; we use deterministic
    # random weights so the output is non-trivial.  Forward semantics unchanged.
    params["fc1"] = _prep_linear(keys[ki], 256 + E_LEN, 150); ki += 1
    params["fc2"] = _prep_linear(keys[ki], 150, 478 * 3); ki += 1
    params["face_emb_fc"] = _prep_linear(keys[ki], 512, REDUCED_FACE_EMB_LEN); ki += 1
    return params


# ----------------------------------------------------------------------------
# Forward pass (mirrors Audio2GeometryModel.forward)
# ----------------------------------------------------------------------------
def forward(params, spec, face_emb, emotion):
    # reduced_face_emb = LeakyReLU(face_emb_fc(face_emb))
    fe = params["face_emb_fc"]
    reduced_face_emb = pallas_linear(face_emb, fe["w"], fe["b"],
                                     REDUCED_FACE_EMB_LEN, act="leaky")

    # formantAnalysis: Conv2d over H + LeakyReLU (channels-last internally).
    x = jnp.transpose(spec, (0, 2, 3, 1))  # NCHW -> NHWC, done once
    for cfg, lp in zip(FORMANT_CFG, params["formant"]):
        x = conv2d_h(x, lp["w"], lp["b"], cfg, act="leaky")

    e_vec = jnp.concatenate([reduced_face_emb, emotion], axis=1)  # (B, 23)

    # articulation layers: concat broadcast E along channels, conv over W, LeakyReLU.
    # TODO(synk): fuse the articulation stack + fc1/tanh/fc2 tail into a single
    # resident-weight Pallas kernel (all activations/weights fit VMEM).
    for cfg, lp in zip(ARTIC_CFG, params["artic"]):
        B, H, W, _ = x.shape
        E = jnp.broadcast_to(e_vec[:, None, None, :], (B, H, W, E_LEN))
        x = conv2d_w(jnp.concatenate([x, E], axis=-1), lp["w"], lp["b"], cfg,
                     act="leaky")

    # final concat + flatten (+ fc1 / tanh / fc2).  H == W == 1 here.
    B, H, W, _ = x.shape
    E = jnp.broadcast_to(e_vec[:, None, None, :], (B, H, W, E_LEN))
    flat = jnp.concatenate([x, E], axis=-1).reshape(B, -1)  # (B, 279)

    h = pallas_linear(flat, params["fc1"]["w"], params["fc1"]["b"], 150,
                      act="tanh")
    geometry = pallas_linear(h, params["fc2"]["w"], params["fc2"]["b"],
                             478 * 3, act="none")
    return geometry.reshape(-1, 478, 3)


# ----------------------------------------------------------------------------
# Main
# ----------------------------------------------------------------------------
if __name__ == "__main__":
    key = jax.random.PRNGKey(0)
    pkey, k_spec, k_face, k_emo = jax.random.split(key, 4)
    params = init_params(pkey)

    # Shapes implied by the module: H=256 reduces to 1 through the formant
    # stack, W=16 reduces to 1 through the 5 articulation layers.
    B = 2
    spec = jax.random.normal(k_spec, (B, 2, 256, 16), dtype=jnp.float32)
    face_emb = jax.random.normal(k_face, (B, 512), dtype=jnp.float32)
    emotion = jax.random.normal(k_emo, (B, EMOTION_LEN), dtype=jnp.float32)

    geometry = jax.jit(forward)(params, spec, face_emb, emotion)
    geometry = jax.block_until_ready(geometry)
    assert geometry.shape == (B, 478, 3), geometry.shape
    assert bool(jnp.all(jnp.isfinite(geometry)))
    print("KERNEL_OK")
</pallas_src>

<mosaic_0001>
module attributes {stable_mosaic.version = 11 : i64} {
  func.func @_mm_act_kernel(%arg0: i32, %arg1: memref<512x128xbf16, #tpu.memory_space<vmem>>, %arg2: memref<128x128xbf16, #tpu.memory_space<vmem>>, %arg3: memref<1x128xf32, #tpu.memory_space<vmem>>, %arg4: memref<512x128xf32, #tpu.memory_space<vmem>>) attributes {dimension_semantics = [#tpu.dimension_semantics<parallel>], iteration_bounds = array<i64: 8>, scalar_prefetch = 0 : i64, scratch_operands = 0 : i64, tpu.core_type = #tpu.core_type<tc>, window_params = [{transform_indices = @transform_0, window_bounds = array<i64: 512, 128>}, {pipeline_mode = #tpu.pipeline_mode<synchronous>, transform_indices = @transform_1, window_bounds = array<i64: 128, 128>}, {pipeline_mode = #tpu.pipeline_mode<synchronous>, transform_indices = @transform_2, window_bounds = array<i64: 1, 128>}, {transform_indices = @transform_3, window_bounds = array<i64: 512, 128>}]} {
    %c0 = arith.constant 0 : index
    %c0_0 = arith.constant 0 : index
    %0 = vector.load %arg1[%c0, %c0_0] : memref<512x128xbf16, #tpu.memory_space<vmem>>, vector<512x128xbf16>
    %c0_1 = arith.constant 0 : index
    %c0_2 = arith.constant 0 : index
    %1 = vector.load %arg2[%c0_1, %c0_2] : memref<128x128xbf16, #tpu.memory_space<vmem>>, vector<128x128xbf16>
    %cst = arith.constant dense<0.000000e+00> : vector<512x128xf32>
    %2 = tpu.matmul %0, %1, %cst {dimension_numbers = #tpu.dot_dimension_numbers<[1], [0], [0], [1], [0, 0, 1, 1], [], []>} : vector<512x128xbf16>, vector<128x128xbf16>, vector<512x128xf32> -> vector<512x128xf32>
    %c0_3 = arith.constant 0 : index
    %c0_4 = arith.constant 0 : index
    %3 = vector.load %arg3[%c0_3, %c0_4] : memref<1x128xf32, #tpu.memory_space<vmem>>, vector<1x128xf32>
    %4 = vector.broadcast %3 : vector<1x128xf32> to vector<512x128xf32>
    %5 = arith.addf %2, %4 : vector<512x128xf32>
    %cst_5 = arith.constant 0.00999999977 : f32
    %6 = vector.broadcast %cst_5 : f32 to vector<512x128xf32>
    %7 = arith.mulf %6, %5 : vector<512x128xf32>
    %8 = arith.maximumf %5, %7 : vector<512x128xf32>
    %c0_6 = arith.constant 0 : index
    %c0_7 = arith.constant 0 : index
    %9 = vector.load %arg4[%c0_6, %c0_7] : memref<512x128xf32, #tpu.memory_space<vmem>>, vector<512x128xf32>
    tpu.vector_store %arg4[%c0_6, %c0_7], %8 {strides = array<i32>} : memref<512x128xf32, #tpu.memory_space<vmem>>, vector<512x128xf32>,
    return
  }
  func.func @transform_0(%arg0: i32) -> (i32, i32) {
    %c0_i32 = arith.constant 0 : i32
    %c0_i32_0 = arith.constant 0 : i32
    return %arg0, %c0_i32 : i32, i32
  }
  func.func @transform_1(%arg0: i32) -> (i32, i32) {
    %c0_i32 = arith.constant 0 : i32
    %c0_i32_0 = arith.constant 0 : i32
    %c0_i32_1 = arith.constant 0 : i32
    return %c0_i32, %c0_i32_0 : i32, i32
  }
  func.func @transform_2(%arg0: i32) -> (i32, i32) {
    %c0_i32 = arith.constant 0 : i32
    %c0_i32_0 = arith.constant 0 : i32
    %c0_i32_1 = arith.constant 0 : i32
    return %c0_i32, %c0_i32_0 : i32, i32
  }
  func.func @transform_3(%arg0: i32) -> (i32, i32) {
    %c0_i32 = arith.constant 0 : i32
    %c0_i32_0 = arith.constant 0 : i32
    return %arg0, %c0_i32 : i32, i32
  }
}

module attributes {stable_mosaic.version = 11 : i64} {
  func.func @_mm_act_kernel(%arg0: i32, %arg1: memref<512x256xbf16, #tpu.memory_space<vmem>>, %arg2: memref<256x128xbf16, #tpu.memory_space<vmem>>, %arg3: memref<1x128xf32, #tpu.memory_space<vmem>>, %arg4: memref<512x128xf32, #tpu.memory_space<vmem>>) attributes {dimension_semantics = [#tpu.dimension_semantics<parallel>], iteration_bounds = array<i64: 4>, scalar_prefetch = 0 : i64, scratch_operands = 0 : i64, tpu.core_type = #tpu.core_type<tc>, window_params = [{transform_indices = @transform_0, window_bounds = array<i64: 512, 256>}, {pipeline_mode = #tpu.pipeline_mode<synchronous>, transform_indices = @transform_1, window_bounds = array<i64: 256, 128>}, {pipeline_mode = #tpu.pipeline_mode<synchronous>, transform_indices = @transform_2, window_bounds = array<i64: 1, 128>}, {transform_indices = @transform_3, window_bounds = array<i64: 512, 128>}]} {
    %c0 = arith.constant 0 : index
    %c0_0 = arith.constant 0 : index
    %0 = vector.load %arg1[%c0, %c0_0] : memref<512x256xbf16, #tpu.memory_space<vmem>>, vector<512x256xbf16>
    %c0_1 = arith.constant 0 : index
    %c0_2 = arith.constant 0 : index
    %1 = vector.load %arg2[%c0_1, %c0_2] : memref<256x128xbf16, #tpu.memory_space<vmem>>, vector<256x128xbf16>
    %cst = arith.constant dense<0.000000e+00> : vector<512x128xf32>
    %2 = tpu.matmul %0, %1, %cst {dimension_numbers = #tpu.dot_dimension_numbers<[1], [0], [0], [1], [0, 0, 1, 1], [], []>} : vector<512x256xbf16>, vector<256x128xbf16>, vector<512x128xf32> -> vector<512x128xf32>
    %c0_3 = arith.constant 0 : index
    %c0_4 = arith.constant 0 : index
    %3 = vector.load %arg3[%c0_3, %c0_4] : memref<1x128xf32, #tpu.memory_space<vmem>>, vector<1x128xf32>
    %4 = vector.broadcast %3 : vector<1x128xf32> to vector<512x128xf32>
    %5 = arith.addf %2, %4 : vector<512x128xf32>
    %cst_5 = arith.constant 0.00999999977 : f32
    %6 = vector.broadcast %cst_5 : f32 to vector<512x128xf32>
    %7 = arith.mulf %6, %5 : vector<512x128xf32>
    %8 = arith.maximumf %5, %7 : vector<512x128xf32>
    %c0_6 = arith.constant 0 : index
    %c0_7 = arith.constant 0 : index
    %9 = vector.load %arg4[%c0_6, %c0_7] : memref<512x128xf32, #tpu.memory_space<vmem>>, vector<512x128xf32>
    tpu.vector_store %arg4[%c0_6, %c0_7], %8 {strides = array<i32>} : memref<512x128xf32, #tpu.memory_space<vmem>>, vector<512x128xf32>,
    return
  }
  func.func @transform_0(%arg0: i32) -> (i32, i32) {
    %c0_i32 = arith.constant 0 : i32
    %c0_i32_0 = arith.constant 0 : i32
    return %arg0, %c0_i32 : i32, i32
  }
  func.func @transform_1(%arg0: i32) -> (i32, i32) {
    %c0_i32 = arith.constant 0 : i32
    %c0_i32_0 = arith.constant 0 : i32
    %c0_i32_1 = arith.constant 0 : i32
    return %c0_i32, %c0_i32_0 : i32, i32
  }
  func.func @transform_2(%arg0: i32) -> (i32, i32) {
    %c0_i32 = arith.constant 0 : i32
    %c0_i32_0 = arith.constant 0 : i32
    %c0_i32_1 = arith.constant 0 : i32
    return %c0_i32, %c0_i32_0 : i32, i32
  }
  func.func @transform_3(%arg0: i32) -> (i32, i32) {
    %c0_i32 = arith.constant 0 : i32
    %c0_i32_0 = arith.constant 0 : i32
    return %arg0, %c0_i32 : i32, i32
  }
}

module attributes {stable_mosaic.version = 11 : i64} {
  func.func @_mm_act_kernel(%arg0: i32, %arg1: memref<512x384xbf16, #tpu.memory_space<vmem>>, %arg2: memref<384x256xbf16, #tpu.memory_space<vmem>>, %arg3: memref<1x256xf32, #tpu.memory_space<vmem>>, %arg4: memref<512x256xf32, #tpu.memory_space<vmem>>) attributes {dimension_semantics = [#tpu.dimension_semantics<parallel>], iteration_bounds = array<i64: 2>, scalar_prefetch = 0 : i64, scratch_operands = 0 : i64, tpu.core_type = #tpu.core_type<tc>, window_params = [{transform_indices = @transform_0, window_bounds = array<i64: 512, 384>}, {pipeline_mode = #tpu.pipeline_mode<synchronous>, transform_indices = @transform_1, window_bounds = array<i64: 384, 256>}, {pipeline_mode = #tpu.pipeline_mode<synchronous>, transform_indices = @transform_2, window_bounds = array<i64: 1, 256>}, {transform_indices = @transform_3, window_bounds = array<i64: 512, 256>}]} {
    %c0 = arith.constant 0 : index
    %c0_0 = arith.constant 0 : index
    %0 = vector.load %arg1[%c0, %c0_0] : memref<512x384xbf16, #tpu.memory_space<vmem>>, vector<512x384xbf16>
    %c0_1 = arith.constant 0 : index
    %c0_2 = arith.constant 0 : index
    %1 = vector.load %arg2[%c0_1, %c0_2] : memref<384x256xbf16, #tpu.memory_space<vmem>>, vector<384x256xbf16>
    %cst = arith.constant dense<0.000000e+00> : vector<512x256xf32>
    %2 = tpu.matmul %0, %1, %cst {dimension_numbers = #tpu.dot_dimension_numbers<[1], [0], [0], [1], [0, 0, 1, 1], [], []>} : vector<512x384xbf16>, vector<384x256xbf16>, vector<512x256xf32> -> vector<512x256xf32>
    %c0_3 = arith.constant 0 : index
    %c0_4 = arith.constant 0 : index
    %3 = vector.load %arg3[%c0_3, %c0_4] : memref<1x256xf32, #tpu.memory_space<vmem>>, vector<1x256xf32>
    %4 = vector.broadcast %3 : vector<1x256xf32> to vector<512x256xf32>
    %5 = arith.addf %2, %4 : vector<512x256xf32>
    %cst_5 = arith.constant 0.00999999977 : f32
    %6 = vector.broadcast %cst_5 : f32 to vector<512x256xf32>
    %7 = arith.mulf %6, %5 : vector<512x256xf32>
    %8 = arith.maximumf %5, %7 : vector<512x256xf32>
    %c0_6 = arith.constant 0 : index
    %c0_7 = arith.constant 0 : index
    %9 = vector.load %arg4[%c0_6, %c0_7] : memref<512x256xf32, #tpu.memory_space<vmem>>, vector<512x256xf32>
    tpu.vector_store %arg4[%c0_6, %c0_7], %8 {strides = array<i32>} : memref<512x256xf32, #tpu.memory_space<vmem>>, vector<512x256xf32>,
    return
  }
  func.func @transform_0(%arg0: i32) -> (i32, i32) {
    %c0_i32 = arith.constant 0 : i32
    %c0_i32_0 = arith.constant 0 : i32
    return %arg0, %c0_i32 : i32, i32
  }
  func.func @transform_1(%arg0: i32) -> (i32, i32) {
    %c0_i32 = arith.constant 0 : i32
    %c0_i32_0 = arith.constant 0 : i32
    %c0_i32_1 = arith.constant 0 : i32
    return %c0_i32, %c0_i32_0 : i32, i32
  }
  func.func @transform_2(%arg0: i32) -> (i32, i32) {
    %c0_i32 = arith.constant 0 : i32
    %c0_i32_0 = arith.constant 0 : i32
    %c0_i32_1 = arith.constant 0 : i32
    return %c0_i32, %c0_i32_0 : i32, i32
  }
  func.func @transform_3(%arg0: i32) -> (i32, i32) {
    %c0_i32 = arith.constant 0 : i32
    %c0_i32_0 = arith.constant 0 : i32
    return %arg0, %c0_i32 : i32, i32
  }
}

module attributes {stable_mosaic.version = 11 : i64} {
  func.func @_mm_act_kernel(%arg0: i32, %arg1: memref<512x512xbf16, #tpu.memory_space<vmem>>, %arg2: memref<512x256xbf16, #tpu.memory_space<vmem>>, %arg3: memref<1x256xf32, #tpu.memory_space<vmem>>, %arg4: memref<512x256xf32, #tpu.memory_space<vmem>>) attributes {dimension_semantics = [#tpu.dimension_semantics<parallel>], iteration_bounds = array<i64: 1>, scalar_prefetch = 0 : i64, scratch_operands = 0 : i64, tpu.core_type = #tpu.core_type<tc>, window_params = [{transform_indices = @transform_0, window_bounds = array<i64: 512, 512>}, {pipeline_mode = #tpu.pipeline_mode<synchronous>, transform_indices = @transform_1, window_bounds = array<i64: 512, 256>}, {pipeline_mode = #tpu.pipeline_mode<synchronous>, transform_indices = @transform_2, window_bounds = array<i64: 1, 256>}, {transform_indices = @transform_3, window_bounds = array<i64: 512, 256>}]} {
    %c0 = arith.constant 0 : index
    %c0_0 = arith.constant 0 : index
    %0 = vector.load %arg1[%c0, %c0_0] : memref<512x512xbf16, #tpu.memory_space<vmem>>, vector<512x512xbf16>
    %c0_1 = arith.constant 0 : index
    %c0_2 = arith.constant 0 : index
    %1 = vector.load %arg2[%c0_1, %c0_2] : memref<512x256xbf16, #tpu.memory_space<vmem>>, vector<512x256xbf16>
    %cst = arith.constant dense<0.000000e+00> : vector<512x256xf32>
    %2 = tpu.matmul %0, %1, %cst {dimension_numbers = #tpu.dot_dimension_numbers<[1], [0], [0], [1], [0, 0, 1, 1], [], []>} : vector<512x512xbf16>, vector<512x256xbf16>, vector<512x256xf32> -> vector<512x256xf32>
    %c0_3 = arith.constant 0 : index
    %c0_4 = arith.constant 0 : index
    %3 = vector.load %arg3[%c0_3, %c0_4] : memref<1x256xf32, #tpu.memory_space<vmem>>, vector<1x256xf32>
    %4 = vector.broadcast %3 : vector<1x256xf32> to vector<512x256xf32>
    %5 = arith.addf %2, %4 : vector<512x256xf32>
    %cst_5 = arith.constant 0.00999999977 : f32
    %6 = vector.broadcast %cst_5 : f32 to vector<512x256xf32>
    %7 = arith.mulf %6, %5 : vector<512x256xf32>
    %8 = arith.maximumf %5, %7 : vector<512x256xf32>
    %c0_6 = arith.constant 0 : index
    %c0_7 = arith.constant 0 : index
    %9 = vector.load %arg4[%c0_6, %c0_7] : memref<512x256xf32, #tpu.memory_space<vmem>>, vector<512x256xf32>
    tpu.vector_store %arg4[%c0_6, %c0_7], %8 {strides = array<i32>} : memref<512x256xf32, #tpu.memory_space<vmem>>, vector<512x256xf32>,
    return
  }
  func.func @transform_0(%arg0: i32) -> (i32, i32) {
    %c0_i32 = arith.constant 0 : i32
    %c0_i32_0 = arith.constant 0 : i32
    return %arg0, %c0_i32 : i32, i32
  }
  func.func @transform_1(%arg0: i32) -> (i32, i32) {
    %c0_i32 = arith.constant 0 : i32
    %c0_i32_0 = arith.constant 0 : i32
    %c0_i32_1 = arith.constant 0 : i32
    return %c0_i32, %c0_i32_0 : i32, i32
  }
  func.func @transform_2(%arg0: i32) -> (i32, i32) {
    %c0_i32 = arith.constant 0 : i32
    %c0_i32_0 = arith.constant 0 : i32
    %c0_i32_1 = arith.constant 0 : i32
    return %c0_i32, %c0_i32_0 : i32, i32
  }
  func.func @transform_3(%arg0: i32) -> (i32, i32) {
    %c0_i32 = arith.constant 0 : i32
    %c0_i32_0 = arith.constant 0 : i32
    return %arg0, %c0_i32 : i32, i32
  }
}

module attributes {stable_mosaic.version = 11 : i64} {
  func.func @_mm_act_kernel(%arg0: i32, %arg1: memref<128x1024xbf16, #tpu.memory_space<vmem>>, %arg2: memref<1024x256xbf16, #tpu.memory_space<vmem>>, %arg3: memref<1x256xf32, #tpu.memory_space<vmem>>, %arg4: memref<128x256xf32, #tpu.memory_space<vmem>>) attributes {dimension_semantics = [#tpu.dimension_semantics<parallel>], iteration_bounds = array<i64: 1>, scalar_prefetch = 0 : i64, scratch_operands = 0 : i64, tpu.core_type = #tpu.core_type<tc>, window_params = [{transform_indices = @transform_0, window_bounds = array<i64: 128, 1024>}, {pipeline_mode = #tpu.pipeline_mode<synchronous>, transform_indices = @transform_1, window_bounds = array<i64: 1024, 256>}, {pipeline_mode = #tpu.pipeline_mode<synchronous>, transform_indices = @transform_2, window_bounds = array<i64: 1, 256>}, {transform_indices = @transform_3, window_bounds = array<i64: 128, 256>}]} {
    %c0 = arith.constant 0 : index
    %c0_0 = arith.constant 0 : index
    %0 = vector.load %arg1[%c0, %c0_0] : memref<128x1024xbf16, #tpu.memory_space<vmem>>, vector<128x1024xbf16>
    %c0_1 = arith.constant 0 : index
    %c0_2 = arith.constant 0 : index
    %1 = vector.load %arg2[%c0_1, %c0_2] : memref<1024x256xbf16, #tpu.memory_space<vmem>>, vector<1024x256xbf16>
    %cst = arith.constant dense<0.000000e+00> : vector<128x256xf32>
    %2 = tpu.matmul %0, %1, %cst {dimension_numbers = #tpu.dot_dimension_numbers<[1], [0], [0], [1], [0, 0, 1, 1], [], []>} : vector<128x1024xbf16>, vector<1024x256xbf16>, vector<128x256xf32> -> vector<128x256xf32>
    %c0_3 = arith.constant 0 : index
    %c0_4 = arith.constant 0 : index
    %3 = vector.load %arg3[%c0_3, %c0_4] : memref<1x256xf32, #tpu.memory_space<vmem>>, vector<1x256xf32>
    %4 = vector.broadcast %3 : vector<1x256xf32> to vector<128x256xf32>
    %5 = arith.addf %2, %4 : vector<128x256xf32>
    %cst_5 = arith.constant 0.00999999977 : f32
    %6 = vector.broadcast %cst_5 : f32 to vector<128x256xf32>
    %7 = arith.mulf %6, %5 : vector<128x256xf32>
    %8 = arith.maximumf %5, %7 : vector<128x256xf32>
    %c0_6 = arith.constant 0 : index
    %c0_7 = arith.constant 0 : index
    %9 = vector.load %arg4[%c0_6, %c0_7] : memref<128x256xf32, #tpu.memory_space<vmem>>, vector<128x256xf32>
    tpu.vector_store %arg4[%c0_6, %c0_7], %8 {strides = array<i32>} : memref<128x256xf32, #tpu.memory_space<vmem>>, vector<128x256xf32>,
    return
  }
  func.func @transform_0(%arg0: i32) -> (i32, i32) {
    %c0_i32 = arith.constant 0 : i32
    %c0_i32_0 = arith.constant 0 : i32
    return %arg0, %c0_i32 : i32, i32
  }
  func.func @transform_1(%arg0: i32) -> (i32, i32) {
    %c0_i32 = arith.constant 0 : i32
    %c0_i32_0 = arith.constant 0 : i32
    %c0_i32_1 = arith.constant 0 : i32
    return %c0_i32, %c0_i32_0 : i32, i32
  }
  func.func @transform_2(%arg0: i32) -> (i32, i32) {
    %c0_i32 = arith.constant 0 : i32
    %c0_i32_0 = arith.constant 0 : i32
    %c0_i32_1 = arith.constant 0 : i32
    return %c0_i32, %c0_i32_0 : i32, i32
  }
  func.func @transform_3(%arg0: i32) -> (i32, i32) {
    %c0_i32 = arith.constant 0 : i32
    %c0_i32_0 = arith.constant 0 : i32
    return %arg0, %c0_i32 : i32, i32
  }
}

module attributes {stable_mosaic.version = 11 : i64} {
  func.func @_mm_act_kernel(%arg0: i32, %arg1: memref<32x1024xbf16, #tpu.memory_space<vmem>>, %arg2: memref<1024x256xbf16, #tpu.memory_space<vmem>>, %arg3: memref<1x256xf32, #tpu.memory_space<vmem>>, %arg4: memref<32x256xf32, #tpu.memory_space<vmem>>) attributes {dimension_semantics = [#tpu.dimension_semantics<parallel>], iteration_bounds = array<i64: 1>, scalar_prefetch = 0 : i64, scratch_operands = 0 : i64, tpu.core_type = #tpu.core_type<tc>, window_params = [{transform_indices = @transform_0, window_bounds = array<i64: 32, 1024>}, {pipeline_mode = #tpu.pipeline_mode<synchronous>, transform_indices = @transform_1, window_bounds = array<i64: 1024, 256>}, {pipeline_mode = #tpu.pipeline_mode<synchronous>, transform_indices = @transform_2, window_bounds = array<i64: 1, 256>}, {transform_indices = @transform_3, window_bounds = array<i64: 32, 256>}]} {
    %c0 = arith.constant 0 : index
    %c0_0 = arith.constant 0 : index
    %0 = vector.load %arg1[%c0, %c0_0] : memref<32x1024xbf16, #tpu.memory_space<vmem>>, vector<32x1024xbf16>
    %c0_1 = arith.constant 0 : index
    %c0_2 = arith.constant 0 : index
    %1 = vector.load %arg2[%c0_1, %c0_2] : memref<1024x256xbf16, #tpu.memory_space<vmem>>, vector<1024x256xbf16>
    %cst = arith.constant dense<0.000000e+00> : vector<32x256xf32>
    %2 = tpu.matmul %0, %1, %cst {dimension_numbers = #tpu.dot_dimension_numbers<[1], [0], [0], [1], [0, 0, 1, 1], [], []>} : vector<32x1024xbf16>, vector<1024x256xbf16>, vector<32x256xf32> -> vector<32x256xf32>
    %c0_3 = arith.constant 0 : index
    %c0_4 = arith.constant 0 : index
    %3 = vector.load %arg3[%c0_3, %c0_4] : memref<1x256xf32, #tpu.memory_space<vmem>>, vector<1x256xf32>
    %4 = vector.broadcast %3 : vector<1x256xf32> to vector<32x256xf32>
    %5 = arith.addf %2, %4 : vector<32x256xf32>
    %cst_5 = arith.constant 0.00999999977 : f32
    %6 = vector.broadcast %cst_5 : f32 to vector<32x256xf32>
    %7 = arith.mulf %6, %5 : vector<32x256xf32>
    %8 = arith.maximumf %5, %7 : vector<32x256xf32>
    %c0_6 = arith.constant 0 : index
    %c0_7 = arith.constant 0 : index
    %9 = vector.load %arg4[%c0_6, %c0_7] : memref<32x256xf32, #tpu.memory_space<vmem>>, vector<32x256xf32>
    tpu.vector_store %arg4[%c0_6, %c0_7], %8 {strides = array<i32>} : memref<32x256xf32, #tpu.memory_space<vmem>>, vector<32x256xf32>,
    return
  }
  func.func @transform_0(%arg0: i32) -> (i32, i32) {
    %c0_i32 = arith.constant 0 : i32
    %c0_i32_0 = arith.constant 0 : i32
    return %arg0, %c0_i32 : i32, i32
  }
  func.func @transform_1(%arg0: i32) -> (i32, i32) {
    %c0_i32 = arith.constant 0 : i32
    %c0_i32_0 = arith.constant 0 : i32
    %c0_i32_1 = arith.constant 0 : i32
    return %c0_i32, %c0_i32_0 : i32, i32
  }
  func.func @transform_2(%arg0: i32) -> (i32, i32) {
    %c0_i32 = arith.constant 0 : i32
    %c0_i32_0 = arith.constant 0 : i32
    %c0_i32_1 = arith.constant 0 : i32
    return %c0_i32, %c0_i32_0 : i32, i32
  }
  func.func @transform_3(%arg0: i32) -> (i32, i32) {
    %c0_i32 = arith.constant 0 : i32
    %c0_i32_0 = arith.constant 0 : i32
    return %arg0, %c0_i32 : i32, i32
  }
}

module attributes {stable_mosaic.version = 11 : i64} {
  func.func @_mm_act_kernel(%arg0: i32, %arg1: memref<16x512xbf16, #tpu.memory_space<vmem>>, %arg2: memref<512x128xbf16, #tpu.memory_space<vmem>>, %arg3: memref<1x128xf32, #tpu.memory_space<vmem>>, %arg4: memref<16x128xf32, #tpu.memory_space<vmem>>) attributes {dimension_semantics = [#tpu.dimension_semantics<parallel>], iteration_bounds = array<i64: 1>, scalar_prefetch = 0 : i64, scratch_operands = 0 : i64, tpu.core_type = #tpu.core_type<tc>, window_params = [{transform_indices = @transform_0, window_bounds = array<i64: 16, 512>}, {pipeline_mode = #tpu.pipeline_mode<synchronous>, transform_indices = @transform_1, window_bounds = array<i64: 512, 128>}, {pipeline_mode = #tpu.pipeline_mode<synchronous>, transform_indices = @transform_2, window_bounds = array<i64: 1, 128>}, {transform_indices = @transform_3, window_bounds = array<i64: 16, 128>}]} {
    %c0 = arith.constant 0 : index
    %c0_0 = arith.constant 0 : index
    %0 = vector.load %arg1[%c0, %c0_0] : memref<16x512xbf16, #tpu.memory_space<vmem>>, vector<16x512xbf16>
    %c0_1 = arith.constant 0 : index
    %c0_2 = arith.constant 0 : index
    %1 = vector.load %arg2[%c0_1, %c0_2] : memref<512x128xbf16, #tpu.memory_space<vmem>>, vector<512x128xbf16>
    %cst = arith.constant dense<0.000000e+00> : vector<16x128xf32>
    %2 = tpu.matmul %0, %1, %cst {dimension_numbers = #tpu.dot_dimension_numbers<[1], [0], [0], [1], [0, 0, 1, 1], [], []>} : vector<16x512xbf16>, vector<512x128xbf16>, vector<16x128xf32> -> vector<16x128xf32>
    %c0_3 = arith.constant 0 : index
    %c0_4 = arith.constant 0 : index
    %3 = vector.load %arg3[%c0_3, %c0_4] : memref<1x128xf32, #tpu.memory_space<vmem>>, vector<1x128xf32>
    %4 = vector.broadcast %3 : vector<1x128xf32> to vector<16x128xf32>
    %5 = arith.addf %2, %4 : vector<16x128xf32>
    %cst_5 = arith.constant 0.00999999977 : f32
    %6 = vector.broadcast %cst_5 : f32 to vector<16x128xf32>
    %7 = arith.mulf %6, %5 : vector<16x128xf32>
    %8 = arith.maximumf %5, %7 : vector<16x128xf32>
    %c0_6 = arith.constant 0 : index
    %c0_7 = arith.constant 0 : index
    %9 = vector.load %arg4[%c0_6, %c0_7] : memref<16x128xf32, #tpu.memory_space<vmem>>, vector<16x128xf32>
    tpu.vector_store %arg4[%c0_6, %c0_7], %8 {strides = array<i32>} : memref<16x128xf32, #tpu.memory_space<vmem>>, vector<16x128xf32>,
    return
  }
  func.func @transform_0(%arg0: i32) -> (i32, i32) {
    %c0_i32 = arith.constant 0 : i32
    %c0_i32_0 = arith.constant 0 : i32
    return %arg0, %c0_i32 : i32, i32
  }
  func.func @transform_1(%arg0: i32) -> (i32, i32) {
    %c0_i32 = arith.constant 0 : i32
    %c0_i32_0 = arith.constant 0 : i32
    %c0_i32_1 = arith.constant 0 : i32
    return %c0_i32, %c0_i32_0 : i32, i32
  }
  func.func @transform_2(%arg0: i32) -> (i32, i32) {
    %c0_i32 = arith.constant 0 : i32
    %c0_i32_0 = arith.constant 0 : i32
    %c0_i32_1 = arith.constant 0 : i32
    return %c0_i32, %c0_i32_0 : i32, i32
  }
  func.func @transform_3(%arg0: i32) -> (i32, i32) {
    %c0_i32 = arith.constant 0 : i32
    %c0_i32_0 = arith.constant 0 : i32
    return %arg0, %c0_i32 : i32, i32
  }
}

module attributes {stable_mosaic.version = 11 : i64} {
  func.func @_mm_act_kernel(%arg0: i32, %arg1: memref<32x896xbf16, #tpu.memory_space<vmem>>, %arg2: memref<896x256xbf16, #tpu.memory_space<vmem>>, %arg3: memref<1x256xf32, #tpu.memory_space<vmem>>, %arg4: memref<32x256xf32, #tpu.memory_space<vmem>>) attributes {dimension_semantics = [#tpu.dimension_semantics<parallel>], iteration_bounds = array<i64: 1>, scalar_prefetch = 0 : i64, scratch_operands = 0 : i64, tpu.core_type = #tpu.core_type<tc>, window_params = [{transform_indices = @transform_0, window_bounds = array<i64: 32, 896>}, {pipeline_mode = #tpu.pipeline_mode<synchronous>, transform_indices = @transform_1, window_bounds = array<i64: 896, 256>}, {pipeline_mode = #tpu.pipeline_mode<synchronous>, transform_indices = @transform_2, window_bounds = array<i64: 1, 256>}, {transform_indices = @transform_3, window_bounds = array<i64: 32, 256>}]} {
    %c0 = arith.constant 0 : index
    %c0_0 = arith.constant 0 : index
    %0 = vector.load %arg1[%c0, %c0_0] : memref<32x896xbf16, #tpu.memory_space<vmem>>, vector<32x896xbf16>
    %c0_1 = arith.constant 0 : index
    %c0_2 = arith.constant 0 : index
    %1 = vector.load %arg2[%c0_1, %c0_2] : memref<896x256xbf16, #tpu.memory_space<vmem>>, vector<896x256xbf16>
    %cst = arith.constant dense<0.000000e+00> : vector<32x256xf32>
    %2 = tpu.matmul %0, %1, %cst {dimension_numbers = #tpu.dot_dimension_numbers<[1], [0], [0], [1], [0, 0, 1, 1], [], []>} : vector<32x896xbf16>, vector<896x256xbf16>, vector<32x256xf32> -> vector<32x256xf32>
    %c0_3 = arith.constant 0 : index
    %c0_4 = arith.constant 0 : index
    %3 = vector.load %arg3[%c0_3, %c0_4] : memref<1x256xf32, #tpu.memory_space<vmem>>, vector<1x256xf32>
    %4 = vector.broadcast %3 : vector<1x256xf32> to vector<32x256xf32>
    %5 = arith.addf %2, %4 : vector<32x256xf32>
    %cst_5 = arith.constant 0.00999999977 : f32
    %6 = vector.broadcast %cst_5 : f32 to vector<32x256xf32>
    %7 = arith.mulf %6, %5 : vector<32x256xf32>
    %8 = arith.maximumf %5, %7 : vector<32x256xf32>
    %c0_6 = arith.constant 0 : index
    %c0_7 = arith.constant 0 : index
    %9 = vector.load %arg4[%c0_6, %c0_7] : memref<32x256xf32, #tpu.memory_space<vmem>>, vector<32x256xf32>
    tpu.vector_store %arg4[%c0_6, %c0_7], %8 {strides = array<i32>} : memref<32x256xf32, #tpu.memory_space<vmem>>, vector<32x256xf32>,
    return
  }
  func.func @transform_0(%arg0: i32) -> (i32, i32) {
    %c0_i32 = arith.constant 0 : i32
    %c0_i32_0 = arith.constant 0 : i32
    return %arg0, %c0_i32 : i32, i32
  }
  func.func @transform_1(%arg0: i32) -> (i32, i32) {
    %c0_i32 = arith.constant 0 : i32
    %c0_i32_0 = arith.constant 0 : i32
    %c0_i32_1 = arith.constant 0 : i32
    return %c0_i32, %c0_i32_0 : i32, i32
  }
  func.func @transform_2(%arg0: i32) -> (i32, i32) {
    %c0_i32 = arith.constant 0 : i32
    %c0_i32_0 = arith.constant 0 : i32
    %c0_i32_1 = arith.constant 0 : i32
    return %c0_i32, %c0_i32_0 : i32, i32
  }
  func.func @transform_3(%arg0: i32) -> (i32, i32) {
    %c0_i32 = arith.constant 0 : i32
    %c0_i32_0 = arith.constant 0 : i32
    return %arg0, %c0_i32 : i32, i32
  }
}

module attributes {stable_mosaic.version = 11 : i64} {
  func.func @_mm_act_kernel(%arg0: i32, %arg1: memref<16x896xbf16, #tpu.memory_space<vmem>>, %arg2: memref<896x256xbf16, #tpu.memory_space<vmem>>, %arg3: memref<1x256xf32, #tpu.memory_space<vmem>>, %arg4: memref<16x256xf32, #tpu.memory_space<vmem>>) attributes {dimension_semantics = [#tpu.dimension_semantics<parallel>], iteration_bounds = array<i64: 1>, scalar_prefetch = 0 : i64, scratch_operands = 0 : i64, tpu.core_type = #tpu.core_type<tc>, window_params = [{transform_indices = @transform_0, window_bounds = array<i64: 16, 896>}, {pipeline_mode = #tpu.pipeline_mode<synchronous>, transform_indices = @transform_1, window_bounds = array<i64: 896, 256>}, {pipeline_mode = #tpu.pipeline_mode<synchronous>, transform_indices = @transform_2, window_bounds = array<i64: 1, 256>}, {transform_indices = @transform_3, window_bounds = array<i64: 16, 256>}]} {
    %c0 = arith.constant 0 : index
    %c0_0 = arith.constant 0 : index
    %0 = vector.load %arg1[%c0, %c0_0] : memref<16x896xbf16, #tpu.memory_space<vmem>>, vector<16x896xbf16>
    %c0_1 = arith.constant 0 : index
    %c0_2 = arith.constant 0 : index
    %1 = vector.load %arg2[%c0_1, %c0_2] : memref<896x256xbf16, #tpu.memory_space<vmem>>, vector<896x256xbf16>
    %cst = arith.constant dense<0.000000e+00> : vector<16x256xf32>
    %2 = tpu.matmul %0, %1, %cst {dimension_numbers = #tpu.dot_dimension_numbers<[1], [0], [0], [1], [0, 0, 1, 1], [], []>} : vector<16x896xbf16>, vector<896x256xbf16>, vector<16x256xf32> -> vector<16x256xf32>
    %c0_3 = arith.constant 0 : index
    %c0_4 = arith.constant 0 : index
    %3 = vector.load %arg3[%c0_3, %c0_4] : memref<1x256xf32, #tpu.memory_space<vmem>>, vector<1x256xf32>
    %4 = vector.broadcast %3 : vector<1x256xf32> to vector<16x256xf32>
    %5 = arith.addf %2, %4 : vector<16x256xf32>
    %cst_5 = arith.constant 0.00999999977 : f32
    %6 = vector.broadcast %cst_5 : f32 to vector<16x256xf32>
    %7 = arith.mulf %6, %5 : vector<16x256xf32>
    %8 = arith.maximumf %5, %7 : vector<16x256xf32>
    %c0_6 = arith.constant 0 : index
    %c0_7 = arith.constant 0 : index
    %9 = vector.load %arg4[%c0_6, %c0_7] : memref<16x256xf32, #tpu.memory_space<vmem>>, vector<16x256xf32>
    tpu.vector_store %arg4[%c0_6, %c0_7], %8 {strides = array<i32>} : memref<16x256xf32, #tpu.memory_space<vmem>>, vector<16x256xf32>,
    return
  }
  func.func @transform_0(%arg0: i32) -> (i32, i32) {
    %c0_i32 = arith.constant 0 : i32
    %c0_i32_0 = arith.constant 0 : i32
    return %arg0, %c0_i32 : i32, i32
  }
  func.func @transform_1(%arg0: i32) -> (i32, i32) {
    %c0_i32 = arith.constant 0 : i32
    %c0_i32_0 = arith.constant 0 : i32
    %c0_i32_1 = arith.constant 0 : i32
    return %c0_i32, %c0_i32_0 : i32, i32
  }
  func.func @transform_2(%arg0: i32) -> (i32, i32) {
    %c0_i32 = arith.constant 0 : i32
    %c0_i32_0 = arith.constant 0 : i32
    %c0_i32_1 = arith.constant 0 : i32
    return %c0_i32, %c0_i32_0 : i32, i32
  }
  func.func @transform_3(%arg0: i32) -> (i32, i32) {
    %c0_i32 = arith.constant 0 : i32
    %c0_i32_0 = arith.constant 0 : i32
    return %arg0, %c0_i32 : i32, i32
  }
}

module attributes {stable_mosaic.version = 11 : i64} {
  func.func @_mm_act_kernel(%arg0: i32, %arg1: memref<16x384xbf16, #tpu.memory_space<vmem>>, %arg2: memref<384x256xbf16, #tpu.memory_space<vmem>>, %arg3: memref<1x256xf32, #tpu.memory_space<vmem>>, %arg4: memref<16x256xf32, #tpu.memory_space<vmem>>) attributes {dimension_semantics = [#tpu.dimension_semantics<parallel>], iteration_bounds = array<i64: 1>, scalar_prefetch = 0 : i64, scratch_operands = 0 : i64, tpu.core_type = #tpu.core_type<tc>, window_params = [{transform_indices = @transform_0, window_bounds = array<i64: 16, 384>}, {pipeline_mode = #tpu.pipeline_mode<synchronous>, transform_indices = @transform_1, window_bounds = array<i64: 384, 256>}, {pipeline_mode = #tpu.pipeline_mode<synchronous>, transform_indices = @transform_2, window_bounds = array<i64: 1, 256>}, {transform_indices = @transform_3, window_bounds = array<i64: 16, 256>}]} {
    %c0 = arith.constant 0 : index
    %c0_0 = arith.constant 0 : index
    %0 = vector.load %arg1[%c0, %c0_0] : memref<16x384xbf16, #tpu.memory_space<vmem>>, vector<16x384xbf16>
    %c0_1 = arith.constant 0 : index
    %c0_2 = arith.constant 0 : index
    %1 = vector.load %arg2[%c0_1, %c0_2] : memref<384x256xbf16, #tpu.memory_space<vmem>>, vector<384x256xbf16>
    %cst = arith.constant dense<0.000000e+00> : vector<16x256xf32>
    %2 = tpu.matmul %0, %1, %cst {dimension_numbers = #tpu.dot_dimension_numbers<[1], [0], [0], [1], [0, 0, 1, 1], [], []>} : vector<16x384xbf16>, vector<384x256xbf16>, vector<16x256xf32> -> vector<16x256xf32>
    %c0_3 = arith.constant 0 : index
    %c0_4 = arith.constant 0 : index
    %3 = vector.load %arg3[%c0_3, %c0_4] : memref<1x256xf32, #tpu.memory_space<vmem>>, vector<1x256xf32>
    %4 = vector.broadcast %3 : vector<1x256xf32> to vector<16x256xf32>
    %5 = arith.addf %2, %4 : vector<16x256xf32>
    %6 = math.tanh %5 : vector<16x256xf32>
    %c0_5 = arith.constant 0 : index
    %c0_6 = arith.constant 0 : index
    %7 = vector.load %arg4[%c0_5, %c0_6] : memref<16x256xf32, #tpu.memory_space<vmem>>, vector<16x256xf32>
    tpu.vector_store %arg4[%c0_5, %c0_6], %6 {strides = array<i32>} : memref<16x256xf32, #tpu.memory_space<vmem>>, vector<16x256xf32>,
    return
  }
  func.func @transform_0(%arg0: i32) -> (i32, i32) {
    %c0_i32 = arith.constant 0 : i32
    %c0_i32_0 = arith.constant 0 : i32
    return %arg0, %c0_i32 : i32, i32
  }
  func.func @transform_1(%arg0: i32) -> (i32, i32) {
    %c0_i32 = arith.constant 0 : i32
    %c0_i32_0 = arith.constant 0 : i32
    %c0_i32_1 = arith.constant 0 : i32
    return %c0_i32, %c0_i32_0 : i32, i32
  }
  func.func @transform_2(%arg0: i32) -> (i32, i32) {
    %c0_i32 = arith.constant 0 : i32
    %c0_i32_0 = arith.constant 0 : i32
    %c0_i32_1 = arith.constant 0 : i32
    return %c0_i32, %c0_i32_0 : i32, i32
  }
  func.func @transform_3(%arg0: i32) -> (i32, i32) {
    %c0_i32 = arith.constant 0 : i32
    %c0_i32_0 = arith.constant 0 : i32
    return %arg0, %c0_i32 : i32, i32
  }
}

module attributes {stable_mosaic.version = 11 : i64} {
  func.func @_mm_act_kernel(%arg0: i32, %arg1: memref<16x256xbf16, #tpu.memory_space<vmem>>, %arg2: memref<256x1536xbf16, #tpu.memory_space<vmem>>, %arg3: memref<1x1536xf32, #tpu.memory_space<vmem>>, %arg4: memref<16x1536xf32, #tpu.memory_space<vmem>>) attributes {dimension_semantics = [#tpu.dimension_semantics<parallel>], iteration_bounds = array<i64: 1>, scalar_prefetch = 0 : i64, scratch_operands = 0 : i64, tpu.core_type = #tpu.core_type<tc>, window_params = [{transform_indices = @transform_0, window_bounds = array<i64: 16, 256>}, {pipeline_mode = #tpu.pipeline_mode<synchronous>, transform_indices = @transform_1, window_bounds = array<i64: 256, 1536>}, {pipeline_mode = #tpu.pipeline_mode<synchronous>, transform_indices = @transform_2, window_bounds = array<i64: 1, 1536>}, {transform_indices = @transform_3, window_bounds = array<i64: 16, 1536>}]} {
    %c0 = arith.constant 0 : index
    %c0_0 = arith.constant 0 : index
    %0 = vector.load %arg1[%c0, %c0_0] : memref<16x256xbf16, #tpu.memory_space<vmem>>, vector<16x256xbf16>
    %c0_1 = arith.constant 0 : index
    %c0_2 = arith.constant 0 : index
    %1 = vector.load %arg2[%c0_1, %c0_2] : memref<256x1536xbf16, #tpu.memory_space<vmem>>, vector<256x1536xbf16>
    %cst = arith.constant dense<0.000000e+00> : vector<16x1536xf32>
    %2 = tpu.matmul %0, %1, %cst {dimension_numbers = #tpu.dot_dimension_numbers<[1], [0], [0], [1], [0, 0, 1, 1], [], []>} : vector<16x256xbf16>, vector<256x1536xbf16>, vector<16x1536xf32> -> vector<16x1536xf32>
    %c0_3 = arith.constant 0 : index
    %c0_4 = arith.constant 0 : index
    %3 = vector.load %arg3[%c0_3, %c0_4] : memref<1x1536xf32, #tpu.memory_space<vmem>>, vector<1x1536xf32>
    %4 = vector.broadcast %3 : vector<1x1536xf32> to vector<16x1536xf32>
    %5 = arith.addf %2, %4 : vector<16x1536xf32>
    %c0_5 = arith.constant 0 : index
    %c0_6 = arith.constant 0 : index
    %6 = vector.load %arg4[%c0_5, %c0_6] : memref<16x1536xf32, #tpu.memory_space<vmem>>, vector<16x1536xf32>
    tpu.vector_store %arg4[%c0_5, %c0_6], %5 {strides = array<i32>} : memref<16x1536xf32, #tpu.memory_space<vmem>>, vector<16x1536xf32>,
    return
  }
  func.func @transform_0(%arg0: i32) -> (i32, i32) {
    %c0_i32 = arith.constant 0 : i32
    %c0_i32_0 = arith.constant 0 : i32
    return %arg0, %c0_i32 : i32, i32
  }
  func.func @transform_1(%arg0: i32) -> (i32, i32) {
    %c0_i32 = arith.constant 0 : i32
    %c0_i32_0 = arith.constant 0 : i32
    %c0_i32_1 = arith.constant 0 : i32
    return %c0_i32, %c0_i32_0 : i32, i32
  }
  func.func @transform_2(%arg0: i32) -> (i32, i32) {
    %c0_i32 = arith.constant 0 : i32
    %c0_i32_0 = arith.constant 0 : i32
    %c0_i32_1 = arith.constant 0 : i32
    return %c0_i32, %c0_i32_0 : i32, i32
  }
  func.func @transform_3(%arg0: i32) -> (i32, i32) {
    %c0_i32 = arith.constant 0 : i32
    %c0_i32_0 = arith.constant 0 : i32
    return %arg0, %c0_i32 : i32, i32
  }
}

</mosaic_0001>

<llo_original>
// kernel: forward.15
$region0: #{forward.15}
  #allocation0 [shape = 'u32[]', space=smem, size = 0x4, offset = 0x4, fixed_abs, tag = 'smem constant byte address 0x4 - core index']
  #allocation1 [shape = 'u32[144,128]{1,0:T(1,128)}', space=vmem, size = 0x12000, scoped, tag = 'internal scratch']
  %s0 = inlined_call_operand.vmem [shape: bf16[4096,128], index: 0, kind: input, shape index: {}]
  %s1 = inlined_call_operand.vmem [shape: bf16[128,128], index: 1, kind: input, shape index: {}]
  %s2 = inlined_call_operand.vmem [shape: f32[1,128], index: 2, kind: input, shape index: {}]
  %s3 = inlined_call_operand.vmem [shape: f32[4096,128], index: 3, kind: output, shape index: {}]
  %s4 = sld [smem:[#allocation0]]
  $region45: #{forward.15} parent=0
    _
  %s6 = ssub.s32 1, %s4
  %s7 = scalar_select 0, %s6, %s4
  loop: start=0, step=1, limit=10
  $region2: #{forward.15} parent=0 // loop_pre_header
    _
  $region3: #{forward.15} parent=0 // loop_header
    %s9 = sphi 0, %s13
    %p10 = scmp.ge.s32.totalorder %s9, 10
    %s19 = sphi 0, %s21
    %s22 = sphi 0, %s19
    %s23 = sphi 0, %s22
    %s39 = sphi 0, %s23
    %s43 = sphi 0, %s43
    %s45 = sphi 0, %s43
    %s46 = sphi 0, %s45
    %s60 = sphi 0, %s46
    %s64 = sphi 0, %s64
    %s66 = sphi 0, %s64
    %s67 = sphi 0, %s66
    %s81 = sphi 0, %s67
    %s87 = sphi 0, %s89
    %s90 = sphi 0, %s87
    %s91 = sphi 0, %s90
    %s107 = sphi 0, %s91
  $region4: #{forward.15} parent=0 // loop_header_branch
    %12 = sbr.rel (%p10) target = $region8
  $region5: #{forward.15} parent=0 // loop_body
    %s14 = ssub.s32 %s9, 1
    %s15 = ssub.s32 %s9, 2
    %s16 = sadd.s32 %s9, 1
    %s17 = ssub.s32 %s9, %s16
    %p18 = scmp.eq.s32.totalorder %s17, 0
    %s20 = sadd.s32 %s19, 1
    %s21 = scalar_select %p18, %s19, %s20
    %p24 = pneg %p18
    %p25 = scmp.eq.s32.totalorder %s9, 7
    %p26 = por %p24, %p25
    %p27 = scmp.ne.s32.totalorder %s19, %s22
    %p28 = scmp.eq.s32.totalorder %s9, 0
    %p29 = por %p27, %p28
    %p30 = scmp.ne.s32.totalorder %s19, %s22
    %p31 = scmp.eq.s32.totalorder %s14, 7
    %p32 = por %p30, %p31
    %p33 = scmp.ne.s32.totalorder %s22, %s23
    %p34 = scmp.eq.s32.totalorder %s14, 0
    %p35 = por %p33, %p34
    %p36 = scmp.ne.s32.totalorder %s22, %s23
    %p37 = scmp.eq.s32.totalorder %s15, 7
    %p38 = por %p36, %p37
    %p40 = scmp.ne.s32.totalorder %s23, %s39
    %p41 = scmp.eq.s32.totalorder %s15, 0
    %p42 = por %p40, %p41
    %s44 = sadd.s32 %s43, 1
    %p47 = scmp.eq.s32.totalorder %s9, 7
    %p48 = scmp.ne.s32.totalorder %s43, %s45
    %p49 = scmp.eq.s32.totalorder %s9, 0
    %p50 = por %p48, %p49
    %p51 = scmp.ne.s32.totalorder %s43, %s45
    %p52 = scmp.eq.s32.totalorder %s14, 7
    %p53 = por %p51, %p52
    %p54 = scmp.ne.s32.totalorder %s45, %s46
    %p55 = scmp.eq.s32.totalorder %s14, 0
    %p56 = por %p54, %p55
    %p57 = scmp.ne.s32.totalorder %s45, %s46
    %p58 = scmp.eq.s32.totalorder %s15, 7
    %p59 = por %p57, %p58
    %p61 = scmp.ne.s32.totalorder %s46, %s60
    %p62 = scmp.eq.s32.totalorder %s15, 0
    %p63 = por %p61, %p62
    %s65 = sadd.s32 %s64, 1
    %p68 = scmp.eq.s32.totalorder %s9, 7
    %p69 = scmp.ne.s32.totalorder %s64, %s66
    %p70 = scmp.eq.s32.totalorder %s9, 0
    %p71 = por %p69, %p70
    %p72 = scmp.ne.s32.totalorder %s64, %s66
    %p73 = scmp.eq.s32.totalorder %s14, 7
    %p74 = por %p72, %p73
    %p75 = scmp.ne.s32.totalorder %s66, %s67
    %p76 = scmp.eq.s32.totalorder %s14, 0
    %p77 = por %p75, %p76
    %p78 = scmp.ne.s32.totalorder %s66, %s67
    %p79 = scmp.eq.s32.totalorder %s15, 7
    %p80 = por %p78, %p79
    %p82 = scmp.ne.s32.totalorder %s67, %s81
    %p83 = scmp.eq.s32.totalorder %s15, 0
    %p84 = por %p82, %p83
    %s85 = ssub.s32 %s9, %s16
    %p86 = scmp.eq.s32.totalorder %s85, 0
    %s88 = sadd.s32 %s87, 1
    %s89 = scalar_select %p86, %s87, %s88
    %p92 = pneg %p86
    %p93 = scmp.eq.s32.totalorder %s9, 7
    %p94 = por %p92, %p93
    %p95 = scmp.ne.s32.totalorder %s87, %s90
    %p96 = scmp.eq.s32.totalorder %s9, 0
    %p97 = por %p95, %p96
    %p98 = scmp.ne.s32.totalorder %s87, %s90
    %p99 = scmp.eq.s32.totalorder %s14, 7
    %p100 = por %p98, %p99
    %p101 = scmp.ne.s32.totalorder %s90, %s91
    %p102 = scmp.eq.s32.totalorder %s14, 0
    %p103 = por %p101, %p102
    %p104 = scmp.ne.s32.totalorder %s90, %s91
    %p105 = scmp.eq.s32.totalorder %s15, 7
    %p106 = por %p104, %p105
    %p108 = scmp.ne.s32.totalorder %s91, %s107
    %p109 = scmp.eq.s32.totalorder %s15, 0
    %p110 = por %p108, %p109
    %p111 = scmp.le.s32.totalorder 1, %s9
    %p112 = scmp.lt.s32.totalorder %s9, 9
    %p113 = pnand %p111, %p112
    %p114 = pneg %p113
    // Predicated region
    $region9: #{forward.15} parent=5 // pred_check
      _
    $region10: #{forward.15} parent=5 // pred_check_branch
      %116 = sbr.rel (%p113) target = $region12
    $region11: #{forward.15} parent=5 // pred_region
      %s117 = ssub.s32 %s9, 1
      // Predicated region
      $region13: #{forward.15} parent=11 // pred_check
        %p118 = pneg %p56
      $region14: #{forward.15} parent=11 // pred_check_branch
        %120 = sbr.rel (%p118) target = $region16
      $region15: #{forward.15} parent=11 // pred_region
        _
      $region16: #{forward.15} parent=11 // pred_fallthru
        _
      // Predicated region
      $region17: #{forward.15} parent=11 // pred_check
        %p121 = pneg %p77
      $region18: #{forward.15} parent=11 // pred_check_branch
        %123 = sbr.rel (%p121) target = $region20
      $region19: #{forward.15} parent=11 // pred_region
        _
      $region20: #{forward.15} parent=11 // pred_fallthru
        _
    $region12: #{forward.15} parent=5 // pred_fallthru
      _
    %p124 = scmp.lt.s32.totalorder %s9, 8
    // Predicated region
    $region21: #{forward.15} parent=5 // pred_check
      %p125 = pneg %p124
    $region22: #{forward.15} parent=5 // pred_check_branch
      %127 = sbr.rel (%p125) target = $region24
    $region23: #{forward.15} parent=5 // pred_region
      // Predicated region
      $region25: #{forward.15} parent=23 // pred_check
        %p128 = pneg %p29
      $region26: #{forward.15} parent=23 // pred_check_branch
        %130 = sbr.rel (%p128) target = $region28
      $region27: #{forward.15} parent=23 // pred_region
        %s131 = smul.u32 64, %s9
        %p132 = scmp.lt.s32.totalorder %s131, 511
        %s133 = scalar_select %p132, %s131, 511
        %s134 = smul.addr %s133, 4
        %s135 = scalar_lea.vmem %s0, %s134
        %s136 = smul.u32 64, %s9
      $region28: #{forward.15} parent=23 // pred_fallthru
        _
    $region24: #{forward.15} parent=5 // pred_fallthru
      _
    %p137 = scmp.le.s32.totalorder 1, %s9
    %p138 = scmp.lt.s32.totalorder %s9, 9
    %p139 = pnand %p137, %p138
    %p140 = pneg %p139
    // Predicated region
    $region29: #{forward.15} parent=5 // pred_check
      _
    $region30: #{forward.15} parent=5 // pred_check_branch
      %142 = sbr.rel (%p139) target = $region32
    $region31: #{forward.15} parent=5 // pred_region
      %s143 = ssub.s32 %s9, 1
      %s144 = smul.u32 64, %s14
      %p145 = scmp.lt.s32.totalorder %s144, 511
      %s146 = scalar_select %p145, %s144, 511
      %s147 = smul.addr %s146, 4
      %s148 = scalar_lea.vmem %s0, %s147
      %p149 = pneg %p35
      %p150 = pneg %p32
      %p151 = pneg %p56
      %p152 = pneg %p53
      %p153 = pneg %p77
      %p154 = pneg %p74
      %p155 = pneg %p103
      %p156 = pneg %p100
      %s157 = smul.u32 64, %s14
      %p158 = scmp.lt.s32.totalorder %s157, 511
      %s159 = scalar_select %p158, %s157, 511
      %s160 = smul.addr %s159, 8
      %s161 = scalar_lea.vmem %s3, %s160
      %s162 = smul.u32 64, %s14
      %p163 = scmp.lt.s32.totalorder %s162, 511
      %s164 = scalar_select %p163, %s162, 511
      %s165 = smul.addr %s164, 4
      %s166 = scalar_lea.vmem %s0, %s165
      %s167 = smul.u32 64, %s14
      %s168 = smul.u32 64, %s14
      %p169 = scmp.lt.s32.totalorder %s168, 511
      %s170 = scalar_select %p169, %s168, 511
      %s171 = smul.addr %s170, 8
      %s172 = scalar_lea.vmem %s3, %s171
      %s173 = smul.u32 64, %s14
      %v175 = vld [vmem:[%s166] sm:$0xf]
      %v176 = vld [vmem:[%s166 + $0x4] sm:$0xf]
      %v177 = vld [vmem:[%s166 + $0x8] sm:$0xf]
      %v178 = vld [vmem:[%s166 + $0xc] sm:$0xf]
      %v179 = vld [vmem:[%s166 + $0x10] sm:$0xf]
      %v180 = vld [vmem:[%s166 + $0x14] sm:$0xf]
      %v181 = vld [vmem:[%s166 + $0x18] sm:$0xf]
      %v182 = vld [vmem:[%s166 + $0x1c] sm:$0xf]
      %v183 = vld [vmem:[%s166 + $0x20] sm:$0xf]
      %v184 = vld [vmem:[%s166 + $0x24] sm:$0xf]
      %v185 = vld [vmem:[%s166 + $0x28] sm:$0xf]
      %v186 = vld [vmem:[%s166 + $0x2c] sm:$0xf]
      %v187 = vld [vmem:[%s166 + $0x30] sm:$0xf]
      %v188 = vld [vmem:[%s166 + $0x34] sm:$0xf]
      %v189 = vld [vmem:[%s166 + $0x38] sm:$0xf]
      %v190 = vld [vmem:[%s166 + $0x3c] sm:$0xf]
      %v191 = vld [vmem:[%s166 + $0x40] sm:$0xf]
      %v192 = vld [vmem:[%s166 + $0x44] sm:$0xf]
      %v193 = vld [vmem:[%s166 + $0x48] sm:$0xf]
      %v194 = vld [vmem:[%s166 + $0x4c] sm:$0xf]
      %v195 = vld [vmem:[%s166 + $0x50] sm:$0xf]
      %v196 = vld [vmem:[%s166 + $0x54] sm:$0xf]
      %v197 = vld [vmem:[%s166 + $0x58] sm:$0xf]
      %v198 = vld [vmem:[%s166 + $0x5c] sm:$0xf]
      %v199 = vld [vmem:[%s166 + $0x60] sm:$0xf]
      %v200 = vld [vmem:[%s166 + $0x64] sm:$0xf]
      %v201 = vld [vmem:[%s166 + $0x68] sm:$0xf]
      %v202 = vld [vmem:[%s166 + $0x6c] sm:$0xf]
      %v203 = vld [vmem:[%s166 + $0x70] sm:$0xf]
      %v204 = vld [vmem:[%s166 + $0x74] sm:$0xf]
      %v205 = vld [vmem:[%s166 + $0x78] sm:$0xf]
      %v206 = vld [vmem:[%s166 + $0x7c] sm:$0xf]
      %v207 = vld [vmem:[%s166 + $0x80] sm:$0xf]
      %v208 = vld [vmem:[%s166 + $0x84] sm:$0xf]
      %v209 = vld [vmem:[%s166 + $0x88] sm:$0xf]
      %v210 = vld [vmem:[%s166 + $0x8c] sm:$0xf]
      %v211 = vld [vmem:[%s166 + $0x90] sm:$0xf]
      %v212 = vld [vmem:[%s166 + $0x94] sm:$0xf]
      %v213 = vld [vmem:[%s166 + $0x98] sm:$0xf]
      %v214 = vld [vmem:[%s166 + $0x9c] sm:$0xf]
      %v215 = vld [vmem:[%s166 + $0xa0] sm:$0xf]
      %v216 = vld [vmem:[%s166 + $0xa4] sm:$0xf]
      %v217 = vld [vmem:[%s166 + $0xa8] sm:$0xf]
      %v218 = vld [vmem:[%s166 + $0xac] sm:$0xf]
      %v219 = vld [vmem:[%s166 + $0xb0] sm:$0xf]
      %v220 = vld [vmem:[%s166 + $0xb4] sm:$0xf]
      %v221 = vld [vmem:[%s166 + $0xb8] sm:$0xf]
      %v222 = vld [vmem:[%s166 + $0xbc] sm:$0xf]
      %v223 = vld [vmem:[%s166 + $0xc0] sm:$0xf]
      %v224 = vld [vmem:[%s166 + $0xc4] sm:$0xf]
      %v225 = vld [vmem:[%s166 + $0xc8] sm:$0xf]
      %v226 = vld [vmem:[%s166 + $0xcc] sm:$0xf]
      %v227 = vld [vmem:[%s166 + $0xd0] sm:$0xf]
      %v228 = vld [vmem:[%s166 + $0xd4] sm:$0xf]
      %v229 = vld [vmem:[%s166 + $0xd8] sm:$0xf]
      %v230 = vld [vmem:[%s166 + $0xdc] sm:$0xf]
      %v231 = vld [vmem:[%s166 + $0xe0] sm:$0xf]
      %v232 = vld [vmem:[%s166 + $0xe4] sm:$0xf]
      %v233 = vld [vmem:[%s166 + $0xe8] sm:$0xf]
      %v234 = vld [vmem:[%s166 + $0xec] sm:$0xf]
      %v235 = vld [vmem:[%s166 + $0xf0] sm:$0xf]
      %v236 = vld [vmem:[%s166 + $0xf4] sm:$0xf]
      %v237 = vld [vmem:[%s166 + $0xf8] sm:$0xf]
      %v238 = vld [vmem:[%s166 + $0xfc] sm:$0xf]
      %v239 = vld [vmem:[%s1] sm:$0xf]
      %v240 = vld [vmem:[%s1 + $0x4] sm:$0xf]
      %v241 = vld [vmem:[%s1 + $0x8] sm:$0xf]
      %v242 = vld [vmem:[%s1 + $0xc] sm:$0xf]
      %v243 = vld [vmem:[%s1 + $0x10] sm:$0xf]
      %v244 = vld [vmem:[%s1 + $0x14] sm:$0xf]
      %v245 = vld [vmem:[%s1 + $0x18] sm:$0xf]
      %v246 = vld [vmem:[%s1 + $0x1c] sm:$0xf]
      %v247 = vld [vmem:[%s1 + $0x20] sm:$0xf]
      %v248 = vld [vmem:[%s1 + $0x24] sm:$0xf]
      %v249 = vld [vmem:[%s1 + $0x28] sm:$0xf]
      %v250 = vld [vmem:[%s1 + $0x2c] sm:$0xf]
      %v251 = vld [vmem:[%s1 + $0x30] sm:$0xf]
      %v252 = vld [vmem:[%s1 + $0x34] sm:$0xf]
      %v253 = vld [vmem:[%s1 + $0x38] sm:$0xf]
      %v254 = vld [vmem:[%s1 + $0x3c] sm:$0xf]
      %v255 = vld [vmem:[%s2] sm:$0x1]
      %v257 = vlaneseq
      %v258 = vshrl.u32 %v257, 7
      %v259 = vsub.s32 0, %v258
      %v260 = vrot.slane %v255, %v259
      %v326 = vunpack.c.l.b16 %v175
      %v327 = vunpack.c.l.b16 %v176
      %v328 = vunpack.c.l.b16 %v177
      %v329 = vunpack.c.l.b16 %v178
      %v330 = vunpack.c.l.b16 %v179
      %v331 = vunpack.c.l.b16 %v180
      %v332 = vunpack.c.l.b16 %v181
      %v333 = vunpack.c.l.b16 %v182
      %v334 = vunpack.c.l.b16 %v183
      %v335 = vunpack.c.l.b16 %v184
      %v336 = vunpack.c.l.b16 %v185
      %v337 = vunpack.c.l.b16 %v186
      %v338 = vunpack.c.l.b16 %v187
      %v339 = vunpack.c.l.b16 %v188
      %v340 = vunpack.c.l.b16 %v189
      %v341 = vunpack.c.l.b16 %v190
      %v342 = vunpack.c.l.b16 %v191
      %v343 = vunpack.c.l.b16 %v192
      %v344 = vunpack.c.l.b16 %v193
      %v345 = vunpack.c.l.b16 %v194
      %v346 = vunpack.c.l.b16 %v195
      %v347 = vunpack.c.l.b16 %v196
      %v348 = vunpack.c.l.b16 %v197
      %v349 = vunpack.c.l.b16 %v198
      %v350 = vunpack.c.l.b16 %v199
      %v351 = vunpack.c.l.b16 %v200
      %v352 = vunpack.c.l.b16 %v201
      %v353 = vunpack.c.l.b16 %v202
      %v354 = vunpack.c.l.b16 %v203
      %v355 = vunpack.c.l.b16 %v204
      %v356 = vunpack.c.l.b16 %v205
      %v357 = vunpack.c.l.b16 %v206
      %v358 = vunpack.c.l.b16 %v207
      %v359 = vunpack.c.l.b16 %v208
      %v360 = vunpack.c.l.b16 %v209
      %v361 = vunpack.c.l.b16 %v210
      %v362 = vunpack.c.l.b16 %v211
      %v363 = vunpack.c.l.b16 %v212
      %v364 = vunpack.c.l.b16 %v213
      %v365 = vunpack.c.l.b16 %v214
      %v366 = vunpack.c.l.b16 %v215
      %v367 = vunpack.c.l.b16 %v216
      %v368 = vunpack.c.l.b16 %v217
      %v369 = vunpack.c.l.b16 %v218
      %v370 = vunpack.c.l.b16 %v219
      %v371 = vunpack.c.l.b16 %v220
      %v372 = vunpack.c.l.b16 %v221
      %v373 = vunpack.c.l.b16 %v222
      %v374 = vunpack.c.l.b16 %v223
      %v375 = vunpack.c.l.b16 %v224
      %v376 = vunpack.c.l.b16 %v225
      %v377 = vunpack.c.l.b16 %v226
      %v378 = vunpack.c.l.b16 %v227
      %v379 = vunpack.c.l.b16 %v228
      %v380 = vunpack.c.l.b16 %v229
      %v381 = vunpack.c.l.b16 %v230
      %v382 = vunpack.c.l.b16 %v231
      %v383 = vunpack.c.l.b16 %v232
      %v384 = vunpack.c.l.b16 %v233
      %v385 = vunpack.c.l.b16 %v234
      %v386 = vunpack.c.l.b16 %v235
      %v387 = vunpack.c.l.b16 %v236
      %v388 = vunpack.c.l.b16 %v237
      %v389 = vunpack.c.l.b16 %v238
      %v390 = vpack.c.b16 %v327, %v326
      %v391 = vpack.c.b16 %v329, %v328
      %v392 = vpack.c.b16 %v331, %v330
      %v393 = vpack.c.b16 %v333, %v332
      %v394 = vpack.c.b16 %v335, %v334
      %v395 = vpack.c.b16 %v337, %v336
      %v396 = vpack.c.b16 %v339, %v338
      %v397 = vpack.c.b16 %v341, %v340
      %v398 = vpack.c.b16 %v343, %v342
      %v399 = vpack.c.b16 %v345, %v344
      %v400 = vpack.c.b16 %v347, %v346
      %v401 = vpack.c.b16 %v349, %v348
      %v402 = vpack.c.b16 %v351, %v350
      %v403 = vpack.c.b16 %v353, %v352
      %v404 = vpack.c.b16 %v355, %v354
      %v405 = vpack.c.b16 %v357, %v356
      %v406 = vpack.c.b16 %v359, %v358
      %v407 = vpack.c.b16 %v361, %v360
      %v408 = vpack.c.b16 %v363, %v362
      %v409 = vpack.c.b16 %v365, %v364
      %v410 = vpack.c.b16 %v367, %v366
      %v411 = vpack.c.b16 %v369, %v368
      %v412 = vpack.c.b16 %v371, %v370
      %v413 = vpack.c.b16 %v373, %v372
      %v414 = vpack.c.b16 %v375, %v374
      %v415 = vpack.c.b16 %v377, %v376
      %v416 = vpack.c.b16 %v379, %v378
      %v417 = vpack.c.b16 %v381, %v380
      %v418 = vpack.c.b16 %v383, %v382
      %v419 = vpack.c.b16 %v385, %v384
      %v420 = vpack.c.b16 %v387, %v386
      %v421 = vpack.c.b16 %v389, %v388
      %v470 = vunpack.c.l.b16 %v239
      %v471 = vunpack.c.l.b16 %v240
      %v472 = vunpack.c.l.b16 %v241
      %v473 = vunpack.c.l.b16 %v242
      %v474 = vunpack.c.l.b16 %v243
      %v475 = vunpack.c.l.b16 %v244
      %v476 = vunpack.c.l.b16 %v245
      %v477 = vunpack.c.l.b16 %v246
      %v478 = vunpack.c.l.b16 %v247
      %v479 = vunpack.c.l.b16 %v248
      %v480 = vunpack.c.l.b16 %v249
      %v481 = vunpack.c.l.b16 %v250
      %v482 = vunpack.c.l.b16 %v251
      %v483 = vunpack.c.l.b16 %v252
      %v484 = vunpack.c.l.b16 %v253
      %v485 = vunpack.c.l.b16 %v254
      %v486 = vpack.c.b16 %v471, %v470
      %v487 = vpack.c.b16 %v473, %v472
      %v488 = vpack.c.b16 %v475, %v474
      %v489 = vpack.c.b16 %v477, %v476
      %v490 = vpack.c.b16 %v479, %v478
      %v491 = vpack.c.b16 %v481, %v480
      %v492 = vpack.c.b16 %v483, %v482
      %v493 = vpack.c.b16 %v485, %v484
      %502 = vmatprep.subr.bf16.mxu0 0
      %503 = vmatpush1.bf16.msra.mxu0 %v493
      %504 = vmatprep.subr.bf16.mxu0 0
      %505 = vmatpush1.bf16.msra.mxu0 %v492
      %506 = vmatprep.subr.bf16.mxu0 0
      %507 = vmatpush1.bf16.msra.mxu0 %v491
      %508 = vmatprep.subr.bf16.mxu0 0
      %509 = vmatpush1.bf16.msra.mxu0 %v490
      %510 = vmatprep.subr.bf16.mxu0 0
      %511 = vmatpush1.bf16.msra.mxu0 %v489
      %512 = vmatprep.subr.bf16.mxu0 0
      %513 = vmatpush1.bf16.msra.mxu0 %v488
      %514 = vmatprep.subr.bf16.mxu0 0
      %515 = vmatpush1.bf16.msra.mxu0 %v487
      %516 = vmatprep.subr.bf16.mxu0 0
      %517 = vmatpush1.bf16.msra.mxu0 %v486
      %518 = vmatprep.subr.bf16.mxu0 0
      %519 = vmatpush2.bf16.msra.mxu0 0
      %520 = vmatprep.subr.bf16.mxu0 0
      %521 = vmatpush2.bf16.msra.mxu0 0
      %522 = vmatprep.subr.bf16.mxu0 0
      %523 = vmatpush2.bf16.msra.mxu0 0
      %524 = vmatprep.subr.bf16.mxu0 0
      %525 = vmatpush2.bf16.msra.mxu0 0
      %526 = vmatprep.subr.bf16.mxu0 0
      %527 = vmatpush2.bf16.msra.mxu0 0
      %528 = vmatprep.subr.bf16.mxu0 0
      %529 = vmatpush2.bf16.msra.mxu0 0
      %530 = vmatprep.subr.bf16.mxu0 0
      %531 = vmatpush2.bf16.msra.mxu0 0
      %532 = vmatprep.subr.bf16.mxu0 0
      %533 = vmatpush2.bf16.msra.mxu0 0
      %534 = vmatprep.mubr.bf16.mxu0 0
      %535 = vmatmul.mubr.bf16.gmra.mxu0 %v390
      %v536 = vpop.f32.mrf.mxu0
      %v537 = vadd.f32 %v260, %v536
      %v538 = vpop.f32.mrf.mxu0
      %v539 = vpop.f32.mrf.mxu0
      %v540 = vadd.f32 %v260, %v539
      %v541 = vpop.f32.mrf.mxu0
      %542 = vmatprep.mubr.bf16.mxu0 0
      %543 = vmatmul.mubr.bf16.gmra.mxu0 %v391
      %v544 = vpop.f32.mrf.mxu0
      %v545 = vadd.f32 %v260, %v544
      %v546 = vpop.f32.mrf.mxu0
      %v547 = vpop.f32.mrf.mxu0
      %v548 = vadd.f32 %v260, %v547
      %v549 = vpop.f32.mrf.mxu0
      %550 = vmatprep.mubr.bf16.mxu0 0
      %551 = vmatmul.mubr.bf16.gmra.mxu0 %v392
      %v552 = vpop.f32.mrf.mxu0
      %v553 = vadd.f32 %v260, %v552
      %v554 = vpop.f32.mrf.mxu0
      %v555 = vpop.f32.mrf.mxu0
      %v556 = vadd.f32 %v260, %v555
      %v557 = vpop.f32.mrf.mxu0
      %558 = vmatprep.mubr.bf16.mxu0 0
      %559 = vmatmul.mubr.bf16.gmra.mxu0 %v393
      %v560 = vpop.f32.mrf.mxu0
      %v561 = vadd.f32 %v260, %v560
      %v562 = vpop.f32.mrf.mxu0
      %v563 = vpop.f32.mrf.mxu0
      %v564 = vadd.f32 %v260, %v563
      %v565 = vpop.f32.mrf.mxu0
      %566 = vmatprep.mubr.bf16.mxu0 0
      %567 = vmatmul.mubr.bf16.gmra.mxu0 %v394
      %v568 = vpop.f32.mrf.mxu0
      %v569 = vadd.f32 %v260, %v568
      %v570 = vpop.f32.mrf.mxu0
      %v571 = vpop.f32.mrf.mxu0
      %v572 = vadd.f32 %v260, %v571
      %v573 = vpop.f32.mrf.mxu0
      %574 = vmatprep.mubr.bf16.mxu0 0
      %575 = vmatmul.mubr.bf16.gmra.mxu0 %v395
      %v576 = vpop.f32.mrf.mxu0
      %v577 = vadd.f32 %v260, %v576
      %v578 = vpop.f32.mrf.mxu0
      %v579 = vpop.f32.mrf.mxu0
      %v580 = vadd.f32 %v260, %v579
      %v581 = vpop.f32.mrf.mxu0
      %582 = vmatprep.mubr.bf16.mxu0 0
      %583 = vmatmul.mubr.bf16.gmra.mxu0 %v396
      %v584 = vpop.f32.mrf.mxu0
      %v585 = vadd.f32 %v260, %v584
      %v586 = vpop.f32.mrf.mxu0
      %v587 = vpop.f32.mrf.mxu0
      %v588 = vadd.f32 %v260, %v587
      %v589 = vpop.f32.mrf.mxu0
      %590 = vmatprep.mubr.bf16.mxu0 0
      %591 = vmatmul.mubr.bf16.gmra.mxu0 %v397
      %v592 = vpop.f32.mrf.mxu0
      %v593 = vadd.f32 %v260, %v592
      %v594 = vpop.f32.mrf.mxu0
      %v595 = vpop.f32.mrf.mxu0
      %v596 = vadd.f32 %v260, %v595
      %v597 = vpop.f32.mrf.mxu0
      %598 = vmatprep.mubr.bf16.mxu0 0
      %599 = vmatmul.mubr.bf16.gmra.mxu0 %v398
      %v600 = vpop.f32.mrf.mxu0
      %v601 = vadd.f32 %v260, %v600
      %v602 = vpop.f32.mrf.mxu0
      %v603 = vpop.f32.mrf.mxu0
      %v604 = vadd.f32 %v260, %v603
      %v605 = vpop.f32.mrf.mxu0
      %606 = vmatprep.mubr.bf16.mxu0 0
      %607 = vmatmul.mubr.bf16.gmra.mxu0 %v399
      %v608 = vpop.f32.mrf.mxu0
      %v609 = vadd.f32 %v260, %v608
      %v610 = vpop.f32.mrf.mxu0
      %v611 = vpop.f32.mrf.mxu0
      %v612 = vadd.f32 %v260, %v611
      %v613 = vpop.f32.mrf.mxu0
      %614 = vmatprep.mubr.bf16.mxu0 0
      %615 = vmatmul.mubr.bf16.gmra.mxu0 %v400
      %v616 = vpop.f32.mrf.mxu0
      %v617 = vadd.f32 %v260, %v616
      %v618 = vpop.f32.mrf.mxu0
      %v619 = vpop.f32.mrf.mxu0
      %v620 = vadd.f32 %v260, %v619
      %v621 = vpop.f32.mrf.mxu0
      %622 = vmatprep.mubr.bf16.mxu0 0
      %623 = vmatmul.mubr.bf16.gmra.mxu0 %v401
      %v624 = vpop.f32.mrf.mxu0
      %v625 = vadd.f32 %v260, %v624
      %v626 = vpop.f32.mrf.mxu0
      %v627 = vpop.f32.mrf.mxu0
      %v628 = vadd.f32 %v260, %v627
      %v629 = vpop.f32.mrf.mxu0
      %630 = vmatprep.mubr.bf16.mxu0 0
      %631 = vmatmul.mubr.bf16.gmra.mxu0 %v402
      %v632 = vpop.f32.mrf.mxu0
      %v633 = vadd.f32 %v260, %v632
      %v634 = vpop.f32.mrf.mxu0
      %v635 = vpop.f32.mrf.mxu0
      %v636 = vadd.f32 %v260, %v635
      %v637 = vpop.f32.mrf.mxu0
      %638 = vmatprep.mubr.bf16.mxu0 0
      %639 = vmatmul.mubr.bf16.gmra.mxu0 %v403
      %v640 = vpop.f32.mrf.mxu0
      %v641 = vadd.f32 %v260, %v640
      %v642 = vpop.f32.mrf.mxu0
      %v643 = vpop.f32.mrf.mxu0
      %v644 = vadd.f32 %v260, %v643
      %v645 = vpop.f32.mrf.mxu0
      %646 = vmatprep.mubr.bf16.mxu0 0
      %647 = vmatmul.mubr.bf16.gmra.mxu0 %v404
      %v648 = vpop.f32.mrf.mxu0
      %v649 = vadd.f32 %v260, %v648
      %v650 = vpop.f32.mrf.mxu0
      %v651 = vpop.f32.mrf.mxu0
      %v652 = vadd.f32 %v260, %v651
      %v653 = vpop.f32.mrf.mxu0
      %654 = vmatprep.mubr.bf16.mxu0 0
      %655 = vmatmul.mubr.bf16.gmra.mxu0 %v405
      %v656 = vpop.f32.mrf.mxu0
      %v657 = vadd.f32 %v260, %v656
      %v658 = vpop.f32.mrf.mxu0
      %v659 = vpop.f32.mrf.mxu0
      %v660 = vadd.f32 %v260, %v659
      %v661 = vpop.f32.mrf.mxu0
      %662 = vmatprep.mubr.bf16.mxu0 0
      %663 = vmatmul.mubr.bf16.gmra.mxu0 %v406
      %v664 = vpop.f32.mrf.mxu0
      %v665 = vadd.f32 %v260, %v664
      %v666 = vpop.f32.mrf.mxu0
      %v667 = vpop.f32.mrf.mxu0
      %v668 = vadd.f32 %v260, %v667
      %v669 = vpop.f32.mrf.mxu0
      %670 = vmatprep.mubr.bf16.mxu0 0
      %671 = vmatmul.mubr.bf16.gmra.mxu0 %v407
      %v672 = vpop.f32.mrf.mxu0
      %v673 = vadd.f32 %v260, %v672
      %v674 = vpop.f32.mrf.mxu0
      %v675 = vpop.f32.mrf.mxu0
      %v676 = vadd.f32 %v260, %v675
      %v677 = vpop.f32.mrf.mxu0
      %678 = vmatprep.mubr.bf16.mxu0 0
      %679 = vmatmul.mubr.bf16.gmra.mxu0 %v408
      %v680 = vpop.f32.mrf.mxu0
      %v681 = vadd.f32 %v260, %v680
      %v682 = vpop.f32.mrf.mxu0
      %v683 = vpop.f32.mrf.mxu0
      %v684 = vadd.f32 %v260, %v683
      %v685 = vpop.f32.mrf.mxu0
      %686 = vmatprep.mubr.bf16.mxu0 0
      %687 = vmatmul.mubr.bf16.gmra.mxu0 %v409
      %v688 = vpop.f32.mrf.mxu0
      %v689 = vadd.f32 %v260, %v688
      %v690 = vpop.f32.mrf.mxu0
      %v691 = vpop.f32.mrf.mxu0
      %v692 = vadd.f32 %v260, %v691
      %v693 = vpop.f32.mrf.mxu0
      %694 = vmatprep.mubr.bf16.mxu0 0
      %695 = vmatmul.mubr.bf16.gmra.mxu0 %v410
      %v696 = vpop.f32.mrf.mxu0
      %v697 = vadd.f32 %v260, %v696
      %v698 = vpop.f32.mrf.mxu0
      %v699 = vpop.f32.mrf.mxu0
      %v700 = vadd.f32 %v260, %v699
      %v701 = vpop.f32.mrf.mxu0
      %702 = vmatprep.mubr.bf16.mxu0 0
      %703 = vmatmul.mubr.bf16.gmra.mxu0 %v411
      %v704 = vpop.f32.mrf.mxu0
      %v705 = vadd.f32 %v260, %v704
      %v706 = vpop.f32.mrf.mxu0
      %v707 = vpop.f32.mrf.mxu0
      %v708 = vadd.f32 %v260, %v707
      %v709 = vpop.f32.mrf.mxu0
      %710 = vmatprep.mubr.bf16.mxu0 0
      %711 = vmatmul.mubr.bf16.gmra.mxu0 %v412
      %v712 = vpop.f32.mrf.mxu0
      %v713 = vadd.f32 %v260, %v712
      %v714 = vpop.f32.mrf.mxu0
      %v715 = vpop.f32.mrf.mxu0
      %v716 = vadd.f32 %v260, %v715
      %v717 = vpop.f32.mrf.mxu0
      %718 = vmatprep.mubr.bf16.mxu0 0
      %719 = vmatmul.mubr.bf16.gmra.mxu0 %v413
      %v720 = vpop.f32.mrf.mxu0
      %v721 = vadd.f32 %v260, %v720
      %v722 = vpop.f32.mrf.mxu0
      %v723 = vpop.f32.mrf.mxu0
      %v724 = vadd.f32 %v260, %v723
      %v725 = vpop.f32.mrf.mxu0
      %726 = vmatprep.mubr.bf16.mxu0 0
      %727 = vmatmul.mubr.bf16.gmra.mxu0 %v414
      %v728 = vpop.f32.mrf.mxu0
      %v729 = vadd.f32 %v260, %v728
      %v730 = vpop.f32.mrf.mxu0
      %v731 = vpop.f32.mrf.mxu0
      %v732 = vadd.f32 %v260, %v731
      %v733 = vpop.f32.mrf.mxu0
      %734 = vmatprep.mubr.bf16.mxu0 0
      %735 = vmatmul.mubr.bf16.gmra.mxu0 %v415
      %v736 = vpop.f32.mrf.mxu0
      %v737 = vadd.f32 %v260, %v736
      %v738 = vpop.f32.mrf.mxu0
      %v739 = vpop.f32.mrf.mxu0
      %v740 = vadd.f32 %v260, %v739
      %v741 = vpop.f32.mrf.mxu0
      %742 = vmatprep.mubr.bf16.mxu0 0
      %743 = vmatmul.mubr.bf16.gmra.mxu0 %v416
      %v744 = vpop.f32.mrf.mxu0
      %v745 = vadd.f32 %v260, %v744
      %v746 = vpop.f32.mrf.mxu0
      %v747 = vpop.f32.mrf.mxu0
      %v748 = vadd.f32 %v260, %v747
      %v749 = vpop.f32.mrf.mxu0
      %750 = vmatprep.mubr.bf16.mxu0 0
      %751 = vmatmul.mubr.bf16.gmra.mxu0 %v417
      %v752 = vpop.f32.mrf.mxu0
      %v753 = vadd.f32 %v260, %v752
      %v754 = vpop.f32.mrf.mxu0
      %v755 = vpop.f32.mrf.mxu0
      %v756 = vadd.f32 %v260, %v755
      %v757 = vpop.f32.mrf.mxu0
      %758 = vmatprep.mubr.bf16.mxu0 0
      %759 = vmatmul.mubr.bf16.gmra.mxu0 %v418
      %v760 = vpop.f32.mrf.mxu0
      %v761 = vadd.f32 %v260, %v760
      %v762 = vpop.f32.mrf.mxu0
      %v763 = vpop.f32.mrf.mxu0
      %v764 = vadd.f32 %v260, %v763
      %v765 = vpop.f32.mrf.mxu0
      %766 = vmatprep.mubr.bf16.mxu0 0
      %767 = vmatmul.mubr.bf16.gmra.mxu0 %v419
      %v768 = vpop.f32.mrf.mxu0
      %v769 = vadd.f32 %v260, %v768
      %v770 = vpop.f32.mrf.mxu0
      %v771 = vpop.f32.mrf.mxu0
      %v772 = vadd.f32 %v260, %v771
      %v773 = vpop.f32.mrf.mxu0
      %774 = vmatprep.mubr.bf16.mxu0 0
      %775 = vmatmul.mubr.bf16.gmra.mxu0 %v420
      %v776 = vpop.f32.mrf.mxu0
      %v777 = vadd.f32 %v260, %v776
      %v778 = vpop.f32.mrf.mxu0
      %v779 = vpop.f32.mrf.mxu0
      %v780 = vadd.f32 %v260, %v779
      %v781 = vpop.f32.mrf.mxu0
      %782 = vmatprep.mubr.bf16.mxu0 0
      %783 = vmatmul.mubr.bf16.gmra.mxu0 %v421
      %v784 = vpop.f32.mrf.mxu0
      %v785 = vadd.f32 %v260, %v784
      %v786 = vpop.f32.mrf.mxu0
      %v787 = vpop.f32.mrf.mxu0
      %v788 = vadd.f32 %v260, %v787
      %v789 = vpop.f32.mrf.mxu0
      %790 = vdwg.mxu0
      %v791 = vmul.f32 %v537, 0.01
      %v792 = vmul.f32 %v540, 0.01
      %v793 = vmul.f32 %v545, 0.01
      %v794 = vmul.f32 %v548, 0.01
      %v795 = vmul.f32 %v553, 0.01
      %v796 = vmul.f32 %v556, 0.01
      %v797 = vmul.f32 %v561, 0.01
      %v798 = vmul.f32 %v564, 0.01
      %v799 = vmul.f32 %v569, 0.01
      %v800 = vmul.f32 %v572, 0.01
      %v801 = vmul.f32 %v577, 0.01
      %v802 = vmul.f32 %v580, 0.01
      %v803 = vmul.f32 %v585, 0.01
      %v804 = vmul.f32 %v588, 0.01
      %v805 = vmul.f32 %v593, 0.01
      %v806 = vmul.f32 %v596, 0.01
      %v807 = vmul.f32 %v601, 0.01
      %v808 = vmul.f32 %v604, 0.01
      %v809 = vmul.f32 %v609, 0.01
      %v810 = vmul.f32 %v612, 0.01
      %v811 = vmul.f32 %v617, 0.01
      %v812 = vmul.f32 %v620, 0.01
      %v813 = vmul.f32 %v625, 0.01
      %v814 = vmul.f32 %v628, 0.01
      %v815 = vmul.f32 %v633, 0.01
      %v816 = vmul.f32 %v636, 0.01
      %v817 = vmul.f32 %v641, 0.01
      %v818 = vmul.f32 %v644, 0.01
      %v819 = vmul.f32 %v649, 0.01
      %v820 = vmul.f32 %v652, 0.01
      %v821 = vmul.f32 %v657, 0.01
      %v822 = vmul.f32 %v660, 0.01
      %v823 = vmul.f32 %v665, 0.01
      %v824 = vmul.f32 %v668, 0.01
      %v825 = vmul.f32 %v673, 0.01
      %v826 = vmul.f32 %v676, 0.01
      %v827 = vmul.f32 %v681, 0.01
      %v828 = vmul.f32 %v684, 0.01
      %v829 = vmul.f32 %v689, 0.01
      %v830 = vmul.f32 %v692, 0.01
      %v831 = vmul.f32 %v697, 0.01
      %v832 = vmul.f32 %v700, 0.01
      %v833 = vmul.f32 %v705, 0.01
      %v834 = vmul.f32 %v708, 0.01
      %v835 = vmul.f32 %v713, 0.01
      %v836 = vmul.f32 %v716, 0.01
      %v837 = vmul.f32 %v721, 0.01
      %v838 = vmul.f32 %v724, 0.01
      %v839 = vmul.f32 %v729, 0.01
      %v840 = vmul.f32 %v732, 0.01
      %v841 = vmul.f32 %v737, 0.01
      %v842 = vmul.f32 %v740, 0.01
      %v843 = vmul.f32 %v745, 0.01
      %v844 = vmul.f32 %v748, 0.01
      %v845 = vmul.f32 %v753, 0.01
      %v846 = vmul.f32 %v756, 0.01
      %v847 = vmul.f32 %v761, 0.01
      %v848 = vmul.f32 %v764, 0.01
      %v849 = vmul.f32 %v769, 0.01
      %v850 = vmul.f32 %v772, 0.01
      %v851 = vmul.f32 %v777, 0.01
      %v852 = vmul.f32 %v780, 0.01
      %v853 = vmul.f32 %v785, 0.01
      %v854 = vmul.f32 %v788, 0.01
      %v855 = vmax.f32 %v537, %v791
      %v856 = vmax.f32 %v540, %v792
      %v857 = vmax.f32 %v545, %v793
      %v858 = vmax.f32 %v548, %v794
      %v859 = vmax.f32 %v553, %v795
      %v860 = vmax.f32 %v556, %v796
      %v861 = vmax.f32 %v561, %v797
      %v862 = vmax.f32 %v564, %v798
      %v863 = vmax.f32 %v569, %v799
      %v864 = vmax.f32 %v572, %v800
      %v865 = vmax.f32 %v577, %v801
      %v866 = vmax.f32 %v580, %v802
      %v867 = vmax.f32 %v585, %v803
      %v868 = vmax.f32 %v588, %v804
      %v869 = vmax.f32 %v593, %v805
      %v870 = vmax.f32 %v596, %v806
      %v871 = vmax.f32 %v601, %v807
      %v872 = vmax.f32 %v604, %v808
      %v873 = vmax.f32 %v609, %v809
      %v874 = vmax.f32 %v612, %v810
      %v875 = vmax.f32 %v617, %v811
      %v876 = vmax.f32 %v620, %v812
      %v877 = vmax.f32 %v625, %v813
      %v878 = vmax.f32 %v628, %v814
      %v879 = vmax.f32 %v633, %v815
      %v880 = vmax.f32 %v636, %v816
      %v881 = vmax.f32 %v641, %v817
      %v882 = vmax.f32 %v644, %v818
      %v883 = vmax.f32 %v649, %v819
      %v884 = vmax.f32 %v652, %v820
      %v885 = vmax.f32 %v657, %v821
      %v886 = vmax.f32 %v660, %v822
      %v887 = vmax.f32 %v665, %v823
      %v888 = vmax.f32 %v668, %v824
      %v889 = vmax.f32 %v673, %v825
      %v890 = vmax.f32 %v676, %v826
      %v891 = vmax.f32 %v681, %v827
      %v892 = vmax.f32 %v684, %v828
      %v893 = vmax.f32 %v689, %v829
      %v894 = vmax.f32 %v692, %v830
      %v895 = vmax.f32 %v697, %v831
      %v896 = vmax.f32 %v700, %v832
      %v897 = vmax.f32 %v705, %v833
      %v898 = vmax.f32 %v708, %v834
      %v899 = vmax.f32 %v713, %v835
      %v900 = vmax.f32 %v716, %v836
      %v901 = vmax.f32 %v721, %v837
      %v902 = vmax.f32 %v724, %v838
      %v903 = vmax.f32 %v729, %v839
      %v904 = vmax.f32 %v732, %v840
      %v905 = vmax.f32 %v737, %v841
      %v906 = vmax.f32 %v740, %v842
      %v907 = vmax.f32 %v745, %v843
      %v908 = vmax.f32 %v748, %v844
      %v909 = vmax.f32 %v753, %v845
      %v910 = vmax.f32 %v756, %v846
      %v911 = vmax.f32 %v761, %v847
      %v912 = vmax.f32 %v764, %v848
      %v913 = vmax.f32 %v769, %v849
      %v914 = vmax.f32 %v772, %v850
      %v915 = vmax.f32 %v777, %v851
      %v916 = vmax.f32 %v780, %v852
      %v917 = vmax.f32 %v785, %v853
      %v918 = vmax.f32 %v788, %v854
      %919 = vst [vmem:[%s172] sm:$0xff] %v855
      %920 = vst [vmem:[%s172 + $0x8] sm:$0xff] %v856
      %921 = vst [vmem:[%s172 + $0x10] sm:$0xff] %v857
      %922 = vst [vmem:[%s172 + $0x18] sm:$0xff] %v858
      %923 = vst [vmem:[%s172 + $0x20] sm:$0xff] %v859
      %924 = vst [vmem:[%s172 + $0x28] sm:$0xff] %v860
      %925 = vst [vmem:[%s172 + $0x30] sm:$0xff] %v861
      %926 = vst [vmem:[%s172 + $0x38] sm:$0xff] %v862
      %927 = vst [vmem:[%s172 + $0x40] sm:$0xff] %v863
      %928 = vst [vmem:[%s172 + $0x48] sm:$0xff] %v864
      %929 = vst [vmem:[%s172 + $0x50] sm:$0xff] %v865
      %930 = vst [vmem:[%s172 + $0x58] sm:$0xff] %v866
      %931 = vst [vmem:[%s172 + $0x60] sm:$0xff] %v867
      %932 = vst [vmem:[%s172 + $0x68] sm:$0xff] %v868
      %933 = vst [vmem:[%s172 + $0x70] sm:$0xff] %v869
      %934 = vst [vmem:[%s172 + $0x78] sm:$0xff] %v870
      %935 = vst [vmem:[%s172 + $0x80] sm:$0xff] %v871
      %936 = vst [vmem:[%s172 + $0x88] sm:$0xff] %v872
      %937 = vst [vmem:[%s172 + $0x90] sm:$0xff] %v873
      %938 = vst [vmem:[%s172 + $0x98] sm:$0xff] %v874
      %939 = vst [vmem:[%s172 + $0xa0] sm:$0xff] %v875
      %940 = vst [vmem:[%s172 + $0xa8] sm:$0xff] %v876
      %941 = vst [vmem:[%s172 + $0xb0] sm:$0xff] %v877
      %942 = vst [vmem:[%s172 + $0xb8] sm:$0xff] %v878
      %943 = vst [vmem:[%s172 + $0xc0] sm:$0xff] %v879
      %944 = vst [vmem:[%s172 + $0xc8] sm:$0xff] %v880
      %945 = vst [vmem:[%s172 + $0xd0] sm:$0xff] %v881
      %946 = vst [vmem:[%s172 + $0xd8] sm:$0xff] %v882
      %947 = vst [vmem:[%s172 + $0xe0] sm:$0xff] %v883
      %948 = vst [vmem:[%s172 + $0xe8] sm:$0xff] %v884
      %949 = vst [vmem:[%s172 + $0xf0] sm:$0xff] %v885
      %950 = vst [vmem:[%s172 + $0xf8] sm:$0xff] %v886
      %951 = vst [vmem:[%s172 + $0x100] sm:$0xff] %v887
      %952 = vst [vmem:[%s172 + $0x108] sm:$0xff] %v888
      %953 = vst [vmem:[%s172 + $0x110] sm:$0xff] %v889
      %954 = vst [vmem:[%s172 + $0x118] sm:$0xff] %v890
      %955 = vst [vmem:[%s172 + $0x120] sm:$0xff] %v891
      %956 = vst [vmem:[%s172 + $0x128] sm:$0xff] %v892
      %957 = vst [vmem:[%s172 + $0x130] sm:$0xff] %v893
      %958 = vst [vmem:[%s172 + $0x138] sm:$0xff] %v894
      %959 = vst [vmem:[%s172 + $0x140] sm:$0xff] %v895
      %960 = vst [vmem:[%s172 + $0x148] sm:$0xff] %v896
      %961 = vst [vmem:[%s172 + $0x150] sm:$0xff] %v897
      %962 = vst [vmem:[%s172 + $0x158] sm:$0xff] %v898
      %963 = vst [vmem:[%s172 + $0x160] sm:$0xff] %v899
      %964 = vst [vmem:[%s172 + $0x168] sm:$0xff] %v900
      %965 = vst [vmem:[%s172 + $0x170] sm:$0xff] %v901
      %966 = vst [vmem:[%s172 + $0x178] sm:$0xff] %v902
      %967 = vst [vmem:[%s172 + $0x180] sm:$0xff] %v903
      %968 = vst [vmem:[%s172 + $0x188] sm:$0xff] %v904
      %969 = vst [vmem:[%s172 + $0x190] sm:$0xff] %v905
      %970 = vst [vmem:[%s172 + $0x198] sm:$0xff] %v906
      %971 = vst [vmem:[%s172 + $0x1a0] sm:$0xff] %v907
      %972 = vst [vmem:[%s172 + $0x1a8] sm:$0xff] %v908
      %973 = vst [vmem:[%s172 + $0x1b0] sm:$0xff] %v909
      %974 = vst [vmem:[%s172 + $0x1b8] sm:$0xff] %v910
      %975 = vst [vmem:[%s172 + $0x1c0] sm:$0xff] %v911
      %976 = vst [vmem:[%s172 + $0x1c8] sm:$0xff] %v912
      %977 = vst [vmem:[%s172 + $0x1d0] sm:$0xff] %v913
      %978 = vst [vmem:[%s172 + $0x1d8] sm:$0xff] %v914
      %979 = vst [vmem:[%s172 + $0x1e0] sm:$0xff] %v915
      %980 = vst [vmem:[%s172 + $0x1e8] sm:$0xff] %v916
      %981 = vst [vmem:[%s172 + $0x1f0] sm:$0xff] %v917
      %982 = vst [vmem:[%s172 + $0x1f8] sm:$0xff] %v918
      %s983 = smul.u32 64, %s14
      %p984 = scmp.lt.s32.totalorder %s983, 511
      %s985 = scalar_select %p984, %s983, 511
      %s986 = smul.addr %s985, 8
      %s987 = scalar_lea.vmem %s3, %s986
      // Predicated region
      $region33: #{forward.15} parent=31 // pred_check
        %p988 = pneg %p100
      $region34: #{forward.15} parent=31 // pred_check_branch
        %990 = sbr.rel (%p988) target = $region36
      $region35: #{forward.15} parent=31 // pred_region
        %s991 = smul.u32 64, %s14
      $region36: #{forward.15} parent=31 // pred_fallthru
        _
    $region32: #{forward.15} parent=5 // pred_fallthru
      _
    %p992 = scmp.le.s32.totalorder 2, %s9
    // Predicated region
    $region37: #{forward.15} parent=5 // pred_check
      %p993 = pneg %p992
    $region38: #{forward.15} parent=5 // pred_check_branch
      %995 = sbr.rel (%p993) target = $region40
    $region39: #{forward.15} parent=5 // pred_region
      %s996 = ssub.s32 %s9, 2
      // Predicated region
      $region41: #{forward.15} parent=39 // pred_check
        %p997 = pneg %p106
      $region42: #{forward.15} parent=39 // pred_check_branch
        %999 = sbr.rel (%p997) target = $region44
      $region43: #{forward.15} parent=39 // pred_region
        %s1000 = smul.u32 64, %s15
        %p1001 = scmp.lt.s32.totalorder %s1000, 511
        %s1002 = scalar_select %p1001, %s1000, 511
        %s1003 = smul.addr %s1002, 8
        %s1004 = scalar_lea.vmem %s3, %s1003
      $region44: #{forward.15} parent=39 // pred_fallthru
        _
    $region40: #{forward.15} parent=5 // pred_fallthru
      _
  $region6: #{forward.15} parent=0 // loop_footer
    %s13 = sadd.s32 1, %s9
  $region7: #{forward.15} parent=0 // loop_footer_branch
    %8 = sbr.rel target = $region3
  $region8: #{forward.15} parent=0 // loop_exit
    _

// kernel: forward.16
$region0: #{forward.16}
  #allocation0 [shape = 'u32[]', space=smem, size = 0x4, offset = 0x4, fixed_abs, tag = 'smem constant byte address 0x4 - core index']
  #allocation1 [shape = 'u32[144,128]{1,0:T(1,128)}', space=vmem, size = 0x12000, scoped, tag = 'internal scratch']
  %s0 = inlined_call_operand.vmem [shape: bf16[2048,256], index: 0, kind: input, shape index: {}]
  %s1 = inlined_call_operand.vmem [shape: bf16[256,128], index: 1, kind: input, shape index: {}]
  %s2 = inlined_call_operand.vmem [shape: f32[1,128], index: 2, kind: input, shape index: {}]
  %s3 = inlined_call_operand.vmem [shape: f32[2048,128], index: 3, kind: output, shape index: {}]
  %s4 = sld [smem:[#allocation0]]
  $region45: #{forward.16} parent=0
    _
  %s6 = ssub.s32 1, %s4
  %s7 = scalar_select 0, %s6, %s4
  loop: start=0, step=1, limit=6
  $region2: #{forward.16} parent=0 // loop_pre_header
    _
  $region3: #{forward.16} parent=0 // loop_header
    %s9 = sphi 0, %s13
    %p10 = scmp.ge.s32.totalorder %s9, 6
    %s19 = sphi 0, %s21
    %s22 = sphi 0, %s19
    %s23 = sphi 0, %s22
    %s39 = sphi 0, %s23
    %s43 = sphi 0, %s43
    %s45 = sphi 0, %s43
    %s46 = sphi 0, %s45
    %s60 = sphi 0, %s46
    %s64 = sphi 0, %s64
    %s66 = sphi 0, %s64
    %s67 = sphi 0, %s66
    %s81 = sphi 0, %s67
    %s87 = sphi 0, %s89
    %s90 = sphi 0, %s87
    %s91 = sphi 0, %s90
    %s107 = sphi 0, %s91
  $region4: #{forward.16} parent=0 // loop_header_branch
    %12 = sbr.rel (%p10) target = $region8
  $region5: #{forward.16} parent=0 // loop_body
    %s14 = ssub.s32 %s9, 1
    %s15 = ssub.s32 %s9, 2
    %s16 = sadd.s32 %s9, 1
    %s17 = ssub.s32 %s9, %s16
    %p18 = scmp.eq.s32.totalorder %s17, 0
    %s20 = sadd.s32 %s19, 1
    %s21 = scalar_select %p18, %s19, %s20
    %p24 = pneg %p18
    %p25 = scmp.eq.s32.totalorder %s9, 3
    %p26 = por %p24, %p25
    %p27 = scmp.ne.s32.totalorder %s19, %s22
    %p28 = scmp.eq.s32.totalorder %s9, 0
    %p29 = por %p27, %p28
    %p30 = scmp.ne.s32.totalorder %s19, %s22
    %p31 = scmp.eq.s32.totalorder %s14, 3
    %p32 = por %p30, %p31
    %p33 = scmp.ne.s32.totalorder %s22, %s23
    %p34 = scmp.eq.s32.totalorder %s14, 0
    %p35 = por %p33, %p34
    %p36 = scmp.ne.s32.totalorder %s22, %s23
    %p37 = scmp.eq.s32.totalorder %s15, 3
    %p38 = por %p36, %p37
    %p40 = scmp.ne.s32.totalorder %s23, %s39
    %p41 = scmp.eq.s32.totalorder %s15, 0
    %p42 = por %p40, %p41
    %s44 = sadd.s32 %s43, 1
    %p47 = scmp.eq.s32.totalorder %s9, 3
    %p48 = scmp.ne.s32.totalorder %s43, %s45
    %p49 = scmp.eq.s32.totalorder %s9, 0
    %p50 = por %p48, %p49
    %p51 = scmp.ne.s32.totalorder %s43, %s45
    %p52 = scmp.eq.s32.totalorder %s14, 3
    %p53 = por %p51, %p52
    %p54 = scmp.ne.s32.totalorder %s45, %s46
    %p55 = scmp.eq.s32.totalorder %s14, 0
    %p56 = por %p54, %p55
    %p57 = scmp.ne.s32.totalorder %s45, %s46
    %p58 = scmp.eq.s32.totalorder %s15, 3
    %p59 = por %p57, %p58
    %p61 = scmp.ne.s32.totalorder %s46, %s60
    %p62 = scmp.eq.s32.totalorder %s15, 0
    %p63 = por %p61, %p62
    %s65 = sadd.s32 %s64, 1
    %p68 = scmp.eq.s32.totalorder %s9, 3
    %p69 = scmp.ne.s32.totalorder %s64, %s66
    %p70 = scmp.eq.s32.totalorder %s9, 0
    %p71 = por %p69, %p70
    %p72 = scmp.ne.s32.totalorder %s64, %s66
    %p73 = scmp.eq.s32.totalorder %s14, 3
    %p74 = por %p72, %p73
    %p75 = scmp.ne.s32.totalorder %s66, %s67
    %p76 = scmp.eq.s32.totalorder %s14, 0
    %p77 = por %p75, %p76
    %p78 = scmp.ne.s32.totalorder %s66, %s67
    %p79 = scmp.eq.s32.totalorder %s15, 3
    %p80 = por %p78, %p79
    %p82 = scmp.ne.s32.totalorder %s67, %s81
    %p83 = scmp.eq.s32.totalorder %s15, 0
    %p84 = por %p82, %p83
    %s85 = ssub.s32 %s9, %s16
    %p86 = scmp.eq.s32.totalorder %s85, 0
    %s88 = sadd.s32 %s87, 1
    %s89 = scalar_select %p86, %s87, %s88
    %p92 = pneg %p86
    %p93 = scmp.eq.s32.totalorder %s9, 3
    %p94 = por %p92, %p93
    %p95 = scmp.ne.s32.totalorder %s87, %s90
    %p96 = scmp.eq.s32.totalorder %s9, 0
    %p97 = por %p95, %p96
    %p98 = scmp.ne.s32.totalorder %s87, %s90
    %p99 = scmp.eq.s32.totalorder %s14, 3
    %p100 = por %p98, %p99
    %p101 = scmp.ne.s32.totalorder %s90, %s91
    %p102 = scmp.eq.s32.totalorder %s14, 0
    %p103 = por %p101, %p102
    %p104 = scmp.ne.s32.totalorder %s90, %s91
    %p105 = scmp.eq.s32.totalorder %s15, 3
    %p106 = por %p104, %p105
    %p108 = scmp.ne.s32.totalorder %s91, %s107
    %p109 = scmp.eq.s32.totalorder %s15, 0
    %p110 = por %p108, %p109
    %p111 = scmp.le.s32.totalorder 1, %s9
    %p112 = scmp.lt.s32.totalorder %s9, 5
    %p113 = pnand %p111, %p112
    %p114 = pneg %p113
    // Predicated region
    $region9: #{forward.16} parent=5 // pred_check
      _
    $region10: #{forward.16} parent=5 // pred_check_branch
      %116 = sbr.rel (%p113) target = $region12
    $region11: #{forward.16} parent=5 // pred_region
      %s117 = ssub.s32 %s9, 1
      // Predicated region
      $region13: #{forward.16} parent=11 // pred_check
        %p118 = pneg %p56
      $region14: #{forward.16} parent=11 // pred_check_branch
        %120 = sbr.rel (%p118) target = $region16
      $region15: #{forward.16} parent=11 // pred_region
        _
      $region16: #{forward.16} parent=11 // pred_fallthru
        _
      // Predicated region
      $region17: #{forward.16} parent=11 // pred_check
        %p121 = pneg %p77
      $region18: #{forward.16} parent=11 // pred_check_branch
        %123 = sbr.rel (%p121) target = $region20
      $region19: #{forward.16} parent=11 // pred_region
        _
      $region20: #{forward.16} parent=11 // pred_fallthru
        _
    $region12: #{forward.16} parent=5 // pred_fallthru
      _
    %p124 = scmp.lt.s32.totalorder %s9, 4
    // Predicated region
    $region21: #{forward.16} parent=5 // pred_check
      %p125 = pneg %p124
    $region22: #{forward.16} parent=5 // pred_check_branch
      %127 = sbr.rel (%p125) target = $region24
    $region23: #{forward.16} parent=5 // pred_region
      // Predicated region
      $region25: #{forward.16} parent=23 // pred_check
        %p128 = pneg %p29
      $region26: #{forward.16} parent=23 // pred_check_branch
        %130 = sbr.rel (%p128) target = $region28
      $region27: #{forward.16} parent=23 // pred_region
        %s131 = smul.u32 64, %s9
        %p132 = scmp.lt.s32.totalorder %s131, 255
        %s133 = scalar_select %p132, %s131, 255
        %s134 = smul.addr %s133, 2
        %s135 = smul.addr %s134, 4
        %s136 = scalar_lea.vmem %s0, %s135
        %s137 = smul.u32 64, %s9
      $region28: #{forward.16} parent=23 // pred_fallthru
        _
    $region24: #{forward.16} parent=5 // pred_fallthru
      _
    %p138 = scmp.le.s32.totalorder 1, %s9
    %p139 = scmp.lt.s32.totalorder %s9, 5
    %p140 = pnand %p138, %p139
    %p141 = pneg %p140
    // Predicated region
    $region29: #{forward.16} parent=5 // pred_check
      _
    $region30: #{forward.16} parent=5 // pred_check_branch
      %143 = sbr.rel (%p140) target = $region32
    $region31: #{forward.16} parent=5 // pred_region
      %s144 = ssub.s32 %s9, 1
      %s145 = smul.u32 64, %s14
      %p146 = scmp.lt.s32.totalorder %s145, 255
      %s147 = scalar_select %p146, %s145, 255
      %s148 = smul.addr %s147, 2
      %s149 = smul.addr %s148, 4
      %s150 = scalar_lea.vmem %s0, %s149
      %p151 = pneg %p35
      %p152 = pneg %p32
      %p153 = pneg %p56
      %p154 = pneg %p53
      %p155 = pneg %p77
      %p156 = pneg %p74
      %p157 = pneg %p103
      %p158 = pneg %p100
      %s159 = smul.u32 64, %s14
      %p160 = scmp.lt.s32.totalorder %s159, 255
      %s161 = scalar_select %p160, %s159, 255
      %s162 = smul.addr %s161, 8
      %s163 = scalar_lea.vmem %s3, %s162
      %s164 = smul.u32 64, %s14
      %p165 = scmp.lt.s32.totalorder %s164, 255
      %s166 = scalar_select %p165, %s164, 255
      %s167 = smul.addr %s166, 2
      %s168 = smul.addr %s167, 4
      %s169 = scalar_lea.vmem %s0, %s168
      %s170 = smul.u32 64, %s14
      %s171 = smul.u32 64, %s14
      %p172 = scmp.lt.s32.totalorder %s171, 255
      %s173 = scalar_select %p172, %s171, 255
      %s174 = smul.addr %s173, 8
      %s175 = scalar_lea.vmem %s3, %s174
      %s176 = smul.u32 64, %s14
      %v178 = vld [vmem:[%s169] sm:$0xff]
      %v179 = vld [vmem:[%s169 + $0x8] sm:$0xff]
      %v180 = vld [vmem:[%s169 + $0x10] sm:$0xff]
      %v181 = vld [vmem:[%s169 + $0x18] sm:$0xff]
      %v182 = vld [vmem:[%s169 + $0x20] sm:$0xff]
      %v183 = vld [vmem:[%s169 + $0x28] sm:$0xff]
      %v184 = vld [vmem:[%s169 + $0x30] sm:$0xff]
      %v185 = vld [vmem:[%s169 + $0x38] sm:$0xff]
      %v186 = vld [vmem:[%s169 + $0x40] sm:$0xff]
      %v187 = vld [vmem:[%s169 + $0x48] sm:$0xff]
      %v188 = vld [vmem:[%s169 + $0x50] sm:$0xff]
      %v189 = vld [vmem:[%s169 + $0x58] sm:$0xff]
      %v190 = vld [vmem:[%s169 + $0x60] sm:$0xff]
      %v191 = vld [vmem:[%s169 + $0x68] sm:$0xff]
      %v192 = vld [vmem:[%s169 + $0x70] sm:$0xff]
      %v193 = vld [vmem:[%s169 + $0x78] sm:$0xff]
      %v194 = vld [vmem:[%s169 + $0x80] sm:$0xff]
      %v195 = vld [vmem:[%s169 + $0x88] sm:$0xff]
      %v196 = vld [vmem:[%s169 + $0x90] sm:$0xff]
      %v197 = vld [vmem:[%s169 + $0x98] sm:$0xff]
      %v198 = vld [vmem:[%s169 + $0xa0] sm:$0xff]
      %v199 = vld [vmem:[%s169 + $0xa8] sm:$0xff]
      %v200 = vld [vmem:[%s169 + $0xb0] sm:$0xff]
      %v201 = vld [vmem:[%s169 + $0xb8] sm:$0xff]
      %v202 = vld [vmem:[%s169 + $0xc0] sm:$0xff]
      %v203 = vld [vmem:[%s169 + $0xc8] sm:$0xff]
      %v204 = vld [vmem:[%s169 + $0xd0] sm:$0xff]
      %v205 = vld [vmem:[%s169 + $0xd8] sm:$0xff]
      %v206 = vld [vmem:[%s169 + $0xe0] sm:$0xff]
      %v207 = vld [vmem:[%s169 + $0xe8] sm:$0xff]
      %v208 = vld [vmem:[%s169 + $0xf0] sm:$0xff]
      %v209 = vld [vmem:[%s169 + $0xf8] sm:$0xff]
      %v210 = vld [vmem:[%s169 + $0x100] sm:$0xff]
      %v211 = vld [vmem:[%s169 + $0x108] sm:$0xff]
      %v212 = vld [vmem:[%s169 + $0x110] sm:$0xff]
      %v213 = vld [vmem:[%s169 + $0x118] sm:$0xff]
      %v214 = vld [vmem:[%s169 + $0x120] sm:$0xff]
      %v215 = vld [vmem:[%s169 + $0x128] sm:$0xff]
      %v216 = vld [vmem:[%s169 + $0x130] sm:$0xff]
      %v217 = vld [vmem:[%s169 + $0x138] sm:$0xff]
      %v218 = vld [vmem:[%s169 + $0x140] sm:$0xff]
      %v219 = vld [vmem:[%s169 + $0x148] sm:$0xff]
      %v220 = vld [vmem:[%s169 + $0x150] sm:$0xff]
      %v221 = vld [vmem:[%s169 + $0x158] sm:$0xff]
      %v222 = vld [vmem:[%s169 + $0x160] sm:$0xff]
      %v223 = vld [vmem:[%s169 + $0x168] sm:$0xff]
      %v224 = vld [vmem:[%s169 + $0x170] sm:$0xff]
      %v225 = vld [vmem:[%s169 + $0x178] sm:$0xff]
      %v226 = vld [vmem:[%s169 + $0x180] sm:$0xff]
      %v227 = vld [vmem:[%s169 + $0x188] sm:$0xff]
      %v228 = vld [vmem:[%s169 + $0x190] sm:$0xff]
      %v229 = vld [vmem:[%s169 + $0x198] sm:$0xff]
      %v230 = vld [vmem:[%s169 + $0x1a0] sm:$0xff]
      %v231 = vld [vmem:[%s169 + $0x1a8] sm:$0xff]
      %v232 = vld [vmem:[%s169 + $0x1b0] sm:$0xff]
      %v233 = vld [vmem:[%s169 + $0x1b8] sm:$0xff]
      %v234 = vld [vmem:[%s169 + $0x1c0] sm:$0xff]
      %v235 = vld [vmem:[%s169 + $0x1c8] sm:$0xff]
      %v236 = vld [vmem:[%s169 + $0x1d0] sm:$0xff]
      %v237 = vld [vmem:[%s169 + $0x1d8] sm:$0xff]
      %v238 = vld [vmem:[%s169 + $0x1e0] sm:$0xff]
      %v239 = vld [vmem:[%s169 + $0x1e8] sm:$0xff]
      %v240 = vld [vmem:[%s169 + $0x1f0] sm:$0xff]
      %v241 = vld [vmem:[%s169 + $0x1f8] sm:$0xff]
      %v242 = vld [vmem:[%s1] sm:$0xf]
      %v243 = vld [vmem:[%s1 + $0x4] sm:$0xf]
      %v244 = vld [vmem:[%s1 + $0x8] sm:$0xf]
      %v245 = vld [vmem:[%s1 + $0xc] sm:$0xf]
      %v246 = vld [vmem:[%s1 + $0x10] sm:$0xf]
      %v247 = vld [vmem:[%s1 + $0x14] sm:$0xf]
      %v248 = vld [vmem:[%s1 + $0x18] sm:$0xf]
      %v249 = vld [vmem:[%s1 + $0x1c] sm:$0xf]
      %v250 = vld [vmem:[%s1 + $0x20] sm:$0xf]
      %v251 = vld [vmem:[%s1 + $0x24] sm:$0xf]
      %v252 = vld [vmem:[%s1 + $0x28] sm:$0xf]
      %v253 = vld [vmem:[%s1 + $0x2c] sm:$0xf]
      %v254 = vld [vmem:[%s1 + $0x30] sm:$0xf]
      %v255 = vld [vmem:[%s1 + $0x34] sm:$0xf]
      %v256 = vld [vmem:[%s1 + $0x38] sm:$0xf]
      %v257 = vld [vmem:[%s1 + $0x3c] sm:$0xf]
      %v258 = vld [vmem:[%s1 + $0x40] sm:$0xf]
      %v259 = vld [vmem:[%s1 + $0x44] sm:$0xf]
      %v260 = vld [vmem:[%s1 + $0x48] sm:$0xf]
      %v261 = vld [vmem:[%s1 + $0x4c] sm:$0xf]
      %v262 = vld [vmem:[%s1 + $0x50] sm:$0xf]
      %v263 = vld [vmem:[%s1 + $0x54] sm:$0xf]
      %v264 = vld [vmem:[%s1 + $0x58] sm:$0xf]
      %v265 = vld [vmem:[%s1 + $0x5c] sm:$0xf]
      %v266 = vld [vmem:[%s1 + $0x60] sm:$0xf]
      %v267 = vld [vmem:[%s1 + $0x64] sm:$0xf]
      %v268 = vld [vmem:[%s1 + $0x68] sm:$0xf]
      %v269 = vld [vmem:[%s1 + $0x6c] sm:$0xf]
      %v270 = vld [vmem:[%s1 + $0x70] sm:$0xf]
      %v271 = vld [vmem:[%s1 + $0x74] sm:$0xf]
      %v272 = vld [vmem:[%s1 + $0x78] sm:$0xf]
      %v273 = vld [vmem:[%s1 + $0x7c] sm:$0xf]
      %v274 = vld [vmem:[%s2] sm:$0x1]
      %v276 = vlaneseq
      %v277 = vshrl.u32 %v276, 7
      %v278 = vsub.s32 0, %v277
      %v279 = vrot.slane %v274, %v278
      %v345 = vunpack.c.l.b16 %v178
      %v346 = vunpack.c.h.b16 %v178
      %v347 = vunpack.c.l.b16 %v179
      %v348 = vunpack.c.h.b16 %v179
      %v349 = vunpack.c.l.b16 %v180
      %v350 = vunpack.c.h.b16 %v180
      %v351 = vunpack.c.l.b16 %v181
      %v352 = vunpack.c.h.b16 %v181
      %v353 = vunpack.c.l.b16 %v182
      %v354 = vunpack.c.h.b16 %v182
      %v355 = vunpack.c.l.b16 %v183
      %v356 = vunpack.c.h.b16 %v183
      %v357 = vunpack.c.l.b16 %v184
      %v358 = vunpack.c.h.b16 %v184
      %v359 = vunpack.c.l.b16 %v185
      %v360 = vunpack.c.h.b16 %v185
      %v361 = vunpack.c.l.b16 %v186
      %v362 = vunpack.c.h.b16 %v186
      %v363 = vunpack.c.l.b16 %v187
      %v364 = vunpack.c.h.b16 %v187
      %v365 = vunpack.c.l.b16 %v188
      %v366 = vunpack.c.h.b16 %v188
      %v367 = vunpack.c.l.b16 %v189
      %v368 = vunpack.c.h.b16 %v189
      %v369 = vunpack.c.l.b16 %v190
      %v370 = vunpack.c.h.b16 %v190
      %v371 = vunpack.c.l.b16 %v191
      %v372 = vunpack.c.h.b16 %v191
      %v373 = vunpack.c.l.b16 %v192
      %v374 = vunpack.c.h.b16 %v192
      %v375 = vunpack.c.l.b16 %v193
      %v376 = vunpack.c.h.b16 %v193
      %v377 = vunpack.c.l.b16 %v194
      %v378 = vunpack.c.h.b16 %v194
      %v379 = vunpack.c.l.b16 %v195
      %v380 = vunpack.c.h.b16 %v195
      %v381 = vunpack.c.l.b16 %v196
      %v382 = vunpack.c.h.b16 %v196
      %v383 = vunpack.c.l.b16 %v197
      %v384 = vunpack.c.h.b16 %v197
      %v385 = vunpack.c.l.b16 %v198
      %v386 = vunpack.c.h.b16 %v198
      %v387 = vunpack.c.l.b16 %v199
      %v388 = vunpack.c.h.b16 %v199
      %v389 = vunpack.c.l.b16 %v200
      %v390 = vunpack.c.h.b16 %v200
      %v391 = vunpack.c.l.b16 %v201
      %v392 = vunpack.c.h.b16 %v201
      %v393 = vunpack.c.l.b16 %v202
      %v394 = vunpack.c.h.b16 %v202
      %v395 = vunpack.c.l.b16 %v203
      %v396 = vunpack.c.h.b16 %v203
      %v397 = vunpack.c.l.b16 %v204
      %v398 = vunpack.c.h.b16 %v204
      %v399 = vunpack.c.l.b16 %v205
      %v400 = vunpack.c.h.b16 %v205
      %v401 = vunpack.c.l.b16 %v206
      %v402 = vunpack.c.h.b16 %v206
      %v403 = vunpack.c.l.b16 %v207
      %v404 = vunpack.c.h.b16 %v207
      %v405 = vunpack.c.l.b16 %v208
      %v406 = vunpack.c.h.b16 %v208
      %v407 = vunpack.c.l.b16 %v209
      %v408 = vunpack.c.h.b16 %v209
      %v409 = vunpack.c.l.b16 %v210
      %v410 = vunpack.c.h.b16 %v210
      %v411 = vunpack.c.l.b16 %v211
      %v412 = vunpack.c.h.b16 %v211
      %v413 = vunpack.c.l.b16 %v212
      %v414 = vunpack.c.h.b16 %v212
      %v415 = vunpack.c.l.b16 %v213
      %v416 = vunpack.c.h.b16 %v213
      %v417 = vunpack.c.l.b16 %v214
      %v418 = vunpack.c.h.b16 %v214
      %v419 = vunpack.c.l.b16 %v215
      %v420 = vunpack.c.h.b16 %v215
      %v421 = vunpack.c.l.b16 %v216
      %v422 = vunpack.c.h.b16 %v216
      %v423 = vunpack.c.l.b16 %v217
      %v424 = vunpack.c.h.b16 %v217
      %v425 = vunpack.c.l.b16 %v218
      %v426 = vunpack.c.h.b16 %v218
      %v427 = vunpack.c.l.b16 %v219
      %v428 = vunpack.c.h.b16 %v219
      %v429 = vunpack.c.l.b16 %v220
      %v430 = vunpack.c.h.b16 %v220
      %v431 = vunpack.c.l.b16 %v221
      %v432 = vunpack.c.h.b16 %v221
      %v433 = vunpack.c.l.b16 %v222
      %v434 = vunpack.c.h.b16 %v222
      %v435 = vunpack.c.l.b16 %v223
      %v436 = vunpack.c.h.b16 %v223
      %v437 = vunpack.c.l.b16 %v224
      %v438 = vunpack.c.h.b16 %v224
      %v439 = vunpack.c.l.b16 %v225
      %v440 = vunpack.c.h.b16 %v225
      %v441 = vunpack.c.l.b16 %v226
      %v442 = vunpack.c.h.b16 %v226
      %v443 = vunpack.c.l.b16 %v227
      %v444 = vunpack.c.h.b16 %v227
      %v445 = vunpack.c.l.b16 %v228
      %v446 = vunpack.c.h.b16 %v228
      %v447 = vunpack.c.l.b16 %v229
      %v448 = vunpack.c.h.b16 %v229
      %v449 = vunpack.c.l.b16 %v230
      %v450 = vunpack.c.h.b16 %v230
      %v451 = vunpack.c.l.b16 %v231
      %v452 = vunpack.c.h.b16 %v231
      %v453 = vunpack.c.l.b16 %v232
      %v454 = vunpack.c.h.b16 %v232
      %v455 = vunpack.c.l.b16 %v233
      %v456 = vunpack.c.h.b16 %v233
      %v457 = vunpack.c.l.b16 %v234
      %v458 = vunpack.c.h.b16 %v234
      %v459 = vunpack.c.l.b16 %v235
      %v460 = vunpack.c.h.b16 %v235
      %v461 = vunpack.c.l.b16 %v236
      %v462 = vunpack.c.h.b16 %v236
      %v463 = vunpack.c.l.b16 %v237
      %v464 = vunpack.c.h.b16 %v237
      %v465 = vunpack.c.l.b16 %v238
      %v466 = vunpack.c.h.b16 %v238
      %v467 = vunpack.c.l.b16 %v239
      %v468 = vunpack.c.h.b16 %v239
      %v469 = vunpack.c.l.b16 %v240
      %v470 = vunpack.c.h.b16 %v240
      %v471 = vunpack.c.l.b16 %v241
      %v472 = vunpack.c.h.b16 %v241
      %v473 = vpack.c.b16 %v347, %v345
      %v474 = vpack.c.b16 %v348, %v346
      %v475 = vpack.c.b16 %v351, %v349
      %v476 = vpack.c.b16 %v352, %v350
      %v477 = vpack.c.b16 %v355, %v353
      %v478 = vpack.c.b16 %v356, %v354
      %v479 = vpack.c.b16 %v359, %v357
      %v480 = vpack.c.b16 %v360, %v358
      %v481 = vpack.c.b16 %v363, %v361
      %v482 = vpack.c.b16 %v364, %v362
      %v483 = vpack.c.b16 %v367, %v365
      %v484 = vpack.c.b16 %v368, %v366
      %v485 = vpack.c.b16 %v371, %v369
      %v486 = vpack.c.b16 %v372, %v370
      %v487 = vpack.c.b16 %v375, %v373
      %v488 = vpack.c.b16 %v376, %v374
      %v489 = vpack.c.b16 %v379, %v377
      %v490 = vpack.c.b16 %v380, %v378
      %v491 = vpack.c.b16 %v383, %v381
      %v492 = vpack.c.b16 %v384, %v382
      %v493 = vpack.c.b16 %v387, %v385
      %v494 = vpack.c.b16 %v388, %v386
      %v495 = vpack.c.b16 %v391, %v389
      %v496 = vpack.c.b16 %v392, %v390
      %v497 = vpack.c.b16 %v395, %v393
      %v498 = vpack.c.b16 %v396, %v394
      %v499 = vpack.c.b16 %v399, %v397
      %v500 = vpack.c.b16 %v400, %v398
      %v501 = vpack.c.b16 %v403, %v401
      %v502 = vpack.c.b16 %v404, %v402
      %v503 = vpack.c.b16 %v407, %v405
      %v504 = vpack.c.b16 %v408, %v406
      %v505 = vpack.c.b16 %v411, %v409
      %v506 = vpack.c.b16 %v412, %v410
      %v507 = vpack.c.b16 %v415, %v413
      %v508 = vpack.c.b16 %v416, %v414
      %v509 = vpack.c.b16 %v419, %v417
      %v510 = vpack.c.b16 %v420, %v418
      %v511 = vpack.c.b16 %v423, %v421
      %v512 = vpack.c.b16 %v424, %v422
      %v513 = vpack.c.b16 %v427, %v425
      %v514 = vpack.c.b16 %v428, %v426
      %v515 = vpack.c.b16 %v431, %v429
      %v516 = vpack.c.b16 %v432, %v430
      %v517 = vpack.c.b16 %v435, %v433
      %v518 = vpack.c.b16 %v436, %v434
      %v519 = vpack.c.b16 %v439, %v437
      %v520 = vpack.c.b16 %v440, %v438
      %v521 = vpack.c.b16 %v443, %v441
      %v522 = vpack.c.b16 %v444, %v442
      %v523 = vpack.c.b16 %v447, %v445
      %v524 = vpack.c.b16 %v448, %v446
      %v525 = vpack.c.b16 %v451, %v449
      %v526 = vpack.c.b16 %v452, %v450
      %v527 = vpack.c.b16 %v455, %v453
      %v528 = vpack.c.b16 %v456, %v454
      %v529 = vpack.c.b16 %v459, %v457
      %v530 = vpack.c.b16 %v460, %v458
      %v531 = vpack.c.b16 %v463, %v461
      %v532 = vpack.c.b16 %v464, %v462
      %v533 = vpack.c.b16 %v467, %v465
      %v534 = vpack.c.b16 %v468, %v466
      %v535 = vpack.c.b16 %v471, %v469
      %v536 = vpack.c.b16 %v472, %v470
      %v633 = vunpack.c.l.b16 %v242
      %v634 = vunpack.c.l.b16 %v243
      %v635 = vunpack.c.l.b16 %v244
      %v636 = vunpack.c.l.b16 %v245
      %v637 = vunpack.c.l.b16 %v246
      %v638 = vunpack.c.l.b16 %v247
      %v639 = vunpack.c.l.b16 %v248
      %v640 = vunpack.c.l.b16 %v249
      %v641 = vunpack.c.l.b16 %v250
      %v642 = vunpack.c.l.b16 %v251
      %v643 = vunpack.c.l.b16 %v252
      %v644 = vunpack.c.l.b16 %v253
      %v645 = vunpack.c.l.b16 %v254
      %v646 = vunpack.c.l.b16 %v255
      %v647 = vunpack.c.l.b16 %v256
      %v648 = vunpack.c.l.b16 %v257
      %v649 = vunpack.c.l.b16 %v258
      %v650 = vunpack.c.l.b16 %v259
      %v651 = vunpack.c.l.b16 %v260
      %v652 = vunpack.c.l.b16 %v261
      %v653 = vunpack.c.l.b16 %v262
      %v654 = vunpack.c.l.b16 %v263
      %v655 = vunpack.c.l.b16 %v264
      %v656 = vunpack.c.l.b16 %v265
      %v657 = vunpack.c.l.b16 %v266
      %v658 = vunpack.c.l.b16 %v267
      %v659 = vunpack.c.l.b16 %v268
      %v660 = vunpack.c.l.b16 %v269
      %v661 = vunpack.c.l.b16 %v270
      %v662 = vunpack.c.l.b16 %v271
      %v663 = vunpack.c.l.b16 %v272
      %v664 = vunpack.c.l.b16 %v273
      %v665 = vpack.c.b16 %v634, %v633
      %v666 = vpack.c.b16 %v636, %v635
      %v667 = vpack.c.b16 %v638, %v637
      %v668 = vpack.c.b16 %v640, %v639
      %v669 = vpack.c.b16 %v642, %v641
      %v670 = vpack.c.b16 %v644, %v643
      %v671 = vpack.c.b16 %v646, %v645
      %v672 = vpack.c.b16 %v648, %v647
      %v673 = vpack.c.b16 %v650, %v649
      %v674 = vpack.c.b16 %v652, %v651
      %v675 = vpack.c.b16 %v654, %v653
      %v676 = vpack.c.b16 %v656, %v655
      %v677 = vpack.c.b16 %v658, %v657
      %v678 = vpack.c.b16 %v660, %v659
      %v679 = vpack.c.b16 %v662, %v661
      %v680 = vpack.c.b16 %v664, %v663
      %697 = vmatprep.subr.bf16.mxu0 0
      %698 = vmatpush1.bf16.msra.mxu0 %v672
      %699 = vmatprep.subr.bf16.mxu0 0
      %700 = vmatpush1.bf16.msra.mxu0 %v671
      %701 = vmatprep.subr.bf16.mxu0 0
      %702 = vmatpush1.bf16.msra.mxu0 %v670
      %703 = vmatprep.subr.bf16.mxu0 0
      %704 = vmatpush1.bf16.msra.mxu0 %v669
      %705 = vmatprep.subr.bf16.mxu0 0
      %706 = vmatpush1.bf16.msra.mxu0 %v668
      %707 = vmatprep.subr.bf16.mxu0 0
      %708 = vmatpush1.bf16.msra.mxu0 %v667
      %709 = vmatprep.subr.bf16.mxu0 0
      %710 = vmatpush1.bf16.msra.mxu0 %v666
      %711 = vmatprep.subr.bf16.mxu0 0
      %712 = vmatpush1.bf16.msra.mxu0 %v665
      %713 = vmatprep.subr.bf16.mxu0 0
      %714 = vmatpush2.bf16.msra.mxu0 %v680
      %715 = vmatprep.subr.bf16.mxu0 0
      %716 = vmatpush2.bf16.msra.mxu0 %v679
      %717 = vmatprep.subr.bf16.mxu0 0
      %718 = vmatpush2.bf16.msra.mxu0 %v678
      %719 = vmatprep.subr.bf16.mxu0 0
      %720 = vmatpush2.bf16.msra.mxu0 %v677
      %721 = vmatprep.subr.bf16.mxu0 0
      %722 = vmatpush2.bf16.msra.mxu0 %v676
      %723 = vmatprep.subr.bf16.mxu0 0
      %724 = vmatpush2.bf16.msra.mxu0 %v675
      %725 = vmatprep.subr.bf16.mxu0 0
      %726 = vmatpush2.bf16.msra.mxu0 %v674
      %727 = vmatprep.subr.bf16.mxu0 0
      %728 = vmatpush2.bf16.msra.mxu0 %v673
      %729 = vmatprep.mubr.bf16.mxu0 %v474
      %730 = vmatmul.mubr.bf16.gmra.mxu0 %v473
      %v731 = vpop.f32.mrf.mxu0
      %v732 = vadd.f32 %v279, %v731
      %v733 = vpop.f32.mrf.mxu0
      %v734 = vpop.f32.mrf.mxu0
      %v735 = vadd.f32 %v279, %v734
      %v736 = vpop.f32.mrf.mxu0
      %737 = vmatprep.mubr.bf16.mxu0 %v476
      %738 = vmatmul.mubr.bf16.gmra.mxu0 %v475
      %v739 = vpop.f32.mrf.mxu0
      %v740 = vadd.f32 %v279, %v739
      %v741 = vpop.f32.mrf.mxu0
      %v742 = vpop.f32.mrf.mxu0
      %v743 = vadd.f32 %v279, %v742
      %v744 = vpop.f32.mrf.mxu0
      %745 = vmatprep.mubr.bf16.mxu0 %v478
      %746 = vmatmul.mubr.bf16.gmra.mxu0 %v477
      %v747 = vpop.f32.mrf.mxu0
      %v748 = vadd.f32 %v279, %v747
      %v749 = vpop.f32.mrf.mxu0
      %v750 = vpop.f32.mrf.mxu0
      %v751 = vadd.f32 %v279, %v750
      %v752 = vpop.f32.mrf.mxu0
      %753 = vmatprep.mubr.bf16.mxu0 %v480
      %754 = vmatmul.mubr.bf16.gmra.mxu0 %v479
      %v755 = vpop.f32.mrf.mxu0
      %v756 = vadd.f32 %v279, %v755
      %v757 = vpop.f32.mrf.mxu0
      %v758 = vpop.f32.mrf.mxu0
      %v759 = vadd.f32 %v279, %v758
      %v760 = vpop.f32.mrf.mxu0
      %761 = vmatprep.mubr.bf16.mxu0 %v482
      %762 = vmatmul.mubr.bf16.gmra.mxu0 %v481
      %v763 = vpop.f32.mrf.mxu0
      %v764 = vadd.f32 %v279, %v763
      %v765 = vpop.f32.mrf.mxu0
      %v766 = vpop.f32.mrf.mxu0
      %v767 = vadd.f32 %v279, %v766
      %v768 = vpop.f32.mrf.mxu0
      %769 = vmatprep.mubr.bf16.mxu0 %v484
      %770 = vmatmul.mubr.bf16.gmra.mxu0 %v483
      %v771 = vpop.f32.mrf.mxu0
      %v772 = vadd.f32 %v279, %v771
      %v773 = vpop.f32.mrf.mxu0
      %v774 = vpop.f32.mrf.mxu0
      %v775 = vadd.f32 %v279, %v774
      %v776 = vpop.f32.mrf.mxu0
      %777 = vmatprep.mubr.bf16.mxu0 %v486
      %778 = vmatmul.mubr.bf16.gmra.mxu0 %v485
      %v779 = vpop.f32.mrf.mxu0
      %v780 = vadd.f32 %v279, %v779
      %v781 = vpop.f32.mrf.mxu0
      %v782 = vpop.f32.mrf.mxu0
      %v783 = vadd.f32 %v279, %v782
      %v784 = vpop.f32.mrf.mxu0
      %785 = vmatprep.mubr.bf16.mxu0 %v488
      %786 = vmatmul.mubr.bf16.gmra.mxu0 %v487
      %v787 = vpop.f32.mrf.mxu0
      %v788 = vadd.f32 %v279, %v787
      %v789 = vpop.f32.mrf.mxu0
      %v790 = vpop.f32.mrf.mxu0
      %v791 = vadd.f32 %v279, %v790
      %v792 = vpop.f32.mrf.mxu0
      %793 = vmatprep.mubr.bf16.mxu0 %v490
      %794 = vmatmul.mubr.bf16.gmra.mxu0 %v489
      %v795 = vpop.f32.mrf.mxu0
      %v796 = vadd.f32 %v279, %v795
      %v797 = vpop.f32.mrf.mxu0
      %v798 = vpop.f32.mrf.mxu0
      %v799 = vadd.f32 %v279, %v798
      %v800 = vpop.f32.mrf.mxu0
      %801 = vmatprep.mubr.bf16.mxu0 %v492
      %802 = vmatmul.mubr.bf16.gmra.mxu0 %v491
      %v803 = vpop.f32.mrf.mxu0
      %v804 = vadd.f32 %v279, %v803
      %v805 = vpop.f32.mrf.mxu0
      %v806 = vpop.f32.mrf.mxu0
      %v807 = vadd.f32 %v279, %v806
      %v808 = vpop.f32.mrf.mxu0
      %809 = vmatprep.mubr.bf16.mxu0 %v494
      %810 = vmatmul.mubr.bf16.gmra.mxu0 %v493
      %v811 = vpop.f32.mrf.mxu0
      %v812 = vadd.f32 %v279, %v811
      %v813 = vpop.f32.mrf.mxu0
      %v814 = vpop.f32.mrf.mxu0
      %v815 = vadd.f32 %v279, %v814
      %v816 = vpop.f32.mrf.mxu0
      %817 = vmatprep.mubr.bf16.mxu0 %v496
      %818 = vmatmul.mubr.bf16.gmra.mxu0 %v495
      %v819 = vpop.f32.mrf.mxu0
      %v820 = vadd.f32 %v279, %v819
      %v821 = vpop.f32.mrf.mxu0
      %v822 = vpop.f32.mrf.mxu0
      %v823 = vadd.f32 %v279, %v822
      %v824 = vpop.f32.mrf.mxu0
      %825 = vmatprep.mubr.bf16.mxu0 %v498
      %826 = vmatmul.mubr.bf16.gmra.mxu0 %v497
      %v827 = vpop.f32.mrf.mxu0
      %v828 = vadd.f32 %v279, %v827
      %v829 = vpop.f32.mrf.mxu0
      %v830 = vpop.f32.mrf.mxu0
      %v831 = vadd.f32 %v279, %v830
      %v832 = vpop.f32.mrf.mxu0
      %833 = vmatprep.mubr.bf16.mxu0 %v500
      %834 = vmatmul.mubr.bf16.gmra.mxu0 %v499
      %v835 = vpop.f32.mrf.mxu0
      %v836 = vadd.f32 %v279, %v835
      %v837 = vpop.f32.mrf.mxu0
      %v838 = vpop.f32.mrf.mxu0
      %v839 = vadd.f32 %v279, %v838
      %v840 = vpop.f32.mrf.mxu0
      %841 = vmatprep.mubr.bf16.mxu0 %v502
      %842 = vmatmul.mubr.bf16.gmra.mxu0 %v501
      %v843 = vpop.f32.mrf.mxu0
      %v844 = vadd.f32 %v279, %v843
      %v845 = vpop.f32.mrf.mxu0
      %v846 = vpop.f32.mrf.mxu0
      %v847 = vadd.f32 %v279, %v846
      %v848 = vpop.f32.mrf.mxu0
      %849 = vmatprep.mubr.bf16.mxu0 %v504
      %850 = vmatmul.mubr.bf16.gmra.mxu0 %v503
      %v851 = vpop.f32.mrf.mxu0
      %v852 = vadd.f32 %v279, %v851
      %v853 = vpop.f32.mrf.mxu0
      %v854 = vpop.f32.mrf.mxu0
      %v855 = vadd.f32 %v279, %v854
      %v856 = vpop.f32.mrf.mxu0
      %857 = vmatprep.mubr.bf16.mxu0 %v506
      %858 = vmatmul.mubr.bf16.gmra.mxu0 %v505
      %v859 = vpop.f32.mrf.mxu0
      %v860 = vadd.f32 %v279, %v859
      %v861 = vpop.f32.mrf.mxu0
      %v862 = vpop.f32.mrf.mxu0
      %v863 = vadd.f32 %v279, %v862
      %v864 = vpop.f32.mrf.mxu0
      %865 = vmatprep.mubr.bf16.mxu0 %v508
      %866 = vmatmul.mubr.bf16.gmra.mxu0 %v507
      %v867 = vpop.f32.mrf.mxu0
      %v868 = vadd.f32 %v279, %v867
      %v869 = vpop.f32.mrf.mxu0
      %v870 = vpop.f32.mrf.mxu0
      %v871 = vadd.f32 %v279, %v870
      %v872 = vpop.f32.mrf.mxu0
      %873 = vmatprep.mubr.bf16.mxu0 %v510
      %874 = vmatmul.mubr.bf16.gmra.mxu0 %v509
      %v875 = vpop.f32.mrf.mxu0
      %v876 = vadd.f32 %v279, %v875
      %v877 = vpop.f32.mrf.mxu0
      %v878 = vpop.f32.mrf.mxu0
      %v879 = vadd.f32 %v279, %v878
      %v880 = vpop.f32.mrf.mxu0
      %881 = vmatprep.mubr.bf16.mxu0 %v512
      %882 = vmatmul.mubr.bf16.gmra.mxu0 %v511
      %v883 = vpop.f32.mrf.mxu0
      %v884 = vadd.f32 %v279, %v883
      %v885 = vpop.f32.mrf.mxu0
      %v886 = vpop.f32.mrf.mxu0
      %v887 = vadd.f32 %v279, %v886
      %v888 = vpop.f32.mrf.mxu0
      %889 = vmatprep.mubr.bf16.mxu0 %v514
      %890 = vmatmul.mubr.bf16.gmra.mxu0 %v513
      %v891 = vpop.f32.mrf.mxu0
      %v892 = vadd.f32 %v279, %v891
      %v893 = vpop.f32.mrf.mxu0
      %v894 = vpop.f32.mrf.mxu0
      %v895 = vadd.f32 %v279, %v894
      %v896 = vpop.f32.mrf.mxu0
      %897 = vmatprep.mubr.bf16.mxu0 %v516
      %898 = vmatmul.mubr.bf16.gmra.mxu0 %v515
      %v899 = vpop.f32.mrf.mxu0
      %v900 = vadd.f32 %v279, %v899
      %v901 = vpop.f32.mrf.mxu0
      %v902 = vpop.f32.mrf.mxu0
      %v903 = vadd.f32 %v279, %v902
      %v904 = vpop.f32.mrf.mxu0
      %905 = vmatprep.mubr.bf16.mxu0 %v518
      %906 = vmatmul.mubr.bf16.gmra.mxu0 %v517
      %v907 = vpop.f32.mrf.mxu0
      %v908 = vadd.f32 %v279, %v907
      %v909 = vpop.f32.mrf.mxu0
      %v910 = vpop.f32.mrf.mxu0
      %v911 = vadd.f32 %v279, %v910
      %v912 = vpop.f32.mrf.mxu0
      %913 = vmatprep.mubr.bf16.mxu0 %v520
      %914 = vmatmul.mubr.bf16.gmra.mxu0 %v519
      %v915 = vpop.f32.mrf.mxu0
      %v916 = vadd.f32 %v279, %v915
      %v917 = vpop.f32.mrf.mxu0
      %v918 = vpop.f32.mrf.mxu0
      %v919 = vadd.f32 %v279, %v918
      %v920 = vpop.f32.mrf.mxu0
      %921 = vmatprep.mubr.bf16.mxu0 %v522
      %922 = vmatmul.mubr.bf16.gmra.mxu0 %v521
      %v923 = vpop.f32.mrf.mxu0
      %v924 = vadd.f32 %v279, %v923
      %v925 = vpop.f32.mrf.mxu0
      %v926 = vpop.f32.mrf.mxu0
      %v927 = vadd.f32 %v279, %v926
      %v928 = vpop.f32.mrf.mxu0
      %929 = vmatprep.mubr.bf16.mxu0 %v524
      %930 = vmatmul.mubr.bf16.gmra.mxu0 %v523
      %v931 = vpop.f32.mrf.mxu0
      %v932 = vadd.f32 %v279, %v931
      %v933 = vpop.f32.mrf.mxu0
      %v934 = vpop.f32.mrf.mxu0
      %v935 = vadd.f32 %v279, %v934
      %v936 = vpop.f32.mrf.mxu0
      %937 = vmatprep.mubr.bf16.mxu0 %v526
      %938 = vmatmul.mubr.bf16.gmra.mxu0 %v525
      %v939 = vpop.f32.mrf.mxu0
      %v940 = vadd.f32 %v279, %v939
      %v941 = vpop.f32.mrf.mxu0
      %v942 = vpop.f32.mrf.mxu0
      %v943 = vadd.f32 %v279, %v942
      %v944 = vpop.f32.mrf.mxu0
      %945 = vmatprep.mubr.bf16.mxu0 %v528
      %946 = vmatmul.mubr.bf16.gmra.mxu0 %v527
      %v947 = vpop.f32.mrf.mxu0
      %v948 = vadd.f32 %v279, %v947
      %v949 = vpop.f32.mrf.mxu0
      %v950 = vpop.f32.mrf.mxu0
      %v951 = vadd.f32 %v279, %v950
      %v952 = vpop.f32.mrf.mxu0
      %953 = vmatprep.mubr.bf16.mxu0 %v530
      %954 = vmatmul.mubr.bf16.gmra.mxu0 %v529
      %v955 = vpop.f32.mrf.mxu0
      %v956 = vadd.f32 %v279, %v955
      %v957 = vpop.f32.mrf.mxu0
      %v958 = vpop.f32.mrf.mxu0
      %v959 = vadd.f32 %v279, %v958
      %v960 = vpop.f32.mrf.mxu0
      %961 = vmatprep.mubr.bf16.mxu0 %v532
      %962 = vmatmul.mubr.bf16.gmra.mxu0 %v531
      %v963 = vpop.f32.mrf.mxu0
      %v964 = vadd.f32 %v279, %v963
      %v965 = vpop.f32.mrf.mxu0
      %v966 = vpop.f32.mrf.mxu0
      %v967 = vadd.f32 %v279, %v966
      %v968 = vpop.f32.mrf.mxu0
      %969 = vmatprep.mubr.bf16.mxu0 %v534
      %970 = vmatmul.mubr.bf16.gmra.mxu0 %v533
      %v971 = vpop.f32.mrf.mxu0
      %v972 = vadd.f32 %v279, %v971
      %v973 = vpop.f32.mrf.mxu0
      %v974 = vpop.f32.mrf.mxu0
      %v975 = vadd.f32 %v279, %v974
      %v976 = vpop.f32.mrf.mxu0
      %977 = vmatprep.mubr.bf16.mxu0 %v536
      %978 = vmatmul.mubr.bf16.gmra.mxu0 %v535
      %v979 = vpop.f32.mrf.mxu0
      %v980 = vadd.f32 %v279, %v979
      %v981 = vpop.f32.mrf.mxu0
      %v982 = vpop.f32.mrf.mxu0
      %v983 = vadd.f32 %v279, %v982
      %v984 = vpop.f32.mrf.mxu0
      %985 = vdwg.mxu0
      %v986 = vmul.f32 %v732, 0.01
      %v987 = vmul.f32 %v735, 0.01
      %v988 = vmul.f32 %v740, 0.01
      %v989 = vmul.f32 %v743, 0.01
      %v990 = vmul.f32 %v748, 0.01
      %v991 = vmul.f32 %v751, 0.01
      %v992 = vmul.f32 %v756, 0.01
      %v993 = vmul.f32 %v759, 0.01
      %v994 = vmul.f32 %v764, 0.01
      %v995 = vmul.f32 %v767, 0.01
      %v996 = vmul.f32 %v772, 0.01
      %v997 = vmul.f32 %v775, 0.01
      %v998 = vmul.f32 %v780, 0.01
      %v999 = vmul.f32 %v783, 0.01
      %v1000 = vmul.f32 %v788, 0.01
      %v1001 = vmul.f32 %v791, 0.01
      %v1002 = vmul.f32 %v796, 0.01
      %v1003 = vmul.f32 %v799, 0.01
      %v1004 = vmul.f32 %v804, 0.01
      %v1005 = vmul.f32 %v807, 0.01
      %v1006 = vmul.f32 %v812, 0.01
      %v1007 = vmul.f32 %v815, 0.01
      %v1008 = vmul.f32 %v820, 0.01
      %v1009 = vmul.f32 %v823, 0.01
      %v1010 = vmul.f32 %v828, 0.01
      %v1011 = vmul.f32 %v831, 0.01
      %v1012 = vmul.f32 %v836, 0.01
      %v1013 = vmul.f32 %v839, 0.01
      %v1014 = vmul.f32 %v844, 0.01
      %v1015 = vmul.f32 %v847, 0.01
      %v1016 = vmul.f32 %v852, 0.01
      %v1017 = vmul.f32 %v855, 0.01
      %v1018 = vmul.f32 %v860, 0.01
      %v1019 = vmul.f32 %v863, 0.01
      %v1020 = vmul.f32 %v868, 0.01
      %v1021 = vmul.f32 %v871, 0.01
      %v1022 = vmul.f32 %v876, 0.01
      %v1023 = vmul.f32 %v879, 0.01
      %v1024 = vmul.f32 %v884, 0.01
      %v1025 = vmul.f32 %v887, 0.01
      %v1026 = vmul.f32 %v892, 0.01
      %v1027 = vmul.f32 %v895, 0.01
      %v1028 = vmul.f32 %v900, 0.01
      %v1029 = vmul.f32 %v903, 0.01
      %v1030 = vmul.f32 %v908, 0.01
      %v1031 = vmul.f32 %v911, 0.01
      %v1032 = vmul.f32 %v916, 0.01
      %v1033 = vmul.f32 %v919, 0.01
      %v1034 = vmul.f32 %v924, 0.01
      %v1035 = vmul.f32 %v927, 0.01
      %v1036 = vmul.f32 %v932, 0.01
      %v1037 = vmul.f32 %v935, 0.01
      %v1038 = vmul.f32 %v940, 0.01
      %v1039 = vmul.f32 %v943, 0.01
      %v1040 = vmul.f32 %v948, 0.01
      %v1041 = vmul.f32 %v951, 0.01
      %v1042 = vmul.f32 %v956, 0.01
      %v1043 = vmul.f32 %v959, 0.01
      %v1044 = vmul.f32 %v964, 0.01
      %v1045 = vmul.f32 %v967, 0.01
      %v1046 = vmul.f32 %v972, 0.01
      %v1047 = vmul.f32 %v975, 0.01
      %v1048 = vmul.f32 %v980, 0.01
      %v1049 = vmul.f32 %v983, 0.01
      %v1050 = vmax.f32 %v732, %v986
      %v1051 = vmax.f32 %v735, %v987
      %v1052 = vmax.f32 %v740, %v988
      %v1053 = vmax.f32 %v743, %v989
      %v1054 = vmax.f32 %v748, %v990
      %v1055 = vmax.f32 %v751, %v991
      %v1056 = vmax.f32 %v756, %v992
      %v1057 = vmax.f32 %v759, %v993
      %v1058 = vmax.f32 %v764, %v994
      %v1059 = vmax.f32 %v767, %v995
      %v1060 = vmax.f32 %v772, %v996
      %v1061 = vmax.f32 %v775, %v997
      %v1062 = vmax.f32 %v780, %v998
      %v1063 = vmax.f32 %v783, %v999
      %v1064 = vmax.f32 %v788, %v1000
      %v1065 = vmax.f32 %v791, %v1001
      %v1066 = vmax.f32 %v796, %v1002
      %v1067 = vmax.f32 %v799, %v1003
      %v1068 = vmax.f32 %v804, %v1004
      %v1069 = vmax.f32 %v807, %v1005
      %v1070 = vmax.f32 %v812, %v1006
      %v1071 = vmax.f32 %v815, %v1007
      %v1072 = vmax.f32 %v820, %v1008
      %v1073 = vmax.f32 %v823, %v1009
      %v1074 = vmax.f32 %v828, %v1010
      %v1075 = vmax.f32 %v831, %v1011
      %v1076 = vmax.f32 %v836, %v1012
      %v1077 = vmax.f32 %v839, %v1013
      %v1078 = vmax.f32 %v844, %v1014
      %v1079 = vmax.f32 %v847, %v1015
      %v1080 = vmax.f32 %v852, %v1016
      %v1081 = vmax.f32 %v855, %v1017
      %v1082 = vmax.f32 %v860, %v1018
      %v1083 = vmax.f32 %v863, %v1019
      %v1084 = vmax.f32 %v868, %v1020
      %v1085 = vmax.f32 %v871, %v1021
      %v1086 = vmax.f32 %v876, %v1022
      %v1087 = vmax.f32 %v879, %v1023
      %v1088 = vmax.f32 %v884, %v1024
      %v1089 = vmax.f32 %v887, %v1025
      %v1090 = vmax.f32 %v892, %v1026
      %v1091 = vmax.f32 %v895, %v1027
      %v1092 = vmax.f32 %v900, %v1028
      %v1093 = vmax.f32 %v903, %v1029
      %v1094 = vmax.f32 %v908, %v1030
      %v1095 = vmax.f32 %v911, %v1031
      %v1096 = vmax.f32 %v916, %v1032
      %v1097 = vmax.f32 %v919, %v1033
      %v1098 = vmax.f32 %v924, %v1034
      %v1099 = vmax.f32 %v927, %v1035
      %v1100 = vmax.f32 %v932, %v1036
      %v1101 = vmax.f32 %v935, %v1037
      %v1102 = vmax.f32 %v940, %v1038
      %v1103 = vmax.f32 %v943, %v1039
      %v1104 = vmax.f32 %v948, %v1040
      %v1105 = vmax.f32 %v951, %v1041
      %v1106 = vmax.f32 %v956, %v1042
      %v1107 = vmax.f32 %v959, %v1043
      %v1108 = vmax.f32 %v964, %v1044
      %v1109 = vmax.f32 %v967, %v1045
      %v1110 = vmax.f32 %v972, %v1046
      %v1111 = vmax.f32 %v975, %v1047
      %v1112 = vmax.f32 %v980, %v1048
      %v1113 = vmax.f32 %v983, %v1049
      %1114 = vst [vmem:[%s175] sm:$0xff] %v1050
      %1115 = vst [vmem:[%s175 + $0x8] sm:$0xff] %v1051
      %1116 = vst [vmem:[%s175 + $0x10] sm:$0xff] %v1052
      %1117 = vst [vmem:[%s175 + $0x18] sm:$0xff] %v1053
      %1118 = vst [vmem:[%s175 + $0x20] sm:$0xff] %v1054
      %1119 = vst [vmem:[%s175 + $0x28] sm:$0xff] %v1055
      %1120 = vst [vmem:[%s175 + $0x30] sm:$0xff] %v1056
      %1121 = vst [vmem:[%s175 + $0x38] sm:$0xff] %v1057
      %1122 = vst [vmem:[%s175 + $0x40] sm:$0xff] %v1058
      %1123 = vst [vmem:[%s175 + $0x48] sm:$0xff] %v1059
      %1124 = vst [vmem:[%s175 + $0x50] sm:$0xff] %v1060
      %1125 = vst [vmem:[%s175 + $0x58] sm:$0xff] %v1061
      %1126 = vst [vmem:[%s175 + $0x60] sm:$0xff] %v1062
      %1127 = vst [vmem:[%s175 + $0x68] sm:$0xff] %v1063
      %1128 = vst [vmem:[%s175 + $0x70] sm:$0xff] %v1064
      %1129 = vst [vmem:[%s175 + $0x78] sm:$0xff] %v1065
      %1130 = vst [vmem:[%s175 + $0x80] sm:$0xff] %v1066
      %1131 = vst [vmem:[%s175 + $0x88] sm:$0xff] %v1067
      %1132 = vst [vmem:[%s175 + $0x90] sm:$0xff] %v1068
      %1133 = vst [vmem:[%s175 + $0x98] sm:$0xff] %v1069
      %1134 = vst [vmem:[%s175 + $0xa0] sm:$0xff] %v1070
      %1135 = vst [vmem:[%s175 + $0xa8] sm:$0xff] %v1071
      %1136 = vst [vmem:[%s175 + $0xb0] sm:$0xff] %v1072
      %1137 = vst [vmem:[%s175 + $0xb8] sm:$0xff] %v1073
      %1138 = vst [vmem:[%s175 + $0xc0] sm:$0xff] %v1074
      %1139 = vst [vmem:[%s175 + $0xc8] sm:$0xff] %v1075
      %1140 = vst [vmem:[%s175 + $0xd0] sm:$0xff] %v1076
      %1141 = vst [vmem:[%s175 + $0xd8] sm:$0xff] %v1077
      %1142 = vst [vmem:[%s175 + $0xe0] sm:$0xff] %v1078
      %1143 = vst [vmem:[%s175 + $0xe8] sm:$0xff] %v1079
      %1144 = vst [vmem:[%s175 + $0xf0] sm:$0xff] %v1080
      %1145 = vst [vmem:[%s175 + $0xf8] sm:$0xff] %v1081
      %1146 = vst [vmem:[%s175 + $0x100] sm:$0xff] %v1082
      %1147 = vst [vmem:[%s175 + $0x108] sm:$0xff] %v1083
      %1148 = vst [vmem:[%s175 + $0x110] sm:$0xff] %v1084
      %1149 = vst [vmem:[%s175 + $0x118] sm:$0xff] %v1085
      %1150 = vst [vmem:[%s175 + $0x120] sm:$0xff] %v1086
      %1151 = vst [vmem:[%s175 + $0x128] sm:$0xff] %v1087
      %1152 = vst [vmem:[%s175 + $0x130] sm:$0xff] %v1088
      %1153 = vst [vmem:[%s175 + $0x138] sm:$0xff] %v1089
      %1154 = vst [vmem:[%s175 + $0x140] sm:$0xff] %v1090
      %1155 = vst [vmem:[%s175 + $0x148] sm:$0xff] %v1091
      %1156 = vst [vmem:[%s175 + $0x150] sm:$0xff] %v1092
      %1157 = vst [vmem:[%s175 + $0x158] sm:$0xff] %v1093
      %1158 = vst [vmem:[%s175 + $0x160] sm:$0xff] %v1094
      %1159 = vst [vmem:[%s175 + $0x168] sm:$0xff] %v1095
      %1160 = vst [vmem:[%s175 + $0x170] sm:$0xff] %v1096
      %1161 = vst [vmem:[%s175 + $0x178] sm:$0xff] %v1097
      %1162 = vst [vmem:[%s175 + $0x180] sm:$0xff] %v1098
      %1163 = vst [vmem:[%s175 + $0x188] sm:$0xff] %v1099
      %1164 = vst [vmem:[%s175 + $0x190] sm:$0xff] %v1100
      %1165 = vst [vmem:[%s175 + $0x198] sm:$0xff] %v1101
      %1166 = vst [vmem:[%s175 + $0x1a0] sm:$0xff] %v1102
      %1167 = vst [vmem:[%s175 + $0x1a8] sm:$0xff] %v1103
      %1168 = vst [vmem:[%s175 + $0x1b0] sm:$0xff] %v1104
      %1169 = vst [vmem:[%s175 + $0x1b8] sm:$0xff] %v1105
      %1170 = vst [vmem:[%s175 + $0x1c0] sm:$0xff] %v1106
      %1171 = vst [vmem:[%s175 + $0x1c8] sm:$0xff] %v1107
      %1172 = vst [vmem:[%s175 + $0x1d0] sm:$0xff] %v1108
      %1173 = vst [vmem:[%s175 + $0x1d8] sm:$0xff] %v1109
      %1174 = vst [vmem:[%s175 + $0x1e0] sm:$0xff] %v1110
      %1175 = vst [vmem:[%s175 + $0x1e8] sm:$0xff] %v1111
      %1176 = vst [vmem:[%s175 + $0x1f0] sm:$0xff] %v1112
      %1177 = vst [vmem:[%s175 + $0x1f8] sm:$0xff] %v1113
      %s1178 = smul.u32 64, %s14
      %p1179 = scmp.lt.s32.totalorder %s1178, 255
      %s1180 = scalar_select %p1179, %s1178, 255
      %s1181 = smul.addr %s1180, 8
      %s1182 = scalar_lea.vmem %s3, %s1181
      // Predicated region
      $region33: #{forward.16} parent=31 // pred_check
        %p1183 = pneg %p100
      $region34: #{forward.16} parent=31 // pred_check_branch
        %1185 = sbr.rel (%p1183) target = $region36
      $region35: #{forward.16} parent=31 // pred_region
        %s1186 = smul.u32 64, %s14
      $region36: #{forward.16} parent=31 // pred_fallthru
        _
    $region32: #{forward.16} parent=5 // pred_fallthru
      _
    %p1187 = scmp.le.s32.totalorder 2, %s9
    // Predicated region
    $region37: #{forward.16} parent=5 // pred_check
      %p1188 = pneg %p1187
    $region38: #{forward.16} parent=5 // pred_check_branch
      %1190 = sbr.rel (%p1188) target = $region40
    $region39: #{forward.16} parent=5 // pred_region
      %s1191 = ssub.s32 %s9, 2
      // Predicated region
      $region41: #{forward.16} parent=39 // pred_check
        %p1192 = pneg %p106
      $region42: #{forward.16} parent=39 // pred_check_branch
        %1194 = sbr.rel (%p1192) target = $region44
      $region43: #{forward.16} parent=39 // pred_region
        %s1195 = smul.u32 64, %s15
        %p1196 = scmp.lt.s32.totalorder %s1195, 255
        %s1197 = scalar_select %p1196, %s1195, 255
        %s1198 = smul.addr %s1197, 8
        %s1199 = scalar_lea.vmem %s3, %s1198
      $region44: #{forward.16} parent=39 // pred_fallthru
        _
    $region40: #{forward.16} parent=5 // pred_fallthru
      _
  $region6: #{forward.16} parent=0 // loop_footer
    %s13 = sadd.s32 1, %s9
  $region7: #{forward.16} parent=0 // loop_footer_branch
    %8 = sbr.rel target = $region3
  $region8: #{forward.16} parent=0 // loop_exit
    _

// kernel: forward.17
$region0: #{forward.17}
  #allocation0 [shape = 'u32[]', space=smem, size = 0x4, offset = 0x4, fixed_abs, tag = 'smem constant byte address 0x4 - core index']
  #allocation1 [shape = 'u32[144,128]{1,0:T(1,128)}', space=vmem, size = 0x12000, scoped, tag = 'internal scratch']
  %s0 = inlined_call_operand.vmem [shape: bf16[1024,384], index: 0, kind: input, shape index: {}]
  %s1 = inlined_call_operand.vmem [shape: bf16[384,256], index: 1, kind: input, shape index: {}]
  %s2 = inlined_call_operand.vmem [shape: f32[1,256], index: 2, kind: input, shape index: {}]
  %s3 = inlined_call_operand.vmem [shape: f32[1024,256], index: 3, kind: output, shape index: {}]
  %s4 = sld [smem:[#allocation0]]
  $region45: #{forward.17} parent=0
    _
  %s6 = ssub.s32 1, %s4
  %s7 = scalar_select 0, %s6, %s4
  loop: start=0, step=1, limit=4
  $region2: #{forward.17} parent=0 // loop_pre_header
    _
  $region3: #{forward.17} parent=0 // loop_header
    %s9 = sphi 0, %s13
    %p10 = scmp.ge.s32.totalorder %s9, 4
    %s19 = sphi 0, %s21
    %s22 = sphi 0, %s19
    %s23 = sphi 0, %s22
    %s39 = sphi 0, %s23
    %s43 = sphi 0, %s43
    %s45 = sphi 0, %s43
    %s46 = sphi 0, %s45
    %s60 = sphi 0, %s46
    %s64 = sphi 0, %s64
    %s66 = sphi 0, %s64
    %s67 = sphi 0, %s66
    %s81 = sphi 0, %s67
    %s87 = sphi 0, %s89
    %s90 = sphi 0, %s87
    %s91 = sphi 0, %s90
    %s107 = sphi 0, %s91
  $region4: #{forward.17} parent=0 // loop_header_branch
    %12 = sbr.rel (%p10) target = $region8
  $region5: #{forward.17} parent=0 // loop_body
    %s14 = ssub.s32 %s9, 1
    %s15 = ssub.s32 %s9, 2
    %s16 = sadd.s32 %s9, 1
    %s17 = ssub.s32 %s9, %s16
    %p18 = scmp.eq.s32.totalorder %s17, 0
    %s20 = sadd.s32 %s19, 1
    %s21 = scalar_select %p18, %s19, %s20
    %p24 = pneg %p18
    %p25 = scmp.eq.s32.totalorder %s9, 1
    %p26 = por %p24, %p25
    %p27 = scmp.ne.s32.totalorder %s19, %s22
    %p28 = scmp.eq.s32.totalorder %s9, 0
    %p29 = por %p27, %p28
    %p30 = scmp.ne.s32.totalorder %s19, %s22
    %p31 = scmp.eq.s32.totalorder %s14, 1
    %p32 = por %p30, %p31
    %p33 = scmp.ne.s32.totalorder %s22, %s23
    %p34 = scmp.eq.s32.totalorder %s14, 0
    %p35 = por %p33, %p34
    %p36 = scmp.ne.s32.totalorder %s22, %s23
    %p37 = scmp.eq.s32.totalorder %s15, 1
    %p38 = por %p36, %p37
    %p40 = scmp.ne.s32.totalorder %s23, %s39
    %p41 = scmp.eq.s32.totalorder %s15, 0
    %p42 = por %p40, %p41
    %s44 = sadd.s32 %s43, 1
    %p47 = scmp.eq.s32.totalorder %s9, 1
    %p48 = scmp.ne.s32.totalorder %s43, %s45
    %p49 = scmp.eq.s32.totalorder %s9, 0
    %p50 = por %p48, %p49
    %p51 = scmp.ne.s32.totalorder %s43, %s45
    %p52 = scmp.eq.s32.totalorder %s14, 1
    %p53 = por %p51, %p52
    %p54 = scmp.ne.s32.totalorder %s45, %s46
    %p55 = scmp.eq.s32.totalorder %s14, 0
    %p56 = por %p54, %p55
    %p57 = scmp.ne.s32.totalorder %s45, %s46
    %p58 = scmp.eq.s32.totalorder %s15, 1
    %p59 = por %p57, %p58
    %p61 = scmp.ne.s32.totalorder %s46, %s60
    %p62 = scmp.eq.s32.totalorder %s15, 0
    %p63 = por %p61, %p62
    %s65 = sadd.s32 %s64, 1
    %p68 = scmp.eq.s32.totalorder %s9, 1
    %p69 = scmp.ne.s32.totalorder %s64, %s66
    %p70 = scmp.eq.s32.totalorder %s9, 0
    %p71 = por %p69, %p70
    %p72 = scmp.ne.s32.totalorder %s64, %s66
    %p73 = scmp.eq.s32.totalorder %s14, 1
    %p74 = por %p72, %p73
    %p75 = scmp.ne.s32.totalorder %s66, %s67
    %p76 = scmp.eq.s32.totalorder %s14, 0
    %p77 = por %p75, %p76
    %p78 = scmp.ne.s32.totalorder %s66, %s67
    %p79 = scmp.eq.s32.totalorder %s15, 1
    %p80 = por %p78, %p79
    %p82 = scmp.ne.s32.totalorder %s67, %s81
    %p83 = scmp.eq.s32.totalorder %s15, 0
    %p84 = por %p82, %p83
    %s85 = ssub.s32 %s9, %s16
    %p86 = scmp.eq.s32.totalorder %s85, 0
    %s88 = sadd.s32 %s87, 1
    %s89 = scalar_select %p86, %s87, %s88
    %p92 = pneg %p86
    %p93 = scmp.eq.s32.totalorder %s9, 1
    %p94 = por %p92, %p93
    %p95 = scmp.ne.s32.totalorder %s87, %s90
    %p96 = scmp.eq.s32.totalorder %s9, 0
    %p97 = por %p95, %p96
    %p98 = scmp.ne.s32.totalorder %s87, %s90
    %p99 = scmp.eq.s32.totalorder %s14, 1
    %p100 = por %p98, %p99
    %p101 = scmp.ne.s32.totalorder %s90, %s91
    %p102 = scmp.eq.s32.totalorder %s14, 0
    %p103 = por %p101, %p102
    %p104 = scmp.ne.s32.totalorder %s90, %s91
    %p105 = scmp.eq.s32.totalorder %s15, 1
    %p106 = por %p104, %p105
    %p108 = scmp.ne.s32.totalorder %s91, %s107
    %p109 = scmp.eq.s32.totalorder %s15, 0
    %p110 = por %p108, %p109
    %p111 = scmp.le.s32.totalorder 1, %s9
    %p112 = scmp.lt.s32.totalorder %s9, 3
    %p113 = pnand %p111, %p112
    %p114 = pneg %p113
    // Predicated region
    $region9: #{forward.17} parent=5 // pred_check
      _
    $region10: #{forward.17} parent=5 // pred_check_branch
      %116 = sbr.rel (%p113) target = $region12
    $region11: #{forward.17} parent=5 // pred_region
      %s117 = ssub.s32 %s9, 1
      // Predicated region
      $region13: #{forward.17} parent=11 // pred_check
        %p118 = pneg %p56
      $region14: #{forward.17} parent=11 // pred_check_branch
        %120 = sbr.rel (%p118) target = $region16
      $region15: #{forward.17} parent=11 // pred_region
        _
      $region16: #{forward.17} parent=11 // pred_fallthru
        _
      // Predicated region
      $region17: #{forward.17} parent=11 // pred_check
        %p121 = pneg %p77
      $region18: #{forward.17} parent=11 // pred_check_branch
        %123 = sbr.rel (%p121) target = $region20
      $region19: #{forward.17} parent=11 // pred_region
        _
      $region20: #{forward.17} parent=11 // pred_fallthru
        _
    $region12: #{forward.17} parent=5 // pred_fallthru
      _
    %p124 = scmp.lt.s32.totalorder %s9, 2
    // Predicated region
    $region21: #{forward.17} parent=5 // pred_check
      %p125 = pneg %p124
    $region22: #{forward.17} parent=5 // pred_check_branch
      %127 = sbr.rel (%p125) target = $region24
    $region23: #{forward.17} parent=5 // pred_region
      // Predicated region
      $region25: #{forward.17} parent=23 // pred_check
        %p128 = pneg %p29
      $region26: #{forward.17} parent=23 // pred_check_branch
        %130 = sbr.rel (%p128) target = $region28
      $region27: #{forward.17} parent=23 // pred_region
        %s131 = smul.u32 64, %s9
        %p132 = scmp.lt.s32.totalorder %s131, 127
        %s133 = scalar_select %p132, %s131, 127
        %s134 = smul.addr %s133, 3
        %s135 = smul.addr %s134, 4
        %s136 = scalar_lea.vmem %s0, %s135
        %s137 = smul.u32 64, %s9
      $region28: #{forward.17} parent=23 // pred_fallthru
        _
    $region24: #{forward.17} parent=5 // pred_fallthru
      _
    %p138 = scmp.le.s32.totalorder 1, %s9
    %p139 = scmp.lt.s32.totalorder %s9, 3
    %p140 = pnand %p138, %p139
    %p141 = pneg %p140
    // Predicated region
    $region29: #{forward.17} parent=5 // pred_check
      _
    $region30: #{forward.17} parent=5 // pred_check_branch
      %143 = sbr.rel (%p140) target = $region32
    $region31: #{forward.17} parent=5 // pred_region
      %s144 = ssub.s32 %s9, 1
      %s145 = smul.u32 64, %s14
      %p146 = scmp.lt.s32.totalorder %s145, 127
      %s147 = scalar_select %p146, %s145, 127
      %s148 = smul.addr %s147, 3
      %s149 = smul.addr %s148, 4
      %s150 = scalar_lea.vmem %s0, %s149
      %p151 = pneg %p35
      %p152 = pneg %p32
      %p153 = pneg %p56
      %p154 = pneg %p53
      %p155 = pneg %p77
      %p156 = pneg %p74
      %p157 = pneg %p103
      %p158 = pneg %p100
      %s159 = smul.u32 64, %s14
      %p160 = scmp.lt.s32.totalorder %s159, 127
      %s161 = scalar_select %p160, %s159, 127
      %s162 = smul.addr %s161, 2
      %s163 = smul.addr %s162, 8
      %s164 = scalar_lea.vmem %s3, %s163
      %s165 = smul.u32 64, %s14
      %p166 = scmp.lt.s32.totalorder %s165, 127
      %s167 = scalar_select %p166, %s165, 127
      %s168 = smul.addr %s167, 3
      %s169 = smul.addr %s168, 4
      %s170 = scalar_lea.vmem %s0, %s169
      %s171 = smul.u32 64, %s14
      %s172 = smul.u32 64, %s14
      %p173 = scmp.lt.s32.totalorder %s172, 127
      %s174 = scalar_select %p173, %s172, 127
      %s175 = smul.addr %s174, 2
      %s176 = smul.addr %s175, 8
      %s177 = scalar_lea.vmem %s3, %s176
      %s178 = smul.u32 64, %s14
      %v180 = vld [vmem:[%s170] sm:$0xff]
      %v181 = vld [vmem:[%s170 + $0x8] sm:$0xf]
      %v182 = vld [vmem:[%s170 + $0xc] sm:$0xff]
      %v183 = vld [vmem:[%s170 + $0x14] sm:$0xf]
      %v184 = vld [vmem:[%s170 + $0x18] sm:$0xff]
      %v185 = vld [vmem:[%s170 + $0x20] sm:$0xf]
      %v186 = vld [vmem:[%s170 + $0x24] sm:$0xff]
      %v187 = vld [vmem:[%s170 + $0x2c] sm:$0xf]
      %v188 = vld [vmem:[%s170 + $0x30] sm:$0xff]
      %v189 = vld [vmem:[%s170 + $0x38] sm:$0xf]
      %v190 = vld [vmem:[%s170 + $0x3c] sm:$0xff]
      %v191 = vld [vmem:[%s170 + $0x44] sm:$0xf]
      %v192 = vld [vmem:[%s170 + $0x48] sm:$0xff]
      %v193 = vld [vmem:[%s170 + $0x50] sm:$0xf]
      %v194 = vld [vmem:[%s170 + $0x54] sm:$0xff]
      %v195 = vld [vmem:[%s170 + $0x5c] sm:$0xf]
      %v196 = vld [vmem:[%s170 + $0x60] sm:$0xff]
      %v197 = vld [vmem:[%s170 + $0x68] sm:$0xf]
      %v198 = vld [vmem:[%s170 + $0x6c] sm:$0xff]
      %v199 = vld [vmem:[%s170 + $0x74] sm:$0xf]
      %v200 = vld [vmem:[%s170 + $0x78] sm:$0xff]
      %v201 = vld [vmem:[%s170 + $0x80] sm:$0xf]
      %v202 = vld [vmem:[%s170 + $0x84] sm:$0xff]
      %v203 = vld [vmem:[%s170 + $0x8c] sm:$0xf]
      %v204 = vld [vmem:[%s170 + $0x90] sm:$0xff]
      %v205 = vld [vmem:[%s170 + $0x98] sm:$0xf]
      %v206 = vld [vmem:[%s170 + $0x9c] sm:$0xff]
      %v207 = vld [vmem:[%s170 + $0xa4] sm:$0xf]
      %v208 = vld [vmem:[%s170 + $0xa8] sm:$0xff]
      %v209 = vld [vmem:[%s170 + $0xb0] sm:$0xf]
      %v210 = vld [vmem:[%s170 + $0xb4] sm:$0xff]
      %v211 = vld [vmem:[%s170 + $0xbc] sm:$0xf]
      %v212 = vld [vmem:[%s170 + $0xc0] sm:$0xff]
      %v213 = vld [vmem:[%s170 + $0xc8] sm:$0xf]
      %v214 = vld [vmem:[%s170 + $0xcc] sm:$0xff]
      %v215 = vld [vmem:[%s170 + $0xd4] sm:$0xf]
      %v216 = vld [vmem:[%s170 + $0xd8] sm:$0xff]
      %v217 = vld [vmem:[%s170 + $0xe0] sm:$0xf]
      %v218 = vld [vmem:[%s170 + $0xe4] sm:$0xff]
      %v219 = vld [vmem:[%s170 + $0xec] sm:$0xf]
      %v220 = vld [vmem:[%s170 + $0xf0] sm:$0xff]
      %v221 = vld [vmem:[%s170 + $0xf8] sm:$0xf]
      %v222 = vld [vmem:[%s170 + $0xfc] sm:$0xff]
      %v223 = vld [vmem:[%s170 + $0x104] sm:$0xf]
      %v224 = vld [vmem:[%s170 + $0x108] sm:$0xff]
      %v225 = vld [vmem:[%s170 + $0x110] sm:$0xf]
      %v226 = vld [vmem:[%s170 + $0x114] sm:$0xff]
      %v227 = vld [vmem:[%s170 + $0x11c] sm:$0xf]
      %v228 = vld [vmem:[%s170 + $0x120] sm:$0xff]
      %v229 = vld [vmem:[%s170 + $0x128] sm:$0xf]
      %v230 = vld [vmem:[%s170 + $0x12c] sm:$0xff]
      %v231 = vld [vmem:[%s170 + $0x134] sm:$0xf]
      %v232 = vld [vmem:[%s170 + $0x138] sm:$0xff]
      %v233 = vld [vmem:[%s170 + $0x140] sm:$0xf]
      %v234 = vld [vmem:[%s170 + $0x144] sm:$0xff]
      %v235 = vld [vmem:[%s170 + $0x14c] sm:$0xf]
      %v236 = vld [vmem:[%s170 + $0x150] sm:$0xff]
      %v237 = vld [vmem:[%s170 + $0x158] sm:$0xf]
      %v238 = vld [vmem:[%s170 + $0x15c] sm:$0xff]
      %v239 = vld [vmem:[%s170 + $0x164] sm:$0xf]
      %v240 = vld [vmem:[%s170 + $0x168] sm:$0xff]
      %v241 = vld [vmem:[%s170 + $0x170] sm:$0xf]
      %v242 = vld [vmem:[%s170 + $0x174] sm:$0xff]
      %v243 = vld [vmem:[%s170 + $0x17c] sm:$0xf]
      %v244 = vld [vmem:[%s170 + $0x180] sm:$0xff]
      %v245 = vld [vmem:[%s170 + $0x188] sm:$0xf]
      %v246 = vld [vmem:[%s170 + $0x18c] sm:$0xff]
      %v247 = vld [vmem:[%s170 + $0x194] sm:$0xf]
      %v248 = vld [vmem:[%s170 + $0x198] sm:$0xff]
      %v249 = vld [vmem:[%s170 + $0x1a0] sm:$0xf]
      %v250 = vld [vmem:[%s170 + $0x1a4] sm:$0xff]
      %v251 = vld [vmem:[%s170 + $0x1ac] sm:$0xf]
      %v252 = vld [vmem:[%s170 + $0x1b0] sm:$0xff]
      %v253 = vld [vmem:[%s170 + $0x1b8] sm:$0xf]
      %v254 = vld [vmem:[%s170 + $0x1bc] sm:$0xff]
      %v255 = vld [vmem:[%s170 + $0x1c4] sm:$0xf]
      %v256 = vld [vmem:[%s170 + $0x1c8] sm:$0xff]
      %v257 = vld [vmem:[%s170 + $0x1d0] sm:$0xf]
      %v258 = vld [vmem:[%s170 + $0x1d4] sm:$0xff]
      %v259 = vld [vmem:[%s170 + $0x1dc] sm:$0xf]
      %v260 = vld [vmem:[%s170 + $0x1e0] sm:$0xff]
      %v261 = vld [vmem:[%s170 + $0x1e8] sm:$0xf]
      %v262 = vld [vmem:[%s170 + $0x1ec] sm:$0xff]
      %v263 = vld [vmem:[%s170 + $0x1f4] sm:$0xf]
      %v264 = vld [vmem:[%s170 + $0x1f8] sm:$0xff]
      %v265 = vld [vmem:[%s170 + $0x200] sm:$0xf]
      %v266 = vld [vmem:[%s170 + $0x204] sm:$0xff]
      %v267 = vld [vmem:[%s170 + $0x20c] sm:$0xf]
      %v268 = vld [vmem:[%s170 + $0x210] sm:$0xff]
      %v269 = vld [vmem:[%s170 + $0x218] sm:$0xf]
      %v270 = vld [vmem:[%s170 + $0x21c] sm:$0xff]
      %v271 = vld [vmem:[%s170 + $0x224] sm:$0xf]
      %v272 = vld [vmem:[%s170 + $0x228] sm:$0xff]
      %v273 = vld [vmem:[%s170 + $0x230] sm:$0xf]
      %v274 = vld [vmem:[%s170 + $0x234] sm:$0xff]
      %v275 = vld [vmem:[%s170 + $0x23c] sm:$0xf]
      %v276 = vld [vmem:[%s170 + $0x240] sm:$0xff]
      %v277 = vld [vmem:[%s170 + $0x248] sm:$0xf]
      %v278 = vld [vmem:[%s170 + $0x24c] sm:$0xff]
      %v279 = vld [vmem:[%s170 + $0x254] sm:$0xf]
      %v280 = vld [vmem:[%s170 + $0x258] sm:$0xff]
      %v281 = vld [vmem:[%s170 + $0x260] sm:$0xf]
      %v282 = vld [vmem:[%s170 + $0x264] sm:$0xff]
      %v283 = vld [vmem:[%s170 + $0x26c] sm:$0xf]
      %v284 = vld [vmem:[%s170 + $0x270] sm:$0xff]
      %v285 = vld [vmem:[%s170 + $0x278] sm:$0xf]
      %v286 = vld [vmem:[%s170 + $0x27c] sm:$0xff]
      %v287 = vld [vmem:[%s170 + $0x284] sm:$0xf]
      %v288 = vld [vmem:[%s170 + $0x288] sm:$0xff]
      %v289 = vld [vmem:[%s170 + $0x290] sm:$0xf]
      %v290 = vld [vmem:[%s170 + $0x294] sm:$0xff]
      %v291 = vld [vmem:[%s170 + $0x29c] sm:$0xf]
      %v292 = vld [vmem:[%s170 + $0x2a0] sm:$0xff]
      %v293 = vld [vmem:[%s170 + $0x2a8] sm:$0xf]
      %v294 = vld [vmem:[%s170 + $0x2ac] sm:$0xff]
      %v295 = vld [vmem:[%s170 + $0x2b4] sm:$0xf]
      %v296 = vld [vmem:[%s170 + $0x2b8] sm:$0xff]
      %v297 = vld [vmem:[%s170 + $0x2c0] sm:$0xf]
      %v298 = vld [vmem:[%s170 + $0x2c4] sm:$0xff]
      %v299 = vld [vmem:[%s170 + $0x2cc] sm:$0xf]
      %v300 = vld [vmem:[%s170 + $0x2d0] sm:$0xff]
      %v301 = vld [vmem:[%s170 + $0x2d8] sm:$0xf]
      %v302 = vld [vmem:[%s170 + $0x2dc] sm:$0xff]
      %v303 = vld [vmem:[%s170 + $0x2e4] sm:$0xf]
      %v304 = vld [vmem:[%s170 + $0x2e8] sm:$0xff]
      %v305 = vld [vmem:[%s170 + $0x2f0] sm:$0xf]
      %v306 = vld [vmem:[%s170 + $0x2f4] sm:$0xff]
      %v307 = vld [vmem:[%s170 + $0x2fc] sm:$0xf]
      %v308 = vld [vmem:[%s1] sm:$0xff]
      %v309 = vld [vmem:[%s1 + $0x8] sm:$0xff]
      %v310 = vld [vmem:[%s1 + $0x10] sm:$0xff]
      %v311 = vld [vmem:[%s1 + $0x18] sm:$0xff]
      %v312 = vld [vmem:[%s1 + $0x20] sm:$0xff]
      %v313 = vld [vmem:[%s1 + $0x28] sm:$0xff]
      %v314 = vld [vmem:[%s1 + $0x30] sm:$0xff]
      %v315 = vld [vmem:[%s1 + $0x38] sm:$0xff]
      %v316 = vld [vmem:[%s1 + $0x40] sm:$0xff]
      %v317 = vld [vmem:[%s1 + $0x48] sm:$0xff]
      %v318 = vld [vmem:[%s1 + $0x50] sm:$0xff]
      %v319 = vld [vmem:[%s1 + $0x58] sm:$0xff]
      %v320 = vld [vmem:[%s1 + $0x60] sm:$0xff]
      %v321 = vld [vmem:[%s1 + $0x68] sm:$0xff]
      %v322 = vld [vmem:[%s1 + $0x70] sm:$0xff]
      %v323 = vld [vmem:[%s1 + $0x78] sm:$0xff]
      %v324 = vld [vmem:[%s1 + $0x80] sm:$0xff]
      %v325 = vld [vmem:[%s1 + $0x88] sm:$0xff]
      %v326 = vld [vmem:[%s1 + $0x90] sm:$0xff]
      %v327 = vld [vmem:[%s1 + $0x98] sm:$0xff]
      %v328 = vld [vmem:[%s1 + $0xa0] sm:$0xff]
      %v329 = vld [vmem:[%s1 + $0xa8] sm:$0xff]
      %v330 = vld [vmem:[%s1 + $0xb0] sm:$0xff]
      %v331 = vld [vmem:[%s1 + $0xb8] sm:$0xff]
      %v332 = vld [vmem:[%s1 + $0xc0] sm:$0xff]
      %v333 = vld [vmem:[%s1 + $0xc8] sm:$0xff]
      %v334 = vld [vmem:[%s1 + $0xd0] sm:$0xff]
      %v335 = vld [vmem:[%s1 + $0xd8] sm:$0xff]
      %v336 = vld [vmem:[%s1 + $0xe0] sm:$0xff]
      %v337 = vld [vmem:[%s1 + $0xe8] sm:$0xff]
      %v338 = vld [vmem:[%s1 + $0xf0] sm:$0xff]
      %v339 = vld [vmem:[%s1 + $0xf8] sm:$0xff]
      %v340 = vld [vmem:[%s1 + $0x100] sm:$0xff]
      %v341 = vld [vmem:[%s1 + $0x108] sm:$0xff]
      %v342 = vld [vmem:[%s1 + $0x110] sm:$0xff]
      %v343 = vld [vmem:[%s1 + $0x118] sm:$0xff]
      %v344 = vld [vmem:[%s1 + $0x120] sm:$0xff]
      %v345 = vld [vmem:[%s1 + $0x128] sm:$0xff]
      %v346 = vld [vmem:[%s1 + $0x130] sm:$0xff]
      %v347 = vld [vmem:[%s1 + $0x138] sm:$0xff]
      %v348 = vld [vmem:[%s1 + $0x140] sm:$0xff]
      %v349 = vld [vmem:[%s1 + $0x148] sm:$0xff]
      %v350 = vld [vmem:[%s1 + $0x150] sm:$0xff]
      %v351 = vld [vmem:[%s1 + $0x158] sm:$0xff]
      %v352 = vld [vmem:[%s1 + $0x160] sm:$0xff]
      %v353 = vld [vmem:[%s1 + $0x168] sm:$0xff]
      %v354 = vld [vmem:[%s1 + $0x170] sm:$0xff]
      %v355 = vld [vmem:[%s1 + $0x178] sm:$0xff]
      %v356 = vld [vmem:[%s2] sm:$0x3]
      %v358 = vlaneseq
      %v359 = vshrl.u32 %v358, 7
      %v360 = vsub.s32 0, %v359
      %v361 = vrot.slane %v356, %v360
      %v362 = vlaneseq
      %v363 = vshrl.u32 %v362, 7
      %v364 = vsub.s32 1, %v363
      %v365 = vrot.slane %v356, %v364
      %v496 = vunpack.c.l.b16 %v180
      %v497 = vunpack.c.h.b16 %v180
      %v498 = vunpack.c.l.b16 %v181
      %v499 = vunpack.c.l.b16 %v182
      %v500 = vunpack.c.h.b16 %v182
      %v501 = vunpack.c.l.b16 %v183
      %v502 = vunpack.c.l.b16 %v184
      %v503 = vunpack.c.h.b16 %v184
      %v504 = vunpack.c.l.b16 %v185
      %v505 = vunpack.c.l.b16 %v186
      %v506 = vunpack.c.h.b16 %v186
      %v507 = vunpack.c.l.b16 %v187
      %v508 = vunpack.c.l.b16 %v188
      %v509 = vunpack.c.h.b16 %v188
      %v510 = vunpack.c.l.b16 %v189
      %v511 = vunpack.c.l.b16 %v190
      %v512 = vunpack.c.h.b16 %v190
      %v513 = vunpack.c.l.b16 %v191
      %v514 = vunpack.c.l.b16 %v192
      %v515 = vunpack.c.h.b16 %v192
      %v516 = vunpack.c.l.b16 %v193
      %v517 = vunpack.c.l.b16 %v194
      %v518 = vunpack.c.h.b16 %v194
      %v519 = vunpack.c.l.b16 %v195
      %v520 = vunpack.c.l.b16 %v196
      %v521 = vunpack.c.h.b16 %v196
      %v522 = vunpack.c.l.b16 %v197
      %v523 = vunpack.c.l.b16 %v198
      %v524 = vunpack.c.h.b16 %v198
      %v525 = vunpack.c.l.b16 %v199
      %v526 = vunpack.c.l.b16 %v200
      %v527 = vunpack.c.h.b16 %v200
      %v528 = vunpack.c.l.b16 %v201
      %v529 = vunpack.c.l.b16 %v202
      %v530 = vunpack.c.h.b16 %v202
      %v531 = vunpack.c.l.b16 %v203
      %v532 = vunpack.c.l.b16 %v204
      %v533 = vunpack.c.h.b16 %v204
      %v534 = vunpack.c.l.b16 %v205
      %v535 = vunpack.c.l.b16 %v206
      %v536 = vunpack.c.h.b16 %v206
      %v537 = vunpack.c.l.b16 %v207
      %v538 = vunpack.c.l.b16 %v208
      %v539 = vunpack.c.h.b16 %v208
      %v540 = vunpack.c.l.b16 %v209
      %v541 = vunpack.c.l.b16 %v210
      %v542 = vunpack.c.h.b16 %v210
      %v543 = vunpack.c.l.b16 %v211
      %v544 = vunpack.c.l.b16 %v212
      %v545 = vunpack.c.h.b16 %v212
      %v546 = vunpack.c.l.b16 %v213
      %v547 = vunpack.c.l.b16 %v214
      %v548 = vunpack.c.h.b16 %v214
      %v549 = vunpack.c.l.b16 %v215
      %v550 = vunpack.c.l.b16 %v216
      %v551 = vunpack.c.h.b16 %v216
      %v552 = vunpack.c.l.b16 %v217
      %v553 = vunpack.c.l.b16 %v218
      %v554 = vunpack.c.h.b16 %v218
      %v555 = vunpack.c.l.b16 %v219
      %v556 = vunpack.c.l.b16 %v220
      %v557 = vunpack.c.h.b16 %v220
      %v558 = vunpack.c.l.b16 %v221
      %v559 = vunpack.c.l.b16 %v222
      %v560 = vunpack.c.h.b16 %v222
      %v561 = vunpack.c.l.b16 %v223
      %v562 = vunpack.c.l.b16 %v224
      %v563 = vunpack.c.h.b16 %v224
      %v564 = vunpack.c.l.b16 %v225
      %v565 = vunpack.c.l.b16 %v226
      %v566 = vunpack.c.h.b16 %v226
      %v567 = vunpack.c.l.b16 %v227
      %v568 = vunpack.c.l.b16 %v228
      %v569 = vunpack.c.h.b16 %v228
      %v570 = vunpack.c.l.b16 %v229
      %v571 = vunpack.c.l.b16 %v230
      %v572 = vunpack.c.h.b16 %v230
      %v573 = vunpack.c.l.b16 %v231
      %v574 = vunpack.c.l.b16 %v232
      %v575 = vunpack.c.h.b16 %v232
      %v576 = vunpack.c.l.b16 %v233
      %v577 = vunpack.c.l.b16 %v234
      %v578 = vunpack.c.h.b16 %v234
      %v579 = vunpack.c.l.b16 %v235
      %v580 = vunpack.c.l.b16 %v236
      %v581 = vunpack.c.h.b16 %v236
      %v582 = vunpack.c.l.b16 %v237
      %v583 = vunpack.c.l.b16 %v238
      %v584 = vunpack.c.h.b16 %v238
      %v585 = vunpack.c.l.b16 %v239
      %v586 = vunpack.c.l.b16 %v240
      %v587 = vunpack.c.h.b16 %v240
      %v588 = vunpack.c.l.b16 %v241
      %v589 = vunpack.c.l.b16 %v242
      %v590 = vunpack.c.h.b16 %v242
      %v591 = vunpack.c.l.b16 %v243
      %v592 = vunpack.c.l.b16 %v244
      %v593 = vunpack.c.h.b16 %v244
      %v594 = vunpack.c.l.b16 %v245
      %v595 = vunpack.c.l.b16 %v246
      %v596 = vunpack.c.h.b16 %v246
      %v597 = vunpack.c.l.b16 %v247
      %v598 = vunpack.c.l.b16 %v248
      %v599 = vunpack.c.h.b16 %v248
      %v600 = vunpack.c.l.b16 %v249
      %v601 = vunpack.c.l.b16 %v250
      %v602 = vunpack.c.h.b16 %v250
      %v603 = vunpack.c.l.b16 %v251
      %v604 = vunpack.c.l.b16 %v252
      %v605 = vunpack.c.h.b16 %v252
      %v606 = vunpack.c.l.b16 %v253
      %v607 = vunpack.c.l.b16 %v254
      %v608 = vunpack.c.h.b16 %v254
      %v609 = vunpack.c.l.b16 %v255
      %v610 = vunpack.c.l.b16 %v256
      %v611 = vunpack.c.h.b16 %v256
      %v612 = vunpack.c.l.b16 %v257
      %v613 = vunpack.c.l.b16 %v258
      %v614 = vunpack.c.h.b16 %v258
      %v615 = vunpack.c.l.b16 %v259
      %v616 = vunpack.c.l.b16 %v260
      %v617 = vunpack.c.h.b16 %v260
      %v618 = vunpack.c.l.b16 %v261
      %v619 = vunpack.c.l.b16 %v262
      %v620 = vunpack.c.h.b16 %v262
      %v621 = vunpack.c.l.b16 %v263
      %v622 = vunpack.c.l.b16 %v264
      %v623 = vunpack.c.h.b16 %v264
      %v624 = vunpack.c.l.b16 %v265
      %v625 = vunpack.c.l.b16 %v266
      %v626 = vunpack.c.h.b16 %v266
      %v627 = vunpack.c.l.b16 %v267
      %v628 = vunpack.c.l.b16 %v268
      %v629 = vunpack.c.h.b16 %v268
      %v630 = vunpack.c.l.b16 %v269
      %v631 = vunpack.c.l.b16 %v270
      %v632 = vunpack.c.h.b16 %v270
      %v633 = vunpack.c.l.b16 %v271
      %v634 = vunpack.c.l.b16 %v272
      %v635 = vunpack.c.h.b16 %v272
      %v636 = vunpack.c.l.b16 %v273
      %v637 = vunpack.c.l.b16 %v274
      %v638 = vunpack.c.h.b16 %v274
      %v639 = vunpack.c.l.b16 %v275
      %v640 = vunpack.c.l.b16 %v276
      %v641 = vunpack.c.h.b16 %v276
      %v642 = vunpack.c.l.b16 %v277
      %v643 = vunpack.c.l.b16 %v278
      %v644 = vunpack.c.h.b16 %v278
      %v645 = vunpack.c.l.b16 %v279
      %v646 = vunpack.c.l.b16 %v280
      %v647 = vunpack.c.h.b16 %v280
      %v648 = vunpack.c.l.b16 %v281
      %v649 = vunpack.c.l.b16 %v282
      %v650 = vunpack.c.h.b16 %v282
      %v651 = vunpack.c.l.b16 %v283
      %v652 = vunpack.c.l.b16 %v284
      %v653 = vunpack.c.h.b16 %v284
      %v654 = vunpack.c.l.b16 %v285
      %v655 = vunpack.c.l.b16 %v286
      %v656 = vunpack.c.h.b16 %v286
      %v657 = vunpack.c.l.b16 %v287
      %v658 = vunpack.c.l.b16 %v288
      %v659 = vunpack.c.h.b16 %v288
      %v660 = vunpack.c.l.b16 %v289
      %v661 = vunpack.c.l.b16 %v290
      %v662 = vunpack.c.h.b16 %v290
      %v663 = vunpack.c.l.b16 %v291
      %v664 = vunpack.c.l.b16 %v292
      %v665 = vunpack.c.h.b16 %v292
      %v666 = vunpack.c.l.b16 %v293
      %v667 = vunpack.c.l.b16 %v294
      %v668 = vunpack.c.h.b16 %v294
      %v669 = vunpack.c.l.b16 %v295
      %v670 = vunpack.c.l.b16 %v296
      %v671 = vunpack.c.h.b16 %v296
      %v672 = vunpack.c.l.b16 %v297
      %v673 = vunpack.c.l.b16 %v298
      %v674 = vunpack.c.h.b16 %v298
      %v675 = vunpack.c.l.b16 %v299
      %v676 = vunpack.c.l.b16 %v300
      %v677 = vunpack.c.h.b16 %v300
      %v678 = vunpack.c.l.b16 %v301
      %v679 = vunpack.c.l.b16 %v302
      %v680 = vunpack.c.h.b16 %v302
      %v681 = vunpack.c.l.b16 %v303
      %v682 = vunpack.c.l.b16 %v304
      %v683 = vunpack.c.h.b16 %v304
      %v684 = vunpack.c.l.b16 %v305
      %v685 = vunpack.c.l.b16 %v306
      %v686 = vunpack.c.h.b16 %v306
      %v687 = vunpack.c.l.b16 %v307
      %v688 = vpack.c.b16 %v499, %v496
      %v689 = vpack.c.b16 %v500, %v497
      %v690 = vpack.c.b16 %v501, %v498
      %v691 = vpack.c.b16 %v505, %v502
      %v692 = vpack.c.b16 %v506, %v503
      %v693 = vpack.c.b16 %v507, %v504
      %v694 = vpack.c.b16 %v511, %v508
      %v695 = vpack.c.b16 %v512, %v509
      %v696 = vpack.c.b16 %v513, %v510
      %v697 = vpack.c.b16 %v517, %v514
      %v698 = vpack.c.b16 %v518, %v515
      %v699 = vpack.c.b16 %v519, %v516
      %v700 = vpack.c.b16 %v523, %v520
      %v701 = vpack.c.b16 %v524, %v521
      %v702 = vpack.c.b16 %v525, %v522
      %v703 = vpack.c.b16 %v529, %v526
      %v704 = vpack.c.b16 %v530, %v527
      %v705 = vpack.c.b16 %v531, %v528
      %v706 = vpack.c.b16 %v535, %v532
      %v707 = vpack.c.b16 %v536, %v533
      %v708 = vpack.c.b16 %v537, %v534
      %v709 = vpack.c.b16 %v541, %v538
      %v710 = vpack.c.b16 %v542, %v539
      %v711 = vpack.c.b16 %v543, %v540
      %v712 = vpack.c.b16 %v547, %v544
      %v713 = vpack.c.b16 %v548, %v545
      %v714 = vpack.c.b16 %v549, %v546
      %v715 = vpack.c.b16 %v553, %v550
      %v716 = vpack.c.b16 %v554, %v551
      %v717 = vpack.c.b16 %v555, %v552
      %v718 = vpack.c.b16 %v559, %v556
      %v719 = vpack.c.b16 %v560, %v557
      %v720 = vpack.c.b16 %v561, %v558
      %v721 = vpack.c.b16 %v565, %v562
      %v722 = vpack.c.b16 %v566, %v563
      %v723 = vpack.c.b16 %v567, %v564
      %v724 = vpack.c.b16 %v571, %v568
      %v725 = vpack.c.b16 %v572, %v569
      %v726 = vpack.c.b16 %v573, %v570
      %v727 = vpack.c.b16 %v577, %v574
      %v728 = vpack.c.b16 %v578, %v575
      %v729 = vpack.c.b16 %v579, %v576
      %v730 = vpack.c.b16 %v583, %v580
      %v731 = vpack.c.b16 %v584, %v581
      %v732 = vpack.c.b16 %v585, %v582
      %v733 = vpack.c.b16 %v589, %v586
      %v734 = vpack.c.b16 %v590, %v587
      %v735 = vpack.c.b16 %v591, %v588
      %v736 = vpack.c.b16 %v595, %v592
      %v737 = vpack.c.b16 %v596, %v593
      %v738 = vpack.c.b16 %v597, %v594
      %v739 = vpack.c.b16 %v601, %v598
      %v740 = vpack.c.b16 %v602, %v599
      %v741 = vpack.c.b16 %v603, %v600
      %v742 = vpack.c.b16 %v607, %v604
      %v743 = vpack.c.b16 %v608, %v605
      %v744 = vpack.c.b16 %v609, %v606
      %v745 = vpack.c.b16 %v613, %v610
      %v746 = vpack.c.b16 %v614, %v611
      %v747 = vpack.c.b16 %v615, %v612
      %v748 = vpack.c.b16 %v619, %v616
      %v749 = vpack.c.b16 %v620, %v617
      %v750 = vpack.c.b16 %v621, %v618
      %v751 = vpack.c.b16 %v625, %v622
      %v752 = vpack.c.b16 %v626, %v623
      %v753 = vpack.c.b16 %v627, %v624
      %v754 = vpack.c.b16 %v631, %v628
      %v755 = vpack.c.b16 %v632, %v629
      %v756 = vpack.c.b16 %v633, %v630
      %v757 = vpack.c.b16 %v637, %v634
      %v758 = vpack.c.b16 %v638, %v635
      %v759 = vpack.c.b16 %v639, %v636
      %v760 = vpack.c.b16 %v643, %v640
      %v761 = vpack.c.b16 %v644, %v641
      %v762 = vpack.c.b16 %v645, %v642
      %v763 = vpack.c.b16 %v649, %v646
      %v764 = vpack.c.b16 %v650, %v647
      %v765 = vpack.c.b16 %v651, %v648
      %v766 = vpack.c.b16 %v655, %v652
      %v767 = vpack.c.b16 %v656, %v653
      %v768 = vpack.c.b16 %v657, %v654
      %v769 = vpack.c.b16 %v661, %v658
      %v770 = vpack.c.b16 %v662, %v659
      %v771 = vpack.c.b16 %v663, %v660
      %v772 = vpack.c.b16 %v667, %v664
      %v773 = vpack.c.b16 %v668, %v665
      %v774 = vpack.c.b16 %v669, %v666
      %v775 = vpack.c.b16 %v673, %v670
      %v776 = vpack.c.b16 %v674, %v671
      %v777 = vpack.c.b16 %v675, %v672
      %v778 = vpack.c.b16 %v679, %v676
      %v779 = vpack.c.b16 %v680, %v677
      %v780 = vpack.c.b16 %v681, %v678
      %v781 = vpack.c.b16 %v685, %v682
      %v782 = vpack.c.b16 %v686, %v683
      %v783 = vpack.c.b16 %v687, %v684
      %v928 = vunpack.c.l.b16 %v308
      %v929 = vunpack.c.h.b16 %v308
      %v930 = vunpack.c.l.b16 %v309
      %v931 = vunpack.c.h.b16 %v309
      %v932 = vunpack.c.l.b16 %v310
      %v933 = vunpack.c.h.b16 %v310
      %v934 = vunpack.c.l.b16 %v311
      %v935 = vunpack.c.h.b16 %v311
      %v936 = vunpack.c.l.b16 %v312
      %v937 = vunpack.c.h.b16 %v312
      %v938 = vunpack.c.l.b16 %v313
      %v939 = vunpack.c.h.b16 %v313
      %v940 = vunpack.c.l.b16 %v314
      %v941 = vunpack.c.h.b16 %v314
      %v942 = vunpack.c.l.b16 %v315
      %v943 = vunpack.c.h.b16 %v315
      %v944 = vunpack.c.l.b16 %v316
      %v945 = vunpack.c.h.b16 %v316
      %v946 = vunpack.c.l.b16 %v317
      %v947 = vunpack.c.h.b16 %v317
      %v948 = vunpack.c.l.b16 %v318
      %v949 = vunpack.c.h.b16 %v318
      %v950 = vunpack.c.l.b16 %v319
      %v951 = vunpack.c.h.b16 %v319
      %v952 = vunpack.c.l.b16 %v320
      %v953 = vunpack.c.h.b16 %v320
      %v954 = vunpack.c.l.b16 %v321
      %v955 = vunpack.c.h.b16 %v321
      %v956 = vunpack.c.l.b16 %v322
      %v957 = vunpack.c.h.b16 %v322
      %v958 = vunpack.c.l.b16 %v323
      %v959 = vunpack.c.h.b16 %v323
      %v960 = vunpack.c.l.b16 %v324
      %v961 = vunpack.c.h.b16 %v324
      %v962 = vunpack.c.l.b16 %v325
      %v963 = vunpack.c.h.b16 %v325
      %v964 = vunpack.c.l.b16 %v326
      %v965 = vunpack.c.h.b16 %v326
      %v966 = vunpack.c.l.b16 %v327
      %v967 = vunpack.c.h.b16 %v327
      %v968 = vunpack.c.l.b16 %v328
      %v969 = vunpack.c.h.b16 %v328
      %v970 = vunpack.c.l.b16 %v329
      %v971 = vunpack.c.h.b16 %v329
      %v972 = vunpack.c.l.b16 %v330
      %v973 = vunpack.c.h.b16 %v330
      %v974 = vunpack.c.l.b16 %v331
      %v975 = vunpack.c.h.b16 %v331
      %v976 = vunpack.c.l.b16 %v332
      %v977 = vunpack.c.h.b16 %v332
      %v978 = vunpack.c.l.b16 %v333
      %v979 = vunpack.c.h.b16 %v333
      %v980 = vunpack.c.l.b16 %v334
      %v981 = vunpack.c.h.b16 %v334
      %v982 = vunpack.c.l.b16 %v335
      %v983 = vunpack.c.h.b16 %v335
      %v984 = vunpack.c.l.b16 %v336
      %v985 = vunpack.c.h.b16 %v336
      %v986 = vunpack.c.l.b16 %v337
      %v987 = vunpack.c.h.b16 %v337
      %v988 = vunpack.c.l.b16 %v338
      %v989 = vunpack.c.h.b16 %v338
      %v990 = vunpack.c.l.b16 %v339
      %v991 = vunpack.c.h.b16 %v339
      %v992 = vunpack.c.l.b16 %v340
      %v993 = vunpack.c.h.b16 %v340
      %v994 = vunpack.c.l.b16 %v341
      %v995 = vunpack.c.h.b16 %v341
      %v996 = vunpack.c.l.b16 %v342
      %v997 = vunpack.c.h.b16 %v342
      %v998 = vunpack.c.l.b16 %v343
      %v999 = vunpack.c.h.b16 %v343
      %v1000 = vunpack.c.l.b16 %v344
      %v1001 = vunpack.c.h.b16 %v344
      %v1002 = vunpack.c.l.b16 %v345
      %v1003 = vunpack.c.h.b16 %v345
      %v1004 = vunpack.c.l.b16 %v346
      %v1005 = vunpack.c.h.b16 %v346
      %v1006 = vunpack.c.l.b16 %v347
      %v1007 = vunpack.c.h.b16 %v347
      %v1008 = vunpack.c.l.b16 %v348
      %v1009 = vunpack.c.h.b16 %v348
      %v1010 = vunpack.c.l.b16 %v349
      %v1011 = vunpack.c.h.b16 %v349
      %v1012 = vunpack.c.l.b16 %v350
      %v1013 = vunpack.c.h.b16 %v350
      %v1014 = vunpack.c.l.b16 %v351
      %v1015 = vunpack.c.h.b16 %v351
      %v1016 = vunpack.c.l.b16 %v352
      %v1017 = vunpack.c.h.b16 %v352
      %v1018 = vunpack.c.l.b16 %v353
      %v1019 = vunpack.c.h.b16 %v353
      %v1020 = vunpack.c.l.b16 %v354
      %v1021 = vunpack.c.h.b16 %v354
      %v1022 = vunpack.c.l.b16 %v355
      %v1023 = vunpack.c.h.b16 %v355
      %v1024 = vpack.c.b16 %v930, %v928
      %v1025 = vpack.c.b16 %v931, %v929
      %v1026 = vpack.c.b16 %v934, %v932
      %v1027 = vpack.c.b16 %v935, %v933
      %v1028 = vpack.c.b16 %v938, %v936
      %v1029 = vpack.c.b16 %v939, %v937
      %v1030 = vpack.c.b16 %v942, %v940
      %v1031 = vpack.c.b16 %v943, %v941
      %v1032 = vpack.c.b16 %v946, %v944
      %v1033 = vpack.c.b16 %v947, %v945
      %v1034 = vpack.c.b16 %v950, %v948
      %v1035 = vpack.c.b16 %v951, %v949
      %v1036 = vpack.c.b16 %v954, %v952
      %v1037 = vpack.c.b16 %v955, %v953
      %v1038 = vpack.c.b16 %v958, %v956
      %v1039 = vpack.c.b16 %v959, %v957
      %v1040 = vpack.c.b16 %v962, %v960
      %v1041 = vpack.c.b16 %v963, %v961
      %v1042 = vpack.c.b16 %v966, %v964
      %v1043 = vpack.c.b16 %v967, %v965
      %v1044 = vpack.c.b16 %v970, %v968
      %v1045 = vpack.c.b16 %v971, %v969
      %v1046 = vpack.c.b16 %v974, %v972
      %v1047 = vpack.c.b16 %v975, %v973
      %v1048 = vpack.c.b16 %v978, %v976
      %v1049 = vpack.c.b16 %v979, %v977
      %v1050 = vpack.c.b16 %v982, %v980
      %v1051 = vpack.c.b16 %v983, %v981
      %v1052 = vpack.c.b16 %v986, %v984
      %v1053 = vpack.c.b16 %v987, %v985
      %v1054 = vpack.c.b16 %v990, %v988
      %v1055 = vpack.c.b16 %v991, %v989
      %v1056 = vpack.c.b16 %v994, %v992
      %v1057 = vpack.c.b16 %v995, %v993
      %v1058 = vpack.c.b16 %v998, %v996
      %v1059 = vpack.c.b16 %v999, %v997
      %v1060 = vpack.c.b16 %v1002, %v1000
      %v1061 = vpack.c.b16 %v1003, %v1001
      %v1062 = vpack.c.b16 %v1006, %v1004
      %v1063 = vpack.c.b16 %v1007, %v1005
      %v1064 = vpack.c.b16 %v1010, %v1008
      %v1065 = vpack.c.b16 %v1011, %v1009
      %v1066 = vpack.c.b16 %v1014, %v1012
      %v1067 = vpack.c.b16 %v1015, %v1013
      %v1068 = vpack.c.b16 %v1018, %v1016
      %v1069 = vpack.c.b16 %v1019, %v1017
      %v1070 = vpack.c.b16 %v1022, %v1020
      %v1071 = vpack.c.b16 %v1023, %v1021
      %1120 = vmatprep.subr.bf16.mxu0 %v1039
      %1121 = vmatpush1.bf16.msra.mxu0 %v1038
      %1122 = vmatprep.subr.bf16.mxu0 %v1037
      %1123 = vmatpush1.bf16.msra.mxu0 %v1036
      %1124 = vmatprep.subr.bf16.mxu0 %v1035
      %1125 = vmatpush1.bf16.msra.mxu0 %v1034
      %1126 = vmatprep.subr.bf16.mxu0 %v1033
      %1127 = vmatpush1.bf16.msra.mxu0 %v1032
      %1128 = vmatprep.subr.bf16.mxu0 %v1031
      %1129 = vmatpush1.bf16.msra.mxu0 %v1030
      %1130 = vmatprep.subr.bf16.mxu0 %v1029
      %1131 = vmatpush1.bf16.msra.mxu0 %v1028
      %1132 = vmatprep.subr.bf16.mxu0 %v1027
      %1133 = vmatpush1.bf16.msra.mxu0 %v1026
      %1134 = vmatprep.subr.bf16.mxu0 %v1025
      %1135 = vmatpush1.bf16.msra.mxu0 %v1024
      %1136 = vmatprep.subr.bf16.mxu0 %v1055
      %1137 = vmatpush2.bf16.msra.mxu0 %v1054
      %1138 = vmatprep.subr.bf16.mxu0 %v1053
      %1139 = vmatpush2.bf16.msra.mxu0 %v1052
      %1140 = vmatprep.subr.bf16.mxu0 %v1051
      %1141 = vmatpush2.bf16.msra.mxu0 %v1050
      %1142 = vmatprep.subr.bf16.mxu0 %v1049
      %1143 = vmatpush2.bf16.msra.mxu0 %v1048
      %1144 = vmatprep.subr.bf16.mxu0 %v1047
      %1145 = vmatpush2.bf16.msra.mxu0 %v1046
      %1146 = vmatprep.subr.bf16.mxu0 %v1045
      %1147 = vmatpush2.bf16.msra.mxu0 %v1044
      %1148 = vmatprep.subr.bf16.mxu0 %v1043
      %1149 = vmatpush2.bf16.msra.mxu0 %v1042
      %1150 = vmatprep.subr.bf16.mxu0 %v1041
      %1151 = vmatpush2.bf16.msra.mxu0 %v1040
      %1152 = vmatprep.mubr.bf16.mxu0 %v689
      %1153 = vmatmul.mubr.bf16.gmra.mxu0 %v688
      %v1154 = vpop.f32.mrf.mxu0
      %v1155 = vadd.f32 %v361, %v1154
      %v1156 = vpop.f32.mrf.mxu0
      %v1157 = vadd.f32 %v365, %v1156
      %v1158 = vpop.f32.mrf.mxu0
      %v1159 = vadd.f32 %v361, %v1158
      %v1160 = vpop.f32.mrf.mxu0
      %v1161 = vadd.f32 %v365, %v1160
      %1162 = vmatprep.mubr.bf16.mxu0 %v692
      %1163 = vmatmul.mubr.bf16.gmra.mxu0 %v691
      %v1164 = vpop.f32.mrf.mxu0
      %v1165 = vadd.f32 %v361, %v1164
      %v1166 = vpop.f32.mrf.mxu0
      %v1167 = vadd.f32 %v365, %v1166
      %v1168 = vpop.f32.mrf.mxu0
      %v1169 = vadd.f32 %v361, %v1168
      %v1170 = vpop.f32.mrf.mxu0
      %v1171 = vadd.f32 %v365, %v1170
      %1172 = vmatprep.mubr.bf16.mxu0 %v695
      %1173 = vmatmul.mubr.bf16.gmra.mxu0 %v694
      %v1174 = vpop.f32.mrf.mxu0
      %v1175 = vadd.f32 %v361, %v1174
      %v1176 = vpop.f32.mrf.mxu0
      %v1177 = vadd.f32 %v365, %v1176
      %v1178 = vpop.f32.mrf.mxu0
      %v1179 = vadd.f32 %v361, %v1178
      %v1180 = vpop.f32.mrf.mxu0
      %v1181 = vadd.f32 %v365, %v1180
      %1182 = vmatprep.mubr.bf16.mxu0 %v698
      %1183 = vmatmul.mubr.bf16.gmra.mxu0 %v697
      %v1184 = vpop.f32.mrf.mxu0
      %v1185 = vadd.f32 %v361, %v1184
      %v1186 = vpop.f32.mrf.mxu0
      %v1187 = vadd.f32 %v365, %v1186
      %v1188 = vpop.f32.mrf.mxu0
      %v1189 = vadd.f32 %v361, %v1188
      %v1190 = vpop.f32.mrf.mxu0
      %v1191 = vadd.f32 %v365, %v1190
      %1192 = vmatprep.mubr.bf16.mxu0 %v701
      %1193 = vmatmul.mubr.bf16.gmra.mxu0 %v700
      %v1194 = vpop.f32.mrf.mxu0
      %v1195 = vadd.f32 %v361, %v1194
      %v1196 = vpop.f32.mrf.mxu0
      %v1197 = vadd.f32 %v365, %v1196
      %v1198 = vpop.f32.mrf.mxu0
      %v1199 = vadd.f32 %v361, %v1198
      %v1200 = vpop.f32.mrf.mxu0
      %v1201 = vadd.f32 %v365, %v1200
      %1202 = vmatprep.mubr.bf16.mxu0 %v704
      %1203 = vmatmul.mubr.bf16.gmra.mxu0 %v703
      %v1204 = vpop.f32.mrf.mxu0
      %v1205 = vadd.f32 %v361, %v1204
      %v1206 = vpop.f32.mrf.mxu0
      %v1207 = vadd.f32 %v365, %v1206
      %v1208 = vpop.f32.mrf.mxu0
      %v1209 = vadd.f32 %v361, %v1208
      %v1210 = vpop.f32.mrf.mxu0
      %v1211 = vadd.f32 %v365, %v1210
      %1212 = vmatprep.mubr.bf16.mxu0 %v707
      %1213 = vmatmul.mubr.bf16.gmra.mxu0 %v706
      %v1214 = vpop.f32.mrf.mxu0
      %v1215 = vadd.f32 %v361, %v1214
      %v1216 = vpop.f32.mrf.mxu0
      %v1217 = vadd.f32 %v365, %v1216
      %v1218 = vpop.f32.mrf.mxu0
      %v1219 = vadd.f32 %v361, %v1218
      %v1220 = vpop.f32.mrf.mxu0
      %v1221 = vadd.f32 %v365, %v1220
      %1222 = vmatprep.mubr.bf16.mxu0 %v710
      %1223 = vmatmul.mubr.bf16.gmra.mxu0 %v709
      %v1224 = vpop.f32.mrf.mxu0
      %v1225 = vadd.f32 %v361, %v1224
      %v1226 = vpop.f32.mrf.mxu0
      %v1227 = vadd.f32 %v365, %v1226
      %v1228 = vpop.f32.mrf.mxu0
      %v1229 = vadd.f32 %v361, %v1228
      %v1230 = vpop.f32.mrf.mxu0
      %v1231 = vadd.f32 %v365, %v1230
      %1232 = vmatprep.mubr.bf16.mxu0 %v713
      %1233 = vmatmul.mubr.bf16.gmra.mxu0 %v712
      %v1234 = vpop.f32.mrf.mxu0
      %v1235 = vadd.f32 %v361, %v1234
      %v1236 = vpop.f32.mrf.mxu0
      %v1237 = vadd.f32 %v365, %v1236
      %v1238 = vpop.f32.mrf.mxu0
      %v1239 = vadd.f32 %v361, %v1238
      %v1240 = vpop.f32.mrf.mxu0
      %v1241 = vadd.f32 %v365, %v1240
      %1242 = vmatprep.mubr.bf16.mxu0 %v716
      %1243 = vmatmul.mubr.bf16.gmra.mxu0 %v715
      %v1244 = vpop.f32.mrf.mxu0
      %v1245 = vadd.f32 %v361, %v1244
      %v1246 = vpop.f32.mrf.mxu0
      %v1247 = vadd.f32 %v365, %v1246
      %v1248 = vpop.f32.mrf.mxu0
      %v1249 = vadd.f32 %v361, %v1248
      %v1250 = vpop.f32.mrf.mxu0
      %v1251 = vadd.f32 %v365, %v1250
      %1252 = vmatprep.mubr.bf16.mxu0 %v719
      %1253 = vmatmul.mubr.bf16.gmra.mxu0 %v718
      %v1254 = vpop.f32.mrf.mxu0
      %v1255 = vadd.f32 %v361, %v1254
      %v1256 = vpop.f32.mrf.mxu0
      %v1257 = vadd.f32 %v365, %v1256
      %v1258 = vpop.f32.mrf.mxu0
      %v1259 = vadd.f32 %v361, %v1258
      %v1260 = vpop.f32.mrf.mxu0
      %v1261 = vadd.f32 %v365, %v1260
      %1262 = vmatprep.mubr.bf16.mxu0 %v722
      %1263 = vmatmul.mubr.bf16.gmra.mxu0 %v721
      %v1264 = vpop.f32.mrf.mxu0
      %v1265 = vadd.f32 %v361, %v1264
      %v1266 = vpop.f32.mrf.mxu0
      %v1267 = vadd.f32 %v365, %v1266
      %v1268 = vpop.f32.mrf.mxu0
      %v1269 = vadd.f32 %v361, %v1268
      %v1270 = vpop.f32.mrf.mxu0
      %v1271 = vadd.f32 %v365, %v1270
      %1272 = vmatprep.mubr.bf16.mxu0 %v725
      %1273 = vmatmul.mubr.bf16.gmra.mxu0 %v724
      %v1274 = vpop.f32.mrf.mxu0
      %v1275 = vadd.f32 %v361, %v1274
      %v1276 = vpop.f32.mrf.mxu0
      %v1277 = vadd.f32 %v365, %v1276
      %v1278 = vpop.f32.mrf.mxu0
      %v1279 = vadd.f32 %v361, %v1278
      %v1280 = vpop.f32.mrf.mxu0
      %v1281 = vadd.f32 %v365, %v1280
      %1282 = vmatprep.mubr.bf16.mxu0 %v728
      %1283 = vmatmul.mubr.bf16.gmra.mxu0 %v727
      %v1284 = vpop.f32.mrf.mxu0
      %v1285 = vadd.f32 %v361, %v1284
      %v1286 = vpop.f32.mrf.mxu0
      %v1287 = vadd.f32 %v365, %v1286
      %v1288 = vpop.f32.mrf.mxu0
      %v1289 = vadd.f32 %v361, %v1288
      %v1290 = vpop.f32.mrf.mxu0
      %v1291 = vadd.f32 %v365, %v1290
      %1292 = vmatprep.mubr.bf16.mxu0 %v731
      %1293 = vmatmul.mubr.bf16.gmra.mxu0 %v730
      %v1294 = vpop.f32.mrf.mxu0
      %v1295 = vadd.f32 %v361, %v1294
      %v1296 = vpop.f32.mrf.mxu0
      %v1297 = vadd.f32 %v365, %v1296
      %v1298 = vpop.f32.mrf.mxu0
      %v1299 = vadd.f32 %v361, %v1298
      %v1300 = vpop.f32.mrf.mxu0
      %v1301 = vadd.f32 %v365, %v1300
      %1302 = vmatprep.mubr.bf16.mxu0 %v734
      %1303 = vmatmul.mubr.bf16.gmra.mxu0 %v733
      %v1304 = vpop.f32.mrf.mxu0
      %v1305 = vadd.f32 %v361, %v1304
      %v1306 = vpop.f32.mrf.mxu0
      %v1307 = vadd.f32 %v365, %v1306
      %v1308 = vpop.f32.mrf.mxu0
      %v1309 = vadd.f32 %v361, %v1308
      %v1310 = vpop.f32.mrf.mxu0
      %v1311 = vadd.f32 %v365, %v1310
      %1312 = vmatprep.mubr.bf16.mxu0 %v737
      %1313 = vmatmul.mubr.bf16.gmra.mxu0 %v736
      %v1314 = vpop.f32.mrf.mxu0
      %v1315 = vadd.f32 %v361, %v1314
      %v1316 = vpop.f32.mrf.mxu0
      %v1317 = vadd.f32 %v365, %v1316
      %v1318 = vpop.f32.mrf.mxu0
      %v1319 = vadd.f32 %v361, %v1318
      %v1320 = vpop.f32.mrf.mxu0
      %v1321 = vadd.f32 %v365, %v1320
      %1322 = vmatprep.mubr.bf16.mxu0 %v740
      %1323 = vmatmul.mubr.bf16.gmra.mxu0 %v739
      %v1324 = vpop.f32.mrf.mxu0
      %v1325 = vadd.f32 %v361, %v1324
      %v1326 = vpop.f32.mrf.mxu0
      %v1327 = vadd.f32 %v365, %v1326
      %v1328 = vpop.f32.mrf.mxu0
      %v1329 = vadd.f32 %v361, %v1328
      %v1330 = vpop.f32.mrf.mxu0
      %v1331 = vadd.f32 %v365, %v1330
      %1332 = vmatprep.mubr.bf16.mxu0 %v743
      %1333 = vmatmul.mubr.bf16.gmra.mxu0 %v742
      %v1334 = vpop.f32.mrf.mxu0
      %v1335 = vadd.f32 %v361, %v1334
      %v1336 = vpop.f32.mrf.mxu0
      %v1337 = vadd.f32 %v365, %v1336
      %v1338 = vpop.f32.mrf.mxu0
      %v1339 = vadd.f32 %v361, %v1338
      %v1340 = vpop.f32.mrf.mxu0
      %v1341 = vadd.f32 %v365, %v1340
      %1342 = vmatprep.mubr.bf16.mxu0 %v746
      %1343 = vmatmul.mubr.bf16.gmra.mxu0 %v745
      %v1344 = vpop.f32.mrf.mxu0
      %v1345 = vadd.f32 %v361, %v1344
      %v1346 = vpop.f32.mrf.mxu0
      %v1347 = vadd.f32 %v365, %v1346
      %v1348 = vpop.f32.mrf.mxu0
      %v1349 = vadd.f32 %v361, %v1348
      %v1350 = vpop.f32.mrf.mxu0
      %v1351 = vadd.f32 %v365, %v1350
      %1352 = vmatprep.mubr.bf16.mxu0 %v749
      %1353 = vmatmul.mubr.bf16.gmra.mxu0 %v748
      %v1354 = vpop.f32.mrf.mxu0
      %v1355 = vadd.f32 %v361, %v1354
      %v1356 = vpop.f32.mrf.mxu0
      %v1357 = vadd.f32 %v365, %v1356
      %v1358 = vpop.f32.mrf.mxu0
      %v1359 = vadd.f32 %v361, %v1358
      %v1360 = vpop.f32.mrf.mxu0
      %v1361 = vadd.f32 %v365, %v1360
      %1362 = vmatprep.mubr.bf16.mxu0 %v752
      %1363 = vmatmul.mubr.bf16.gmra.mxu0 %v751
      %v1364 = vpop.f32.mrf.mxu0
      %v1365 = vadd.f32 %v361, %v1364
      %v1366 = vpop.f32.mrf.mxu0
      %v1367 = vadd.f32 %v365, %v1366
      %v1368 = vpop.f32.mrf.mxu0
      %v1369 = vadd.f32 %v361, %v1368
      %v1370 = vpop.f32.mrf.mxu0
      %v1371 = vadd.f32 %v365, %v1370
      %1372 = vmatprep.mubr.bf16.mxu0 %v755
      %1373 = vmatmul.mubr.bf16.gmra.mxu0 %v754
      %v1374 = vpop.f32.mrf.mxu0
      %v1375 = vadd.f32 %v361, %v1374
      %v1376 = vpop.f32.mrf.mxu0
      %v1377 = vadd.f32 %v365, %v1376
      %v1378 = vpop.f32.mrf.mxu0
      %v1379 = vadd.f32 %v361, %v1378
      %v1380 = vpop.f32.mrf.mxu0
      %v1381 = vadd.f32 %v365, %v1380
      %1382 = vmatprep.mubr.bf16.mxu0 %v758
      %1383 = vmatmul.mubr.bf16.gmra.mxu0 %v757
      %v1384 = vpop.f32.mrf.mxu0
      %v1385 = vadd.f32 %v361, %v1384
      %v1386 = vpop.f32.mrf.mxu0
      %v1387 = vadd.f32 %v365, %v1386
      %v1388 = vpop.f32.mrf.mxu0
      %v1389 = vadd.f32 %v361, %v1388
      %v1390 = vpop.f32.mrf.mxu0
      %v1391 = vadd.f32 %v365, %v1390
      %1392 = vmatprep.mubr.bf16.mxu0 %v761
      %1393 = vmatmul.mubr.bf16.gmra.mxu0 %v760
      %v1394 = vpop.f32.mrf.mxu0
      %v1395 = vadd.f32 %v361, %v1394
      %v1396 = vpop.f32.mrf.mxu0
      %v1397 = vadd.f32 %v365, %v1396
      %v1398 = vpop.f32.mrf.mxu0
      %v1399 = vadd.f32 %v361, %v1398
      %v1400 = vpop.f32.mrf.mxu0
      %v1401 = vadd.f32 %v365, %v1400
      %1402 = vmatprep.mubr.bf16.mxu0 %v764
      %1403 = vmatmul.mubr.bf16.gmra.mxu0 %v763
      %v1404 = vpop.f32.mrf.mxu0
      %v1405 = vadd.f32 %v361, %v1404
      %v1406 = vpop.f32.mrf.mxu0
      %v1407 = vadd.f32 %v365, %v1406
      %v1408 = vpop.f32.mrf.mxu0
      %v1409 = vadd.f32 %v361, %v1408
      %v1410 = vpop.f32.mrf.mxu0
      %v1411 = vadd.f32 %v365, %v1410
      %1412 = vmatprep.mubr.bf16.mxu0 %v767
      %1413 = vmatmul.mubr.bf16.gmra.mxu0 %v766
      %v1414 = vpop.f32.mrf.mxu0
      %v1415 = vadd.f32 %v361, %v1414
      %v1416 = vpop.f32.mrf.mxu0
      %v1417 = vadd.f32 %v365, %v1416
      %v1418 = vpop.f32.mrf.mxu0
      %v1419 = vadd.f32 %v361, %v1418
      %v1420 = vpop.f32.mrf.mxu0
      %v1421 = vadd.f32 %v365, %v1420
      %1422 = vmatprep.mubr.bf16.mxu0 %v770
      %1423 = vmatmul.mubr.bf16.gmra.mxu0 %v769
      %v1424 = vpop.f32.mrf.mxu0
      %v1425 = vadd.f32 %v361, %v1424
      %v1426 = vpop.f32.mrf.mxu0
      %v1427 = vadd.f32 %v365, %v1426
      %v1428 = vpop.f32.mrf.mxu0
      %v1429 = vadd.f32 %v361, %v1428
      %v1430 = vpop.f32.mrf.mxu0
      %v1431 = vadd.f32 %v365, %v1430
      %1432 = vmatprep.mubr.bf16.mxu0 %v773
      %1433 = vmatmul.mubr.bf16.gmra.mxu0 %v772
      %v1434 = vpop.f32.mrf.mxu0
      %v1435 = vadd.f32 %v361, %v1434
      %v1436 = vpop.f32.mrf.mxu0
      %v1437 = vadd.f32 %v365, %v1436
      %v1438 = vpop.f32.mrf.mxu0
      %v1439 = vadd.f32 %v361, %v1438
      %v1440 = vpop.f32.mrf.mxu0
      %v1441 = vadd.f32 %v365, %v1440
      %1442 = vmatprep.mubr.bf16.mxu0 %v776
      %1443 = vmatmul.mubr.bf16.gmra.mxu0 %v775
      %v1444 = vpop.f32.mrf.mxu0
      %v1445 = vadd.f32 %v361, %v1444
      %v1446 = vpop.f32.mrf.mxu0
      %v1447 = vadd.f32 %v365, %v1446
      %v1448 = vpop.f32.mrf.mxu0
      %v1449 = vadd.f32 %v361, %v1448
      %v1450 = vpop.f32.mrf.mxu0
      %v1451 = vadd.f32 %v365, %v1450
      %1452 = vmatprep.mubr.bf16.mxu0 %v779
      %1453 = vmatmul.mubr.bf16.gmra.mxu0 %v778
      %v1454 = vpop.f32.mrf.mxu0
      %v1455 = vadd.f32 %v361, %v1454
      %v1456 = vpop.f32.mrf.mxu0
      %v1457 = vadd.f32 %v365, %v1456
      %v1458 = vpop.f32.mrf.mxu0
      %v1459 = vadd.f32 %v361, %v1458
      %v1460 = vpop.f32.mrf.mxu0
      %v1461 = vadd.f32 %v365, %v1460
      %1462 = vmatprep.mubr.bf16.mxu0 %v782
      %1463 = vmatmul.mubr.bf16.gmra.mxu0 %v781
      %v1464 = vpop.f32.mrf.mxu0
      %v1465 = vadd.f32 %v361, %v1464
      %v1466 = vpop.f32.mrf.mxu0
      %v1467 = vadd.f32 %v365, %v1466
      %v1468 = vpop.f32.mrf.mxu0
      %v1469 = vadd.f32 %v361, %v1468
      %v1470 = vpop.f32.mrf.mxu0
      %v1471 = vadd.f32 %v365, %v1470
      %1472 = vdwg.mxu0
      %1473 = vmatprep.subr.bf16.mxu0 %v1071
      %1474 = vmatpush1.bf16.msra.mxu0 %v1070
      %1475 = vmatprep.subr.bf16.mxu0 %v1069
      %1476 = vmatpush1.bf16.msra.mxu0 %v1068
      %1477 = vmatprep.subr.bf16.mxu0 %v1067
      %1478 = vmatpush1.bf16.msra.mxu0 %v1066
      %1479 = vmatprep.subr.bf16.mxu0 %v1065
      %1480 = vmatpush1.bf16.msra.mxu0 %v1064
      %1481 = vmatprep.subr.bf16.mxu0 %v1063
      %1482 = vmatpush1.bf16.msra.mxu0 %v1062
      %1483 = vmatprep.subr.bf16.mxu0 %v1061
      %1484 = vmatpush1.bf16.msra.mxu0 %v1060
      %1485 = vmatprep.subr.bf16.mxu0 %v1059
      %1486 = vmatpush1.bf16.msra.mxu0 %v1058
      %1487 = vmatprep.subr.bf16.mxu0 %v1057
      %1488 = vmatpush1.bf16.msra.mxu0 %v1056
      %1489 = vmatprep.subr.bf16.mxu0 0
      %1490 = vmatpush2.bf16.msra.mxu0 0
      %1491 = vmatprep.subr.bf16.mxu0 0
      %1492 = vmatpush2.bf16.msra.mxu0 0
      %1493 = vmatprep.subr.bf16.mxu0 0
      %1494 = vmatpush2.bf16.msra.mxu0 0
      %1495 = vmatprep.subr.bf16.mxu0 0
      %1496 = vmatpush2.bf16.msra.mxu0 0
      %1497 = vmatprep.subr.bf16.mxu0 0
      %1498 = vmatpush2.bf16.msra.mxu0 0
      %1499 = vmatprep.subr.bf16.mxu0 0
      %1500 = vmatpush2.bf16.msra.mxu0 0
      %1501 = vmatprep.subr.bf16.mxu0 0
      %1502 = vmatpush2.bf16.msra.mxu0 0
      %1503 = vmatprep.subr.bf16.mxu0 0
      %1504 = vmatpush2.bf16.msra.mxu0 0
      %1505 = vmatprep.mubr.bf16.mxu0 0
      %1506 = vmatmul.mubr.bf16.gmra.mxu0 %v690
      %v1507 = vpop.f32.mrf.mxu0
      %v1508 = vadd.f32 %v1155, %v1507
      %v1509 = vpop.f32.mrf.mxu0
      %v1510 = vadd.f32 %v1157, %v1509
      %v1511 = vpop.f32.mrf.mxu0
      %v1512 = vadd.f32 %v1159, %v1511
      %v1513 = vpop.f32.mrf.mxu0
      %v1514 = vadd.f32 %v1161, %v1513
      %1515 = vmatprep.mubr.bf16.mxu0 0
      %1516 = vmatmul.mubr.bf16.gmra.mxu0 %v693
      %v1517 = vpop.f32.mrf.mxu0
      %v1518 = vadd.f32 %v1165, %v1517
      %v1519 = vpop.f32.mrf.mxu0
      %v1520 = vadd.f32 %v1167, %v1519
      %v1521 = vpop.f32.mrf.mxu0
      %v1522 = vadd.f32 %v1169, %v1521
      %v1523 = vpop.f32.mrf.mxu0
      %v1524 = vadd.f32 %v1171, %v1523
      %1525 = vmatprep.mubr.bf16.mxu0 0
      %1526 = vmatmul.mubr.bf16.gmra.mxu0 %v696
      %v1527 = vpop.f32.mrf.mxu0
      %v1528 = vadd.f32 %v1175, %v1527
      %v1529 = vpop.f32.mrf.mxu0
      %v1530 = vadd.f32 %v1177, %v1529
      %v1531 = vpop.f32.mrf.mxu0
      %v1532 = vadd.f32 %v1179, %v1531
      %v1533 = vpop.f32.mrf.mxu0
      %v1534 = vadd.f32 %v1181, %v1533
      %1535 = vmatprep.mubr.bf16.mxu0 0
      %1536 = vmatmul.mubr.bf16.gmra.mxu0 %v699
      %v1537 = vpop.f32.mrf.mxu0
      %v1538 = vadd.f32 %v1185, %v1537
      %v1539 = vpop.f32.mrf.mxu0
      %v1540 = vadd.f32 %v1187, %v1539
      %v1541 = vpop.f32.mrf.mxu0
      %v1542 = vadd.f32 %v1189, %v1541
      %v1543 = vpop.f32.mrf.mxu0
      %v1544 = vadd.f32 %v1191, %v1543
      %1545 = vmatprep.mubr.bf16.mxu0 0
      %1546 = vmatmul.mubr.bf16.gmra.mxu0 %v702
      %v1547 = vpop.f32.mrf.mxu0
      %v1548 = vadd.f32 %v1195, %v1547
      %v1549 = vpop.f32.mrf.mxu0
      %v1550 = vadd.f32 %v1197, %v1549
      %v1551 = vpop.f32.mrf.mxu0
      %v1552 = vadd.f32 %v1199, %v1551
      %v1553 = vpop.f32.mrf.mxu0
      %v1554 = vadd.f32 %v1201, %v1553
      %1555 = vmatprep.mubr.bf16.mxu0 0
      %1556 = vmatmul.mubr.bf16.gmra.mxu0 %v705
      %v1557 = vpop.f32.mrf.mxu0
      %v1558 = vadd.f32 %v1205, %v1557
      %v1559 = vpop.f32.mrf.mxu0
      %v1560 = vadd.f32 %v1207, %v1559
      %v1561 = vpop.f32.mrf.mxu0
      %v1562 = vadd.f32 %v1209, %v1561
      %v1563 = vpop.f32.mrf.mxu0
      %v1564 = vadd.f32 %v1211, %v1563
      %1565 = vmatprep.mubr.bf16.mxu0 0
      %1566 = vmatmul.mubr.bf16.gmra.mxu0 %v708
      %v1567 = vpop.f32.mrf.mxu0
      %v1568 = vadd.f32 %v1215, %v1567
      %v1569 = vpop.f32.mrf.mxu0
      %v1570 = vadd.f32 %v1217, %v1569
      %v1571 = vpop.f32.mrf.mxu0
      %v1572 = vadd.f32 %v1219, %v1571
      %v1573 = vpop.f32.mrf.mxu0
      %v1574 = vadd.f32 %v1221, %v1573
      %1575 = vmatprep.mubr.bf16.mxu0 0
      %1576 = vmatmul.mubr.bf16.gmra.mxu0 %v711
      %v1577 = vpop.f32.mrf.mxu0
      %v1578 = vadd.f32 %v1225, %v1577
      %v1579 = vpop.f32.mrf.mxu0
      %v1580 = vadd.f32 %v1227, %v1579
      %v1581 = vpop.f32.mrf.mxu0
      %v1582 = vadd.f32 %v1229, %v1581
      %v1583 = vpop.f32.mrf.mxu0
      %v1584 = vadd.f32 %v1231, %v1583
      %1585 = vmatprep.mubr.bf16.mxu0 0
      %1586 = vmatmul.mubr.bf16.gmra.mxu0 %v714
      %v1587 = vpop.f32.mrf.mxu0
      %v1588 = vadd.f32 %v1235, %v1587
      %v1589 = vpop.f32.mrf.mxu0
      %v1590 = vadd.f32 %v1237, %v1589
      %v1591 = vpop.f32.mrf.mxu0
      %v1592 = vadd.f32 %v1239, %v1591
      %v1593 = vpop.f32.mrf.mxu0
      %v1594 = vadd.f32 %v1241, %v1593
      %1595 = vmatprep.mubr.bf16.mxu0 0
      %1596 = vmatmul.mubr.bf16.gmra.mxu0 %v717
      %v1597 = vpop.f32.mrf.mxu0
      %v1598 = vadd.f32 %v1245, %v1597
      %v1599 = vpop.f32.mrf.mxu0
      %v1600 = vadd.f32 %v1247, %v1599
      %v1601 = vpop.f32.mrf.mxu0
      %v1602 = vadd.f32 %v1249, %v1601
      %v1603 = vpop.f32.mrf.mxu0
      %v1604 = vadd.f32 %v1251, %v1603
      %1605 = vmatprep.mubr.bf16.mxu0 0
      %1606 = vmatmul.mubr.bf16.gmra.mxu0 %v720
      %v1607 = vpop.f32.mrf.mxu0
      %v1608 = vadd.f32 %v1255, %v1607
      %v1609 = vpop.f32.mrf.mxu0
      %v1610 = vadd.f32 %v1257, %v1609
      %v1611 = vpop.f32.mrf.mxu0
      %v1612 = vadd.f32 %v1259, %v1611
      %v1613 = vpop.f32.mrf.mxu0
      %v1614 = vadd.f32 %v1261, %v1613
      %1615 = vmatprep.mubr.bf16.mxu0 0
      %1616 = vmatmul.mubr.bf16.gmra.mxu0 %v723
      %v1617 = vpop.f32.mrf.mxu0
      %v1618 = vadd.f32 %v1265, %v1617
      %v1619 = vpop.f32.mrf.mxu0
      %v1620 = vadd.f32 %v1267, %v1619
      %v1621 = vpop.f32.mrf.mxu0
      %v1622 = vadd.f32 %v1269, %v1621
      %v1623 = vpop.f32.mrf.mxu0
      %v1624 = vadd.f32 %v1271, %v1623
      %1625 = vmatprep.mubr.bf16.mxu0 0
      %1626 = vmatmul.mubr.bf16.gmra.mxu0 %v726
      %v1627 = vpop.f32.mrf.mxu0
      %v1628 = vadd.f32 %v1275, %v1627
      %v1629 = vpop.f32.mrf.mxu0
      %v1630 = vadd.f32 %v1277, %v1629
      %v1631 = vpop.f32.mrf.mxu0
      %v1632 = vadd.f32 %v1279, %v1631
      %v1633 = vpop.f32.mrf.mxu0
      %v1634 = vadd.f32 %v1281, %v1633
      %1635 = vmatprep.mubr.bf16.mxu0 0
      %1636 = vmatmul.mubr.bf16.gmra.mxu0 %v729
      %v1637 = vpop.f32.mrf.mxu0
      %v1638 = vadd.f32 %v1285, %v1637
      %v1639 = vpop.f32.mrf.mxu0
      %v1640 = vadd.f32 %v1287, %v1639
      %v1641 = vpop.f32.mrf.mxu0
      %v1642 = vadd.f32 %v1289, %v1641
      %v1643 = vpop.f32.mrf.mxu0
      %v1644 = vadd.f32 %v1291, %v1643
      %1645 = vmatprep.mubr.bf16.mxu0 0
      %1646 = vmatmul.mubr.bf16.gmra.mxu0 %v732
      %v1647 = vpop.f32.mrf.mxu0
      %v1648 = vadd.f32 %v1295, %v1647
      %v1649 = vpop.f32.mrf.mxu0
      %v1650 = vadd.f32 %v1297, %v1649
      %v1651 = vpop.f32.mrf.mxu0
      %v1652 = vadd.f32 %v1299, %v1651
      %v1653 = vpop.f32.mrf.mxu0
      %v1654 = vadd.f32 %v1301, %v1653
      %1655 = vmatprep.mubr.bf16.mxu0 0
      %1656 = vmatmul.mubr.bf16.gmra.mxu0 %v735
      %v1657 = vpop.f32.mrf.mxu0
      %v1658 = vadd.f32 %v1305, %v1657
      %v1659 = vpop.f32.mrf.mxu0
      %v1660 = vadd.f32 %v1307, %v1659
      %v1661 = vpop.f32.mrf.mxu0
      %v1662 = vadd.f32 %v1309, %v1661
      %v1663 = vpop.f32.mrf.mxu0
      %v1664 = vadd.f32 %v1311, %v1663
      %1665 = vmatprep.mubr.bf16.mxu0 0
      %1666 = vmatmul.mubr.bf16.gmra.mxu0 %v738
      %v1667 = vpop.f32.mrf.mxu0
      %v1668 = vadd.f32 %v1315, %v1667
      %v1669 = vpop.f32.mrf.mxu0
      %v1670 = vadd.f32 %v1317, %v1669
      %v1671 = vpop.f32.mrf.mxu0
      %v1672 = vadd.f32 %v1319, %v1671
      %v1673 = vpop.f32.mrf.mxu0
      %v1674 = vadd.f32 %v1321, %v1673
      %1675 = vmatprep.mubr.bf16.mxu0 0
      %1676 = vmatmul.mubr.bf16.gmra.mxu0 %v741
      %v1677 = vpop.f32.mrf.mxu0
      %v1678 = vadd.f32 %v1325, %v1677
      %v1679 = vpop.f32.mrf.mxu0
      %v1680 = vadd.f32 %v1327, %v1679
      %v1681 = vpop.f32.mrf.mxu0
      %v1682 = vadd.f32 %v1329, %v1681
      %v1683 = vpop.f32.mrf.mxu0
      %v1684 = vadd.f32 %v1331, %v1683
      %1685 = vmatprep.mubr.bf16.mxu0 0
      %1686 = vmatmul.mubr.bf16.gmra.mxu0 %v744
      %v1687 = vpop.f32.mrf.mxu0
      %v1688 = vadd.f32 %v1335, %v1687
      %v1689 = vpop.f32.mrf.mxu0
      %v1690 = vadd.f32 %v1337, %v1689
      %v1691 = vpop.f32.mrf.mxu0
      %v1692 = vadd.f32 %v1339, %v1691
      %v1693 = vpop.f32.mrf.mxu0
      %v1694 = vadd.f32 %v1341, %v1693
      %1695 = vmatprep.mubr.bf16.mxu0 0
      %1696 = vmatmul.mubr.bf16.gmra.mxu0 %v747
      %v1697 = vpop.f32.mrf.mxu0
      %v1698 = vadd.f32 %v1345, %v1697
      %v1699 = vpop.f32.mrf.mxu0
      %v1700 = vadd.f32 %v1347, %v1699
      %v1701 = vpop.f32.mrf.mxu0
      %v1702 = vadd.f32 %v1349, %v1701
      %v1703 = vpop.f32.mrf.mxu0
      %v1704 = vadd.f32 %v1351, %v1703
      %1705 = vmatprep.mubr.bf16.mxu0 0
      %1706 = vmatmul.mubr.bf16.gmra.mxu0 %v750
      %v1707 = vpop.f32.mrf.mxu0
      %v1708 = vadd.f32 %v1355, %v1707
      %v1709 = vpop.f32.mrf.mxu0
      %v1710 = vadd.f32 %v1357, %v1709
      %v1711 = vpop.f32.mrf.mxu0
      %v1712 = vadd.f32 %v1359, %v1711
      %v1713 = vpop.f32.mrf.mxu0
      %v1714 = vadd.f32 %v1361, %v1713
      %1715 = vmatprep.mubr.bf16.mxu0 0
      %1716 = vmatmul.mubr.bf16.gmra.mxu0 %v753
      %v1717 = vpop.f32.mrf.mxu0
      %v1718 = vadd.f32 %v1365, %v1717
      %v1719 = vpop.f32.mrf.mxu0
      %v1720 = vadd.f32 %v1367, %v1719
      %v1721 = vpop.f32.mrf.mxu0
      %v1722 = vadd.f32 %v1369, %v1721
      %v1723 = vpop.f32.mrf.mxu0
      %v1724 = vadd.f32 %v1371, %v1723
      %1725 = vmatprep.mubr.bf16.mxu0 0
      %1726 = vmatmul.mubr.bf16.gmra.mxu0 %v756
      %v1727 = vpop.f32.mrf.mxu0
      %v1728 = vadd.f32 %v1375, %v1727
      %v1729 = vpop.f32.mrf.mxu0
      %v1730 = vadd.f32 %v1377, %v1729
      %v1731 = vpop.f32.mrf.mxu0
      %v1732 = vadd.f32 %v1379, %v1731
      %v1733 = vpop.f32.mrf.mxu0
      %v1734 = vadd.f32 %v1381, %v1733
      %1735 = vmatprep.mubr.bf16.mxu0 0
      %1736 = vmatmul.mubr.bf16.gmra.mxu0 %v759
      %v1737 = vpop.f32.mrf.mxu0
      %v1738 = vadd.f32 %v1385, %v1737
      %v1739 = vpop.f32.mrf.mxu0
      %v1740 = vadd.f32 %v1387, %v1739
      %v1741 = vpop.f32.mrf.mxu0
      %v1742 = vadd.f32 %v1389, %v1741
      %v1743 = vpop.f32.mrf.mxu0
      %v1744 = vadd.f32 %v1391, %v1743
      %1745 = vmatprep.mubr.bf16.mxu0 0
      %1746 = vmatmul.mubr.bf16.gmra.mxu0 %v762
      %v1747 = vpop.f32.mrf.mxu0
      %v1748 = vadd.f32 %v1395, %v1747
      %v1749 = vpop.f32.mrf.mxu0
      %v1750 = vadd.f32 %v1397, %v1749
      %v1751 = vpop.f32.mrf.mxu0
      %v1752 = vadd.f32 %v1399, %v1751
      %v1753 = vpop.f32.mrf.mxu0
      %v1754 = vadd.f32 %v1401, %v1753
      %1755 = vmatprep.mubr.bf16.mxu0 0
      %1756 = vmatmul.mubr.bf16.gmra.mxu0 %v765
      %v1757 = vpop.f32.mrf.mxu0
      %v1758 = vadd.f32 %v1405, %v1757
      %v1759 = vpop.f32.mrf.mxu0
      %v1760 = vadd.f32 %v1407, %v1759
      %v1761 = vpop.f32.mrf.mxu0
      %v1762 = vadd.f32 %v1409, %v1761
      %v1763 = vpop.f32.mrf.mxu0
      %v1764 = vadd.f32 %v1411, %v1763
      %1765 = vmatprep.mubr.bf16.mxu0 0
      %1766 = vmatmul.mubr.bf16.gmra.mxu0 %v768
      %v1767 = vpop.f32.mrf.mxu0
      %v1768 = vadd.f32 %v1415, %v1767
      %v1769 = vpop.f32.mrf.mxu0
      %v1770 = vadd.f32 %v1417, %v1769
      %v1771 = vpop.f32.mrf.mxu0
      %v1772 = vadd.f32 %v1419, %v1771
      %v1773 = vpop.f32.mrf.mxu0
      %v1774 = vadd.f32 %v1421, %v1773
      %1775 = vmatprep.mubr.bf16.mxu0 0
      %1776 = vmatmul.mubr.bf16.gmra.mxu0 %v771
      %v1777 = vpop.f32.mrf.mxu0
      %v1778 = vadd.f32 %v1425, %v1777
      %v1779 = vpop.f32.mrf.mxu0
      %v1780 = vadd.f32 %v1427, %v1779
      %v1781 = vpop.f32.mrf.mxu0
      %v1782 = vadd.f32 %v1429, %v1781
      %v1783 = vpop.f32.mrf.mxu0
      %v1784 = vadd.f32 %v1431, %v1783
      %1785 = vmatprep.mubr.bf16.mxu0 0
      %1786 = vmatmul.mubr.bf16.gmra.mxu0 %v774
      %v1787 = vpop.f32.mrf.mxu0
      %v1788 = vadd.f32 %v1435, %v1787
      %v1789 = vpop.f32.mrf.mxu0
      %v1790 = vadd.f32 %v1437, %v1789
      %v1791 = vpop.f32.mrf.mxu0
      %v1792 = vadd.f32 %v1439, %v1791
      %v1793 = vpop.f32.mrf.mxu0
      %v1794 = vadd.f32 %v1441, %v1793
      %1795 = vmatprep.mubr.bf16.mxu0 0
      %1796 = vmatmul.mubr.bf16.gmra.mxu0 %v777
      %v1797 = vpop.f32.mrf.mxu0
      %v1798 = vadd.f32 %v1445, %v1797
      %v1799 = vpop.f32.mrf.mxu0
      %v1800 = vadd.f32 %v1447, %v1799
      %v1801 = vpop.f32.mrf.mxu0
      %v1802 = vadd.f32 %v1449, %v1801
      %v1803 = vpop.f32.mrf.mxu0
      %v1804 = vadd.f32 %v1451, %v1803
      %1805 = vmatprep.mubr.bf16.mxu0 0
      %1806 = vmatmul.mubr.bf16.gmra.mxu0 %v780
      %v1807 = vpop.f32.mrf.mxu0
      %v1808 = vadd.f32 %v1455, %v1807
      %v1809 = vpop.f32.mrf.mxu0
      %v1810 = vadd.f32 %v1457, %v1809
      %v1811 = vpop.f32.mrf.mxu0
      %v1812 = vadd.f32 %v1459, %v1811
      %v1813 = vpop.f32.mrf.mxu0
      %v1814 = vadd.f32 %v1461, %v1813
      %1815 = vmatprep.mubr.bf16.mxu0 0
      %1816 = vmatmul.mubr.bf16.gmra.mxu0 %v783
      %v1817 = vpop.f32.mrf.mxu0
      %v1818 = vadd.f32 %v1465, %v1817
      %v1819 = vpop.f32.mrf.mxu0
      %v1820 = vadd.f32 %v1467, %v1819
      %v1821 = vpop.f32.mrf.mxu0
      %v1822 = vadd.f32 %v1469, %v1821
      %v1823 = vpop.f32.mrf.mxu0
      %v1824 = vadd.f32 %v1471, %v1823
      %1825 = vdwg.mxu0
      %v1826 = vmul.f32 %v1508, 0.01
      %v1827 = vmul.f32 %v1510, 0.01
      %v1828 = vmul.f32 %v1512, 0.01
      %v1829 = vmul.f32 %v1514, 0.01
      %v1830 = vmul.f32 %v1518, 0.01
      %v1831 = vmul.f32 %v1520, 0.01
      %v1832 = vmul.f32 %v1522, 0.01
      %v1833 = vmul.f32 %v1524, 0.01
      %v1834 = vmul.f32 %v1528, 0.01
      %v1835 = vmul.f32 %v1530, 0.01
      %v1836 = vmul.f32 %v1532, 0.01
      %v1837 = vmul.f32 %v1534, 0.01
      %v1838 = vmul.f32 %v1538, 0.01
      %v1839 = vmul.f32 %v1540, 0.01
      %v1840 = vmul.f32 %v1542, 0.01
      %v1841 = vmul.f32 %v1544, 0.01
      %v1842 = vmul.f32 %v1548, 0.01
      %v1843 = vmul.f32 %v1550, 0.01
      %v1844 = vmul.f32 %v1552, 0.01
      %v1845 = vmul.f32 %v1554, 0.01
      %v1846 = vmul.f32 %v1558, 0.01
      %v1847 = vmul.f32 %v1560, 0.01
      %v1848 = vmul.f32 %v1562, 0.01
      %v1849 = vmul.f32 %v1564, 0.01
      %v1850 = vmul.f32 %v1568, 0.01
      %v1851 = vmul.f32 %v1570, 0.01
      %v1852 = vmul.f32 %v1572, 0.01
      %v1853 = vmul.f32 %v1574, 0.01
      %v1854 = vmul.f32 %v1578, 0.01
      %v1855 = vmul.f32 %v1580, 0.01
      %v1856 = vmul.f32 %v1582, 0.01
      %v1857 = vmul.f32 %v1584, 0.01
      %v1858 = vmul.f32 %v1588, 0.01
      %v1859 = vmul.f32 %v1590, 0.01
      %v1860 = vmul.f32 %v1592, 0.01
      %v1861 = vmul.f32 %v1594, 0.01
      %v1862 = vmul.f32 %v1598, 0.01
      %v1863 = vmul.f32 %v1600, 0.01
      %v1864 = vmul.f32 %v1602, 0.01
      %v1865 = vmul.f32 %v1604, 0.01
      %v1866 = vmul.f32 %v1608, 0.01
      %v1867 = vmul.f32 %v1610, 0.01
      %v1868 = vmul.f32 %v1612, 0.01
      %v1869 = vmul.f32 %v1614, 0.01
      %v1870 = vmul.f32 %v1618, 0.01
      %v1871 = vmul.f32 %v1620, 0.01
      %v1872 = vmul.f32 %v1622, 0.01
      %v1873 = vmul.f32 %v1624, 0.01
      %v1874 = vmul.f32 %v1628, 0.01
      %v1875 = vmul.f32 %v1630, 0.01
      %v1876 = vmul.f32 %v1632, 0.01
      %v1877 = vmul.f32 %v1634, 0.01
      %v1878 = vmul.f32 %v1638, 0.01
      %v1879 = vmul.f32 %v1640, 0.01
      %v1880 = vmul.f32 %v1642, 0.01
      %v1881 = vmul.f32 %v1644, 0.01
      %v1882 = vmul.f32 %v1648, 0.01
      %v1883 = vmul.f32 %v1650, 0.01
      %v1884 = vmul.f32 %v1652, 0.01
      %v1885 = vmul.f32 %v1654, 0.01
      %v1886 = vmul.f32 %v1658, 0.01
      %v1887 = vmul.f32 %v1660, 0.01
      %v1888 = vmul.f32 %v1662, 0.01
      %v1889 = vmul.f32 %v1664, 0.01
      %v1890 = vmul.f32 %v1668, 0.01
      %v1891 = vmul.f32 %v1670, 0.01
      %v1892 = vmul.f32 %v1672, 0.01
      %v1893 = vmul.f32 %v1674, 0.01
      %v1894 = vmul.f32 %v1678, 0.01
      %v1895 = vmul.f32 %v1680, 0.01
      %v1896 = vmul.f32 %v1682, 0.01
      %v1897 = vmul.f32 %v1684, 0.01
      %v1898 = vmul.f32 %v1688, 0.01
      %v1899 = vmul.f32 %v1690, 0.01
      %v1900 = vmul.f32 %v1692, 0.01
      %v1901 = vmul.f32 %v1694, 0.01
      %v1902 = vmul.f32 %v1698, 0.01
      %v1903 = vmul.f32 %v1700, 0.01
      %v1904 = vmul.f32 %v1702, 0.01
      %v1905 = vmul.f32 %v1704, 0.01
      %v1906 = vmul.f32 %v1708, 0.01
      %v1907 = vmul.f32 %v1710, 0.01
      %v1908 = vmul.f32 %v1712, 0.01
      %v1909 = vmul.f32 %v1714, 0.01
      %v1910 = vmul.f32 %v1718, 0.01
      %v1911 = vmul.f32 %v1720, 0.01
      %v1912 = vmul.f32 %v1722, 0.01
      %v1913 = vmul.f32 %v1724, 0.01
      %v1914 = vmul.f32 %v1728, 0.01
      %v1915 = vmul.f32 %v1730, 0.01
      %v1916 = vmul.f32 %v1732, 0.01
      %v1917 = vmul.f32 %v1734, 0.01
      %v1918 = vmul.f32 %v1738, 0.01
      %v1919 = vmul.f32 %v1740, 0.01
      %v1920 = vmul.f32 %v1742, 0.01
      %v1921 = vmul.f32 %v1744, 0.01
      %v1922 = vmul.f32 %v1748, 0.01
      %v1923 = vmul.f32 %v1750, 0.01
      %v1924 = vmul.f32 %v1752, 0.01
      %v1925 = vmul.f32 %v1754, 0.01
      %v1926 = vmul.f32 %v1758, 0.01
      %v1927 = vmul.f32 %v1760, 0.01
      %v1928 = vmul.f32 %v1762, 0.01
      %v1929 = vmul.f32 %v1764, 0.01
      %v1930 = vmul.f32 %v1768, 0.01
      %v1931 = vmul.f32 %v1770, 0.01
      %v1932 = vmul.f32 %v1772, 0.01
      %v1933 = vmul.f32 %v1774, 0.01
      %v1934 = vmul.f32 %v1778, 0.01
      %v1935 = vmul.f32 %v1780, 0.01
      %v1936 = vmul.f32 %v1782, 0.01
      %v1937 = vmul.f32 %v1784, 0.01
      %v1938 = vmul.f32 %v1788, 0.01
      %v1939 = vmul.f32 %v1790, 0.01
      %v1940 = vmul.f32 %v1792, 0.01
      %v1941 = vmul.f32 %v1794, 0.01
      %v1942 = vmul.f32 %v1798, 0.01
      %v1943 = vmul.f32 %v1800, 0.01
      %v1944 = vmul.f32 %v1802, 0.01
      %v1945 = vmul.f32 %v1804, 0.01
      %v1946 = vmul.f32 %v1808, 0.01
      %v1947 = vmul.f32 %v1810, 0.01
      %v1948 = vmul.f32 %v1812, 0.01
      %v1949 = vmul.f32 %v1814, 0.01
      %v1950 = vmul.f32 %v1818, 0.01
      %v1951 = vmul.f32 %v1820, 0.01
      %v1952 = vmul.f32 %v1822, 0.01
      %v1953 = vmul.f32 %v1824, 0.01
      %v1954 = vmax.f32 %v1508, %v1826
      %v1955 = vmax.f32 %v1510, %v1827
      %v1956 = vmax.f32 %v1512, %v1828
      %v1957 = vmax.f32 %v1514, %v1829
      %v1958 = vmax.f32 %v1518, %v1830
      %v1959 = vmax.f32 %v1520, %v1831
      %v1960 = vmax.f32 %v1522, %v1832
      %v1961 = vmax.f32 %v1524, %v1833
      %v1962 = vmax.f32 %v1528, %v1834
      %v1963 = vmax.f32 %v1530, %v1835
      %v1964 = vmax.f32 %v1532, %v1836
      %v1965 = vmax.f32 %v1534, %v1837
      %v1966 = vmax.f32 %v1538, %v1838
      %v1967 = vmax.f32 %v1540, %v1839
      %v1968 = vmax.f32 %v1542, %v1840
      %v1969 = vmax.f32 %v1544, %v1841
      %v1970 = vmax.f32 %v1548, %v1842
      %v1971 = vmax.f32 %v1550, %v1843
      %v1972 = vmax.f32 %v1552, %v1844
      %v1973 = vmax.f32 %v1554, %v1845
      %v1974 = vmax.f32 %v1558, %v1846
      %v1975 = vmax.f32 %v1560, %v1847
      %v1976 = vmax.f32 %v1562, %v1848
      %v1977 = vmax.f32 %v1564, %v1849
      %v1978 = vmax.f32 %v1568, %v1850
      %v1979 = vmax.f32 %v1570, %v1851
      %v1980 = vmax.f32 %v1572, %v1852
      %v1981 = vmax.f32 %v1574, %v1853
      %v1982 = vmax.f32 %v1578, %v1854
      %v1983 = vmax.f32 %v1580, %v1855
      %v1984 = vmax.f32 %v1582, %v1856
      %v1985 = vmax.f32 %v1584, %v1857
      %v1986 = vmax.f32 %v1588, %v1858
      %v1987 = vmax.f32 %v1590, %v1859
      %v1988 = vmax.f32 %v1592, %v1860
      %v1989 = vmax.f32 %v1594, %v1861
      %v1990 = vmax.f32 %v1598, %v1862
      %v1991 = vmax.f32 %v1600, %v1863
      %v1992 = vmax.f32 %v1602, %v1864
      %v1993 = vmax.f32 %v1604, %v1865
      %v1994 = vmax.f32 %v1608, %v1866
      %v1995 = vmax.f32 %v1610, %v1867
      %v1996 = vmax.f32 %v1612, %v1868
      %v1997 = vmax.f32 %v1614, %v1869
      %v1998 = vmax.f32 %v1618, %v1870
      %v1999 = vmax.f32 %v1620, %v1871
      %v2000 = vmax.f32 %v1622, %v1872
      %v2001 = vmax.f32 %v1624, %v1873
      %v2002 = vmax.f32 %v1628, %v1874
      %v2003 = vmax.f32 %v1630, %v1875
      %v2004 = vmax.f32 %v1632, %v1876
      %v2005 = vmax.f32 %v1634, %v1877
      %v2006 = vmax.f32 %v1638, %v1878
      %v2007 = vmax.f32 %v1640, %v1879
      %v2008 = vmax.f32 %v1642, %v1880
      %v2009 = vmax.f32 %v1644, %v1881
      %v2010 = vmax.f32 %v1648, %v1882
      %v2011 = vmax.f32 %v1650, %v1883
      %v2012 = vmax.f32 %v1652, %v1884
      %v2013 = vmax.f32 %v1654, %v1885
      %v2014 = vmax.f32 %v1658, %v1886
      %v2015 = vmax.f32 %v1660, %v1887
      %v2016 = vmax.f32 %v1662, %v1888
      %v2017 = vmax.f32 %v1664, %v1889
      %v2018 = vmax.f32 %v1668, %v1890
      %v2019 = vmax.f32 %v1670, %v1891
      %v2020 = vmax.f32 %v1672, %v1892
      %v2021 = vmax.f32 %v1674, %v1893
      %v2022 = vmax.f32 %v1678, %v1894
      %v2023 = vmax.f32 %v1680, %v1895
      %v2024 = vmax.f32 %v1682, %v1896
      %v2025 = vmax.f32 %v1684, %v1897
      %v2026 = vmax.f32 %v1688, %v1898
      %v2027 = vmax.f32 %v1690, %v1899
      %v2028 = vmax.f32 %v1692, %v1900
      %v2029 = vmax.f32 %v1694, %v1901
      %v2030 = vmax.f32 %v1698, %v1902
      %v2031 = vmax.f32 %v1700, %v1903
      %v2032 = vmax.f32 %v1702, %v1904
      %v2033 = vmax.f32 %v1704, %v1905
      %v2034 = vmax.f32 %v1708, %v1906
      %v2035 = vmax.f32 %v1710, %v1907
      %v2036 = vmax.f32 %v1712, %v1908
      %v2037 = vmax.f32 %v1714, %v1909
      %v2038 = vmax.f32 %v1718, %v1910
      %v2039 = vmax.f32 %v1720, %v1911
      %v2040 = vmax.f32 %v1722, %v1912
      %v2041 = vmax.f32 %v1724, %v1913
      %v2042 = vmax.f32 %v1728, %v1914
      %v2043 = vmax.f32 %v1730, %v1915
      %v2044 = vmax.f32 %v1732, %v1916
      %v2045 = vmax.f32 %v1734, %v1917
      %v2046 = vmax.f32 %v1738, %v1918
      %v2047 = vmax.f32 %v1740, %v1919
      %v2048 = vmax.f32 %v1742, %v1920
      %v2049 = vmax.f32 %v1744, %v1921
      %v2050 = vmax.f32 %v1748, %v1922
      %v2051 = vmax.f32 %v1750, %v1923
      %v2052 = vmax.f32 %v1752, %v1924
      %v2053 = vmax.f32 %v1754, %v1925
      %v2054 = vmax.f32 %v1758, %v1926
      %v2055 = vmax.f32 %v1760, %v1927
      %v2056 = vmax.f32 %v1762, %v1928
      %v2057 = vmax.f32 %v1764, %v1929
      %v2058 = vmax.f32 %v1768, %v1930
      %v2059 = vmax.f32 %v1770, %v1931
      %v2060 = vmax.f32 %v1772, %v1932
      %v2061 = vmax.f32 %v1774, %v1933
      %v2062 = vmax.f32 %v1778, %v1934
      %v2063 = vmax.f32 %v1780, %v1935
      %v2064 = vmax.f32 %v1782, %v1936
      %v2065 = vmax.f32 %v1784, %v1937
      %v2066 = vmax.f32 %v1788, %v1938
      %v2067 = vmax.f32 %v1790, %v1939
      %v2068 = vmax.f32 %v1792, %v1940
      %v2069 = vmax.f32 %v1794, %v1941
      %v2070 = vmax.f32 %v1798, %v1942
      %v2071 = vmax.f32 %v1800, %v1943
      %v2072 = vmax.f32 %v1802, %v1944
      %v2073 = vmax.f32 %v1804, %v1945
      %v2074 = vmax.f32 %v1808, %v1946
      %v2075 = vmax.f32 %v1810, %v1947
      %v2076 = vmax.f32 %v1812, %v1948
      %v2077 = vmax.f32 %v1814, %v1949
      %v2078 = vmax.f32 %v1818, %v1950
      %v2079 = vmax.f32 %v1820, %v1951
      %v2080 = vmax.f32 %v1822, %v1952
      %v2081 = vmax.f32 %v1824, %v1953
      %2082 = vst [vmem:[%s177] sm:$0xff] %v1954
      %2083 = vst [vmem:[%s177 + $0x8] sm:$0xff] %v1955
      %2084 = vst [vmem:[%s177 + $0x10] sm:$0xff] %v1956
      %2085 = vst [vmem:[%s177 + $0x18] sm:$0xff] %v1957
      %2086 = vst [vmem:[%s177 + $0x20] sm:$0xff] %v1958
      %2087 = vst [vmem:[%s177 + $0x28] sm:$0xff] %v1959
      %2088 = vst [vmem:[%s177 + $0x30] sm:$0xff] %v1960
      %2089 = vst [vmem:[%s177 + $0x38] sm:$0xff] %v1961
      %2090 = vst [vmem:[%s177 + $0x40] sm:$0xff] %v1962
      %2091 = vst [vmem:[%s177 + $0x48] sm:$0xff] %v1963
      %2092 = vst [vmem:[%s177 + $0x50] sm:$0xff] %v1964
      %2093 = vst [vmem:[%s177 + $0x58] sm:$0xff] %v1965
      %2094 = vst [vmem:[%s177 + $0x60] sm:$0xff] %v1966
      %2095 = vst [vmem:[%s177 + $0x68] sm:$0xff] %v1967
      %2096 = vst [vmem:[%s177 + $0x70] sm:$0xff] %v1968
      %2097 = vst [vmem:[%s177 + $0x78] sm:$0xff] %v1969
      %2098 = vst [vmem:[%s177 + $0x80] sm:$0xff] %v1970
      %2099 = vst [vmem:[%s177 + $0x88] sm:$0xff] %v1971
      %2100 = vst [vmem:[%s177 + $0x90] sm:$0xff] %v1972
      %2101 = vst [vmem:[%s177 + $0x98] sm:$0xff] %v1973
      %2102 = vst [vmem:[%s177 + $0xa0] sm:$0xff] %v1974
      %2103 = vst [vmem:[%s177 + $0xa8] sm:$0xff] %v1975
      %2104 = vst [vmem:[%s177 + $0xb0] sm:$0xff] %v1976
      %2105 = vst [vmem:[%s177 + $0xb8] sm:$0xff] %v1977
      %2106 = vst [vmem:[%s177 + $0xc0] sm:$0xff] %v1978
      %2107 = vst [vmem:[%s177 + $0xc8] sm:$0xff] %v1979
      %2108 = vst [vmem:[%s177 + $0xd0] sm:$0xff] %v1980
      %2109 = vst [vmem:[%s177 + $0xd8] sm:$0xff] %v1981
      %2110 = vst [vmem:[%s177 + $0xe0] sm:$0xff] %v1982
      %2111 = vst [vmem:[%s177 + $0xe8] sm:$0xff] %v1983
      %2112 = vst [vmem:[%s177 + $0xf0] sm:$0xff] %v1984
      %2113 = vst [vmem:[%s177 + $0xf8] sm:$0xff] %v1985
      %2114 = vst [vmem:[%s177 + $0x100] sm:$0xff] %v1986
      %2115 = vst [vmem:[%s177 + $0x108] sm:$0xff] %v1987
      %2116 = vst [vmem:[%s177 + $0x110] sm:$0xff] %v1988
      %2117 = vst [vmem:[%s177 + $0x118] sm:$0xff] %v1989
      %2118 = vst [vmem:[%s177 + $0x120] sm:$0xff] %v1990
      %2119 = vst [vmem:[%s177 + $0x128] sm:$0xff] %v1991
      %2120 = vst [vmem:[%s177 + $0x130] sm:$0xff] %v1992
      %2121 = vst [vmem:[%s177 + $0x138] sm:$0xff] %v1993
      %2122 = vst [vmem:[%s177 + $0x140] sm:$0xff] %v1994
      %2123 = vst [vmem:[%s177 + $0x148] sm:$0xff] %v1995
      %2124 = vst [vmem:[%s177 + $0x150] sm:$0xff] %v1996
      %2125 = vst [vmem:[%s177 + $0x158] sm:$0xff] %v1997
      %2126 = vst [vmem:[%s177 + $0x160] sm:$0xff] %v1998
      %2127 = vst [vmem:[%s177 + $0x168] sm:$0xff] %v1999
      %2128 = vst [vmem:[%s177 + $0x170] sm:$0xff] %v2000
      %2129 = vst [vmem:[%s177 + $0x178] sm:$0xff] %v2001
      %2130 = vst [vmem:[%s177 + $0x180] sm:$0xff] %v2002
      %2131 = vst [vmem:[%s177 + $0x188] sm:$0xff] %v2003
      %2132 = vst [vmem:[%s177 + $0x190] sm:$0xff] %v2004
      %2133 = vst [vmem:[%s177 + $0x198] sm:$0xff] %v2005
      %2134 = vst [vmem:[%s177 + $0x1a0] sm:$0xff] %v2006
      %2135 = vst [vmem:[%s177 + $0x1a8] sm:$0xff] %v2007
      %2136 = vst [vmem:[%s177 + $0x1b0] sm:$0xff] %v2008
      %2137 = vst [vmem:[%s177 + $0x1b8] sm:$0xff] %v2009
      %2138 = vst [vmem:[%s177 + $0x1c0] sm:$0xff] %v2010
      %2139 = vst [vmem:[%s177 + $0x1c8] sm:$0xff] %v2011
      %2140 = vst [vmem:[%s177 + $0x1d0] sm:$0xff] %v2012
      %2141 = vst [vmem:[%s177 + $0x1d8] sm:$0xff] %v2013
      %2142 = vst [vmem:[%s177 + $0x1e0] sm:$0xff] %v2014
      %2143 = vst [vmem:[%s177 + $0x1e8] sm:$0xff] %v2015
      %2144 = vst [vmem:[%s177 + $0x1f0] sm:$0xff] %v2016
      %2145 = vst [vmem:[%s177 + $0x1f8] sm:$0xff] %v2017
      %2146 = vst [vmem:[%s177 + $0x200] sm:$0xff] %v2018
      %2147 = vst [vmem:[%s177 + $0x208] sm:$0xff] %v2019
      %2148 = vst [vmem:[%s177 + $0x210] sm:$0xff] %v2020
      %2149 = vst [vmem:[%s177 + $0x218] sm:$0xff] %v2021
      %2150 = vst [vmem:[%s177 + $0x220] sm:$0xff] %v2022
      %2151 = vst [vmem:[%s177 + $0x228] sm:$0xff] %v2023
      %2152 = vst [vmem:[%s177 + $0x230] sm:$0xff] %v2024
      %2153 = vst [vmem:[%s177 + $0x238] sm:$0xff] %v2025
      %2154 = vst [vmem:[%s177 + $0x240] sm:$0xff] %v2026
      %2155 = vst [vmem:[%s177 + $0x248] sm:$0xff] %v2027
      %2156 = vst [vmem:[%s177 + $0x250] sm:$0xff] %v2028
      %2157 = vst [vmem:[%s177 + $0x258] sm:$0xff] %v2029
      %2158 = vst [vmem:[%s177 + $0x260] sm:$0xff] %v2030
      %2159 = vst [vmem:[%s177 + $0x268] sm:$0xff] %v2031
      %2160 = vst [vmem:[%s177 + $0x270] sm:$0xff] %v2032
      %2161 = vst [vmem:[%s177 + $0x278] sm:$0xff] %v2033
      %2162 = vst [vmem:[%s177 + $0x280] sm:$0xff] %v2034
      %2163 = vst [vmem:[%s177 + $0x288] sm:$0xff] %v2035
      %2164 = vst [vmem:[%s177 + $0x290] sm:$0xff] %v2036
      %2165 = vst [vmem:[%s177 + $0x298] sm:$0xff] %v2037
      %2166 = vst [vmem:[%s177 + $0x2a0] sm:$0xff] %v2038
      %2167 = vst [vmem:[%s177 + $0x2a8] sm:$0xff] %v2039
      %2168 = vst [vmem:[%s177 + $0x2b0] sm:$0xff] %v2040
      %2169 = vst [vmem:[%s177 + $0x2b8] sm:$0xff] %v2041
      %2170 = vst [vmem:[%s177 + $0x2c0] sm:$0xff] %v2042
      %2171 = vst [vmem:[%s177 + $0x2c8] sm:$0xff] %v2043
      %2172 = vst [vmem:[%s177 + $0x2d0] sm:$0xff] %v2044
      %2173 = vst [vmem:[%s177 + $0x2d8] sm:$0xff] %v2045
      %2174 = vst [vmem:[%s177 + $0x2e0] sm:$0xff] %v2046
      %2175 = vst [vmem:[%s177 + $0x2e8] sm:$0xff] %v2047
      %2176 = vst [vmem:[%s177 + $0x2f0] sm:$0xff] %v2048
      %2177 = vst [vmem:[%s177 + $0x2f8] sm:$0xff] %v2049
      %2178 = vst [vmem:[%s177 + $0x300] sm:$0xff] %v2050
      %2179 = vst [vmem:[%s177 + $0x308] sm:$0xff] %v2051
      %2180 = vst [vmem:[%s177 + $0x310] sm:$0xff] %v2052
      %2181 = vst [vmem:[%s177 + $0x318] sm:$0xff] %v2053
      %2182 = vst [vmem:[%s177 + $0x320] sm:$0xff] %v2054
      %2183 = vst [vmem:[%s177 + $0x328] sm:$0xff] %v2055
      %2184 = vst [vmem:[%s177 + $0x330] sm:$0xff] %v2056
      %2185 = vst [vmem:[%s177 + $0x338] sm:$0xff] %v2057
      %2186 = vst [vmem:[%s177 + $0x340] sm:$0xff] %v2058
      %2187 = vst [vmem:[%s177 + $0x348] sm:$0xff] %v2059
      %2188 = vst [vmem:[%s177 + $0x350] sm:$0xff] %v2060
      %2189 = vst [vmem:[%s177 + $0x358] sm:$0xff] %v2061
      %2190 = vst [vmem:[%s177 + $0x360] sm:$0xff] %v2062
      %2191 = vst [vmem:[%s177 + $0x368] sm:$0xff] %v2063
      %2192 = vst [vmem:[%s177 + $0x370] sm:$0xff] %v2064
      %2193 = vst [vmem:[%s177 + $0x378] sm:$0xff] %v2065
      %2194 = vst [vmem:[%s177 + $0x380] sm:$0xff] %v2066
      %2195 = vst [vmem:[%s177 + $0x388] sm:$0xff] %v2067
      %2196 = vst [vmem:[%s177 + $0x390] sm:$0xff] %v2068
      %2197 = vst [vmem:[%s177 + $0x398] sm:$0xff] %v2069
      %2198 = vst [vmem:[%s177 + $0x3a0] sm:$0xff] %v2070
      %2199 = vst [vmem:[%s177 + $0x3a8] sm:$0xff] %v2071
      %2200 = vst [vmem:[%s177 + $0x3b0] sm:$0xff] %v2072
      %2201 = vst [vmem:[%s177 + $0x3b8] sm:$0xff] %v2073
      %2202 = vst [vmem:[%s177 + $0x3c0] sm:$0xff] %v2074
      %2203 = vst [vmem:[%s177 + $0x3c8] sm:$0xff] %v2075
      %2204 = vst [vmem:[%s177 + $0x3d0] sm:$0xff] %v2076
      %2205 = vst [vmem:[%s177 + $0x3d8] sm:$0xff] %v2077
      %2206 = vst [vmem:[%s177 + $0x3e0] sm:$0xff] %v2078
      %2207 = vst [vmem:[%s177 + $0x3e8] sm:$0xff] %v2079
      %2208 = vst [vmem:[%s177 + $0x3f0] sm:$0xff] %v2080
      %2209 = vst [vmem:[%s177 + $0x3f8] sm:$0xff] %v2081
      %s2210 = smul.u32 64, %s14
      %p2211 = scmp.lt.s32.totalorder %s2210, 127
      %s2212 = scalar_select %p2211, %s2210, 127
      %s2213 = smul.addr %s2212, 2
      %s2214 = smul.addr %s2213, 8
      %s2215 = scalar_lea.vmem %s3, %s2214
      // Predicated region
      $region33: #{forward.17} parent=31 // pred_check
        %p2216 = pneg %p100
      $region34: #{forward.17} parent=31 // pred_check_branch
        %2218 = sbr.rel (%p2216) target = $region36
      $region35: #{forward.17} parent=31 // pred_region
        %s2219 = smul.u32 64, %s14
      $region36: #{forward.17} parent=31 // pred_fallthru
        _
    $region32: #{forward.17} parent=5 // pred_fallthru
      _
    %p2220 = scmp.le.s32.totalorder 2, %s9
    // Predicated region
    $region37: #{forward.17} parent=5 // pred_check
      %p2221 = pneg %p2220
    $region38: #{forward.17} parent=5 // pred_check_branch
      %2223 = sbr.rel (%p2221) target = $region40
    $region39: #{forward.17} parent=5 // pred_region
      %s2224 = ssub.s32 %s9, 2
      // Predicated region
      $region41: #{forward.17} parent=39 // pred_check
        %p2225 = pneg %p106
      $region42: #{forward.17} parent=39 // pred_check_branch
        %2227 = sbr.rel (%p2225) target = $region44
      $region43: #{forward.17} parent=39 // pred_region
        %s2228 = smul.u32 64, %s15
        %p2229 = scmp.lt.s32.totalorder %s2228, 127
        %s2230 = scalar_select %p2229, %s2228, 127
        %s2231 = smul.addr %s2230, 2
        %s2232 = smul.addr %s2231, 8
        %s2233 = scalar_lea.vmem %s3, %s2232
      $region44: #{forward.17} parent=39 // pred_fallthru
        _
    $region40: #{forward.17} parent=5 // pred_fallthru
      _
  $region6: #{forward.17} parent=0 // loop_footer
    %s13 = sadd.s32 1, %s9
  $region7: #{forward.17} parent=0 // loop_footer_branch
    %8 = sbr.rel target = $region3
  $region8: #{forward.17} parent=0 // loop_exit
    _

// kernel: forward.18
$region0: #{forward.18}
  #allocation0 [shape = 'u32[]', space=smem, size = 0x4, offset = 0x4, fixed_abs, tag = 'smem constant byte address 0x4 - core index']
  #allocation1 [shape = 'u32[144,128]{1,0:T(1,128)}', space=vmem, size = 0x12000, scoped, tag = 'internal scratch']
  %s0 = inlined_call_operand.vmem [shape: bf16[512,512], index: 0, kind: input, shape index: {}]
  %s1 = inlined_call_operand.vmem [shape: bf16[512,256], index: 1, kind: input, shape index: {}]
  %s2 = inlined_call_operand.vmem [shape: f32[1,256], index: 2, kind: input, shape index: {}]
  %s3 = inlined_call_operand.vmem [shape: f32[512,256], index: 3, kind: output, shape index: {}]
  %s4 = sld [smem:[#allocation0]]
  $region22: #{forward.18} parent=0
    _
  %s6 = ssub.s32 1, %s4
  %s7 = scalar_select 0, %s6, %s4
  // Predicated region
  $region2: #{forward.18} parent=0 // pred_check
    _
  $region3: #{forward.18} parent=0 // pred_check_branch
    %9 = sbr.rel (0) target = $region5
  $region4: #{forward.18} parent=0 // pred_region
    _
  $region5: #{forward.18} parent=0 // pred_fallthru
    _
  // Predicated region
  $region6: #{forward.18} parent=0 // pred_check
    _
  $region7: #{forward.18} parent=0 // pred_check_branch
    %11 = sbr.rel (0) target = $region9
  $region8: #{forward.18} parent=0 // pred_region
    _
  $region9: #{forward.18} parent=0 // pred_fallthru
    _
  // Predicated region
  $region10: #{forward.18} parent=0 // pred_check
    _
  $region11: #{forward.18} parent=0 // pred_check_branch
    %13 = sbr.rel (0) target = $region13
  $region12: #{forward.18} parent=0 // pred_region
    _
  $region13: #{forward.18} parent=0 // pred_fallthru
    _
  %v14 = vld [vmem:[%s0] sm:$0xff]
  %v15 = vld [vmem:[%s0 + $0x8] sm:$0xff]
  %v16 = vld [vmem:[%s0 + $0x10] sm:$0xff]
  %v17 = vld [vmem:[%s0 + $0x18] sm:$0xff]
  %v18 = vld [vmem:[%s0 + $0x20] sm:$0xff]
  %v19 = vld [vmem:[%s0 + $0x28] sm:$0xff]
  %v20 = vld [vmem:[%s0 + $0x30] sm:$0xff]
  %v21 = vld [vmem:[%s0 + $0x38] sm:$0xff]
  %v22 = vld [vmem:[%s0 + $0x40] sm:$0xff]
  %v23 = vld [vmem:[%s0 + $0x48] sm:$0xff]
  %v24 = vld [vmem:[%s0 + $0x50] sm:$0xff]
  %v25 = vld [vmem:[%s0 + $0x58] sm:$0xff]
  %v26 = vld [vmem:[%s0 + $0x60] sm:$0xff]
  %v27 = vld [vmem:[%s0 + $0x68] sm:$0xff]
  %v28 = vld [vmem:[%s0 + $0x70] sm:$0xff]
  %v29 = vld [vmem:[%s0 + $0x78] sm:$0xff]
  %v30 = vld [vmem:[%s0 + $0x80] sm:$0xff]
  %v31 = vld [vmem:[%s0 + $0x88] sm:$0xff]
  %v32 = vld [vmem:[%s0 + $0x90] sm:$0xff]
  %v33 = vld [vmem:[%s0 + $0x98] sm:$0xff]
  %v34 = vld [vmem:[%s0 + $0xa0] sm:$0xff]
  %v35 = vld [vmem:[%s0 + $0xa8] sm:$0xff]
  %v36 = vld [vmem:[%s0 + $0xb0] sm:$0xff]
  %v37 = vld [vmem:[%s0 + $0xb8] sm:$0xff]
  %v38 = vld [vmem:[%s0 + $0xc0] sm:$0xff]
  %v39 = vld [vmem:[%s0 + $0xc8] sm:$0xff]
  %v40 = vld [vmem:[%s0 + $0xd0] sm:$0xff]
  %v41 = vld [vmem:[%s0 + $0xd8] sm:$0xff]
  %v42 = vld [vmem:[%s0 + $0xe0] sm:$0xff]
  %v43 = vld [vmem:[%s0 + $0xe8] sm:$0xff]
  %v44 = vld [vmem:[%s0 + $0xf0] sm:$0xff]
  %v45 = vld [vmem:[%s0 + $0xf8] sm:$0xff]
  %v46 = vld [vmem:[%s0 + $0x100] sm:$0xff]
  %v47 = vld [vmem:[%s0 + $0x108] sm:$0xff]
  %v48 = vld [vmem:[%s0 + $0x110] sm:$0xff]
  %v49 = vld [vmem:[%s0 + $0x118] sm:$0xff]
  %v50 = vld [vmem:[%s0 + $0x120] sm:$0xff]
  %v51 = vld [vmem:[%s0 + $0x128] sm:$0xff]
  %v52 = vld [vmem:[%s0 + $0x130] sm:$0xff]
  %v53 = vld [vmem:[%s0 + $0x138] sm:$0xff]
  %v54 = vld [vmem:[%s0 + $0x140] sm:$0xff]
  %v55 = vld [vmem:[%s0 + $0x148] sm:$0xff]
  %v56 = vld [vmem:[%s0 + $0x150] sm:$0xff]
  %v57 = vld [vmem:[%s0 + $0x158] sm:$0xff]
  %v58 = vld [vmem:[%s0 + $0x160] sm:$0xff]
  %v59 = vld [vmem:[%s0 + $0x168] sm:$0xff]
  %v60 = vld [vmem:[%s0 + $0x170] sm:$0xff]
  %v61 = vld [vmem:[%s0 + $0x178] sm:$0xff]
  %v62 = vld [vmem:[%s0 + $0x180] sm:$0xff]
  %v63 = vld [vmem:[%s0 + $0x188] sm:$0xff]
  %v64 = vld [vmem:[%s0 + $0x190] sm:$0xff]
  %v65 = vld [vmem:[%s0 + $0x198] sm:$0xff]
  %v66 = vld [vmem:[%s0 + $0x1a0] sm:$0xff]
  %v67 = vld [vmem:[%s0 + $0x1a8] sm:$0xff]
  %v68 = vld [vmem:[%s0 + $0x1b0] sm:$0xff]
  %v69 = vld [vmem:[%s0 + $0x1b8] sm:$0xff]
  %v70 = vld [vmem:[%s0 + $0x1c0] sm:$0xff]
  %v71 = vld [vmem:[%s0 + $0x1c8] sm:$0xff]
  %v72 = vld [vmem:[%s0 + $0x1d0] sm:$0xff]
  %v73 = vld [vmem:[%s0 + $0x1d8] sm:$0xff]
  %v74 = vld [vmem:[%s0 + $0x1e0] sm:$0xff]
  %v75 = vld [vmem:[%s0 + $0x1e8] sm:$0xff]
  %v76 = vld [vmem:[%s0 + $0x1f0] sm:$0xff]
  %v77 = vld [vmem:[%s0 + $0x1f8] sm:$0xff]
  %v78 = vld [vmem:[%s0 + $0x200] sm:$0xff]
  %v79 = vld [vmem:[%s0 + $0x208] sm:$0xff]
  %v80 = vld [vmem:[%s0 + $0x210] sm:$0xff]
  %v81 = vld [vmem:[%s0 + $0x218] sm:$0xff]
  %v82 = vld [vmem:[%s0 + $0x220] sm:$0xff]
  %v83 = vld [vmem:[%s0 + $0x228] sm:$0xff]
  %v84 = vld [vmem:[%s0 + $0x230] sm:$0xff]
  %v85 = vld [vmem:[%s0 + $0x238] sm:$0xff]
  %v86 = vld [vmem:[%s0 + $0x240] sm:$0xff]
  %v87 = vld [vmem:[%s0 + $0x248] sm:$0xff]
  %v88 = vld [vmem:[%s0 + $0x250] sm:$0xff]
  %v89 = vld [vmem:[%s0 + $0x258] sm:$0xff]
  %v90 = vld [vmem:[%s0 + $0x260] sm:$0xff]
  %v91 = vld [vmem:[%s0 + $0x268] sm:$0xff]
  %v92 = vld [vmem:[%s0 + $0x270] sm:$0xff]
  %v93 = vld [vmem:[%s0 + $0x278] sm:$0xff]
  %v94 = vld [vmem:[%s0 + $0x280] sm:$0xff]
  %v95 = vld [vmem:[%s0 + $0x288] sm:$0xff]
  %v96 = vld [vmem:[%s0 + $0x290] sm:$0xff]
  %v97 = vld [vmem:[%s0 + $0x298] sm:$0xff]
  %v98 = vld [vmem:[%s0 + $0x2a0] sm:$0xff]
  %v99 = vld [vmem:[%s0 + $0x2a8] sm:$0xff]
  %v100 = vld [vmem:[%s0 + $0x2b0] sm:$0xff]
  %v101 = vld [vmem:[%s0 + $0x2b8] sm:$0xff]
  %v102 = vld [vmem:[%s0 + $0x2c0] sm:$0xff]
  %v103 = vld [vmem:[%s0 + $0x2c8] sm:$0xff]
  %v104 = vld [vmem:[%s0 + $0x2d0] sm:$0xff]
  %v105 = vld [vmem:[%s0 + $0x2d8] sm:$0xff]
  %v106 = vld [vmem:[%s0 + $0x2e0] sm:$0xff]
  %v107 = vld [vmem:[%s0 + $0x2e8] sm:$0xff]
  %v108 = vld [vmem:[%s0 + $0x2f0] sm:$0xff]
  %v109 = vld [vmem:[%s0 + $0x2f8] sm:$0xff]
  %v110 = vld [vmem:[%s0 + $0x300] sm:$0xff]
  %v111 = vld [vmem:[%s0 + $0x308] sm:$0xff]
  %v112 = vld [vmem:[%s0 + $0x310] sm:$0xff]
  %v113 = vld [vmem:[%s0 + $0x318] sm:$0xff]
  %v114 = vld [vmem:[%s0 + $0x320] sm:$0xff]
  %v115 = vld [vmem:[%s0 + $0x328] sm:$0xff]
  %v116 = vld [vmem:[%s0 + $0x330] sm:$0xff]
  %v117 = vld [vmem:[%s0 + $0x338] sm:$0xff]
  %v118 = vld [vmem:[%s0 + $0x340] sm:$0xff]
  %v119 = vld [vmem:[%s0 + $0x348] sm:$0xff]
  %v120 = vld [vmem:[%s0 + $0x350] sm:$0xff]
  %v121 = vld [vmem:[%s0 + $0x358] sm:$0xff]
  %v122 = vld [vmem:[%s0 + $0x360] sm:$0xff]
  %v123 = vld [vmem:[%s0 + $0x368] sm:$0xff]
  %v124 = vld [vmem:[%s0 + $0x370] sm:$0xff]
  %v125 = vld [vmem:[%s0 + $0x378] sm:$0xff]
  %v126 = vld [vmem:[%s0 + $0x380] sm:$0xff]
  %v127 = vld [vmem:[%s0 + $0x388] sm:$0xff]
  %v128 = vld [vmem:[%s0 + $0x390] sm:$0xff]
  %v129 = vld [vmem:[%s0 + $0x398] sm:$0xff]
  %v130 = vld [vmem:[%s0 + $0x3a0] sm:$0xff]
  %v131 = vld [vmem:[%s0 + $0x3a8] sm:$0xff]
  %v132 = vld [vmem:[%s0 + $0x3b0] sm:$0xff]
  %v133 = vld [vmem:[%s0 + $0x3b8] sm:$0xff]
  %v134 = vld [vmem:[%s0 + $0x3c0] sm:$0xff]
  %v135 = vld [vmem:[%s0 + $0x3c8] sm:$0xff]
  %v136 = vld [vmem:[%s0 + $0x3d0] sm:$0xff]
  %v137 = vld [vmem:[%s0 + $0x3d8] sm:$0xff]
  %v138 = vld [vmem:[%s0 + $0x3e0] sm:$0xff]
  %v139 = vld [vmem:[%s0 + $0x3e8] sm:$0xff]
  %v140 = vld [vmem:[%s0 + $0x3f0] sm:$0xff]
  %v141 = vld [vmem:[%s0 + $0x3f8] sm:$0xff]
  %v142 = vld [vmem:[%s1] sm:$0xff]
  %v143 = vld [vmem:[%s1 + $0x8] sm:$0xff]
  %v144 = vld [vmem:[%s1 + $0x10] sm:$0xff]
  %v145 = vld [vmem:[%s1 + $0x18] sm:$0xff]
  %v146 = vld [vmem:[%s1 + $0x20] sm:$0xff]
  %v147 = vld [vmem:[%s1 + $0x28] sm:$0xff]
  %v148 = vld [vmem:[%s1 + $0x30] sm:$0xff]
  %v149 = vld [vmem:[%s1 + $0x38] sm:$0xff]
  %v150 = vld [vmem:[%s1 + $0x40] sm:$0xff]
  %v151 = vld [vmem:[%s1 + $0x48] sm:$0xff]
  %v152 = vld [vmem:[%s1 + $0x50] sm:$0xff]
  %v153 = vld [vmem:[%s1 + $0x58] sm:$0xff]
  %v154 = vld [vmem:[%s1 + $0x60] sm:$0xff]
  %v155 = vld [vmem:[%s1 + $0x68] sm:$0xff]
  %v156 = vld [vmem:[%s1 + $0x70] sm:$0xff]
  %v157 = vld [vmem:[%s1 + $0x78] sm:$0xff]
  %v158 = vld [vmem:[%s1 + $0x80] sm:$0xff]
  %v159 = vld [vmem:[%s1 + $0x88] sm:$0xff]
  %v160 = vld [vmem:[%s1 + $0x90] sm:$0xff]
  %v161 = vld [vmem:[%s1 + $0x98] sm:$0xff]
  %v162 = vld [vmem:[%s1 + $0xa0] sm:$0xff]
  %v163 = vld [vmem:[%s1 + $0xa8] sm:$0xff]
  %v164 = vld [vmem:[%s1 + $0xb0] sm:$0xff]
  %v165 = vld [vmem:[%s1 + $0xb8] sm:$0xff]
  %v166 = vld [vmem:[%s1 + $0xc0] sm:$0xff]
  %v167 = vld [vmem:[%s1 + $0xc8] sm:$0xff]
  %v168 = vld [vmem:[%s1 + $0xd0] sm:$0xff]
  %v169 = vld [vmem:[%s1 + $0xd8] sm:$0xff]
  %v170 = vld [vmem:[%s1 + $0xe0] sm:$0xff]
  %v171 = vld [vmem:[%s1 + $0xe8] sm:$0xff]
  %v172 = vld [vmem:[%s1 + $0xf0] sm:$0xff]
  %v173 = vld [vmem:[%s1 + $0xf8] sm:$0xff]
  %v174 = vld [vmem:[%s1 + $0x100] sm:$0xff]
  %v175 = vld [vmem:[%s1 + $0x108] sm:$0xff]
  %v176 = vld [vmem:[%s1 + $0x110] sm:$0xff]
  %v177 = vld [vmem:[%s1 + $0x118] sm:$0xff]
  %v178 = vld [vmem:[%s1 + $0x120] sm:$0xff]
  %v179 = vld [vmem:[%s1 + $0x128] sm:$0xff]
  %v180 = vld [vmem:[%s1 + $0x130] sm:$0xff]
  %v181 = vld [vmem:[%s1 + $0x138] sm:$0xff]
  %v182 = vld [vmem:[%s1 + $0x140] sm:$0xff]
  %v183 = vld [vmem:[%s1 + $0x148] sm:$0xff]
  %v184 = vld [vmem:[%s1 + $0x150] sm:$0xff]
  %v185 = vld [vmem:[%s1 + $0x158] sm:$0xff]
  %v186 = vld [vmem:[%s1 + $0x160] sm:$0xff]
  %v187 = vld [vmem:[%s1 + $0x168] sm:$0xff]
  %v188 = vld [vmem:[%s1 + $0x170] sm:$0xff]
  %v189 = vld [vmem:[%s1 + $0x178] sm:$0xff]
  %v190 = vld [vmem:[%s1 + $0x180] sm:$0xff]
  %v191 = vld [vmem:[%s1 + $0x188] sm:$0xff]
  %v192 = vld [vmem:[%s1 + $0x190] sm:$0xff]
  %v193 = vld [vmem:[%s1 + $0x198] sm:$0xff]
  %v194 = vld [vmem:[%s1 + $0x1a0] sm:$0xff]
  %v195 = vld [vmem:[%s1 + $0x1a8] sm:$0xff]
  %v196 = vld [vmem:[%s1 + $0x1b0] sm:$0xff]
  %v197 = vld [vmem:[%s1 + $0x1b8] sm:$0xff]
  %v198 = vld [vmem:[%s1 + $0x1c0] sm:$0xff]
  %v199 = vld [vmem:[%s1 + $0x1c8] sm:$0xff]
  %v200 = vld [vmem:[%s1 + $0x1d0] sm:$0xff]
  %v201 = vld [vmem:[%s1 + $0x1d8] sm:$0xff]
  %v202 = vld [vmem:[%s1 + $0x1e0] sm:$0xff]
  %v203 = vld [vmem:[%s1 + $0x1e8] sm:$0xff]
  %v204 = vld [vmem:[%s1 + $0x1f0] sm:$0xff]
  %v205 = vld [vmem:[%s1 + $0x1f8] sm:$0xff]
  %v206 = vld [vmem:[%s2] sm:$0x3]
  %v208 = vlaneseq
  %v209 = vshrl.u32 %v208, 7
  %v210 = vsub.s32 0, %v209
  %v211 = vrot.slane %v206, %v210
  %v212 = vlaneseq
  %v213 = vshrl.u32 %v212, 7
  %v214 = vsub.s32 1, %v213
  %v215 = vrot.slane %v206, %v214
  %v346 = vunpack.c.l.b16 %v14
  %v347 = vunpack.c.h.b16 %v14
  %v348 = vunpack.c.l.b16 %v15
  %v349 = vunpack.c.h.b16 %v15
  %v350 = vunpack.c.l.b16 %v16
  %v351 = vunpack.c.h.b16 %v16
  %v352 = vunpack.c.l.b16 %v17
  %v353 = vunpack.c.h.b16 %v17
  %v354 = vunpack.c.l.b16 %v18
  %v355 = vunpack.c.h.b16 %v18
  %v356 = vunpack.c.l.b16 %v19
  %v357 = vunpack.c.h.b16 %v19
  %v358 = vunpack.c.l.b16 %v20
  %v359 = vunpack.c.h.b16 %v20
  %v360 = vunpack.c.l.b16 %v21
  %v361 = vunpack.c.h.b16 %v21
  %v362 = vunpack.c.l.b16 %v22
  %v363 = vunpack.c.h.b16 %v22
  %v364 = vunpack.c.l.b16 %v23
  %v365 = vunpack.c.h.b16 %v23
  %v366 = vunpack.c.l.b16 %v24
  %v367 = vunpack.c.h.b16 %v24
  %v368 = vunpack.c.l.b16 %v25
  %v369 = vunpack.c.h.b16 %v25
  %v370 = vunpack.c.l.b16 %v26
  %v371 = vunpack.c.h.b16 %v26
  %v372 = vunpack.c.l.b16 %v27
  %v373 = vunpack.c.h.b16 %v27
  %v374 = vunpack.c.l.b16 %v28
  %v375 = vunpack.c.h.b16 %v28
  %v376 = vunpack.c.l.b16 %v29
  %v377 = vunpack.c.h.b16 %v29
  %v378 = vunpack.c.l.b16 %v30
  %v379 = vunpack.c.h.b16 %v30
  %v380 = vunpack.c.l.b16 %v31
  %v381 = vunpack.c.h.b16 %v31
  %v382 = vunpack.c.l.b16 %v32
  %v383 = vunpack.c.h.b16 %v32
  %v384 = vunpack.c.l.b16 %v33
  %v385 = vunpack.c.h.b16 %v33
  %v386 = vunpack.c.l.b16 %v34
  %v387 = vunpack.c.h.b16 %v34
  %v388 = vunpack.c.l.b16 %v35
  %v389 = vunpack.c.h.b16 %v35
  %v390 = vunpack.c.l.b16 %v36
  %v391 = vunpack.c.h.b16 %v36
  %v392 = vunpack.c.l.b16 %v37
  %v393 = vunpack.c.h.b16 %v37
  %v394 = vunpack.c.l.b16 %v38
  %v395 = vunpack.c.h.b16 %v38
  %v396 = vunpack.c.l.b16 %v39
  %v397 = vunpack.c.h.b16 %v39
  %v398 = vunpack.c.l.b16 %v40
  %v399 = vunpack.c.h.b16 %v40
  %v400 = vunpack.c.l.b16 %v41
  %v401 = vunpack.c.h.b16 %v41
  %v402 = vunpack.c.l.b16 %v42
  %v403 = vunpack.c.h.b16 %v42
  %v404 = vunpack.c.l.b16 %v43
  %v405 = vunpack.c.h.b16 %v43
  %v406 = vunpack.c.l.b16 %v44
  %v407 = vunpack.c.h.b16 %v44
  %v408 = vunpack.c.l.b16 %v45
  %v409 = vunpack.c.h.b16 %v45
  %v410 = vunpack.c.l.b16 %v46
  %v411 = vunpack.c.h.b16 %v46
  %v412 = vunpack.c.l.b16 %v47
  %v413 = vunpack.c.h.b16 %v47
  %v414 = vunpack.c.l.b16 %v48
  %v415 = vunpack.c.h.b16 %v48
  %v416 = vunpack.c.l.b16 %v49
  %v417 = vunpack.c.h.b16 %v49
  %v418 = vunpack.c.l.b16 %v50
  %v419 = vunpack.c.h.b16 %v50
  %v420 = vunpack.c.l.b16 %v51
  %v421 = vunpack.c.h.b16 %v51
  %v422 = vunpack.c.l.b16 %v52
  %v423 = vunpack.c.h.b16 %v52
  %v424 = vunpack.c.l.b16 %v53
  %v425 = vunpack.c.h.b16 %v53
  %v426 = vunpack.c.l.b16 %v54
  %v427 = vunpack.c.h.b16 %v54
  %v428 = vunpack.c.l.b16 %v55
  %v429 = vunpack.c.h.b16 %v55
  %v430 = vunpack.c.l.b16 %v56
  %v431 = vunpack.c.h.b16 %v56
  %v432 = vunpack.c.l.b16 %v57
  %v433 = vunpack.c.h.b16 %v57
  %v434 = vunpack.c.l.b16 %v58
  %v435 = vunpack.c.h.b16 %v58
  %v436 = vunpack.c.l.b16 %v59
  %v437 = vunpack.c.h.b16 %v59
  %v438 = vunpack.c.l.b16 %v60
  %v439 = vunpack.c.h.b16 %v60
  %v440 = vunpack.c.l.b16 %v61
  %v441 = vunpack.c.h.b16 %v61
  %v442 = vunpack.c.l.b16 %v62
  %v443 = vunpack.c.h.b16 %v62
  %v444 = vunpack.c.l.b16 %v63
  %v445 = vunpack.c.h.b16 %v63
  %v446 = vunpack.c.l.b16 %v64
  %v447 = vunpack.c.h.b16 %v64
  %v448 = vunpack.c.l.b16 %v65
  %v449 = vunpack.c.h.b16 %v65
  %v450 = vunpack.c.l.b16 %v66
  %v451 = vunpack.c.h.b16 %v66
  %v452 = vunpack.c.l.b16 %v67
  %v453 = vunpack.c.h.b16 %v67
  %v454 = vunpack.c.l.b16 %v68
  %v455 = vunpack.c.h.b16 %v68
  %v456 = vunpack.c.l.b16 %v69
  %v457 = vunpack.c.h.b16 %v69
  %v458 = vunpack.c.l.b16 %v70
  %v459 = vunpack.c.h.b16 %v70
  %v460 = vunpack.c.l.b16 %v71
  %v461 = vunpack.c.h.b16 %v71
  %v462 = vunpack.c.l.b16 %v72
  %v463 = vunpack.c.h.b16 %v72
  %v464 = vunpack.c.l.b16 %v73
  %v465 = vunpack.c.h.b16 %v73
  %v466 = vunpack.c.l.b16 %v74
  %v467 = vunpack.c.h.b16 %v74
  %v468 = vunpack.c.l.b16 %v75
  %v469 = vunpack.c.h.b16 %v75
  %v470 = vunpack.c.l.b16 %v76
  %v471 = vunpack.c.h.b16 %v76
  %v472 = vunpack.c.l.b16 %v77
  %v473 = vunpack.c.h.b16 %v77
  %v474 = vunpack.c.l.b16 %v78
  %v475 = vunpack.c.h.b16 %v78
  %v476 = vunpack.c.l.b16 %v79
  %v477 = vunpack.c.h.b16 %v79
  %v478 = vunpack.c.l.b16 %v80
  %v479 = vunpack.c.h.b16 %v80
  %v480 = vunpack.c.l.b16 %v81
  %v481 = vunpack.c.h.b16 %v81
  %v482 = vunpack.c.l.b16 %v82
  %v483 = vunpack.c.h.b16 %v82
  %v484 = vunpack.c.l.b16 %v83
  %v485 = vunpack.c.h.b16 %v83
  %v486 = vunpack.c.l.b16 %v84
  %v487 = vunpack.c.h.b16 %v84
  %v488 = vunpack.c.l.b16 %v85
  %v489 = vunpack.c.h.b16 %v85
  %v490 = vunpack.c.l.b16 %v86
  %v491 = vunpack.c.h.b16 %v86
  %v492 = vunpack.c.l.b16 %v87
  %v493 = vunpack.c.h.b16 %v87
  %v494 = vunpack.c.l.b16 %v88
  %v495 = vunpack.c.h.b16 %v88
  %v496 = vunpack.c.l.b16 %v89
  %v497 = vunpack.c.h.b16 %v89
  %v498 = vunpack.c.l.b16 %v90
  %v499 = vunpack.c.h.b16 %v90
  %v500 = vunpack.c.l.b16 %v91
  %v501 = vunpack.c.h.b16 %v91
  %v502 = vunpack.c.l.b16 %v92
  %v503 = vunpack.c.h.b16 %v92
  %v504 = vunpack.c.l.b16 %v93
  %v505 = vunpack.c.h.b16 %v93
  %v506 = vunpack.c.l.b16 %v94
  %v507 = vunpack.c.h.b16 %v94
  %v508 = vunpack.c.l.b16 %v95
  %v509 = vunpack.c.h.b16 %v95
  %v510 = vunpack.c.l.b16 %v96
  %v511 = vunpack.c.h.b16 %v96
  %v512 = vunpack.c.l.b16 %v97
  %v513 = vunpack.c.h.b16 %v97
  %v514 = vunpack.c.l.b16 %v98
  %v515 = vunpack.c.h.b16 %v98
  %v516 = vunpack.c.l.b16 %v99
  %v517 = vunpack.c.h.b16 %v99
  %v518 = vunpack.c.l.b16 %v100
  %v519 = vunpack.c.h.b16 %v100
  %v520 = vunpack.c.l.b16 %v101
  %v521 = vunpack.c.h.b16 %v101
  %v522 = vunpack.c.l.b16 %v102
  %v523 = vunpack.c.h.b16 %v102
  %v524 = vunpack.c.l.b16 %v103
  %v525 = vunpack.c.h.b16 %v103
  %v526 = vunpack.c.l.b16 %v104
  %v527 = vunpack.c.h.b16 %v104
  %v528 = vunpack.c.l.b16 %v105
  %v529 = vunpack.c.h.b16 %v105
  %v530 = vunpack.c.l.b16 %v106
  %v531 = vunpack.c.h.b16 %v106
  %v532 = vunpack.c.l.b16 %v107
  %v533 = vunpack.c.h.b16 %v107
  %v534 = vunpack.c.l.b16 %v108
  %v535 = vunpack.c.h.b16 %v108
  %v536 = vunpack.c.l.b16 %v109
  %v537 = vunpack.c.h.b16 %v109
  %v538 = vunpack.c.l.b16 %v110
  %v539 = vunpack.c.h.b16 %v110
  %v540 = vunpack.c.l.b16 %v111
  %v541 = vunpack.c.h.b16 %v111
  %v542 = vunpack.c.l.b16 %v112
  %v543 = vunpack.c.h.b16 %v112
  %v544 = vunpack.c.l.b16 %v113
  %v545 = vunpack.c.h.b16 %v113
  %v546 = vunpack.c.l.b16 %v114
  %v547 = vunpack.c.h.b16 %v114
  %v548 = vunpack.c.l.b16 %v115
  %v549 = vunpack.c.h.b16 %v115
  %v550 = vunpack.c.l.b16 %v116
  %v551 = vunpack.c.h.b16 %v116
  %v552 = vunpack.c.l.b16 %v117
  %v553 = vunpack.c.h.b16 %v117
  %v554 = vunpack.c.l.b16 %v118
  %v555 = vunpack.c.h.b16 %v118
  %v556 = vunpack.c.l.b16 %v119
  %v557 = vunpack.c.h.b16 %v119
  %v558 = vunpack.c.l.b16 %v120
  %v559 = vunpack.c.h.b16 %v120
  %v560 = vunpack.c.l.b16 %v121
  %v561 = vunpack.c.h.b16 %v121
  %v562 = vunpack.c.l.b16 %v122
  %v563 = vunpack.c.h.b16 %v122
  %v564 = vunpack.c.l.b16 %v123
  %v565 = vunpack.c.h.b16 %v123
  %v566 = vunpack.c.l.b16 %v124
  %v567 = vunpack.c.h.b16 %v124
  %v568 = vunpack.c.l.b16 %v125
  %v569 = vunpack.c.h.b16 %v125
  %v570 = vunpack.c.l.b16 %v126
  %v571 = vunpack.c.h.b16 %v126
  %v572 = vunpack.c.l.b16 %v127
  %v573 = vunpack.c.h.b16 %v127
  %v574 = vunpack.c.l.b16 %v128
  %v575 = vunpack.c.h.b16 %v128
  %v576 = vunpack.c.l.b16 %v129
  %v577 = vunpack.c.h.b16 %v129
  %v578 = vunpack.c.l.b16 %v130
  %v579 = vunpack.c.h.b16 %v130
  %v580 = vunpack.c.l.b16 %v131
  %v581 = vunpack.c.h.b16 %v131
  %v582 = vunpack.c.l.b16 %v132
  %v583 = vunpack.c.h.b16 %v132
  %v584 = vunpack.c.l.b16 %v133
  %v585 = vunpack.c.h.b16 %v133
  %v586 = vunpack.c.l.b16 %v134
  %v587 = vunpack.c.h.b16 %v134
  %v588 = vunpack.c.l.b16 %v135
  %v589 = vunpack.c.h.b16 %v135
  %v590 = vunpack.c.l.b16 %v136
  %v591 = vunpack.c.h.b16 %v136
  %v592 = vunpack.c.l.b16 %v137
  %v593 = vunpack.c.h.b16 %v137
  %v594 = vunpack.c.l.b16 %v138
  %v595 = vunpack.c.h.b16 %v138
  %v596 = vunpack.c.l.b16 %v139
  %v597 = vunpack.c.h.b16 %v139
  %v598 = vunpack.c.l.b16 %v140
  %v599 = vunpack.c.h.b16 %v140
  %v600 = vunpack.c.l.b16 %v141
  %v601 = vunpack.c.h.b16 %v141
  %v602 = vpack.c.b16 %v350, %v346
  %v603 = vpack.c.b16 %v351, %v347
  %v604 = vpack.c.b16 %v352, %v348
  %v605 = vpack.c.b16 %v353, %v349
  %v606 = vpack.c.b16 %v358, %v354
  %v607 = vpack.c.b16 %v359, %v355
  %v608 = vpack.c.b16 %v360, %v356
  %v609 = vpack.c.b16 %v361, %v357
  %v610 = vpack.c.b16 %v366, %v362
  %v611 = vpack.c.b16 %v367, %v363
  %v612 = vpack.c.b16 %v368, %v364
  %v613 = vpack.c.b16 %v369, %v365
  %v614 = vpack.c.b16 %v374, %v370
  %v615 = vpack.c.b16 %v375, %v371
  %v616 = vpack.c.b16 %v376, %v372
  %v617 = vpack.c.b16 %v377, %v373
  %v618 = vpack.c.b16 %v382, %v378
  %v619 = vpack.c.b16 %v383, %v379
  %v620 = vpack.c.b16 %v384, %v380
  %v621 = vpack.c.b16 %v385, %v381
  %v622 = vpack.c.b16 %v390, %v386
  %v623 = vpack.c.b16 %v391, %v387
  %v624 = vpack.c.b16 %v392, %v388
  %v625 = vpack.c.b16 %v393, %v389
  %v626 = vpack.c.b16 %v398, %v394
  %v627 = vpack.c.b16 %v399, %v395
  %v628 = vpack.c.b16 %v400, %v396
  %v629 = vpack.c.b16 %v401, %v397
  %v630 = vpack.c.b16 %v406, %v402
  %v631 = vpack.c.b16 %v407, %v403
  %v632 = vpack.c.b16 %v408, %v404
  %v633 = vpack.c.b16 %v409, %v405
  %v634 = vpack.c.b16 %v414, %v410
  %v635 = vpack.c.b16 %v415, %v411
  %v636 = vpack.c.b16 %v416, %v412
  %v637 = vpack.c.b16 %v417, %v413
  %v638 = vpack.c.b16 %v422, %v418
  %v639 = vpack.c.b16 %v423, %v419
  %v640 = vpack.c.b16 %v424, %v420
  %v641 = vpack.c.b16 %v425, %v421
  %v642 = vpack.c.b16 %v430, %v426
  %v643 = vpack.c.b16 %v431, %v427
  %v644 = vpack.c.b16 %v432, %v428
  %v645 = vpack.c.b16 %v433, %v429
  %v646 = vpack.c.b16 %v438, %v434
  %v647 = vpack.c.b16 %v439, %v435
  %v648 = vpack.c.b16 %v440, %v436
  %v649 = vpack.c.b16 %v441, %v437
  %v650 = vpack.c.b16 %v446, %v442
  %v651 = vpack.c.b16 %v447, %v443
  %v652 = vpack.c.b16 %v448, %v444
  %v653 = vpack.c.b16 %v449, %v445
  %v654 = vpack.c.b16 %v454, %v450
  %v655 = vpack.c.b16 %v455, %v451
  %v656 = vpack.c.b16 %v456, %v452
  %v657 = vpack.c.b16 %v457, %v453
  %v658 = vpack.c.b16 %v462, %v458
  %v659 = vpack.c.b16 %v463, %v459
  %v660 = vpack.c.b16 %v464, %v460
  %v661 = vpack.c.b16 %v465, %v461
  %v662 = vpack.c.b16 %v470, %v466
  %v663 = vpack.c.b16 %v471, %v467
  %v664 = vpack.c.b16 %v472, %v468
  %v665 = vpack.c.b16 %v473, %v469
  %v666 = vpack.c.b16 %v478, %v474
  %v667 = vpack.c.b16 %v479, %v475
  %v668 = vpack.c.b16 %v480, %v476
  %v669 = vpack.c.b16 %v481, %v477
  %v670 = vpack.c.b16 %v486, %v482
  %v671 = vpack.c.b16 %v487, %v483
  %v672 = vpack.c.b16 %v488, %v484
  %v673 = vpack.c.b16 %v489, %v485
  %v674 = vpack.c.b16 %v494, %v490
  %v675 = vpack.c.b16 %v495, %v491
  %v676 = vpack.c.b16 %v496, %v492
  %v677 = vpack.c.b16 %v497, %v493
  %v678 = vpack.c.b16 %v502, %v498
  %v679 = vpack.c.b16 %v503, %v499
  %v680 = vpack.c.b16 %v504, %v500
  %v681 = vpack.c.b16 %v505, %v501
  %v682 = vpack.c.b16 %v510, %v506
  %v683 = vpack.c.b16 %v511, %v507
  %v684 = vpack.c.b16 %v512, %v508
  %v685 = vpack.c.b16 %v513, %v509
  %v686 = vpack.c.b16 %v518, %v514
  %v687 = vpack.c.b16 %v519, %v515
  %v688 = vpack.c.b16 %v520, %v516
  %v689 = vpack.c.b16 %v521, %v517
  %v690 = vpack.c.b16 %v526, %v522
  %v691 = vpack.c.b16 %v527, %v523
  %v692 = vpack.c.b16 %v528, %v524
  %v693 = vpack.c.b16 %v529, %v525
  %v694 = vpack.c.b16 %v534, %v530
  %v695 = vpack.c.b16 %v535, %v531
  %v696 = vpack.c.b16 %v536, %v532
  %v697 = vpack.c.b16 %v537, %v533
  %v698 = vpack.c.b16 %v542, %v538
  %v699 = vpack.c.b16 %v543, %v539
  %v700 = vpack.c.b16 %v544, %v540
  %v701 = vpack.c.b16 %v545, %v541
  %v702 = vpack.c.b16 %v550, %v546
  %v703 = vpack.c.b16 %v551, %v547
  %v704 = vpack.c.b16 %v552, %v548
  %v705 = vpack.c.b16 %v553, %v549
  %v706 = vpack.c.b16 %v558, %v554
  %v707 = vpack.c.b16 %v559, %v555
  %v708 = vpack.c.b16 %v560, %v556
  %v709 = vpack.c.b16 %v561, %v557
  %v710 = vpack.c.b16 %v566, %v562
  %v711 = vpack.c.b16 %v567, %v563
  %v712 = vpack.c.b16 %v568, %v564
  %v713 = vpack.c.b16 %v569, %v565
  %v714 = vpack.c.b16 %v574, %v570
  %v715 = vpack.c.b16 %v575, %v571
  %v716 = vpack.c.b16 %v576, %v572
  %v717 = vpack.c.b16 %v577, %v573
  %v718 = vpack.c.b16 %v582, %v578
  %v719 = vpack.c.b16 %v583, %v579
  %v720 = vpack.c.b16 %v584, %v580
  %v721 = vpack.c.b16 %v585, %v581
  %v722 = vpack.c.b16 %v590, %v586
  %v723 = vpack.c.b16 %v591, %v587
  %v724 = vpack.c.b16 %v592, %v588
  %v725 = vpack.c.b16 %v593, %v589
  %v726 = vpack.c.b16 %v598, %v594
  %v727 = vpack.c.b16 %v599, %v595
  %v728 = vpack.c.b16 %v600, %v596
  %v729 = vpack.c.b16 %v601, %v597
  %v922 = vunpack.c.l.b16 %v142
  %v923 = vunpack.c.h.b16 %v142
  %v924 = vunpack.c.l.b16 %v143
  %v925 = vunpack.c.h.b16 %v143
  %v926 = vunpack.c.l.b16 %v144
  %v927 = vunpack.c.h.b16 %v144
  %v928 = vunpack.c.l.b16 %v145
  %v929 = vunpack.c.h.b16 %v145
  %v930 = vunpack.c.l.b16 %v146
  %v931 = vunpack.c.h.b16 %v146
  %v932 = vunpack.c.l.b16 %v147
  %v933 = vunpack.c.h.b16 %v147
  %v934 = vunpack.c.l.b16 %v148
  %v935 = vunpack.c.h.b16 %v148
  %v936 = vunpack.c.l.b16 %v149
  %v937 = vunpack.c.h.b16 %v149
  %v938 = vunpack.c.l.b16 %v150
  %v939 = vunpack.c.h.b16 %v150
  %v940 = vunpack.c.l.b16 %v151
  %v941 = vunpack.c.h.b16 %v151
  %v942 = vunpack.c.l.b16 %v152
  %v943 = vunpack.c.h.b16 %v152
  %v944 = vunpack.c.l.b16 %v153
  %v945 = vunpack.c.h.b16 %v153
  %v946 = vunpack.c.l.b16 %v154
  %v947 = vunpack.c.h.b16 %v154
  %v948 = vunpack.c.l.b16 %v155
  %v949 = vunpack.c.h.b16 %v155
  %v950 = vunpack.c.l.b16 %v156
  %v951 = vunpack.c.h.b16 %v156
  %v952 = vunpack.c.l.b16 %v157
  %v953 = vunpack.c.h.b16 %v157
  %v954 = vunpack.c.l.b16 %v158
  %v955 = vunpack.c.h.b16 %v158
  %v956 = vunpack.c.l.b16 %v159
  %v957 = vunpack.c.h.b16 %v159
  %v958 = vunpack.c.l.b16 %v160
  %v959 = vunpack.c.h.b16 %v160
  %v960 = vunpack.c.l.b16 %v161
  %v961 = vunpack.c.h.b16 %v161
  %v962 = vunpack.c.l.b16 %v162
  %v963 = vunpack.c.h.b16 %v162
  %v964 = vunpack.c.l.b16 %v163
  %v965 = vunpack.c.h.b16 %v163
  %v966 = vunpack.c.l.b16 %v164
  %v967 = vunpack.c.h.b16 %v164
  %v968 = vunpack.c.l.b16 %v165
  %v969 = vunpack.c.h.b16 %v165
  %v970 = vunpack.c.l.b16 %v166
  %v971 = vunpack.c.h.b16 %v166
  %v972 = vunpack.c.l.b16 %v167
  %v973 = vunpack.c.h.b16 %v167
  %v974 = vunpack.c.l.b16 %v168
  %v975 = vunpack.c.h.b16 %v168
  %v976 = vunpack.c.l.b16 %v169
  %v977 = vunpack.c.h.b16 %v169
  %v978 = vunpack.c.l.b16 %v170
  %v979 = vunpack.c.h.b16 %v170
  %v980 = vunpack.c.l.b16 %v171
  %v981 = vunpack.c.h.b16 %v171
  %v982 = vunpack.c.l.b16 %v172
  %v983 = vunpack.c.h.b16 %v172
  %v984 = vunpack.c.l.b16 %v173
  %v985 = vunpack.c.h.b16 %v173
  %v986 = vunpack.c.l.b16 %v174
  %v987 = vunpack.c.h.b16 %v174
  %v988 = vunpack.c.l.b16 %v175
  %v989 = vunpack.c.h.b16 %v175
  %v990 = vunpack.c.l.b16 %v176
  %v991 = vunpack.c.h.b16 %v176
  %v992 = vunpack.c.l.b16 %v177
  %v993 = vunpack.c.h.b16 %v177
  %v994 = vunpack.c.l.b16 %v178
  %v995 = vunpack.c.h.b16 %v178
  %v996 = vunpack.c.l.b16 %v179
  %v997 = vunpack.c.h.b16 %v179
  %v998 = vunpack.c.l.b16 %v180
  %v999 = vunpack.c.h.b16 %v180
  %v1000 = vunpack.c.l.b16 %v181
  %v1001 = vunpack.c.h.b16 %v181
  %v1002 = vunpack.c.l.b16 %v182
  %v1003 = vunpack.c.h.b16 %v182
  %v1004 = vunpack.c.l.b16 %v183
  %v1005 = vunpack.c.h.b16 %v183
  %v1006 = vunpack.c.l.b16 %v184
  %v1007 = vunpack.c.h.b16 %v184
  %v1008 = vunpack.c.l.b16 %v185
  %v1009 = vunpack.c.h.b16 %v185
  %v1010 = vunpack.c.l.b16 %v186
  %v1011 = vunpack.c.h.b16 %v186
  %v1012 = vunpack.c.l.b16 %v187
  %v1013 = vunpack.c.h.b16 %v187
  %v1014 = vunpack.c.l.b16 %v188
  %v1015 = vunpack.c.h.b16 %v188
  %v1016 = vunpack.c.l.b16 %v189
  %v1017 = vunpack.c.h.b16 %v189
  %v1018 = vunpack.c.l.b16 %v190
  %v1019 = vunpack.c.h.b16 %v190
  %v1020 = vunpack.c.l.b16 %v191
  %v1021 = vunpack.c.h.b16 %v191
  %v1022 = vunpack.c.l.b16 %v192
  %v1023 = vunpack.c.h.b16 %v192
  %v1024 = vunpack.c.l.b16 %v193
  %v1025 = vunpack.c.h.b16 %v193
  %v1026 = vunpack.c.l.b16 %v194
  %v1027 = vunpack.c.h.b16 %v194
  %v1028 = vunpack.c.l.b16 %v195
  %v1029 = vunpack.c.h.b16 %v195
  %v1030 = vunpack.c.l.b16 %v196
  %v1031 = vunpack.c.h.b16 %v196
  %v1032 = vunpack.c.l.b16 %v197
  %v1033 = vunpack.c.h.b16 %v197
  %v1034 = vunpack.c.l.b16 %v198
  %v1035 = vunpack.c.h.b16 %v198
  %v1036 = vunpack.c.l.b16 %v199
  %v1037 = vunpack.c.h.b16 %v199
  %v1038 = vunpack.c.l.b16 %v200
  %v1039 = vunpack.c.h.b16 %v200
  %v1040 = vunpack.c.l.b16 %v201
  %v1041 = vunpack.c.h.b16 %v201
  %v1042 = vunpack.c.l.b16 %v202
  %v1043 = vunpack.c.h.b16 %v202
  %v1044 = vunpack.c.l.b16 %v203
  %v1045 = vunpack.c.h.b16 %v203
  %v1046 = vunpack.c.l.b16 %v204
  %v1047 = vunpack.c.h.b16 %v204
  %v1048 = vunpack.c.l.b16 %v205
  %v1049 = vunpack.c.h.b16 %v205
  %v1050 = vpack.c.b16 %v924, %v922
  %v1051 = vpack.c.b16 %v925, %v923
  %v1052 = vpack.c.b16 %v928, %v926
  %v1053 = vpack.c.b16 %v929, %v927
  %v1054 = vpack.c.b16 %v932, %v930
  %v1055 = vpack.c.b16 %v933, %v931
  %v1056 = vpack.c.b16 %v936, %v934
  %v1057 = vpack.c.b16 %v937, %v935
  %v1058 = vpack.c.b16 %v940, %v938
  %v1059 = vpack.c.b16 %v941, %v939
  %v1060 = vpack.c.b16 %v944, %v942
  %v1061 = vpack.c.b16 %v945, %v943
  %v1062 = vpack.c.b16 %v948, %v946
  %v1063 = vpack.c.b16 %v949, %v947
  %v1064 = vpack.c.b16 %v952, %v950
  %v1065 = vpack.c.b16 %v953, %v951
  %v1066 = vpack.c.b16 %v956, %v954
  %v1067 = vpack.c.b16 %v957, %v955
  %v1068 = vpack.c.b16 %v960, %v958
  %v1069 = vpack.c.b16 %v961, %v959
  %v1070 = vpack.c.b16 %v964, %v962
  %v1071 = vpack.c.b16 %v965, %v963
  %v1072 = vpack.c.b16 %v968, %v966
  %v1073 = vpack.c.b16 %v969, %v967
  %v1074 = vpack.c.b16 %v972, %v970
  %v1075 = vpack.c.b16 %v973, %v971
  %v1076 = vpack.c.b16 %v976, %v974
  %v1077 = vpack.c.b16 %v977, %v975
  %v1078 = vpack.c.b16 %v980, %v978
  %v1079 = vpack.c.b16 %v981, %v979
  %v1080 = vpack.c.b16 %v984, %v982
  %v1081 = vpack.c.b16 %v985, %v983
  %v1082 = vpack.c.b16 %v988, %v986
  %v1083 = vpack.c.b16 %v989, %v987
  %v1084 = vpack.c.b16 %v992, %v990
  %v1085 = vpack.c.b16 %v993, %v991
  %v1086 = vpack.c.b16 %v996, %v994
  %v1087 = vpack.c.b16 %v997, %v995
  %v1088 = vpack.c.b16 %v1000, %v998
  %v1089 = vpack.c.b16 %v1001, %v999
  %v1090 = vpack.c.b16 %v1004, %v1002
  %v1091 = vpack.c.b16 %v1005, %v1003
  %v1092 = vpack.c.b16 %v1008, %v1006
  %v1093 = vpack.c.b16 %v1009, %v1007
  %v1094 = vpack.c.b16 %v1012, %v1010
  %v1095 = vpack.c.b16 %v1013, %v1011
  %v1096 = vpack.c.b16 %v1016, %v1014
  %v1097 = vpack.c.b16 %v1017, %v1015
  %v1098 = vpack.c.b16 %v1020, %v1018
  %v1099 = vpack.c.b16 %v1021, %v1019
  %v1100 = vpack.c.b16 %v1024, %v1022
  %v1101 = vpack.c.b16 %v1025, %v1023
  %v1102 = vpack.c.b16 %v1028, %v1026
  %v1103 = vpack.c.b16 %v1029, %v1027
  %v1104 = vpack.c.b16 %v1032, %v1030
  %v1105 = vpack.c.b16 %v1033, %v1031
  %v1106 = vpack.c.b16 %v1036, %v1034
  %v1107 = vpack.c.b16 %v1037, %v1035
  %v1108 = vpack.c.b16 %v1040, %v1038
  %v1109 = vpack.c.b16 %v1041, %v1039
  %v1110 = vpack.c.b16 %v1044, %v1042
  %v1111 = vpack.c.b16 %v1045, %v1043
  %v1112 = vpack.c.b16 %v1048, %v1046
  %v1113 = vpack.c.b16 %v1049, %v1047
  %1178 = vmatprep.subr.bf16.mxu0 %v1065
  %1179 = vmatpush1.bf16.msra.mxu0 %v1064
  %1180 = vmatprep.subr.bf16.mxu0 %v1063
  %1181 = vmatpush1.bf16.msra.mxu0 %v1062
  %1182 = vmatprep.subr.bf16.mxu0 %v1061
  %1183 = vmatpush1.bf16.msra.mxu0 %v1060
  %1184 = vmatprep.subr.bf16.mxu0 %v1059
  %1185 = vmatpush1.bf16.msra.mxu0 %v1058
  %1186 = vmatprep.subr.bf16.mxu0 %v1057
  %1187 = vmatpush1.bf16.msra.mxu0 %v1056
  %1188 = vmatprep.subr.bf16.mxu0 %v1055
  %1189 = vmatpush1.bf16.msra.mxu0 %v1054
  %1190 = vmatprep.subr.bf16.mxu0 %v1053
  %1191 = vmatpush1.bf16.msra.mxu0 %v1052
  %1192 = vmatprep.subr.bf16.mxu0 %v1051
  %1193 = vmatpush1.bf16.msra.mxu0 %v1050
  %1194 = vmatprep.subr.bf16.mxu0 %v1081
  %1195 = vmatpush2.bf16.msra.mxu0 %v1080
  %1196 = vmatprep.subr.bf16.mxu0 %v1079
  %1197 = vmatpush2.bf16.msra.mxu0 %v1078
  %1198 = vmatprep.subr.bf16.mxu0 %v1077
  %1199 = vmatpush2.bf16.msra.mxu0 %v1076
  %1200 = vmatprep.subr.bf16.mxu0 %v1075
  %1201 = vmatpush2.bf16.msra.mxu0 %v1074
  %1202 = vmatprep.subr.bf16.mxu0 %v1073
  %1203 = vmatpush2.bf16.msra.mxu0 %v1072
  %1204 = vmatprep.subr.bf16.mxu0 %v1071
  %1205 = vmatpush2.bf16.msra.mxu0 %v1070
  %1206 = vmatprep.subr.bf16.mxu0 %v1069
  %1207 = vmatpush2.bf16.msra.mxu0 %v1068
  %1208 = vmatprep.subr.bf16.mxu0 %v1067
  %1209 = vmatpush2.bf16.msra.mxu0 %v1066
  %1210 = vmatprep.mubr.bf16.mxu0 %v603
  %1211 = vmatmul.mubr.bf16.gmra.mxu0 %v602
  %v1212 = vpop.f32.mrf.mxu0
  %v1213 = vadd.f32 %v211, %v1212
  %v1214 = vpop.f32.mrf.mxu0
  %v1215 = vadd.f32 %v215, %v1214
  %v1216 = vpop.f32.mrf.mxu0
  %v1217 = vadd.f32 %v211, %v1216
  %v1218 = vpop.f32.mrf.mxu0
  %v1219 = vadd.f32 %v215, %v1218
  %1220 = vmatprep.mubr.bf16.mxu0 %v607
  %1221 = vmatmul.mubr.bf16.gmra.mxu0 %v606
  %v1222 = vpop.f32.mrf.mxu0
  %v1223 = vadd.f32 %v211, %v1222
  %v1224 = vpop.f32.mrf.mxu0
  %v1225 = vadd.f32 %v215, %v1224
  %v1226 = vpop.f32.mrf.mxu0
  %v1227 = vadd.f32 %v211, %v1226
  %v1228 = vpop.f32.mrf.mxu0
  %v1229 = vadd.f32 %v215, %v1228
  %1230 = vmatprep.mubr.bf16.mxu0 %v611
  %1231 = vmatmul.mubr.bf16.gmra.mxu0 %v610
  %v1232 = vpop.f32.mrf.mxu0
  %v1233 = vadd.f32 %v211, %v1232
  %v1234 = vpop.f32.mrf.mxu0
  %v1235 = vadd.f32 %v215, %v1234
  %v1236 = vpop.f32.mrf.mxu0
  %v1237 = vadd.f32 %v211, %v1236
  %v1238 = vpop.f32.mrf.mxu0
  %v1239 = vadd.f32 %v215, %v1238
  %1240 = vmatprep.mubr.bf16.mxu0 %v615
  %1241 = vmatmul.mubr.bf16.gmra.mxu0 %v614
  %v1242 = vpop.f32.mrf.mxu0
  %v1243 = vadd.f32 %v211, %v1242
  %v1244 = vpop.f32.mrf.mxu0
  %v1245 = vadd.f32 %v215, %v1244
  %v1246 = vpop.f32.mrf.mxu0
  %v1247 = vadd.f32 %v211, %v1246
  %v1248 = vpop.f32.mrf.mxu0
  %v1249 = vadd.f32 %v215, %v1248
  %1250 = vmatprep.mubr.bf16.mxu0 %v619
  %1251 = vmatmul.mubr.bf16.gmra.mxu0 %v618
  %v1252 = vpop.f32.mrf.mxu0
  %v1253 = vadd.f32 %v211, %v1252
  %v1254 = vpop.f32.mrf.mxu0
  %v1255 = vadd.f32 %v215, %v1254
  %v1256 = vpop.f32.mrf.mxu0
  %v1257 = vadd.f32 %v211, %v1256
  %v1258 = vpop.f32.mrf.mxu0
  %v1259 = vadd.f32 %v215, %v1258
  %1260 = vmatprep.mubr.bf16.mxu0 %v623
  %1261 = vmatmul.mubr.bf16.gmra.mxu0 %v622
  %v1262 = vpop.f32.mrf.mxu0
  %v1263 = vadd.f32 %v211, %v1262
  %v1264 = vpop.f32.mrf.mxu0
  %v1265 = vadd.f32 %v215, %v1264
  %v1266 = vpop.f32.mrf.mxu0
  %v1267 = vadd.f32 %v211, %v1266
  %v1268 = vpop.f32.mrf.mxu0
  %v1269 = vadd.f32 %v215, %v1268
  %1270 = vmatprep.mubr.bf16.mxu0 %v627
  %1271 = vmatmul.mubr.bf16.gmra.mxu0 %v626
  %v1272 = vpop.f32.mrf.mxu0
  %v1273 = vadd.f32 %v211, %v1272
  %v1274 = vpop.f32.mrf.mxu0
  %v1275 = vadd.f32 %v215, %v1274
  %v1276 = vpop.f32.mrf.mxu0
  %v1277 = vadd.f32 %v211, %v1276
  %v1278 = vpop.f32.mrf.mxu0
  %v1279 = vadd.f32 %v215, %v1278
  %1280 = vmatprep.mubr.bf16.mxu0 %v631
  %1281 = vmatmul.mubr.bf16.gmra.mxu0 %v630
  %v1282 = vpop.f32.mrf.mxu0
  %v1283 = vadd.f32 %v211, %v1282
  %v1284 = vpop.f32.mrf.mxu0
  %v1285 = vadd.f32 %v215, %v1284
  %v1286 = vpop.f32.mrf.mxu0
  %v1287 = vadd.f32 %v211, %v1286
  %v1288 = vpop.f32.mrf.mxu0
  %v1289 = vadd.f32 %v215, %v1288
  %1290 = vmatprep.mubr.bf16.mxu0 %v635
  %1291 = vmatmul.mubr.bf16.gmra.mxu0 %v634
  %v1292 = vpop.f32.mrf.mxu0
  %v1293 = vadd.f32 %v211, %v1292
  %v1294 = vpop.f32.mrf.mxu0
  %v1295 = vadd.f32 %v215, %v1294
  %v1296 = vpop.f32.mrf.mxu0
  %v1297 = vadd.f32 %v211, %v1296
  %v1298 = vpop.f32.mrf.mxu0
  %v1299 = vadd.f32 %v215, %v1298
  %1300 = vmatprep.mubr.bf16.mxu0 %v639
  %1301 = vmatmul.mubr.bf16.gmra.mxu0 %v638
  %v1302 = vpop.f32.mrf.mxu0
  %v1303 = vadd.f32 %v211, %v1302
  %v1304 = vpop.f32.mrf.mxu0
  %v1305 = vadd.f32 %v215, %v1304
  %v1306 = vpop.f32.mrf.mxu0
  %v1307 = vadd.f32 %v211, %v1306
  %v1308 = vpop.f32.mrf.mxu0
  %v1309 = vadd.f32 %v215, %v1308
  %1310 = vmatprep.mubr.bf16.mxu0 %v643
  %1311 = vmatmul.mubr.bf16.gmra.mxu0 %v642
  %v1312 = vpop.f32.mrf.mxu0
  %v1313 = vadd.f32 %v211, %v1312
  %v1314 = vpop.f32.mrf.mxu0
  %v1315 = vadd.f32 %v215, %v1314
  %v1316 = vpop.f32.mrf.mxu0
  %v1317 = vadd.f32 %v211, %v1316
  %v1318 = vpop.f32.mrf.mxu0
  %v1319 = vadd.f32 %v215, %v1318
  %1320 = vmatprep.mubr.bf16.mxu0 %v647
  %1321 = vmatmul.mubr.bf16.gmra.mxu0 %v646
  %v1322 = vpop.f32.mrf.mxu0
  %v1323 = vadd.f32 %v211, %v1322
  %v1324 = vpop.f32.mrf.mxu0
  %v1325 = vadd.f32 %v215, %v1324
  %v1326 = vpop.f32.mrf.mxu0
  %v1327 = vadd.f32 %v211, %v1326
  %v1328 = vpop.f32.mrf.mxu0
  %v1329 = vadd.f32 %v215, %v1328
  %1330 = vmatprep.mubr.bf16.mxu0 %v651
  %1331 = vmatmul.mubr.bf16.gmra.mxu0 %v650
  %v1332 = vpop.f32.mrf.mxu0
  %v1333 = vadd.f32 %v211, %v1332
  %v1334 = vpop.f32.mrf.mxu0
  %v1335 = vadd.f32 %v215, %v1334
  %v1336 = vpop.f32.mrf.mxu0
  %v1337 = vadd.f32 %v211, %v1336
  %v1338 = vpop.f32.mrf.mxu0
  %v1339 = vadd.f32 %v215, %v1338
  %1340 = vmatprep.mubr.bf16.mxu0 %v655
  %1341 = vmatmul.mubr.bf16.gmra.mxu0 %v654
  %v1342 = vpop.f32.mrf.mxu0
  %v1343 = vadd.f32 %v211, %v1342
  %v1344 = vpop.f32.mrf.mxu0
  %v1345 = vadd.f32 %v215, %v1344
  %v1346 = vpop.f32.mrf.mxu0
  %v1347 = vadd.f32 %v211, %v1346
  %v1348 = vpop.f32.mrf.mxu0
  %v1349 = vadd.f32 %v215, %v1348
  %1350 = vmatprep.mubr.bf16.mxu0 %v659
  %1351 = vmatmul.mubr.bf16.gmra.mxu0 %v658
  %v1352 = vpop.f32.mrf.mxu0
  %v1353 = vadd.f32 %v211, %v1352
  %v1354 = vpop.f32.mrf.mxu0
  %v1355 = vadd.f32 %v215, %v1354
  %v1356 = vpop.f32.mrf.mxu0
  %v1357 = vadd.f32 %v211, %v1356
  %v1358 = vpop.f32.mrf.mxu0
  %v1359 = vadd.f32 %v215, %v1358
  %1360 = vmatprep.mubr.bf16.mxu0 %v663
  %1361 = vmatmul.mubr.bf16.gmra.mxu0 %v662
  %v1362 = vpop.f32.mrf.mxu0
  %v1363 = vadd.f32 %v211, %v1362
  %v1364 = vpop.f32.mrf.mxu0
  %v1365 = vadd.f32 %v215, %v1364
  %v1366 = vpop.f32.mrf.mxu0
  %v1367 = vadd.f32 %v211, %v1366
  %v1368 = vpop.f32.mrf.mxu0
  %v1369 = vadd.f32 %v215, %v1368
  %1370 = vmatprep.mubr.bf16.mxu0 %v667
  %1371 = vmatmul.mubr.bf16.gmra.mxu0 %v666
  %v1372 = vpop.f32.mrf.mxu0
  %v1373 = vadd.f32 %v211, %v1372
  %v1374 = vpop.f32.mrf.mxu0
  %v1375 = vadd.f32 %v215, %v1374
  %v1376 = vpop.f32.mrf.mxu0
  %v1377 = vadd.f32 %v211, %v1376
  %v1378 = vpop.f32.mrf.mxu0
  %v1379 = vadd.f32 %v215, %v1378
  %1380 = vmatprep.mubr.bf16.mxu0 %v671
  %1381 = vmatmul.mubr.bf16.gmra.mxu0 %v670
  %v1382 = vpop.f32.mrf.mxu0
  %v1383 = vadd.f32 %v211, %v1382
  %v1384 = vpop.f32.mrf.mxu0
  %v1385 = vadd.f32 %v215, %v1384
  %v1386 = vpop.f32.mrf.mxu0
  %v1387 = vadd.f32 %v211, %v1386
  %v1388 = vpop.f32.mrf.mxu0
  %v1389 = vadd.f32 %v215, %v1388
  %1390 = vmatprep.mubr.bf16.mxu0 %v675
  %1391 = vmatmul.mubr.bf16.gmra.mxu0 %v674
  %v1392 = vpop.f32.mrf.mxu0
  %v1393 = vadd.f32 %v211, %v1392
  %v1394 = vpop.f32.mrf.mxu0
  %v1395 = vadd.f32 %v215, %v1394
  %v1396 = vpop.f32.mrf.mxu0
  %v1397 = vadd.f32 %v211, %v1396
  %v1398 = vpop.f32.mrf.mxu0
  %v1399 = vadd.f32 %v215, %v1398
  %1400 = vmatprep.mubr.bf16.mxu0 %v679
  %1401 = vmatmul.mubr.bf16.gmra.mxu0 %v678
  %v1402 = vpop.f32.mrf.mxu0
  %v1403 = vadd.f32 %v211, %v1402
  %v1404 = vpop.f32.mrf.mxu0
  %v1405 = vadd.f32 %v215, %v1404
  %v1406 = vpop.f32.mrf.mxu0
  %v1407 = vadd.f32 %v211, %v1406
  %v1408 = vpop.f32.mrf.mxu0
  %v1409 = vadd.f32 %v215, %v1408
  %1410 = vmatprep.mubr.bf16.mxu0 %v683
  %1411 = vmatmul.mubr.bf16.gmra.mxu0 %v682
  %v1412 = vpop.f32.mrf.mxu0
  %v1413 = vadd.f32 %v211, %v1412
  %v1414 = vpop.f32.mrf.mxu0
  %v1415 = vadd.f32 %v215, %v1414
  %v1416 = vpop.f32.mrf.mxu0
  %v1417 = vadd.f32 %v211, %v1416
  %v1418 = vpop.f32.mrf.mxu0
  %v1419 = vadd.f32 %v215, %v1418
  %1420 = vmatprep.mubr.bf16.mxu0 %v687
  %1421 = vmatmul.mubr.bf16.gmra.mxu0 %v686
  %v1422 = vpop.f32.mrf.mxu0
  %v1423 = vadd.f32 %v211, %v1422
  %v1424 = vpop.f32.mrf.mxu0
  %v1425 = vadd.f32 %v215, %v1424
  %v1426 = vpop.f32.mrf.mxu0
  %v1427 = vadd.f32 %v211, %v1426
  %v1428 = vpop.f32.mrf.mxu0
  %v1429 = vadd.f32 %v215, %v1428
  %1430 = vmatprep.mubr.bf16.mxu0 %v691
  %1431 = vmatmul.mubr.bf16.gmra.mxu0 %v690
  %v1432 = vpop.f32.mrf.mxu0
  %v1433 = vadd.f32 %v211, %v1432
  %v1434 = vpop.f32.mrf.mxu0
  %v1435 = vadd.f32 %v215, %v1434
  %v1436 = vpop.f32.mrf.mxu0
  %v1437 = vadd.f32 %v211, %v1436
  %v1438 = vpop.f32.mrf.mxu0
  %v1439 = vadd.f32 %v215, %v1438
  %1440 = vmatprep.mubr.bf16.mxu0 %v695
  %1441 = vmatmul.mubr.bf16.gmra.mxu0 %v694
  %v1442 = vpop.f32.mrf.mxu0
  %v1443 = vadd.f32 %v211, %v1442
  %v1444 = vpop.f32.mrf.mxu0
  %v1445 = vadd.f32 %v215, %v1444
  %v1446 = vpop.f32.mrf.mxu0
  %v1447 = vadd.f32 %v211, %v1446
  %v1448 = vpop.f32.mrf.mxu0
  %v1449 = vadd.f32 %v215, %v1448
  %1450 = vmatprep.mubr.bf16.mxu0 %v699
  %1451 = vmatmul.mubr.bf16.gmra.mxu0 %v698
  %v1452 = vpop.f32.mrf.mxu0
  %v1453 = vadd.f32 %v211, %v1452
  %v1454 = vpop.f32.mrf.mxu0
  %v1455 = vadd.f32 %v215, %v1454
  %v1456 = vpop.f32.mrf.mxu0
  %v1457 = vadd.f32 %v211, %v1456
  %v1458 = vpop.f32.mrf.mxu0
  %v1459 = vadd.f32 %v215, %v1458
  %1460 = vmatprep.mubr.bf16.mxu0 %v703
  %1461 = vmatmul.mubr.bf16.gmra.mxu0 %v702
  %v1462 = vpop.f32.mrf.mxu0
  %v1463 = vadd.f32 %v211, %v1462
  %v1464 = vpop.f32.mrf.mxu0
  %v1465 = vadd.f32 %v215, %v1464
  %v1466 = vpop.f32.mrf.mxu0
  %v1467 = vadd.f32 %v211, %v1466
  %v1468 = vpop.f32.mrf.mxu0
  %v1469 = vadd.f32 %v215, %v1468
  %1470 = vmatprep.mubr.bf16.mxu0 %v707
  %1471 = vmatmul.mubr.bf16.gmra.mxu0 %v706
  %v1472 = vpop.f32.mrf.mxu0
  %v1473 = vadd.f32 %v211, %v1472
  %v1474 = vpop.f32.mrf.mxu0
  %v1475 = vadd.f32 %v215, %v1474
  %v1476 = vpop.f32.mrf.mxu0
  %v1477 = vadd.f32 %v211, %v1476
  %v1478 = vpop.f32.mrf.mxu0
  %v1479 = vadd.f32 %v215, %v1478
  %1480 = vmatprep.mubr.bf16.mxu0 %v711
  %1481 = vmatmul.mubr.bf16.gmra.mxu0 %v710
  %v1482 = vpop.f32.mrf.mxu0
  %v1483 = vadd.f32 %v211, %v1482
  %v1484 = vpop.f32.mrf.mxu0
  %v1485 = vadd.f32 %v215, %v1484
  %v1486 = vpop.f32.mrf.mxu0
  %v1487 = vadd.f32 %v211, %v1486
  %v1488 = vpop.f32.mrf.mxu0
  %v1489 = vadd.f32 %v215, %v1488
  %1490 = vmatprep.mubr.bf16.mxu0 %v715
  %1491 = vmatmul.mubr.bf16.gmra.mxu0 %v714
  %v1492 = vpop.f32.mrf.mxu0
  %v1493 = vadd.f32 %v211, %v1492
  %v1494 = vpop.f32.mrf.mxu0
  %v1495 = vadd.f32 %v215, %v1494
  %v1496 = vpop.f32.mrf.mxu0
  %v1497 = vadd.f32 %v211, %v1496
  %v1498 = vpop.f32.mrf.mxu0
  %v1499 = vadd.f32 %v215, %v1498
  %1500 = vmatprep.mubr.bf16.mxu0 %v719
  %1501 = vmatmul.mubr.bf16.gmra.mxu0 %v718
  %v1502 = vpop.f32.mrf.mxu0
  %v1503 = vadd.f32 %v211, %v1502
  %v1504 = vpop.f32.mrf.mxu0
  %v1505 = vadd.f32 %v215, %v1504
  %v1506 = vpop.f32.mrf.mxu0
  %v1507 = vadd.f32 %v211, %v1506
  %v1508 = vpop.f32.mrf.mxu0
  %v1509 = vadd.f32 %v215, %v1508
  %1510 = vmatprep.mubr.bf16.mxu0 %v723
  %1511 = vmatmul.mubr.bf16.gmra.mxu0 %v722
  %v1512 = vpop.f32.mrf.mxu0
  %v1513 = vadd.f32 %v211, %v1512
  %v1514 = vpop.f32.mrf.mxu0
  %v1515 = vadd.f32 %v215, %v1514
  %v1516 = vpop.f32.mrf.mxu0
  %v1517 = vadd.f32 %v211, %v1516
  %v1518 = vpop.f32.mrf.mxu0
  %v1519 = vadd.f32 %v215, %v1518
  %1520 = vmatprep.mubr.bf16.mxu0 %v727
  %1521 = vmatmul.mubr.bf16.gmra.mxu0 %v726
  %v1522 = vpop.f32.mrf.mxu0
  %v1523 = vadd.f32 %v211, %v1522
  %v1524 = vpop.f32.mrf.mxu0
  %v1525 = vadd.f32 %v215, %v1524
  %v1526 = vpop.f32.mrf.mxu0
  %v1527 = vadd.f32 %v211, %v1526
  %v1528 = vpop.f32.mrf.mxu0
  %v1529 = vadd.f32 %v215, %v1528
  %1530 = vdwg.mxu0
  %1531 = vmatprep.subr.bf16.mxu0 %v1097
  %1532 = vmatpush1.bf16.msra.mxu0 %v1096
  %1533 = vmatprep.subr.bf16.mxu0 %v1095
  %1534 = vmatpush1.bf16.msra.mxu0 %v1094
  %1535 = vmatprep.subr.bf16.mxu0 %v1093
  %1536 = vmatpush1.bf16.msra.mxu0 %v1092
  %1537 = vmatprep.subr.bf16.mxu0 %v1091
  %1538 = vmatpush1.bf16.msra.mxu0 %v1090
  %1539 = vmatprep.subr.bf16.mxu0 %v1089
  %1540 = vmatpush1.bf16.msra.mxu0 %v1088
  %1541 = vmatprep.subr.bf16.mxu0 %v1087
  %1542 = vmatpush1.bf16.msra.mxu0 %v1086
  %1543 = vmatprep.subr.bf16.mxu0 %v1085
  %1544 = vmatpush1.bf16.msra.mxu0 %v1084
  %1545 = vmatprep.subr.bf16.mxu0 %v1083
  %1546 = vmatpush1.bf16.msra.mxu0 %v1082
  %1547 = vmatprep.subr.bf16.mxu0 %v1113
  %1548 = vmatpush2.bf16.msra.mxu0 %v1112
  %1549 = vmatprep.subr.bf16.mxu0 %v1111
  %1550 = vmatpush2.bf16.msra.mxu0 %v1110
  %1551 = vmatprep.subr.bf16.mxu0 %v1109
  %1552 = vmatpush2.bf16.msra.mxu0 %v1108
  %1553 = vmatprep.subr.bf16.mxu0 %v1107
  %1554 = vmatpush2.bf16.msra.mxu0 %v1106
  %1555 = vmatprep.subr.bf16.mxu0 %v1105
  %1556 = vmatpush2.bf16.msra.mxu0 %v1104
  %1557 = vmatprep.subr.bf16.mxu0 %v1103
  %1558 = vmatpush2.bf16.msra.mxu0 %v1102
  %1559 = vmatprep.subr.bf16.mxu0 %v1101
  %1560 = vmatpush2.bf16.msra.mxu0 %v1100
  %1561 = vmatprep.subr.bf16.mxu0 %v1099
  %1562 = vmatpush2.bf16.msra.mxu0 %v1098
  %1563 = vmatprep.mubr.bf16.mxu0 %v605
  %1564 = vmatmul.mubr.bf16.gmra.mxu0 %v604
  %v1565 = vpop.f32.mrf.mxu0
  %v1566 = vadd.f32 %v1213, %v1565
  %v1567 = vpop.f32.mrf.mxu0
  %v1568 = vadd.f32 %v1215, %v1567
  %v1569 = vpop.f32.mrf.mxu0
  %v1570 = vadd.f32 %v1217, %v1569
  %v1571 = vpop.f32.mrf.mxu0
  %v1572 = vadd.f32 %v1219, %v1571
  %1573 = vmatprep.mubr.bf16.mxu0 %v609
  %1574 = vmatmul.mubr.bf16.gmra.mxu0 %v608
  %v1575 = vpop.f32.mrf.mxu0
  %v1576 = vadd.f32 %v1223, %v1575
  %v1577 = vpop.f32.mrf.mxu0
  %v1578 = vadd.f32 %v1225, %v1577
  %v1579 = vpop.f32.mrf.mxu0
  %v1580 = vadd.f32 %v1227, %v1579
  %v1581 = vpop.f32.mrf.mxu0
  %v1582 = vadd.f32 %v1229, %v1581
  %1583 = vmatprep.mubr.bf16.mxu0 %v613
  %1584 = vmatmul.mubr.bf16.gmra.mxu0 %v612
  %v1585 = vpop.f32.mrf.mxu0
  %v1586 = vadd.f32 %v1233, %v1585
  %v1587 = vpop.f32.mrf.mxu0
  %v1588 = vadd.f32 %v1235, %v1587
  %v1589 = vpop.f32.mrf.mxu0
  %v1590 = vadd.f32 %v1237, %v1589
  %v1591 = vpop.f32.mrf.mxu0
  %v1592 = vadd.f32 %v1239, %v1591
  %1593 = vmatprep.mubr.bf16.mxu0 %v617
  %1594 = vmatmul.mubr.bf16.gmra.mxu0 %v616
  %v1595 = vpop.f32.mrf.mxu0
  %v1596 = vadd.f32 %v1243, %v1595
  %v1597 = vpop.f32.mrf.mxu0
  %v1598 = vadd.f32 %v1245, %v1597
  %v1599 = vpop.f32.mrf.mxu0
  %v1600 = vadd.f32 %v1247, %v1599
  %v1601 = vpop.f32.mrf.mxu0
  %v1602 = vadd.f32 %v1249, %v1601
  %1603 = vmatprep.mubr.bf16.mxu0 %v621
  %1604 = vmatmul.mubr.bf16.gmra.mxu0 %v620
  %v1605 = vpop.f32.mrf.mxu0
  %v1606 = vadd.f32 %v1253, %v1605
  %v1607 = vpop.f32.mrf.mxu0
  %v1608 = vadd.f32 %v1255, %v1607
  %v1609 = vpop.f32.mrf.mxu0
  %v1610 = vadd.f32 %v1257, %v1609
  %v1611 = vpop.f32.mrf.mxu0
  %v1612 = vadd.f32 %v1259, %v1611
  %1613 = vmatprep.mubr.bf16.mxu0 %v625
  %1614 = vmatmul.mubr.bf16.gmra.mxu0 %v624
  %v1615 = vpop.f32.mrf.mxu0
  %v1616 = vadd.f32 %v1263, %v1615
  %v1617 = vpop.f32.mrf.mxu0
  %v1618 = vadd.f32 %v1265, %v1617
  %v1619 = vpop.f32.mrf.mxu0
  %v1620 = vadd.f32 %v1267, %v1619
  %v1621 = vpop.f32.mrf.mxu0
  %v1622 = vadd.f32 %v1269, %v1621
  %1623 = vmatprep.mubr.bf16.mxu0 %v629
  %1624 = vmatmul.mubr.bf16.gmra.mxu0 %v628
  %v1625 = vpop.f32.mrf.mxu0
  %v1626 = vadd.f32 %v1273, %v1625
  %v1627 = vpop.f32.mrf.mxu0
  %v1628 = vadd.f32 %v1275, %v1627
  %v1629 = vpop.f32.mrf.mxu0
  %v1630 = vadd.f32 %v1277, %v1629
  %v1631 = vpop.f32.mrf.mxu0
  %v1632 = vadd.f32 %v1279, %v1631
  %1633 = vmatprep.mubr.bf16.mxu0 %v633
  %1634 = vmatmul.mubr.bf16.gmra.mxu0 %v632
  %v1635 = vpop.f32.mrf.mxu0
  %v1636 = vadd.f32 %v1283, %v1635
  %v1637 = vpop.f32.mrf.mxu0
  %v1638 = vadd.f32 %v1285, %v1637
  %v1639 = vpop.f32.mrf.mxu0
  %v1640 = vadd.f32 %v1287, %v1639
  %v1641 = vpop.f32.mrf.mxu0
  %v1642 = vadd.f32 %v1289, %v1641
  %1643 = vmatprep.mubr.bf16.mxu0 %v637
  %1644 = vmatmul.mubr.bf16.gmra.mxu0 %v636
  %v1645 = vpop.f32.mrf.mxu0
  %v1646 = vadd.f32 %v1293, %v1645
  %v1647 = vpop.f32.mrf.mxu0
  %v1648 = vadd.f32 %v1295, %v1647
  %v1649 = vpop.f32.mrf.mxu0
  %v1650 = vadd.f32 %v1297, %v1649
  %v1651 = vpop.f32.mrf.mxu0
  %v1652 = vadd.f32 %v1299, %v1651
  %1653 = vmatprep.mubr.bf16.mxu0 %v641
  %1654 = vmatmul.mubr.bf16.gmra.mxu0 %v640
  %v1655 = vpop.f32.mrf.mxu0
  %v1656 = vadd.f32 %v1303, %v1655
  %v1657 = vpop.f32.mrf.mxu0
  %v1658 = vadd.f32 %v1305, %v1657
  %v1659 = vpop.f32.mrf.mxu0
  %v1660 = vadd.f32 %v1307, %v1659
  %v1661 = vpop.f32.mrf.mxu0
  %v1662 = vadd.f32 %v1309, %v1661
  %1663 = vmatprep.mubr.bf16.mxu0 %v645
  %1664 = vmatmul.mubr.bf16.gmra.mxu0 %v644
  %v1665 = vpop.f32.mrf.mxu0
  %v1666 = vadd.f32 %v1313, %v1665
  %v1667 = vpop.f32.mrf.mxu0
  %v1668 = vadd.f32 %v1315, %v1667
  %v1669 = vpop.f32.mrf.mxu0
  %v1670 = vadd.f32 %v1317, %v1669
  %v1671 = vpop.f32.mrf.mxu0
  %v1672 = vadd.f32 %v1319, %v1671
  %1673 = vmatprep.mubr.bf16.mxu0 %v649
  %1674 = vmatmul.mubr.bf16.gmra.mxu0 %v648
  %v1675 = vpop.f32.mrf.mxu0
  %v1676 = vadd.f32 %v1323, %v1675
  %v1677 = vpop.f32.mrf.mxu0
  %v1678 = vadd.f32 %v1325, %v1677
  %v1679 = vpop.f32.mrf.mxu0
  %v1680 = vadd.f32 %v1327, %v1679
  %v1681 = vpop.f32.mrf.mxu0
  %v1682 = vadd.f32 %v1329, %v1681
  %1683 = vmatprep.mubr.bf16.mxu0 %v653
  %1684 = vmatmul.mubr.bf16.gmra.mxu0 %v652
  %v1685 = vpop.f32.mrf.mxu0
  %v1686 = vadd.f32 %v1333, %v1685
  %v1687 = vpop.f32.mrf.mxu0
  %v1688 = vadd.f32 %v1335, %v1687
  %v1689 = vpop.f32.mrf.mxu0
  %v1690 = vadd.f32 %v1337, %v1689
  %v1691 = vpop.f32.mrf.mxu0
  %v1692 = vadd.f32 %v1339, %v1691
  %1693 = vmatprep.mubr.bf16.mxu0 %v657
  %1694 = vmatmul.mubr.bf16.gmra.mxu0 %v656
  %v1695 = vpop.f32.mrf.mxu0
  %v1696 = vadd.f32 %v1343, %v1695
  %v1697 = vpop.f32.mrf.mxu0
  %v1698 = vadd.f32 %v1345, %v1697
  %v1699 = vpop.f32.mrf.mxu0
  %v1700 = vadd.f32 %v1347, %v1699
  %v1701 = vpop.f32.mrf.mxu0
  %v1702 = vadd.f32 %v1349, %v1701
  %1703 = vmatprep.mubr.bf16.mxu0 %v661
  %1704 = vmatmul.mubr.bf16.gmra.mxu0 %v660
  %v1705 = vpop.f32.mrf.mxu0
  %v1706 = vadd.f32 %v1353, %v1705
  %v1707 = vpop.f32.mrf.mxu0
  %v1708 = vadd.f32 %v1355, %v1707
  %v1709 = vpop.f32.mrf.mxu0
  %v1710 = vadd.f32 %v1357, %v1709
  %v1711 = vpop.f32.mrf.mxu0
  %v1712 = vadd.f32 %v1359, %v1711
  %1713 = vmatprep.mubr.bf16.mxu0 %v665
  %1714 = vmatmul.mubr.bf16.gmra.mxu0 %v664
  %v1715 = vpop.f32.mrf.mxu0
  %v1716 = vadd.f32 %v1363, %v1715
  %v1717 = vpop.f32.mrf.mxu0
  %v1718 = vadd.f32 %v1365, %v1717
  %v1719 = vpop.f32.mrf.mxu0
  %v1720 = vadd.f32 %v1367, %v1719
  %v1721 = vpop.f32.mrf.mxu0
  %v1722 = vadd.f32 %v1369, %v1721
  %1723 = vmatprep.mubr.bf16.mxu0 %v669
  %1724 = vmatmul.mubr.bf16.gmra.mxu0 %v668
  %v1725 = vpop.f32.mrf.mxu0
  %v1726 = vadd.f32 %v1373, %v1725
  %v1727 = vpop.f32.mrf.mxu0
  %v1728 = vadd.f32 %v1375, %v1727
  %v1729 = vpop.f32.mrf.mxu0
  %v1730 = vadd.f32 %v1377, %v1729
  %v1731 = vpop.f32.mrf.mxu0
  %v1732 = vadd.f32 %v1379, %v1731
  %1733 = vmatprep.mubr.bf16.mxu0 %v673
  %1734 = vmatmul.mubr.bf16.gmra.mxu0 %v672
  %v1735 = vpop.f32.mrf.mxu0
  %v1736 = vadd.f32 %v1383, %v1735
  %v1737 = vpop.f32.mrf.mxu0
  %v1738 = vadd.f32 %v1385, %v1737
  %v1739 = vpop.f32.mrf.mxu0
  %v1740 = vadd.f32 %v1387, %v1739
  %v1741 = vpop.f32.mrf.mxu0
  %v1742 = vadd.f32 %v1389, %v1741
  %1743 = vmatprep.mubr.bf16.mxu0 %v677
  %1744 = vmatmul.mubr.bf16.gmra.mxu0 %v676
  %v1745 = vpop.f32.mrf.mxu0
  %v1746 = vadd.f32 %v1393, %v1745
  %v1747 = vpop.f32.mrf.mxu0
  %v1748 = vadd.f32 %v1395, %v1747
  %v1749 = vpop.f32.mrf.mxu0
  %v1750 = vadd.f32 %v1397, %v1749
  %v1751 = vpop.f32.mrf.mxu0
  %v1752 = vadd.f32 %v1399, %v1751
  %1753 = vmatprep.mubr.bf16.mxu0 %v681
  %1754 = vmatmul.mubr.bf16.gmra.mxu0 %v680
  %v1755 = vpop.f32.mrf.mxu0
  %v1756 = vadd.f32 %v1403, %v1755
  %v1757 = vpop.f32.mrf.mxu0
  %v1758 = vadd.f32 %v1405, %v1757
  %v1759 = vpop.f32.mrf.mxu0
  %v1760 = vadd.f32 %v1407, %v1759
  %v1761 = vpop.f32.mrf.mxu0
  %v1762 = vadd.f32 %v1409, %v1761
  %1763 = vmatprep.mubr.bf16.mxu0 %v685
  %1764 = vmatmul.mubr.bf16.gmra.mxu0 %v684
  %v1765 = vpop.f32.mrf.mxu0
  %v1766 = vadd.f32 %v1413, %v1765
  %v1767 = vpop.f32.mrf.mxu0
  %v1768 = vadd.f32 %v1415, %v1767
  %v1769 = vpop.f32.mrf.mxu0
  %v1770 = vadd.f32 %v1417, %v1769
  %v1771 = vpop.f32.mrf.mxu0
  %v1772 = vadd.f32 %v1419, %v1771
  %1773 = vmatprep.mubr.bf16.mxu0 %v689
  %1774 = vmatmul.mubr.bf16.gmra.mxu0 %v688
  %v1775 = vpop.f32.mrf.mxu0
  %v1776 = vadd.f32 %v1423, %v1775
  %v1777 = vpop.f32.mrf.mxu0
  %v1778 = vadd.f32 %v1425, %v1777
  %v1779 = vpop.f32.mrf.mxu0
  %v1780 = vadd.f32 %v1427, %v1779
  %v1781 = vpop.f32.mrf.mxu0
  %v1782 = vadd.f32 %v1429, %v1781
  %1783 = vmatprep.mubr.bf16.mxu0 %v693
  %1784 = vmatmul.mubr.bf16.gmra.mxu0 %v692
  %v1785 = vpop.f32.mrf.mxu0
  %v1786 = vadd.f32 %v1433, %v1785
  %v1787 = vpop.f32.mrf.mxu0
  %v1788 = vadd.f32 %v1435, %v1787
  %v1789 = vpop.f32.mrf.mxu0
  %v1790 = vadd.f32 %v1437, %v1789
  %v1791 = vpop.f32.mrf.mxu0
  %v1792 = vadd.f32 %v1439, %v1791
  %1793 = vmatprep.mubr.bf16.mxu0 %v697
  %1794 = vmatmul.mubr.bf16.gmra.mxu0 %v696
  %v1795 = vpop.f32.mrf.mxu0
  %v1796 = vadd.f32 %v1443, %v1795
  %v1797 = vpop.f32.mrf.mxu0
  %v1798 = vadd.f32 %v1445, %v1797
  %v1799 = vpop.f32.mrf.mxu0
  %v1800 = vadd.f32 %v1447, %v1799
  %v1801 = vpop.f32.mrf.mxu0
  %v1802 = vadd.f32 %v1449, %v1801
  %1803 = vmatprep.mubr.bf16.mxu0 %v701
  %1804 = vmatmul.mubr.bf16.gmra.mxu0 %v700
  %v1805 = vpop.f32.mrf.mxu0
  %v1806 = vadd.f32 %v1453, %v1805
  %v1807 = vpop.f32.mrf.mxu0
  %v1808 = vadd.f32 %v1455, %v1807
  %v1809 = vpop.f32.mrf.mxu0
  %v1810 = vadd.f32 %v1457, %v1809
  %v1811 = vpop.f32.mrf.mxu0
  %v1812 = vadd.f32 %v1459, %v1811
  %1813 = vmatprep.mubr.bf16.mxu0 %v705
  %1814 = vmatmul.mubr.bf16.gmra.mxu0 %v704
  %v1815 = vpop.f32.mrf.mxu0
  %v1816 = vadd.f32 %v1463, %v1815
  %v1817 = vpop.f32.mrf.mxu0
  %v1818 = vadd.f32 %v1465, %v1817
  %v1819 = vpop.f32.mrf.mxu0
  %v1820 = vadd.f32 %v1467, %v1819
  %v1821 = vpop.f32.mrf.mxu0
  %v1822 = vadd.f32 %v1469, %v1821
  %1823 = vmatprep.mubr.bf16.mxu0 %v709
  %1824 = vmatmul.mubr.bf16.gmra.mxu0 %v708
  %v1825 = vpop.f32.mrf.mxu0
  %v1826 = vadd.f32 %v1473, %v1825
  %v1827 = vpop.f32.mrf.mxu0
  %v1828 = vadd.f32 %v1475, %v1827
  %v1829 = vpop.f32.mrf.mxu0
  %v1830 = vadd.f32 %v1477, %v1829
  %v1831 = vpop.f32.mrf.mxu0
  %v1832 = vadd.f32 %v1479, %v1831
  %1833 = vmatprep.mubr.bf16.mxu0 %v713
  %1834 = vmatmul.mubr.bf16.gmra.mxu0 %v712
  %v1835 = vpop.f32.mrf.mxu0
  %v1836 = vadd.f32 %v1483, %v1835
  %v1837 = vpop.f32.mrf.mxu0
  %v1838 = vadd.f32 %v1485, %v1837
  %v1839 = vpop.f32.mrf.mxu0
  %v1840 = vadd.f32 %v1487, %v1839
  %v1841 = vpop.f32.mrf.mxu0
  %v1842 = vadd.f32 %v1489, %v1841
  %1843 = vmatprep.mubr.bf16.mxu0 %v717
  %1844 = vmatmul.mubr.bf16.gmra.mxu0 %v716
  %v1845 = vpop.f32.mrf.mxu0
  %v1846 = vadd.f32 %v1493, %v1845
  %v1847 = vpop.f32.mrf.mxu0
  %v1848 = vadd.f32 %v1495, %v1847
  %v1849 = vpop.f32.mrf.mxu0
  %v1850 = vadd.f32 %v1497, %v1849
  %v1851 = vpop.f32.mrf.mxu0
  %v1852 = vadd.f32 %v1499, %v1851
  %1853 = vmatprep.mubr.bf16.mxu0 %v721
  %1854 = vmatmul.mubr.bf16.gmra.mxu0 %v720
  %v1855 = vpop.f32.mrf.mxu0
  %v1856 = vadd.f32 %v1503, %v1855
  %v1857 = vpop.f32.mrf.mxu0
  %v1858 = vadd.f32 %v1505, %v1857
  %v1859 = vpop.f32.mrf.mxu0
  %v1860 = vadd.f32 %v1507, %v1859
  %v1861 = vpop.f32.mrf.mxu0
  %v1862 = vadd.f32 %v1509, %v1861
  %1863 = vmatprep.mubr.bf16.mxu0 %v725
  %1864 = vmatmul.mubr.bf16.gmra.mxu0 %v724
  %v1865 = vpop.f32.mrf.mxu0
  %v1866 = vadd.f32 %v1513, %v1865
  %v1867 = vpop.f32.mrf.mxu0
  %v1868 = vadd.f32 %v1515, %v1867
  %v1869 = vpop.f32.mrf.mxu0
  %v1870 = vadd.f32 %v1517, %v1869
  %v1871 = vpop.f32.mrf.mxu0
  %v1872 = vadd.f32 %v1519, %v1871
  %1873 = vmatprep.mubr.bf16.mxu0 %v729
  %1874 = vmatmul.mubr.bf16.gmra.mxu0 %v728
  %v1875 = vpop.f32.mrf.mxu0
  %v1876 = vadd.f32 %v1523, %v1875
  %v1877 = vpop.f32.mrf.mxu0
  %v1878 = vadd.f32 %v1525, %v1877
  %v1879 = vpop.f32.mrf.mxu0
  %v1880 = vadd.f32 %v1527, %v1879
  %v1881 = vpop.f32.mrf.mxu0
  %v1882 = vadd.f32 %v1529, %v1881
  %1883 = vdwg.mxu0
  %v1884 = vmul.f32 %v1566, 0.01
  %v1885 = vmul.f32 %v1568, 0.01
  %v1886 = vmul.f32 %v1570, 0.01
  %v1887 = vmul.f32 %v1572, 0.01
  %v1888 = vmul.f32 %v1576, 0.01
  %v1889 = vmul.f32 %v1578, 0.01
  %v1890 = vmul.f32 %v1580, 0.01
  %v1891 = vmul.f32 %v1582, 0.01
  %v1892 = vmul.f32 %v1586, 0.01
  %v1893 = vmul.f32 %v1588, 0.01
  %v1894 = vmul.f32 %v1590, 0.01
  %v1895 = vmul.f32 %v1592, 0.01
  %v1896 = vmul.f32 %v1596, 0.01
  %v1897 = vmul.f32 %v1598, 0.01
  %v1898 = vmul.f32 %v1600, 0.01
  %v1899 = vmul.f32 %v1602, 0.01
  %v1900 = vmul.f32 %v1606, 0.01
  %v1901 = vmul.f32 %v1608, 0.01
  %v1902 = vmul.f32 %v1610, 0.01
  %v1903 = vmul.f32 %v1612, 0.01
  %v1904 = vmul.f32 %v1616, 0.01
  %v1905 = vmul.f32 %v1618, 0.01
  %v1906 = vmul.f32 %v1620, 0.01
  %v1907 = vmul.f32 %v1622, 0.01
  %v1908 = vmul.f32 %v1626, 0.01
  %v1909 = vmul.f32 %v1628, 0.01
  %v1910 = vmul.f32 %v1630, 0.01
  %v1911 = vmul.f32 %v1632, 0.01
  %v1912 = vmul.f32 %v1636, 0.01
  %v1913 = vmul.f32 %v1638, 0.01
  %v1914 = vmul.f32 %v1640, 0.01
  %v1915 = vmul.f32 %v1642, 0.01
  %v1916 = vmul.f32 %v1646, 0.01
  %v1917 = vmul.f32 %v1648, 0.01
  %v1918 = vmul.f32 %v1650, 0.01
  %v1919 = vmul.f32 %v1652, 0.01
  %v1920 = vmul.f32 %v1656, 0.01
  %v1921 = vmul.f32 %v1658, 0.01
  %v1922 = vmul.f32 %v1660, 0.01
  %v1923 = vmul.f32 %v1662, 0.01
  %v1924 = vmul.f32 %v1666, 0.01
  %v1925 = vmul.f32 %v1668, 0.01
  %v1926 = vmul.f32 %v1670, 0.01
  %v1927 = vmul.f32 %v1672, 0.01
  %v1928 = vmul.f32 %v1676, 0.01
  %v1929 = vmul.f32 %v1678, 0.01
  %v1930 = vmul.f32 %v1680, 0.01
  %v1931 = vmul.f32 %v1682, 0.01
  %v1932 = vmul.f32 %v1686, 0.01
  %v1933 = vmul.f32 %v1688, 0.01
  %v1934 = vmul.f32 %v1690, 0.01
  %v1935 = vmul.f32 %v1692, 0.01
  %v1936 = vmul.f32 %v1696, 0.01
  %v1937 = vmul.f32 %v1698, 0.01
  %v1938 = vmul.f32 %v1700, 0.01
  %v1939 = vmul.f32 %v1702, 0.01
  %v1940 = vmul.f32 %v1706, 0.01
  %v1941 = vmul.f32 %v1708, 0.01
  %v1942 = vmul.f32 %v1710, 0.01
  %v1943 = vmul.f32 %v1712, 0.01
  %v1944 = vmul.f32 %v1716, 0.01
  %v1945 = vmul.f32 %v1718, 0.01
  %v1946 = vmul.f32 %v1720, 0.01
  %v1947 = vmul.f32 %v1722, 0.01
  %v1948 = vmul.f32 %v1726, 0.01
  %v1949 = vmul.f32 %v1728, 0.01
  %v1950 = vmul.f32 %v1730, 0.01
  %v1951 = vmul.f32 %v1732, 0.01
  %v1952 = vmul.f32 %v1736, 0.01
  %v1953 = vmul.f32 %v1738, 0.01
  %v1954 = vmul.f32 %v1740, 0.01
  %v1955 = vmul.f32 %v1742, 0.01
  %v1956 = vmul.f32 %v1746, 0.01
  %v1957 = vmul.f32 %v1748, 0.01
  %v1958 = vmul.f32 %v1750, 0.01
  %v1959 = vmul.f32 %v1752, 0.01
  %v1960 = vmul.f32 %v1756, 0.01
  %v1961 = vmul.f32 %v1758, 0.01
  %v1962 = vmul.f32 %v1760, 0.01
  %v1963 = vmul.f32 %v1762, 0.01
  %v1964 = vmul.f32 %v1766, 0.01
  %v1965 = vmul.f32 %v1768, 0.01
  %v1966 = vmul.f32 %v1770, 0.01
  %v1967 = vmul.f32 %v1772, 0.01
  %v1968 = vmul.f32 %v1776, 0.01
  %v1969 = vmul.f32 %v1778, 0.01
  %v1970 = vmul.f32 %v1780, 0.01
  %v1971 = vmul.f32 %v1782, 0.01
  %v1972 = vmul.f32 %v1786, 0.01
  %v1973 = vmul.f32 %v1788, 0.01
  %v1974 = vmul.f32 %v1790, 0.01
  %v1975 = vmul.f32 %v1792, 0.01
  %v1976 = vmul.f32 %v1796, 0.01
  %v1977 = vmul.f32 %v1798, 0.01
  %v1978 = vmul.f32 %v1800, 0.01
  %v1979 = vmul.f32 %v1802, 0.01
  %v1980 = vmul.f32 %v1806, 0.01
  %v1981 = vmul.f32 %v1808, 0.01
  %v1982 = vmul.f32 %v1810, 0.01
  %v1983 = vmul.f32 %v1812, 0.01
  %v1984 = vmul.f32 %v1816, 0.01
  %v1985 = vmul.f32 %v1818, 0.01
  %v1986 = vmul.f32 %v1820, 0.01
  %v1987 = vmul.f32 %v1822, 0.01
  %v1988 = vmul.f32 %v1826, 0.01
  %v1989 = vmul.f32 %v1828, 0.01
  %v1990 = vmul.f32 %v1830, 0.01
  %v1991 = vmul.f32 %v1832, 0.01
  %v1992 = vmul.f32 %v1836, 0.01
  %v1993 = vmul.f32 %v1838, 0.01
  %v1994 = vmul.f32 %v1840, 0.01
  %v1995 = vmul.f32 %v1842, 0.01
  %v1996 = vmul.f32 %v1846, 0.01
  %v1997 = vmul.f32 %v1848, 0.01
  %v1998 = vmul.f32 %v1850, 0.01
  %v1999 = vmul.f32 %v1852, 0.01
  %v2000 = vmul.f32 %v1856, 0.01
  %v2001 = vmul.f32 %v1858, 0.01
  %v2002 = vmul.f32 %v1860, 0.01
  %v2003 = vmul.f32 %v1862, 0.01
  %v2004 = vmul.f32 %v1866, 0.01
  %v2005 = vmul.f32 %v1868, 0.01
  %v2006 = vmul.f32 %v1870, 0.01
  %v2007 = vmul.f32 %v1872, 0.01
  %v2008 = vmul.f32 %v1876, 0.01
  %v2009 = vmul.f32 %v1878, 0.01
  %v2010 = vmul.f32 %v1880, 0.01
  %v2011 = vmul.f32 %v1882, 0.01
  %v2012 = vmax.f32 %v1566, %v1884
  %v2013 = vmax.f32 %v1568, %v1885
  %v2014 = vmax.f32 %v1570, %v1886
  %v2015 = vmax.f32 %v1572, %v1887
  %v2016 = vmax.f32 %v1576, %v1888
  %v2017 = vmax.f32 %v1578, %v1889
  %v2018 = vmax.f32 %v1580, %v1890
  %v2019 = vmax.f32 %v1582, %v1891
  %v2020 = vmax.f32 %v1586, %v1892
  %v2021 = vmax.f32 %v1588, %v1893
  %v2022 = vmax.f32 %v1590, %v1894
  %v2023 = vmax.f32 %v1592, %v1895
  %v2024 = vmax.f32 %v1596, %v1896
  %v2025 = vmax.f32 %v1598, %v1897
  %v2026 = vmax.f32 %v1600, %v1898
  %v2027 = vmax.f32 %v1602, %v1899
  %v2028 = vmax.f32 %v1606, %v1900
  %v2029 = vmax.f32 %v1608, %v1901
  %v2030 = vmax.f32 %v1610, %v1902
  %v2031 = vmax.f32 %v1612, %v1903
  %v2032 = vmax.f32 %v1616, %v1904
  %v2033 = vmax.f32 %v1618, %v1905
  %v2034 = vmax.f32 %v1620, %v1906
  %v2035 = vmax.f32 %v1622, %v1907
  %v2036 = vmax.f32 %v1626, %v1908
  %v2037 = vmax.f32 %v1628, %v1909
  %v2038 = vmax.f32 %v1630, %v1910
  %v2039 = vmax.f32 %v1632, %v1911
  %v2040 = vmax.f32 %v1636, %v1912
  %v2041 = vmax.f32 %v1638, %v1913
  %v2042 = vmax.f32 %v1640, %v1914
  %v2043 = vmax.f32 %v1642, %v1915
  %v2044 = vmax.f32 %v1646, %v1916
  %v2045 = vmax.f32 %v1648, %v1917
  %v2046 = vmax.f32 %v1650, %v1918
  %v2047 = vmax.f32 %v1652, %v1919
  %v2048 = vmax.f32 %v1656, %v1920
  %v2049 = vmax.f32 %v1658, %v1921
  %v2050 = vmax.f32 %v1660, %v1922
  %v2051 = vmax.f32 %v1662, %v1923
  %v2052 = vmax.f32 %v1666, %v1924
  %v2053 = vmax.f32 %v1668, %v1925
  %v2054 = vmax.f32 %v1670, %v1926
  %v2055 = vmax.f32 %v1672, %v1927
  %v2056 = vmax.f32 %v1676, %v1928
  %v2057 = vmax.f32 %v1678, %v1929
  %v2058 = vmax.f32 %v1680, %v1930
  %v2059 = vmax.f32 %v1682, %v1931
  %v2060 = vmax.f32 %v1686, %v1932
  %v2061 = vmax.f32 %v1688, %v1933
  %v2062 = vmax.f32 %v1690, %v1934
  %v2063 = vmax.f32 %v1692, %v1935
  %v2064 = vmax.f32 %v1696, %v1936
  %v2065 = vmax.f32 %v1698, %v1937
  %v2066 = vmax.f32 %v1700, %v1938
  %v2067 = vmax.f32 %v1702, %v1939
  %v2068 = vmax.f32 %v1706, %v1940
  %v2069 = vmax.f32 %v1708, %v1941
  %v2070 = vmax.f32 %v1710, %v1942
  %v2071 = vmax.f32 %v1712, %v1943
  %v2072 = vmax.f32 %v1716, %v1944
  %v2073 = vmax.f32 %v1718, %v1945
  %v2074 = vmax.f32 %v1720, %v1946
  %v2075 = vmax.f32 %v1722, %v1947
  %v2076 = vmax.f32 %v1726, %v1948
  %v2077 = vmax.f32 %v1728, %v1949
  %v2078 = vmax.f32 %v1730, %v1950
  %v2079 = vmax.f32 %v1732, %v1951
  %v2080 = vmax.f32 %v1736, %v1952
  %v2081 = vmax.f32 %v1738, %v1953
  %v2082 = vmax.f32 %v1740, %v1954
  %v2083 = vmax.f32 %v1742, %v1955
  %v2084 = vmax.f32 %v1746, %v1956
  %v2085 = vmax.f32 %v1748, %v1957
  %v2086 = vmax.f32 %v1750, %v1958
  %v2087 = vmax.f32 %v1752, %v1959
  %v2088 = vmax.f32 %v1756, %v1960
  %v2089 = vmax.f32 %v1758, %v1961
  %v2090 = vmax.f32 %v1760, %v1962
  %v2091 = vmax.f32 %v1762, %v1963
  %v2092 = vmax.f32 %v1766, %v1964
  %v2093 = vmax.f32 %v1768, %v1965
  %v2094 = vmax.f32 %v1770, %v1966
  %v2095 = vmax.f32 %v1772, %v1967
  %v2096 = vmax.f32 %v1776, %v1968
  %v2097 = vmax.f32 %v1778, %v1969
  %v2098 = vmax.f32 %v1780, %v1970
  %v2099 = vmax.f32 %v1782, %v1971
  %v2100 = vmax.f32 %v1786, %v1972
  %v2101 = vmax.f32 %v1788, %v1973
  %v2102 = vmax.f32 %v1790, %v1974
  %v2103 = vmax.f32 %v1792, %v1975
  %v2104 = vmax.f32 %v1796, %v1976
  %v2105 = vmax.f32 %v1798, %v1977
  %v2106 = vmax.f32 %v1800, %v1978
  %v2107 = vmax.f32 %v1802, %v1979
  %v2108 = vmax.f32 %v1806, %v1980
  %v2109 = vmax.f32 %v1808, %v1981
  %v2110 = vmax.f32 %v1810, %v1982
  %v2111 = vmax.f32 %v1812, %v1983
  %v2112 = vmax.f32 %v1816, %v1984
  %v2113 = vmax.f32 %v1818, %v1985
  %v2114 = vmax.f32 %v1820, %v1986
  %v2115 = vmax.f32 %v1822, %v1987
  %v2116 = vmax.f32 %v1826, %v1988
  %v2117 = vmax.f32 %v1828, %v1989
  %v2118 = vmax.f32 %v1830, %v1990
  %v2119 = vmax.f32 %v1832, %v1991
  %v2120 = vmax.f32 %v1836, %v1992
  %v2121 = vmax.f32 %v1838, %v1993
  %v2122 = vmax.f32 %v1840, %v1994
  %v2123 = vmax.f32 %v1842, %v1995
  %v2124 = vmax.f32 %v1846, %v1996
  %v2125 = vmax.f32 %v1848, %v1997
  %v2126 = vmax.f32 %v1850, %v1998
  %v2127 = vmax.f32 %v1852, %v1999
  %v2128 = vmax.f32 %v1856, %v2000
  %v2129 = vmax.f32 %v1858, %v2001
  %v2130 = vmax.f32 %v1860, %v2002
  %v2131 = vmax.f32 %v1862, %v2003
  %v2132 = vmax.f32 %v1866, %v2004
  %v2133 = vmax.f32 %v1868, %v2005
  %v2134 = vmax.f32 %v1870, %v2006
  %v2135 = vmax.f32 %v1872, %v2007
  %v2136 = vmax.f32 %v1876, %v2008
  %v2137 = vmax.f32 %v1878, %v2009
  %v2138 = vmax.f32 %v1880, %v2010
  %v2139 = vmax.f32 %v1882, %v2011
  %2140 = vst [vmem:[%s3] sm:$0xff] %v2012
  %2141 = vst [vmem:[%s3 + $0x8] sm:$0xff] %v2013
  %2142 = vst [vmem:[%s3 + $0x10] sm:$0xff] %v2014
  %2143 = vst [vmem:[%s3 + $0x18] sm:$0xff] %v2015
  %2144 = vst [vmem:[%s3 + $0x20] sm:$0xff] %v2016
  %2145 = vst [vmem:[%s3 + $0x28] sm:$0xff] %v2017
  %2146 = vst [vmem:[%s3 + $0x30] sm:$0xff] %v2018
  %2147 = vst [vmem:[%s3 + $0x38] sm:$0xff] %v2019
  %2148 = vst [vmem:[%s3 + $0x40] sm:$0xff] %v2020
  %2149 = vst [vmem:[%s3 + $0x48] sm:$0xff] %v2021
  %2150 = vst [vmem:[%s3 + $0x50] sm:$0xff] %v2022
  %2151 = vst [vmem:[%s3 + $0x58] sm:$0xff] %v2023
  %2152 = vst [vmem:[%s3 + $0x60] sm:$0xff] %v2024
  %2153 = vst [vmem:[%s3 + $0x68] sm:$0xff] %v2025
  %2154 = vst [vmem:[%s3 + $0x70] sm:$0xff] %v2026
  %2155 = vst [vmem:[%s3 + $0x78] sm:$0xff] %v2027
  %2156 = vst [vmem:[%s3 + $0x80] sm:$0xff] %v2028
  %2157 = vst [vmem:[%s3 + $0x88] sm:$0xff] %v2029
  %2158 = vst [vmem:[%s3 + $0x90] sm:$0xff] %v2030
  %2159 = vst [vmem:[%s3 + $0x98] sm:$0xff] %v2031
  %2160 = vst [vmem:[%s3 + $0xa0] sm:$0xff] %v2032
  %2161 = vst [vmem:[%s3 + $0xa8] sm:$0xff] %v2033
  %2162 = vst [vmem:[%s3 + $0xb0] sm:$0xff] %v2034
  %2163 = vst [vmem:[%s3 + $0xb8] sm:$0xff] %v2035
  %2164 = vst [vmem:[%s3 + $0xc0] sm:$0xff] %v2036
  %2165 = vst [vmem:[%s3 + $0xc8] sm:$0xff] %v2037
  %2166 = vst [vmem:[%s3 + $0xd0] sm:$0xff] %v2038
  %2167 = vst [vmem:[%s3 + $0xd8] sm:$0xff] %v2039
  %2168 = vst [vmem:[%s3 + $0xe0] sm:$0xff] %v2040
  %2169 = vst [vmem:[%s3 + $0xe8] sm:$0xff] %v2041
  %2170 = vst [vmem:[%s3 + $0xf0] sm:$0xff] %v2042
  %2171 = vst [vmem:[%s3 + $0xf8] sm:$0xff] %v2043
  %2172 = vst [vmem:[%s3 + $0x100] sm:$0xff] %v2044
  %2173 = vst [vmem:[%s3 + $0x108] sm:$0xff] %v2045
  %2174 = vst [vmem:[%s3 + $0x110] sm:$0xff] %v2046
  %2175 = vst [vmem:[%s3 + $0x118] sm:$0xff] %v2047
  %2176 = vst [vmem:[%s3 + $0x120] sm:$0xff] %v2048
  %2177 = vst [vmem:[%s3 + $0x128] sm:$0xff] %v2049
  %2178 = vst [vmem:[%s3 + $0x130] sm:$0xff] %v2050
  %2179 = vst [vmem:[%s3 + $0x138] sm:$0xff] %v2051
  %2180 = vst [vmem:[%s3 + $0x140] sm:$0xff] %v2052
  %2181 = vst [vmem:[%s3 + $0x148] sm:$0xff] %v2053
  %2182 = vst [vmem:[%s3 + $0x150] sm:$0xff] %v2054
  %2183 = vst [vmem:[%s3 + $0x158] sm:$0xff] %v2055
  %2184 = vst [vmem:[%s3 + $0x160] sm:$0xff] %v2056
  %2185 = vst [vmem:[%s3 + $0x168] sm:$0xff] %v2057
  %2186 = vst [vmem:[%s3 + $0x170] sm:$0xff] %v2058
  %2187 = vst [vmem:[%s3 + $0x178] sm:$0xff] %v2059
  %2188 = vst [vmem:[%s3 + $0x180] sm:$0xff] %v2060
  %2189 = vst [vmem:[%s3 + $0x188] sm:$0xff] %v2061
  %2190 = vst [vmem:[%s3 + $0x190] sm:$0xff] %v2062
  %2191 = vst [vmem:[%s3 + $0x198] sm:$0xff] %v2063
  %2192 = vst [vmem:[%s3 + $0x1a0] sm:$0xff] %v2064
  %2193 = vst [vmem:[%s3 + $0x1a8] sm:$0xff] %v2065
  %2194 = vst [vmem:[%s3 + $0x1b0] sm:$0xff] %v2066
  %2195 = vst [vmem:[%s3 + $0x1b8] sm:$0xff] %v2067
  %2196 = vst [vmem:[%s3 + $0x1c0] sm:$0xff] %v2068
  %2197 = vst [vmem:[%s3 + $0x1c8] sm:$0xff] %v2069
  %2198 = vst [vmem:[%s3 + $0x1d0] sm:$0xff] %v2070
  %2199 = vst [vmem:[%s3 + $0x1d8] sm:$0xff] %v2071
  %2200 = vst [vmem:[%s3 + $0x1e0] sm:$0xff] %v2072
  %2201 = vst [vmem:[%s3 + $0x1e8] sm:$0xff] %v2073
  %2202 = vst [vmem:[%s3 + $0x1f0] sm:$0xff] %v2074
  %2203 = vst [vmem:[%s3 + $0x1f8] sm:$0xff] %v2075
  %2204 = vst [vmem:[%s3 + $0x200] sm:$0xff] %v2076
  %2205 = vst [vmem:[%s3 + $0x208] sm:$0xff] %v2077
  %2206 = vst [vmem:[%s3 + $0x210] sm:$0xff] %v2078
  %2207 = vst [vmem:[%s3 + $0x218] sm:$0xff] %v2079
  %2208 = vst [vmem:[%s3 + $0x220] sm:$0xff] %v2080
  %2209 = vst [vmem:[%s3 + $0x228] sm:$0xff] %v2081
  %2210 = vst [vmem:[%s3 + $0x230] sm:$0xff] %v2082
  %2211 = vst [vmem:[%s3 + $0x238] sm:$0xff] %v2083
  %2212 = vst [vmem:[%s3 + $0x240] sm:$0xff] %v2084
  %2213 = vst [vmem:[%s3 + $0x248] sm:$0xff] %v2085
  %2214 = vst [vmem:[%s3 + $0x250] sm:$0xff] %v2086
  %2215 = vst [vmem:[%s3 + $0x258] sm:$0xff] %v2087
  %2216 = vst [vmem:[%s3 + $0x260] sm:$0xff] %v2088
  %2217 = vst [vmem:[%s3 + $0x268] sm:$0xff] %v2089
  %2218 = vst [vmem:[%s3 + $0x270] sm:$0xff] %v2090
  %2219 = vst [vmem:[%s3 + $0x278] sm:$0xff] %v2091
  %2220 = vst [vmem:[%s3 + $0x280] sm:$0xff] %v2092
  %2221 = vst [vmem:[%s3 + $0x288] sm:$0xff] %v2093
  %2222 = vst [vmem:[%s3 + $0x290] sm:$0xff] %v2094
  %2223 = vst [vmem:[%s3 + $0x298] sm:$0xff] %v2095
  %2224 = vst [vmem:[%s3 + $0x2a0] sm:$0xff] %v2096
  %2225 = vst [vmem:[%s3 + $0x2a8] sm:$0xff] %v2097
  %2226 = vst [vmem:[%s3 + $0x2b0] sm:$0xff] %v2098
  %2227 = vst [vmem:[%s3 + $0x2b8] sm:$0xff] %v2099
  %2228 = vst [vmem:[%s3 + $0x2c0] sm:$0xff] %v2100
  %2229 = vst [vmem:[%s3 + $0x2c8] sm:$0xff] %v2101
  %2230 = vst [vmem:[%s3 + $0x2d0] sm:$0xff] %v2102
  %2231 = vst [vmem:[%s3 + $0x2d8] sm:$0xff] %v2103
  %2232 = vst [vmem:[%s3 + $0x2e0] sm:$0xff] %v2104
  %2233 = vst [vmem:[%s3 + $0x2e8] sm:$0xff] %v2105
  %2234 = vst [vmem:[%s3 + $0x2f0] sm:$0xff] %v2106
  %2235 = vst [vmem:[%s3 + $0x2f8] sm:$0xff] %v2107
  %2236 = vst [vmem:[%s3 + $0x300] sm:$0xff] %v2108
  %2237 = vst [vmem:[%s3 + $0x308] sm:$0xff] %v2109
  %2238 = vst [vmem:[%s3 + $0x310] sm:$0xff] %v2110
  %2239 = vst [vmem:[%s3 + $0x318] sm:$0xff] %v2111
  %2240 = vst [vmem:[%s3 + $0x320] sm:$0xff] %v2112
  %2241 = vst [vmem:[%s3 + $0x328] sm:$0xff] %v2113
  %2242 = vst [vmem:[%s3 + $0x330] sm:$0xff] %v2114
  %2243 = vst [vmem:[%s3 + $0x338] sm:$0xff] %v2115
  %2244 = vst [vmem:[%s3 + $0x340] sm:$0xff] %v2116
  %2245 = vst [vmem:[%s3 + $0x348] sm:$0xff] %v2117
  %2246 = vst [vmem:[%s3 + $0x350] sm:$0xff] %v2118
  %2247 = vst [vmem:[%s3 + $0x358] sm:$0xff] %v2119
  %2248 = vst [vmem:[%s3 + $0x360] sm:$0xff] %v2120
  %2249 = vst [vmem:[%s3 + $0x368] sm:$0xff] %v2121
  %2250 = vst [vmem:[%s3 + $0x370] sm:$0xff] %v2122
  %2251 = vst [vmem:[%s3 + $0x378] sm:$0xff] %v2123
  %2252 = vst [vmem:[%s3 + $0x380] sm:$0xff] %v2124
  %2253 = vst [vmem:[%s3 + $0x388] sm:$0xff] %v2125
  %2254 = vst [vmem:[%s3 + $0x390] sm:$0xff] %v2126
  %2255 = vst [vmem:[%s3 + $0x398] sm:$0xff] %v2127
  %2256 = vst [vmem:[%s3 + $0x3a0] sm:$0xff] %v2128
  %2257 = vst [vmem:[%s3 + $0x3a8] sm:$0xff] %v2129
  %2258 = vst [vmem:[%s3 + $0x3b0] sm:$0xff] %v2130
  %2259 = vst [vmem:[%s3 + $0x3b8] sm:$0xff] %v2131
  %2260 = vst [vmem:[%s3 + $0x3c0] sm:$0xff] %v2132
  %2261 = vst [vmem:[%s3 + $0x3c8] sm:$0xff] %v2133
  %2262 = vst [vmem:[%s3 + $0x3d0] sm:$0xff] %v2134
  %2263 = vst [vmem:[%s3 + $0x3d8] sm:$0xff] %v2135
  %2264 = vst [vmem:[%s3 + $0x3e0] sm:$0xff] %v2136
  %2265 = vst [vmem:[%s3 + $0x3e8] sm:$0xff] %v2137
  %2266 = vst [vmem:[%s3 + $0x3f0] sm:$0xff] %v2138
  %2267 = vst [vmem:[%s3 + $0x3f8] sm:$0xff] %v2139
  // Predicated region
  $region14: #{forward.18} parent=0 // pred_check
    _
  $region15: #{forward.18} parent=0 // pred_check_branch
    %2269 = sbr.rel (0) target = $region17
  $region16: #{forward.18} parent=0 // pred_region
    _
  $region17: #{forward.18} parent=0 // pred_fallthru
    _
  // Predicated region
  $region18: #{forward.18} parent=0 // pred_check
    _
  $region19: #{forward.18} parent=0 // pred_check_branch
    %2271 = sbr.rel (0) target = $region21
  $region20: #{forward.18} parent=0 // pred_region
    _
  $region21: #{forward.18} parent=0 // pred_fallthru
    _

// kernel: forward.14
$region0: #{forward.14}
  #allocation0 [shape = 'u32[]', space=smem, size = 0x4, offset = 0x4, fixed_abs, tag = 'smem constant byte address 0x4 - core index']
  #allocation1 [shape = 'u32[144,128]{1,0:T(1,128)}', space=vmem, size = 0x12000, scoped, tag = 'internal scratch']
  %s0 = inlined_call_operand.vmem [shape: bf16[16,512], index: 0, kind: input, shape index: {}]
  %s1 = inlined_call_operand.vmem [shape: bf16[512,128], index: 1, kind: input, shape index: {}]
  %s2 = inlined_call_operand.vmem [shape: f32[1,128], index: 2, kind: input, shape index: {}]
  %s3 = inlined_call_operand.vmem [shape: f32[16,128], index: 3, kind: output, shape index: {}]
  %s4 = sld [smem:[#allocation0]]
  $region22: #{forward.14} parent=0
    _
  %s6 = ssub.s32 1, %s4
  %s7 = scalar_select 0, %s6, %s4
  // Predicated region
  $region2: #{forward.14} parent=0 // pred_check
    _
  $region3: #{forward.14} parent=0 // pred_check_branch
    %9 = sbr.rel (0) target = $region5
  $region4: #{forward.14} parent=0 // pred_region
    _
  $region5: #{forward.14} parent=0 // pred_fallthru
    _
  // Predicated region
  $region6: #{forward.14} parent=0 // pred_check
    _
  $region7: #{forward.14} parent=0 // pred_check_branch
    %11 = sbr.rel (0) target = $region9
  $region8: #{forward.14} parent=0 // pred_region
    _
  $region9: #{forward.14} parent=0 // pred_fallthru
    _
  // Predicated region
  $region10: #{forward.14} parent=0 // pred_check
    _
  $region11: #{forward.14} parent=0 // pred_check_branch
    %13 = sbr.rel (0) target = $region13
  $region12: #{forward.14} parent=0 // pred_region
    _
  $region13: #{forward.14} parent=0 // pred_fallthru
    _
  %v15 = vld [vmem:[%s0] sm:$0xff]
  %v16 = vld [vmem:[%s0 + $0x8] sm:$0xff]
  %v17 = vld [vmem:[%s0 + $0x10] sm:$0xff]
  %v18 = vld [vmem:[%s0 + $0x18] sm:$0xff]
  %v19 = vld [vmem:[%s1] sm:$0xf]
  %v20 = vld [vmem:[%s1 + $0x4] sm:$0xf]
  %v21 = vld [vmem:[%s1 + $0x8] sm:$0xf]
  %v22 = vld [vmem:[%s1 + $0xc] sm:$0xf]
  %v23 = vld [vmem:[%s1 + $0x10] sm:$0xf]
  %v24 = vld [vmem:[%s1 + $0x14] sm:$0xf]
  %v25 = vld [vmem:[%s1 + $0x18] sm:$0xf]
  %v26 = vld [vmem:[%s1 + $0x1c] sm:$0xf]
  %v27 = vld [vmem:[%s1 + $0x20] sm:$0xf]
  %v28 = vld [vmem:[%s1 + $0x24] sm:$0xf]
  %v29 = vld [vmem:[%s1 + $0x28] sm:$0xf]
  %v30 = vld [vmem:[%s1 + $0x2c] sm:$0xf]
  %v31 = vld [vmem:[%s1 + $0x30] sm:$0xf]
  %v32 = vld [vmem:[%s1 + $0x34] sm:$0xf]
  %v33 = vld [vmem:[%s1 + $0x38] sm:$0xf]
  %v34 = vld [vmem:[%s1 + $0x3c] sm:$0xf]
  %v35 = vld [vmem:[%s1 + $0x40] sm:$0xf]
  %v36 = vld [vmem:[%s1 + $0x44] sm:$0xf]
  %v37 = vld [vmem:[%s1 + $0x48] sm:$0xf]
  %v38 = vld [vmem:[%s1 + $0x4c] sm:$0xf]
  %v39 = vld [vmem:[%s1 + $0x50] sm:$0xf]
  %v40 = vld [vmem:[%s1 + $0x54] sm:$0xf]
  %v41 = vld [vmem:[%s1 + $0x58] sm:$0xf]
  %v42 = vld [vmem:[%s1 + $0x5c] sm:$0xf]
  %v43 = vld [vmem:[%s1 + $0x60] sm:$0xf]
  %v44 = vld [vmem:[%s1 + $0x64] sm:$0xf]
  %v45 = vld [vmem:[%s1 + $0x68] sm:$0xf]
  %v46 = vld [vmem:[%s1 + $0x6c] sm:$0xf]
  %v47 = vld [vmem:[%s1 + $0x70] sm:$0xf]
  %v48 = vld [vmem:[%s1 + $0x74] sm:$0xf]
  %v49 = vld [vmem:[%s1 + $0x78] sm:$0xf]
  %v50 = vld [vmem:[%s1 + $0x7c] sm:$0xf]
  %v51 = vld [vmem:[%s1 + $0x80] sm:$0xf]
  %v52 = vld [vmem:[%s1 + $0x84] sm:$0xf]
  %v53 = vld [vmem:[%s1 + $0x88] sm:$0xf]
  %v54 = vld [vmem:[%s1 + $0x8c] sm:$0xf]
  %v55 = vld [vmem:[%s1 + $0x90] sm:$0xf]
  %v56 = vld [vmem:[%s1 + $0x94] sm:$0xf]
  %v57 = vld [vmem:[%s1 + $0x98] sm:$0xf]
  %v58 = vld [vmem:[%s1 + $0x9c] sm:$0xf]
  %v59 = vld [vmem:[%s1 + $0xa0] sm:$0xf]
  %v60 = vld [vmem:[%s1 + $0xa4] sm:$0xf]
  %v61 = vld [vmem:[%s1 + $0xa8] sm:$0xf]
  %v62 = vld [vmem:[%s1 + $0xac] sm:$0xf]
  %v63 = vld [vmem:[%s1 + $0xb0] sm:$0xf]
  %v64 = vld [vmem:[%s1 + $0xb4] sm:$0xf]
  %v65 = vld [vmem:[%s1 + $0xb8] sm:$0xf]
  %v66 = vld [vmem:[%s1 + $0xbc] sm:$0xf]
  %v67 = vld [vmem:[%s1 + $0xc0] sm:$0xf]
  %v68 = vld [vmem:[%s1 + $0xc4] sm:$0xf]
  %v69 = vld [vmem:[%s1 + $0xc8] sm:$0xf]
  %v70 = vld [vmem:[%s1 + $0xcc] sm:$0xf]
  %v71 = vld [vmem:[%s1 + $0xd0] sm:$0xf]
  %v72 = vld [vmem:[%s1 + $0xd4] sm:$0xf]
  %v73 = vld [vmem:[%s1 + $0xd8] sm:$0xf]
  %v74 = vld [vmem:[%s1 + $0xdc] sm:$0xf]
  %v75 = vld [vmem:[%s1 + $0xe0] sm:$0xf]
  %v76 = vld [vmem:[%s1 + $0xe4] sm:$0xf]
  %v77 = vld [vmem:[%s1 + $0xe8] sm:$0xf]
  %v78 = vld [vmem:[%s1 + $0xec] sm:$0xf]
  %v79 = vld [vmem:[%s1 + $0xf0] sm:$0xf]
  %v80 = vld [vmem:[%s1 + $0xf4] sm:$0xf]
  %v81 = vld [vmem:[%s1 + $0xf8] sm:$0xf]
  %v82 = vld [vmem:[%s1 + $0xfc] sm:$0xf]
  %v83 = vld [vmem:[%s2] sm:$0x1]
  %v85 = vlaneseq
  %v86 = vshrl.u32 %v85, 7
  %v87 = vsub.s32 0, %v86
  %v88 = vrot.slane %v83, %v87
  %v94 = vunpack.c.l.b16 %v15
  %v95 = vunpack.c.h.b16 %v15
  %v96 = vunpack.c.l.b16 %v16
  %v97 = vunpack.c.h.b16 %v16
  %v98 = vunpack.c.l.b16 %v17
  %v99 = vunpack.c.h.b16 %v17
  %v100 = vunpack.c.l.b16 %v18
  %v101 = vunpack.c.h.b16 %v18
  %v102 = vpack.c.b16 %v98, %v94
  %v103 = vpack.c.b16 %v99, %v95
  %v104 = vpack.c.b16 %v100, %v96
  %v105 = vpack.c.b16 %v101, %v97
  %v174 = vunpack.c.l.b16 %v19
  %v175 = vunpack.c.l.b16 %v20
  %v176 = vunpack.c.l.b16 %v21
  %v177 = vunpack.c.l.b16 %v22
  %v178 = vunpack.c.l.b16 %v23
  %v179 = vunpack.c.l.b16 %v24
  %v180 = vunpack.c.l.b16 %v25
  %v181 = vunpack.c.l.b16 %v26
  %v182 = vunpack.c.l.b16 %v27
  %v183 = vunpack.c.l.b16 %v28
  %v184 = vunpack.c.l.b16 %v29
  %v185 = vunpack.c.l.b16 %v30
  %v186 = vunpack.c.l.b16 %v31
  %v187 = vunpack.c.l.b16 %v32
  %v188 = vunpack.c.l.b16 %v33
  %v189 = vunpack.c.l.b16 %v34
  %v190 = vunpack.c.l.b16 %v35
  %v191 = vunpack.c.l.b16 %v36
  %v192 = vunpack.c.l.b16 %v37
  %v193 = vunpack.c.l.b16 %v38
  %v194 = vunpack.c.l.b16 %v39
  %v195 = vunpack.c.l.b16 %v40
  %v196 = vunpack.c.l.b16 %v41
  %v197 = vunpack.c.l.b16 %v42
  %v198 = vunpack.c.l.b16 %v43
  %v199 = vunpack.c.l.b16 %v44
  %v200 = vunpack.c.l.b16 %v45
  %v201 = vunpack.c.l.b16 %v46
  %v202 = vunpack.c.l.b16 %v47
  %v203 = vunpack.c.l.b16 %v48
  %v204 = vunpack.c.l.b16 %v49
  %v205 = vunpack.c.l.b16 %v50
  %v206 = vunpack.c.l.b16 %v51
  %v207 = vunpack.c.l.b16 %v52
  %v208 = vunpack.c.l.b16 %v53
  %v209 = vunpack.c.l.b16 %v54
  %v210 = vunpack.c.l.b16 %v55
  %v211 = vunpack.c.l.b16 %v56
  %v212 = vunpack.c.l.b16 %v57
  %v213 = vunpack.c.l.b16 %v58
  %v214 = vunpack.c.l.b16 %v59
  %v215 = vunpack.c.l.b16 %v60
  %v216 = vunpack.c.l.b16 %v61
  %v217 = vunpack.c.l.b16 %v62
  %v218 = vunpack.c.l.b16 %v63
  %v219 = vunpack.c.l.b16 %v64
  %v220 = vunpack.c.l.b16 %v65
  %v221 = vunpack.c.l.b16 %v66
  %v222 = vunpack.c.l.b16 %v67
  %v223 = vunpack.c.l.b16 %v68
  %v224 = vunpack.c.l.b16 %v69
  %v225 = vunpack.c.l.b16 %v70
  %v226 = vunpack.c.l.b16 %v71
  %v227 = vunpack.c.l.b16 %v72
  %v228 = vunpack.c.l.b16 %v73
  %v229 = vunpack.c.l.b16 %v74
  %v230 = vunpack.c.l.b16 %v75
  %v231 = vunpack.c.l.b16 %v76
  %v232 = vunpack.c.l.b16 %v77
  %v233 = vunpack.c.l.b16 %v78
  %v234 = vunpack.c.l.b16 %v79
  %v235 = vunpack.c.l.b16 %v80
  %v236 = vunpack.c.l.b16 %v81
  %v237 = vunpack.c.l.b16 %v82
  %v238 = vpack.c.b16 %v175, %v174
  %v239 = vpack.c.b16 %v177, %v176
  %v240 = vpack.c.b16 %v179, %v178
  %v241 = vpack.c.b16 %v181, %v180
  %v242 = vpack.c.b16 %v183, %v182
  %v243 = vpack.c.b16 %v185, %v184
  %v244 = vpack.c.b16 %v187, %v186
  %v245 = vpack.c.b16 %v189, %v188
  %v246 = vpack.c.b16 %v191, %v190
  %v247 = vpack.c.b16 %v193, %v192
  %v248 = vpack.c.b16 %v195, %v194
  %v249 = vpack.c.b16 %v197, %v196
  %v250 = vpack.c.b16 %v199, %v198
  %v251 = vpack.c.b16 %v201, %v200
  %v252 = vpack.c.b16 %v203, %v202
  %v253 = vpack.c.b16 %v205, %v204
  %v254 = vpack.c.b16 %v207, %v206
  %v255 = vpack.c.b16 %v209, %v208
  %v256 = vpack.c.b16 %v211, %v210
  %v257 = vpack.c.b16 %v213, %v212
  %v258 = vpack.c.b16 %v215, %v214
  %v259 = vpack.c.b16 %v217, %v216
  %v260 = vpack.c.b16 %v219, %v218
  %v261 = vpack.c.b16 %v221, %v220
  %v262 = vpack.c.b16 %v223, %v222
  %v263 = vpack.c.b16 %v225, %v224
  %v264 = vpack.c.b16 %v227, %v226
  %v265 = vpack.c.b16 %v229, %v228
  %v266 = vpack.c.b16 %v231, %v230
  %v267 = vpack.c.b16 %v233, %v232
  %v268 = vpack.c.b16 %v235, %v234
  %v269 = vpack.c.b16 %v237, %v236
  %302 = vmatprep.subr.bf16.mxu0 0
  %303 = vmatpush1.bf16.msra.mxu0 %v245
  %304 = vmatprep.subr.bf16.mxu0 0
  %305 = vmatpush1.bf16.msra.mxu0 %v244
  %306 = vmatprep.subr.bf16.mxu0 0
  %307 = vmatpush1.bf16.msra.mxu0 %v243
  %308 = vmatprep.subr.bf16.mxu0 0
  %309 = vmatpush1.bf16.msra.mxu0 %v242
  %310 = vmatprep.subr.bf16.mxu0 0
  %311 = vmatpush1.bf16.msra.mxu0 %v241
  %312 = vmatprep.subr.bf16.mxu0 0
  %313 = vmatpush1.bf16.msra.mxu0 %v240
  %314 = vmatprep.subr.bf16.mxu0 0
  %315 = vmatpush1.bf16.msra.mxu0 %v239
  %316 = vmatprep.subr.bf16.mxu0 0
  %317 = vmatpush1.bf16.msra.mxu0 %v238
  %318 = vmatprep.subr.bf16.mxu0 0
  %319 = vmatpush2.bf16.msra.mxu0 %v253
  %320 = vmatprep.subr.bf16.mxu0 0
  %321 = vmatpush2.bf16.msra.mxu0 %v252
  %322 = vmatprep.subr.bf16.mxu0 0
  %323 = vmatpush2.bf16.msra.mxu0 %v251
  %324 = vmatprep.subr.bf16.mxu0 0
  %325 = vmatpush2.bf16.msra.mxu0 %v250
  %326 = vmatprep.subr.bf16.mxu0 0
  %327 = vmatpush2.bf16.msra.mxu0 %v249
  %328 = vmatprep.subr.bf16.mxu0 0
  %329 = vmatpush2.bf16.msra.mxu0 %v248
  %330 = vmatprep.subr.bf16.mxu0 0
  %331 = vmatpush2.bf16.msra.mxu0 %v247
  %332 = vmatprep.subr.bf16.mxu0 0
  %333 = vmatpush2.bf16.msra.mxu0 %v246
  %334 = vmatprep.mubr.bf16.mxu0 %v103
  %335 = vmatmul.mubr.bf16.gmra.mxu0 %v102
  %v336 = vpop.f32.mrf.mxu0
  %v337 = vadd.f32 %v88, %v336
  %v338 = vpop.f32.mrf.mxu0
  %v339 = vpop.f32.mrf.mxu0
  %v340 = vadd.f32 %v88, %v339
  %v341 = vpop.f32.mrf.mxu0
  %342 = vdwg.mxu0
  %343 = vmatprep.subr.bf16.mxu0 0
  %344 = vmatpush1.bf16.msra.mxu0 %v261
  %345 = vmatprep.subr.bf16.mxu0 0
  %346 = vmatpush1.bf16.msra.mxu0 %v260
  %347 = vmatprep.subr.bf16.mxu0 0
  %348 = vmatpush1.bf16.msra.mxu0 %v259
  %349 = vmatprep.subr.bf16.mxu0 0
  %350 = vmatpush1.bf16.msra.mxu0 %v258
  %351 = vmatprep.subr.bf16.mxu0 0
  %352 = vmatpush1.bf16.msra.mxu0 %v257
  %353 = vmatprep.subr.bf16.mxu0 0
  %354 = vmatpush1.bf16.msra.mxu0 %v256
  %355 = vmatprep.subr.bf16.mxu0 0
  %356 = vmatpush1.bf16.msra.mxu0 %v255
  %357 = vmatprep.subr.bf16.mxu0 0
  %358 = vmatpush1.bf16.msra.mxu0 %v254
  %359 = vmatprep.subr.bf16.mxu0 0
  %360 = vmatpush2.bf16.msra.mxu0 %v269
  %361 = vmatprep.subr.bf16.mxu0 0
  %362 = vmatpush2.bf16.msra.mxu0 %v268
  %363 = vmatprep.subr.bf16.mxu0 0
  %364 = vmatpush2.bf16.msra.mxu0 %v267
  %365 = vmatprep.subr.bf16.mxu0 0
  %366 = vmatpush2.bf16.msra.mxu0 %v266
  %367 = vmatprep.subr.bf16.mxu0 0
  %368 = vmatpush2.bf16.msra.mxu0 %v265
  %369 = vmatprep.subr.bf16.mxu0 0
  %370 = vmatpush2.bf16.msra.mxu0 %v264
  %371 = vmatprep.subr.bf16.mxu0 0
  %372 = vmatpush2.bf16.msra.mxu0 %v263
  %373 = vmatprep.subr.bf16.mxu0 0
  %374 = vmatpush2.bf16.msra.mxu0 %v262
  %375 = vmatprep.mubr.bf16.mxu0 %v105
  %376 = vmatmul.mubr.bf16.gmra.mxu0 %v104
  %v377 = vpop.f32.mrf.mxu0
  %v378 = vadd.f32 %v337, %v377
  %v379 = vpop.f32.mrf.mxu0
  %v380 = vpop.f32.mrf.mxu0
  %v381 = vadd.f32 %v340, %v380
  %v382 = vpop.f32.mrf.mxu0
  %383 = vdwg.mxu0
  %v384 = vmul.f32 %v378, 0.01
  %v385 = vmul.f32 %v381, 0.01
  %v386 = vmax.f32 %v378, %v384
  %v387 = vmax.f32 %v381, %v385
  %388 = vst [vmem:[%s3] sm:$0xff] %v386
  %389 = vst [vmem:[%s3 + $0x8] sm:$0xff] %v387
  // Predicated region
  $region14: #{forward.14} parent=0 // pred_check
    _
  $region15: #{forward.14} parent=0 // pred_check_branch
    %391 = sbr.rel (0) target = $region17
  $region16: #{forward.14} parent=0 // pred_region
    _
  $region17: #{forward.14} parent=0 // pred_fallthru
    _
  // Predicated region
  $region18: #{forward.14} parent=0 // pred_check
    _
  $region19: #{forward.14} parent=0 // pred_check_branch
    %393 = sbr.rel (0) target = $region21
  $region20: #{forward.14} parent=0 // pred_region
    _
  $region21: #{forward.14} parent=0 // pred_fallthru
    _

// kernel: forward.19
$region0: #{forward.19}
  #allocation0 [shape = 'u32[]', space=smem, size = 0x4, offset = 0x4, fixed_abs, tag = 'smem constant byte address 0x4 - core index']
  #allocation1 [shape = 'u32[144,128]{1,0:T(1,128)}', space=vmem, size = 0x12000, scoped, tag = 'internal scratch']
  %s0 = inlined_call_operand.vmem [shape: bf16[128,1024], index: 0, kind: input, shape index: {}]
  %s1 = inlined_call_operand.vmem [shape: bf16[1024,256], index: 1, kind: input, shape index: {}]
  %s2 = inlined_call_operand.vmem [shape: f32[1,256], index: 2, kind: input, shape index: {}]
  %s3 = inlined_call_operand.vmem [shape: f32[128,256], index: 3, kind: output, shape index: {}]
  %s4 = sld [smem:[#allocation0]]
  $region22: #{forward.19} parent=0
    _
  %s6 = ssub.s32 1, %s4
  %s7 = scalar_select 0, %s6, %s4
  // Predicated region
  $region2: #{forward.19} parent=0 // pred_check
    _
  $region3: #{forward.19} parent=0 // pred_check_branch
    %9 = sbr.rel (0) target = $region5
  $region4: #{forward.19} parent=0 // pred_region
    _
  $region5: #{forward.19} parent=0 // pred_fallthru
    _
  // Predicated region
  $region6: #{forward.19} parent=0 // pred_check
    _
  $region7: #{forward.19} parent=0 // pred_check_branch
    %11 = sbr.rel (0) target = $region9
  $region8: #{forward.19} parent=0 // pred_region
    _
  $region9: #{forward.19} parent=0 // pred_fallthru
    _
  // Predicated region
  $region10: #{forward.19} parent=0 // pred_check
    _
  $region11: #{forward.19} parent=0 // pred_check_branch
    %13 = sbr.rel (0) target = $region13
  $region12: #{forward.19} parent=0 // pred_region
    _
  $region13: #{forward.19} parent=0 // pred_fallthru
    _
  %v14 = vld [vmem:[%s0] sm:$0xff]
  %v15 = vld [vmem:[%s0 + $0x8] sm:$0xff]
  %v16 = vld [vmem:[%s0 + $0x10] sm:$0xff]
  %v17 = vld [vmem:[%s0 + $0x18] sm:$0xff]
  %v18 = vld [vmem:[%s0 + $0x20] sm:$0xff]
  %v19 = vld [vmem:[%s0 + $0x28] sm:$0xff]
  %v20 = vld [vmem:[%s0 + $0x30] sm:$0xff]
  %v21 = vld [vmem:[%s0 + $0x38] sm:$0xff]
  %v22 = vld [vmem:[%s0 + $0x40] sm:$0xff]
  %v23 = vld [vmem:[%s0 + $0x48] sm:$0xff]
  %v24 = vld [vmem:[%s0 + $0x50] sm:$0xff]
  %v25 = vld [vmem:[%s0 + $0x58] sm:$0xff]
  %v26 = vld [vmem:[%s0 + $0x60] sm:$0xff]
  %v27 = vld [vmem:[%s0 + $0x68] sm:$0xff]
  %v28 = vld [vmem:[%s0 + $0x70] sm:$0xff]
  %v29 = vld [vmem:[%s0 + $0x78] sm:$0xff]
  %v30 = vld [vmem:[%s0 + $0x80] sm:$0xff]
  %v31 = vld [vmem:[%s0 + $0x88] sm:$0xff]
  %v32 = vld [vmem:[%s0 + $0x90] sm:$0xff]
  %v33 = vld [vmem:[%s0 + $0x98] sm:$0xff]
  %v34 = vld [vmem:[%s0 + $0xa0] sm:$0xff]
  %v35 = vld [vmem:[%s0 + $0xa8] sm:$0xff]
  %v36 = vld [vmem:[%s0 + $0xb0] sm:$0xff]
  %v37 = vld [vmem:[%s0 + $0xb8] sm:$0xff]
  %v38 = vld [vmem:[%s0 + $0xc0] sm:$0xff]
  %v39 = vld [vmem:[%s0 + $0xc8] sm:$0xff]
  %v40 = vld [vmem:[%s0 + $0xd0] sm:$0xff]
  %v41 = vld [vmem:[%s0 + $0xd8] sm:$0xff]
  %v42 = vld [vmem:[%s0 + $0xe0] sm:$0xff]
  %v43 = vld [vmem:[%s0 + $0xe8] sm:$0xff]
  %v44 = vld [vmem:[%s0 + $0xf0] sm:$0xff]
  %v45 = vld [vmem:[%s0 + $0xf8] sm:$0xff]
  %v46 = vld [vmem:[%s0 + $0x100] sm:$0xff]
  %v47 = vld [vmem:[%s0 + $0x108] sm:$0xff]
  %v48 = vld [vmem:[%s0 + $0x110] sm:$0xff]
  %v49 = vld [vmem:[%s0 + $0x118] sm:$0xff]
  %v50 = vld [vmem:[%s0 + $0x120] sm:$0xff]
  %v51 = vld [vmem:[%s0 + $0x128] sm:$0xff]
  %v52 = vld [vmem:[%s0 + $0x130] sm:$0xff]
  %v53 = vld [vmem:[%s0 + $0x138] sm:$0xff]
  %v54 = vld [vmem:[%s0 + $0x140] sm:$0xff]
  %v55 = vld [vmem:[%s0 + $0x148] sm:$0xff]
  %v56 = vld [vmem:[%s0 + $0x150] sm:$0xff]
  %v57 = vld [vmem:[%s0 + $0x158] sm:$0xff]
  %v58 = vld [vmem:[%s0 + $0x160] sm:$0xff]
  %v59 = vld [vmem:[%s0 + $0x168] sm:$0xff]
  %v60 = vld [vmem:[%s0 + $0x170] sm:$0xff]
  %v61 = vld [vmem:[%s0 + $0x178] sm:$0xff]
  %v62 = vld [vmem:[%s0 + $0x180] sm:$0xff]
  %v63 = vld [vmem:[%s0 + $0x188] sm:$0xff]
  %v64 = vld [vmem:[%s0 + $0x190] sm:$0xff]
  %v65 = vld [vmem:[%s0 + $0x198] sm:$0xff]
  %v66 = vld [vmem:[%s0 + $0x1a0] sm:$0xff]
  %v67 = vld [vmem:[%s0 + $0x1a8] sm:$0xff]
  %v68 = vld [vmem:[%s0 + $0x1b0] sm:$0xff]
  %v69 = vld [vmem:[%s0 + $0x1b8] sm:$0xff]
  %v70 = vld [vmem:[%s0 + $0x1c0] sm:$0xff]
  %v71 = vld [vmem:[%s0 + $0x1c8] sm:$0xff]
  %v72 = vld [vmem:[%s0 + $0x1d0] sm:$0xff]
  %v73 = vld [vmem:[%s0 + $0x1d8] sm:$0xff]
  %v74 = vld [vmem:[%s0 + $0x1e0] sm:$0xff]
  %v75 = vld [vmem:[%s0 + $0x1e8] sm:$0xff]
  %v76 = vld [vmem:[%s0 + $0x1f0] sm:$0xff]
  %v77 = vld [vmem:[%s0 + $0x1f8] sm:$0xff]
  %v78 = vld [vmem:[%s1] sm:$0xff]
  %v79 = vld [vmem:[%s1 + $0x8] sm:$0xff]
  %v80 = vld [vmem:[%s1 + $0x10] sm:$0xff]
  %v81 = vld [vmem:[%s1 + $0x18] sm:$0xff]
  %v82 = vld [vmem:[%s1 + $0x20] sm:$0xff]
  %v83 = vld [vmem:[%s1 + $0x28] sm:$0xff]
  %v84 = vld [vmem:[%s1 + $0x30] sm:$0xff]
  %v85 = vld [vmem:[%s1 + $0x38] sm:$0xff]
  %v86 = vld [vmem:[%s1 + $0x40] sm:$0xff]
  %v87 = vld [vmem:[%s1 + $0x48] sm:$0xff]
  %v88 = vld [vmem:[%s1 + $0x50] sm:$0xff]
  %v89 = vld [vmem:[%s1 + $0x58] sm:$0xff]
  %v90 = vld [vmem:[%s1 + $0x60] sm:$0xff]
  %v91 = vld [vmem:[%s1 + $0x68] sm:$0xff]
  %v92 = vld [vmem:[%s1 + $0x70] sm:$0xff]
  %v93 = vld [vmem:[%s1 + $0x78] sm:$0xff]
  %v94 = vld [vmem:[%s1 + $0x80] sm:$0xff]
  %v95 = vld [vmem:[%s1 + $0x88] sm:$0xff]
  %v96 = vld [vmem:[%s1 + $0x90] sm:$0xff]
  %v97 = vld [vmem:[%s1 + $0x98] sm:$0xff]
  %v98 = vld [vmem:[%s1 + $0xa0] sm:$0xff]
  %v99 = vld [vmem:[%s1 + $0xa8] sm:$0xff]
  %v100 = vld [vmem:[%s1 + $0xb0] sm:$0xff]
  %v101 = vld [vmem:[%s1 + $0xb8] sm:$0xff]
  %v102 = vld [vmem:[%s1 + $0xc0] sm:$0xff]
  %v103 = vld [vmem:[%s1 + $0xc8] sm:$0xff]
  %v104 = vld [vmem:[%s1 + $0xd0] sm:$0xff]
  %v105 = vld [vmem:[%s1 + $0xd8] sm:$0xff]
  %v106 = vld [vmem:[%s1 + $0xe0] sm:$0xff]
  %v107 = vld [vmem:[%s1 + $0xe8] sm:$0xff]
  %v108 = vld [vmem:[%s1 + $0xf0] sm:$0xff]
  %v109 = vld [vmem:[%s1 + $0xf8] sm:$0xff]
  %v110 = vld [vmem:[%s1 + $0x100] sm:$0xff]
  %v111 = vld [vmem:[%s1 + $0x108] sm:$0xff]
  %v112 = vld [vmem:[%s1 + $0x110] sm:$0xff]
  %v113 = vld [vmem:[%s1 + $0x118] sm:$0xff]
  %v114 = vld [vmem:[%s1 + $0x120] sm:$0xff]
  %v115 = vld [vmem:[%s1 + $0x128] sm:$0xff]
  %v116 = vld [vmem:[%s1 + $0x130] sm:$0xff]
  %v117 = vld [vmem:[%s1 + $0x138] sm:$0xff]
  %v118 = vld [vmem:[%s1 + $0x140] sm:$0xff]
  %v119 = vld [vmem:[%s1 + $0x148] sm:$0xff]
  %v120 = vld [vmem:[%s1 + $0x150] sm:$0xff]
  %v121 = vld [vmem:[%s1 + $0x158] sm:$0xff]
  %v122 = vld [vmem:[%s1 + $0x160] sm:$0xff]
  %v123 = vld [vmem:[%s1 + $0x168] sm:$0xff]
  %v124 = vld [vmem:[%s1 + $0x170] sm:$0xff]
  %v125 = vld [vmem:[%s1 + $0x178] sm:$0xff]
  %v126 = vld [vmem:[%s1 + $0x180] sm:$0xff]
  %v127 = vld [vmem:[%s1 + $0x188] sm:$0xff]
  %v128 = vld [vmem:[%s1 + $0x190] sm:$0xff]
  %v129 = vld [vmem:[%s1 + $0x198] sm:$0xff]
  %v130 = vld [vmem:[%s1 + $0x1a0] sm:$0xff]
  %v131 = vld [vmem:[%s1 + $0x1a8] sm:$0xff]
  %v132 = vld [vmem:[%s1 + $0x1b0] sm:$0xff]
  %v133 = vld [vmem:[%s1 + $0x1b8] sm:$0xff]
  %v134 = vld [vmem:[%s1 + $0x1c0] sm:$0xff]
  %v135 = vld [vmem:[%s1 + $0x1c8] sm:$0xff]
  %v136 = vld [vmem:[%s1 + $0x1d0] sm:$0xff]
  %v137 = vld [vmem:[%s1 + $0x1d8] sm:$0xff]
  %v138 = vld [vmem:[%s1 + $0x1e0] sm:$0xff]
  %v139 = vld [vmem:[%s1 + $0x1e8] sm:$0xff]
  %v140 = vld [vmem:[%s1 + $0x1f0] sm:$0xff]
  %v141 = vld [vmem:[%s1 + $0x1f8] sm:$0xff]
  %v142 = vld [vmem:[%s1 + $0x200] sm:$0xff]
  %v143 = vld [vmem:[%s1 + $0x208] sm:$0xff]
  %v144 = vld [vmem:[%s1 + $0x210] sm:$0xff]
  %v145 = vld [vmem:[%s1 + $0x218] sm:$0xff]
  %v146 = vld [vmem:[%s1 + $0x220] sm:$0xff]
  %v147 = vld [vmem:[%s1 + $0x228] sm:$0xff]
  %v148 = vld [vmem:[%s1 + $0x230] sm:$0xff]
  %v149 = vld [vmem:[%s1 + $0x238] sm:$0xff]
  %v150 = vld [vmem:[%s1 + $0x240] sm:$0xff]
  %v151 = vld [vmem:[%s1 + $0x248] sm:$0xff]
  %v152 = vld [vmem:[%s1 + $0x250] sm:$0xff]
  %v153 = vld [vmem:[%s1 + $0x258] sm:$0xff]
  %v154 = vld [vmem:[%s1 + $0x260] sm:$0xff]
  %v155 = vld [vmem:[%s1 + $0x268] sm:$0xff]
  %v156 = vld [vmem:[%s1 + $0x270] sm:$0xff]
  %v157 = vld [vmem:[%s1 + $0x278] sm:$0xff]
  %v158 = vld [vmem:[%s1 + $0x280] sm:$0xff]
  %v159 = vld [vmem:[%s1 + $0x288] sm:$0xff]
  %v160 = vld [vmem:[%s1 + $0x290] sm:$0xff]
  %v161 = vld [vmem:[%s1 + $0x298] sm:$0xff]
  %v162 = vld [vmem:[%s1 + $0x2a0] sm:$0xff]
  %v163 = vld [vmem:[%s1 + $0x2a8] sm:$0xff]
  %v164 = vld [vmem:[%s1 + $0x2b0] sm:$0xff]
  %v165 = vld [vmem:[%s1 + $0x2b8] sm:$0xff]
  %v166 = vld [vmem:[%s1 + $0x2c0] sm:$0xff]
  %v167 = vld [vmem:[%s1 + $0x2c8] sm:$0xff]
  %v168 = vld [vmem:[%s1 + $0x2d0] sm:$0xff]
  %v169 = vld [vmem:[%s1 + $0x2d8] sm:$0xff]
  %v170 = vld [vmem:[%s1 + $0x2e0] sm:$0xff]
  %v171 = vld [vmem:[%s1 + $0x2e8] sm:$0xff]
  %v172 = vld [vmem:[%s1 + $0x2f0] sm:$0xff]
  %v173 = vld [vmem:[%s1 + $0x2f8] sm:$0xff]
  %v174 = vld [vmem:[%s1 + $0x300] sm:$0xff]
  %v175 = vld [vmem:[%s1 + $0x308] sm:$0xff]
  %v176 = vld [vmem:[%s1 + $0x310] sm:$0xff]
  %v177 = vld [vmem:[%s1 + $0x318] sm:$0xff]
  %v178 = vld [vmem:[%s1 + $0x320] sm:$0xff]
  %v179 = vld [vmem:[%s1 + $0x328] sm:$0xff]
  %v180 = vld [vmem:[%s1 + $0x330] sm:$0xff]
  %v181 = vld [vmem:[%s1 + $0x338] sm:$0xff]
  %v182 = vld [vmem:[%s1 + $0x340] sm:$0xff]
  %v183 = vld [vmem:[%s1 + $0x348] sm:$0xff]
  %v184 = vld [vmem:[%s1 + $0x350] sm:$0xff]
  %v185 = vld [vmem:[%s1 + $0x358] sm:$0xff]
  %v186 = vld [vmem:[%s1 + $0x360] sm:$0xff]
  %v187 = vld [vmem:[%s1 + $0x368] sm:$0xff]
  %v188 = vld [vmem:[%s1 + $0x370] sm:$0xff]
  %v189 = vld [vmem:[%s1 + $0x378] sm:$0xff]
  %v190 = vld [vmem:[%s1 + $0x380] sm:$0xff]
  %v191 = vld [vmem:[%s1 + $0x388] sm:$0xff]
  %v192 = vld [vmem:[%s1 + $0x390] sm:$0xff]
  %v193 = vld [vmem:[%s1 + $0x398] sm:$0xff]
  %v194 = vld [vmem:[%s1 + $0x3a0] sm:$0xff]
  %v195 = vld [vmem:[%s1 + $0x3a8] sm:$0xff]
  %v196 = vld [vmem:[%s1 + $0x3b0] sm:$0xff]
  %v197 = vld [vmem:[%s1 + $0x3b8] sm:$0xff]
  %v198 = vld [vmem:[%s1 + $0x3c0] sm:$0xff]
  %v199 = vld [vmem:[%s1 + $0x3c8] sm:$0xff]
  %v200 = vld [vmem:[%s1 + $0x3d0] sm:$0xff]
  %v201 = vld [vmem:[%s1 + $0x3d8] sm:$0xff]
  %v202 = vld [vmem:[%s1 + $0x3e0] sm:$0xff]
  %v203 = vld [vmem:[%s1 + $0x3e8] sm:$0xff]
  %v204 = vld [vmem:[%s1 + $0x3f0] sm:$0xff]
  %v205 = vld [vmem:[%s1 + $0x3f8] sm:$0xff]
  %v206 = vld [vmem:[%s2] sm:$0x3]
  %v208 = vlaneseq
  %v209 = vshrl.u32 %v208, 7
  %v210 = vsub.s32 0, %v209
  %v211 = vrot.slane %v206, %v210
  %v212 = vlaneseq
  %v213 = vshrl.u32 %v212, 7
  %v214 = vsub.s32 1, %v213
  %v215 = vrot.slane %v206, %v214
  %v282 = vunpack.c.l.b16 %v14
  %v283 = vunpack.c.h.b16 %v14
  %v284 = vunpack.c.l.b16 %v15
  %v285 = vunpack.c.h.b16 %v15
  %v286 = vunpack.c.l.b16 %v16
  %v287 = vunpack.c.h.b16 %v16
  %v288 = vunpack.c.l.b16 %v17
  %v289 = vunpack.c.h.b16 %v17
  %v290 = vunpack.c.l.b16 %v18
  %v291 = vunpack.c.h.b16 %v18
  %v292 = vunpack.c.l.b16 %v19
  %v293 = vunpack.c.h.b16 %v19
  %v294 = vunpack.c.l.b16 %v20
  %v295 = vunpack.c.h.b16 %v20
  %v296 = vunpack.c.l.b16 %v21
  %v297 = vunpack.c.h.b16 %v21
  %v298 = vunpack.c.l.b16 %v22
  %v299 = vunpack.c.h.b16 %v22
  %v300 = vunpack.c.l.b16 %v23
  %v301 = vunpack.c.h.b16 %v23
  %v302 = vunpack.c.l.b16 %v24
  %v303 = vunpack.c.h.b16 %v24
  %v304 = vunpack.c.l.b16 %v25
  %v305 = vunpack.c.h.b16 %v25
  %v306 = vunpack.c.l.b16 %v26
  %v307 = vunpack.c.h.b16 %v26
  %v308 = vunpack.c.l.b16 %v27
  %v309 = vunpack.c.h.b16 %v27
  %v310 = vunpack.c.l.b16 %v28
  %v311 = vunpack.c.h.b16 %v28
  %v312 = vunpack.c.l.b16 %v29
  %v313 = vunpack.c.h.b16 %v29
  %v314 = vunpack.c.l.b16 %v30
  %v315 = vunpack.c.h.b16 %v30
  %v316 = vunpack.c.l.b16 %v31
  %v317 = vunpack.c.h.b16 %v31
  %v318 = vunpack.c.l.b16 %v32
  %v319 = vunpack.c.h.b16 %v32
  %v320 = vunpack.c.l.b16 %v33
  %v321 = vunpack.c.h.b16 %v33
  %v322 = vunpack.c.l.b16 %v34
  %v323 = vunpack.c.h.b16 %v34
  %v324 = vunpack.c.l.b16 %v35
  %v325 = vunpack.c.h.b16 %v35
  %v326 = vunpack.c.l.b16 %v36
  %v327 = vunpack.c.h.b16 %v36
  %v328 = vunpack.c.l.b16 %v37
  %v329 = vunpack.c.h.b16 %v37
  %v330 = vunpack.c.l.b16 %v38
  %v331 = vunpack.c.h.b16 %v38
  %v332 = vunpack.c.l.b16 %v39
  %v333 = vunpack.c.h.b16 %v39
  %v334 = vunpack.c.l.b16 %v40
  %v335 = vunpack.c.h.b16 %v40
  %v336 = vunpack.c.l.b16 %v41
  %v337 = vunpack.c.h.b16 %v41
  %v338 = vunpack.c.l.b16 %v42
  %v339 = vunpack.c.h.b16 %v42
  %v340 = vunpack.c.l.b16 %v43
  %v341 = vunpack.c.h.b16 %v43
  %v342 = vunpack.c.l.b16 %v44
  %v343 = vunpack.c.h.b16 %v44
  %v344 = vunpack.c.l.b16 %v45
  %v345 = vunpack.c.h.b16 %v45
  %v346 = vunpack.c.l.b16 %v46
  %v347 = vunpack.c.h.b16 %v46
  %v348 = vunpack.c.l.b16 %v47
  %v349 = vunpack.c.h.b16 %v47
  %v350 = vunpack.c.l.b16 %v48
  %v351 = vunpack.c.h.b16 %v48
  %v352 = vunpack.c.l.b16 %v49
  %v353 = vunpack.c.h.b16 %v49
  %v354 = vunpack.c.l.b16 %v50
  %v355 = vunpack.c.h.b16 %v50
  %v356 = vunpack.c.l.b16 %v51
  %v357 = vunpack.c.h.b16 %v51
  %v358 = vunpack.c.l.b16 %v52
  %v359 = vunpack.c.h.b16 %v52
  %v360 = vunpack.c.l.b16 %v53
  %v361 = vunpack.c.h.b16 %v53
  %v362 = vunpack.c.l.b16 %v54
  %v363 = vunpack.c.h.b16 %v54
  %v364 = vunpack.c.l.b16 %v55
  %v365 = vunpack.c.h.b16 %v55
  %v366 = vunpack.c.l.b16 %v56
  %v367 = vunpack.c.h.b16 %v56
  %v368 = vunpack.c.l.b16 %v57
  %v369 = vunpack.c.h.b16 %v57
  %v370 = vunpack.c.l.b16 %v58
  %v371 = vunpack.c.h.b16 %v58
  %v372 = vunpack.c.l.b16 %v59
  %v373 = vunpack.c.h.b16 %v59
  %v374 = vunpack.c.l.b16 %v60
  %v375 = vunpack.c.h.b16 %v60
  %v376 = vunpack.c.l.b16 %v61
  %v377 = vunpack.c.h.b16 %v61
  %v378 = vunpack.c.l.b16 %v62
  %v379 = vunpack.c.h.b16 %v62
  %v380 = vunpack.c.l.b16 %v63
  %v381 = vunpack.c.h.b16 %v63
  %v382 = vunpack.c.l.b16 %v64
  %v383 = vunpack.c.h.b16 %v64
  %v384 = vunpack.c.l.b16 %v65
  %v385 = vunpack.c.h.b16 %v65
  %v386 = vunpack.c.l.b16 %v66
  %v387 = vunpack.c.h.b16 %v66
  %v388 = vunpack.c.l.b16 %v67
  %v389 = vunpack.c.h.b16 %v67
  %v390 = vunpack.c.l.b16 %v68
  %v391 = vunpack.c.h.b16 %v68
  %v392 = vunpack.c.l.b16 %v69
  %v393 = vunpack.c.h.b16 %v69
  %v394 = vunpack.c.l.b16 %v70
  %v395 = vunpack.c.h.b16 %v70
  %v396 = vunpack.c.l.b16 %v71
  %v397 = vunpack.c.h.b16 %v71
  %v398 = vunpack.c.l.b16 %v72
  %v399 = vunpack.c.h.b16 %v72
  %v400 = vunpack.c.l.b16 %v73
  %v401 = vunpack.c.h.b16 %v73
  %v402 = vunpack.c.l.b16 %v74
  %v403 = vunpack.c.h.b16 %v74
  %v404 = vunpack.c.l.b16 %v75
  %v405 = vunpack.c.h.b16 %v75
  %v406 = vunpack.c.l.b16 %v76
  %v407 = vunpack.c.h.b16 %v76
  %v408 = vunpack.c.l.b16 %v77
  %v409 = vunpack.c.h.b16 %v77
  %v410 = vpack.c.b16 %v290, %v282
  %v411 = vpack.c.b16 %v291, %v283
  %v412 = vpack.c.b16 %v292, %v284
  %v413 = vpack.c.b16 %v293, %v285
  %v414 = vpack.c.b16 %v294, %v286
  %v415 = vpack.c.b16 %v295, %v287
  %v416 = vpack.c.b16 %v296, %v288
  %v417 = vpack.c.b16 %v297, %v289
  %v418 = vpack.c.b16 %v306, %v298
  %v419 = vpack.c.b16 %v307, %v299
  %v420 = vpack.c.b16 %v308, %v300
  %v421 = vpack.c.b16 %v309, %v301
  %v422 = vpack.c.b16 %v310, %v302
  %v423 = vpack.c.b16 %v311, %v303
  %v424 = vpack.c.b16 %v312, %v304
  %v425 = vpack.c.b16 %v313, %v305
  %v426 = vpack.c.b16 %v322, %v314
  %v427 = vpack.c.b16 %v323, %v315
  %v428 = vpack.c.b16 %v324, %v316
  %v429 = vpack.c.b16 %v325, %v317
  %v430 = vpack.c.b16 %v326, %v318
  %v431 = vpack.c.b16 %v327, %v319
  %v432 = vpack.c.b16 %v328, %v320
  %v433 = vpack.c.b16 %v329, %v321
  %v434 = vpack.c.b16 %v338, %v330
  %v435 = vpack.c.b16 %v339, %v331
  %v436 = vpack.c.b16 %v340, %v332
  %v437 = vpack.c.b16 %v341, %v333
  %v438 = vpack.c.b16 %v342, %v334
  %v439 = vpack.c.b16 %v343, %v335
  %v440 = vpack.c.b16 %v344, %v336
  %v441 = vpack.c.b16 %v345, %v337
  %v442 = vpack.c.b16 %v354, %v346
  %v443 = vpack.c.b16 %v355, %v347
  %v444 = vpack.c.b16 %v356, %v348
  %v445 = vpack.c.b16 %v357, %v349
  %v446 = vpack.c.b16 %v358, %v350
  %v447 = vpack.c.b16 %v359, %v351
  %v448 = vpack.c.b16 %v360, %v352
  %v449 = vpack.c.b16 %v361, %v353
  %v450 = vpack.c.b16 %v370, %v362
  %v451 = vpack.c.b16 %v371, %v363
  %v452 = vpack.c.b16 %v372, %v364
  %v453 = vpack.c.b16 %v373, %v365
  %v454 = vpack.c.b16 %v374, %v366
  %v455 = vpack.c.b16 %v375, %v367
  %v456 = vpack.c.b16 %v376, %v368
  %v457 = vpack.c.b16 %v377, %v369
  %v458 = vpack.c.b16 %v386, %v378
  %v459 = vpack.c.b16 %v387, %v379
  %v460 = vpack.c.b16 %v388, %v380
  %v461 = vpack.c.b16 %v389, %v381
  %v462 = vpack.c.b16 %v390, %v382
  %v463 = vpack.c.b16 %v391, %v383
  %v464 = vpack.c.b16 %v392, %v384
  %v465 = vpack.c.b16 %v393, %v385
  %v466 = vpack.c.b16 %v402, %v394
  %v467 = vpack.c.b16 %v403, %v395
  %v468 = vpack.c.b16 %v404, %v396
  %v469 = vpack.c.b16 %v405, %v397
  %v470 = vpack.c.b16 %v406, %v398
  %v471 = vpack.c.b16 %v407, %v399
  %v472 = vpack.c.b16 %v408, %v400
  %v473 = vpack.c.b16 %v409, %v401
  %v666 = vunpack.c.l.b16 %v78
  %v667 = vunpack.c.h.b16 %v78
  %v668 = vunpack.c.l.b16 %v79
  %v669 = vunpack.c.h.b16 %v79
  %v670 = vunpack.c.l.b16 %v80
  %v671 = vunpack.c.h.b16 %v80
  %v672 = vunpack.c.l.b16 %v81
  %v673 = vunpack.c.h.b16 %v81
  %v674 = vunpack.c.l.b16 %v82
  %v675 = vunpack.c.h.b16 %v82
  %v676 = vunpack.c.l.b16 %v83
  %v677 = vunpack.c.h.b16 %v83
  %v678 = vunpack.c.l.b16 %v84
  %v679 = vunpack.c.h.b16 %v84
  %v680 = vunpack.c.l.b16 %v85
  %v681 = vunpack.c.h.b16 %v85
  %v682 = vunpack.c.l.b16 %v86
  %v683 = vunpack.c.h.b16 %v86
  %v684 = vunpack.c.l.b16 %v87
  %v685 = vunpack.c.h.b16 %v87
  %v686 = vunpack.c.l.b16 %v88
  %v687 = vunpack.c.h.b16 %v88
  %v688 = vunpack.c.l.b16 %v89
  %v689 = vunpack.c.h.b16 %v89
  %v690 = vunpack.c.l.b16 %v90
  %v691 = vunpack.c.h.b16 %v90
  %v692 = vunpack.c.l.b16 %v91
  %v693 = vunpack.c.h.b16 %v91
  %v694 = vunpack.c.l.b16 %v92
  %v695 = vunpack.c.h.b16 %v92
  %v696 = vunpack.c.l.b16 %v93
  %v697 = vunpack.c.h.b16 %v93
  %v698 = vunpack.c.l.b16 %v94
  %v699 = vunpack.c.h.b16 %v94
  %v700 = vunpack.c.l.b16 %v95
  %v701 = vunpack.c.h.b16 %v95
  %v702 = vunpack.c.l.b16 %v96
  %v703 = vunpack.c.h.b16 %v96
  %v704 = vunpack.c.l.b16 %v97
  %v705 = vunpack.c.h.b16 %v97
  %v706 = vunpack.c.l.b16 %v98
  %v707 = vunpack.c.h.b16 %v98
  %v708 = vunpack.c.l.b16 %v99
  %v709 = vunpack.c.h.b16 %v99
  %v710 = vunpack.c.l.b16 %v100
  %v711 = vunpack.c.h.b16 %v100
  %v712 = vunpack.c.l.b16 %v101
  %v713 = vunpack.c.h.b16 %v101
  %v714 = vunpack.c.l.b16 %v102
  %v715 = vunpack.c.h.b16 %v102
  %v716 = vunpack.c.l.b16 %v103
  %v717 = vunpack.c.h.b16 %v103
  %v718 = vunpack.c.l.b16 %v104
  %v719 = vunpack.c.h.b16 %v104
  %v720 = vunpack.c.l.b16 %v105
  %v721 = vunpack.c.h.b16 %v105
  %v722 = vunpack.c.l.b16 %v106
  %v723 = vunpack.c.h.b16 %v106
  %v724 = vunpack.c.l.b16 %v107
  %v725 = vunpack.c.h.b16 %v107
  %v726 = vunpack.c.l.b16 %v108
  %v727 = vunpack.c.h.b16 %v108
  %v728 = vunpack.c.l.b16 %v109
  %v729 = vunpack.c.h.b16 %v109
  %v730 = vunpack.c.l.b16 %v110
  %v731 = vunpack.c.h.b16 %v110
  %v732 = vunpack.c.l.b16 %v111
  %v733 = vunpack.c.h.b16 %v111
  %v734 = vunpack.c.l.b16 %v112
  %v735 = vunpack.c.h.b16 %v112
  %v736 = vunpack.c.l.b16 %v113
  %v737 = vunpack.c.h.b16 %v113
  %v738 = vunpack.c.l.b16 %v114
  %v739 = vunpack.c.h.b16 %v114
  %v740 = vunpack.c.l.b16 %v115
  %v741 = vunpack.c.h.b16 %v115
  %v742 = vunpack.c.l.b16 %v116
  %v743 = vunpack.c.h.b16 %v116
  %v744 = vunpack.c.l.b16 %v117
  %v745 = vunpack.c.h.b16 %v117
  %v746 = vunpack.c.l.b16 %v118
  %v747 = vunpack.c.h.b16 %v118
  %v748 = vunpack.c.l.b16 %v119
  %v749 = vunpack.c.h.b16 %v119
  %v750 = vunpack.c.l.b16 %v120
  %v751 = vunpack.c.h.b16 %v120
  %v752 = vunpack.c.l.b16 %v121
  %v753 = vunpack.c.h.b16 %v121
  %v754 = vunpack.c.l.b16 %v122
  %v755 = vunpack.c.h.b16 %v122
  %v756 = vunpack.c.l.b16 %v123
  %v757 = vunpack.c.h.b16 %v123
  %v758 = vunpack.c.l.b16 %v124
  %v759 = vunpack.c.h.b16 %v124
  %v760 = vunpack.c.l.b16 %v125
  %v761 = vunpack.c.h.b16 %v125
  %v762 = vunpack.c.l.b16 %v126
  %v763 = vunpack.c.h.b16 %v126
  %v764 = vunpack.c.l.b16 %v127
  %v765 = vunpack.c.h.b16 %v127
  %v766 = vunpack.c.l.b16 %v128
  %v767 = vunpack.c.h.b16 %v128
  %v768 = vunpack.c.l.b16 %v129
  %v769 = vunpack.c.h.b16 %v129
  %v770 = vunpack.c.l.b16 %v130
  %v771 = vunpack.c.h.b16 %v130
  %v772 = vunpack.c.l.b16 %v131
  %v773 = vunpack.c.h.b16 %v131
  %v774 = vunpack.c.l.b16 %v132
  %v775 = vunpack.c.h.b16 %v132
  %v776 = vunpack.c.l.b16 %v133
  %v777 = vunpack.c.h.b16 %v133
  %v778 = vunpack.c.l.b16 %v134
  %v779 = vunpack.c.h.b16 %v134
  %v780 = vunpack.c.l.b16 %v135
  %v781 = vunpack.c.h.b16 %v135
  %v782 = vunpack.c.l.b16 %v136
  %v783 = vunpack.c.h.b16 %v136
  %v784 = vunpack.c.l.b16 %v137
  %v785 = vunpack.c.h.b16 %v137
  %v786 = vunpack.c.l.b16 %v138
  %v787 = vunpack.c.h.b16 %v138
  %v788 = vunpack.c.l.b16 %v139
  %v789 = vunpack.c.h.b16 %v139
  %v790 = vunpack.c.l.b16 %v140
  %v791 = vunpack.c.h.b16 %v140
  %v792 = vunpack.c.l.b16 %v141
  %v793 = vunpack.c.h.b16 %v141
  %v794 = vunpack.c.l.b16 %v142
  %v795 = vunpack.c.h.b16 %v142
  %v796 = vunpack.c.l.b16 %v143
  %v797 = vunpack.c.h.b16 %v143
  %v798 = vunpack.c.l.b16 %v144
  %v799 = vunpack.c.h.b16 %v144
  %v800 = vunpack.c.l.b16 %v145
  %v801 = vunpack.c.h.b16 %v145
  %v802 = vunpack.c.l.b16 %v146
  %v803 = vunpack.c.h.b16 %v146
  %v804 = vunpack.c.l.b16 %v147
  %v805 = vunpack.c.h.b16 %v147
  %v806 = vunpack.c.l.b16 %v148
  %v807 = vunpack.c.h.b16 %v148
  %v808 = vunpack.c.l.b16 %v149
  %v809 = vunpack.c.h.b16 %v149
  %v810 = vunpack.c.l.b16 %v150
  %v811 = vunpack.c.h.b16 %v150
  %v812 = vunpack.c.l.b16 %v151
  %v813 = vunpack.c.h.b16 %v151
  %v814 = vunpack.c.l.b16 %v152
  %v815 = vunpack.c.h.b16 %v152
  %v816 = vunpack.c.l.b16 %v153
  %v817 = vunpack.c.h.b16 %v153
  %v818 = vunpack.c.l.b16 %v154
  %v819 = vunpack.c.h.b16 %v154
  %v820 = vunpack.c.l.b16 %v155
  %v821 = vunpack.c.h.b16 %v155
  %v822 = vunpack.c.l.b16 %v156
  %v823 = vunpack.c.h.b16 %v156
  %v824 = vunpack.c.l.b16 %v157
  %v825 = vunpack.c.h.b16 %v157
  %v826 = vunpack.c.l.b16 %v158
  %v827 = vunpack.c.h.b16 %v158
  %v828 = vunpack.c.l.b16 %v159
  %v829 = vunpack.c.h.b16 %v159
  %v830 = vunpack.c.l.b16 %v160
  %v831 = vunpack.c.h.b16 %v160
  %v832 = vunpack.c.l.b16 %v161
  %v833 = vunpack.c.h.b16 %v161
  %v834 = vunpack.c.l.b16 %v162
  %v835 = vunpack.c.h.b16 %v162
  %v836 = vunpack.c.l.b16 %v163
  %v837 = vunpack.c.h.b16 %v163
  %v838 = vunpack.c.l.b16 %v164
  %v839 = vunpack.c.h.b16 %v164
  %v840 = vunpack.c.l.b16 %v165
  %v841 = vunpack.c.h.b16 %v165
  %v842 = vunpack.c.l.b16 %v166
  %v843 = vunpack.c.h.b16 %v166
  %v844 = vunpack.c.l.b16 %v167
  %v845 = vunpack.c.h.b16 %v167
  %v846 = vunpack.c.l.b16 %v168
  %v847 = vunpack.c.h.b16 %v168
  %v848 = vunpack.c.l.b16 %v169
  %v849 = vunpack.c.h.b16 %v169
  %v850 = vunpack.c.l.b16 %v170
  %v851 = vunpack.c.h.b16 %v170
  %v852 = vunpack.c.l.b16 %v171
  %v853 = vunpack.c.h.b16 %v171
  %v854 = vunpack.c.l.b16 %v172
  %v855 = vunpack.c.h.b16 %v172
  %v856 = vunpack.c.l.b16 %v173
  %v857 = vunpack.c.h.b16 %v173
  %v858 = vunpack.c.l.b16 %v174
  %v859 = vunpack.c.h.b16 %v174
  %v860 = vunpack.c.l.b16 %v175
  %v861 = vunpack.c.h.b16 %v175
  %v862 = vunpack.c.l.b16 %v176
  %v863 = vunpack.c.h.b16 %v176
  %v864 = vunpack.c.l.b16 %v177
  %v865 = vunpack.c.h.b16 %v177
  %v866 = vunpack.c.l.b16 %v178
  %v867 = vunpack.c.h.b16 %v178
  %v868 = vunpack.c.l.b16 %v179
  %v869 = vunpack.c.h.b16 %v179
  %v870 = vunpack.c.l.b16 %v180
  %v871 = vunpack.c.h.b16 %v180
  %v872 = vunpack.c.l.b16 %v181
  %v873 = vunpack.c.h.b16 %v181
  %v874 = vunpack.c.l.b16 %v182
  %v875 = vunpack.c.h.b16 %v182
  %v876 = vunpack.c.l.b16 %v183
  %v877 = vunpack.c.h.b16 %v183
  %v878 = vunpack.c.l.b16 %v184
  %v879 = vunpack.c.h.b16 %v184
  %v880 = vunpack.c.l.b16 %v185
  %v881 = vunpack.c.h.b16 %v185
  %v882 = vunpack.c.l.b16 %v186
  %v883 = vunpack.c.h.b16 %v186
  %v884 = vunpack.c.l.b16 %v187
  %v885 = vunpack.c.h.b16 %v187
  %v886 = vunpack.c.l.b16 %v188
  %v887 = vunpack.c.h.b16 %v188
  %v888 = vunpack.c.l.b16 %v189
  %v889 = vunpack.c.h.b16 %v189
  %v890 = vunpack.c.l.b16 %v190
  %v891 = vunpack.c.h.b16 %v190
  %v892 = vunpack.c.l.b16 %v191
  %v893 = vunpack.c.h.b16 %v191
  %v894 = vunpack.c.l.b16 %v192
  %v895 = vunpack.c.h.b16 %v192
  %v896 = vunpack.c.l.b16 %v193
  %v897 = vunpack.c.h.b16 %v193
  %v898 = vunpack.c.l.b16 %v194
  %v899 = vunpack.c.h.b16 %v194
  %v900 = vunpack.c.l.b16 %v195
  %v901 = vunpack.c.h.b16 %v195
  %v902 = vunpack.c.l.b16 %v196
  %v903 = vunpack.c.h.b16 %v196
  %v904 = vunpack.c.l.b16 %v197
  %v905 = vunpack.c.h.b16 %v197
  %v906 = vunpack.c.l.b16 %v198
  %v907 = vunpack.c.h.b16 %v198
  %v908 = vunpack.c.l.b16 %v199
  %v909 = vunpack.c.h.b16 %v199
  %v910 = vunpack.c.l.b16 %v200
  %v911 = vunpack.c.h.b16 %v200
  %v912 = vunpack.c.l.b16 %v201
  %v913 = vunpack.c.h.b16 %v201
  %v914 = vunpack.c.l.b16 %v202
  %v915 = vunpack.c.h.b16 %v202
  %v916 = vunpack.c.l.b16 %v203
  %v917 = vunpack.c.h.b16 %v203
  %v918 = vunpack.c.l.b16 %v204
  %v919 = vunpack.c.h.b16 %v204
  %v920 = vunpack.c.l.b16 %v205
  %v921 = vunpack.c.h.b16 %v205
  %v922 = vpack.c.b16 %v668, %v666
  %v923 = vpack.c.b16 %v669, %v667
  %v924 = vpack.c.b16 %v672, %v670
  %v925 = vpack.c.b16 %v673, %v671
  %v926 = vpack.c.b16 %v676, %v674
  %v927 = vpack.c.b16 %v677, %v675
  %v928 = vpack.c.b16 %v680, %v678
  %v929 = vpack.c.b16 %v681, %v679
  %v930 = vpack.c.b16 %v684, %v682
  %v931 = vpack.c.b16 %v685, %v683
  %v932 = vpack.c.b16 %v688, %v686
  %v933 = vpack.c.b16 %v689, %v687
  %v934 = vpack.c.b16 %v692, %v690
  %v935 = vpack.c.b16 %v693, %v691
  %v936 = vpack.c.b16 %v696, %v694
  %v937 = vpack.c.b16 %v697, %v695
  %v938 = vpack.c.b16 %v700, %v698
  %v939 = vpack.c.b16 %v701, %v699
  %v940 = vpack.c.b16 %v704, %v702
  %v941 = vpack.c.b16 %v705, %v703
  %v942 = vpack.c.b16 %v708, %v706
  %v943 = vpack.c.b16 %v709, %v707
  %v944 = vpack.c.b16 %v712, %v710
  %v945 = vpack.c.b16 %v713, %v711
  %v946 = vpack.c.b16 %v716, %v714
  %v947 = vpack.c.b16 %v717, %v715
  %v948 = vpack.c.b16 %v720, %v718
  %v949 = vpack.c.b16 %v721, %v719
  %v950 = vpack.c.b16 %v724, %v722
  %v951 = vpack.c.b16 %v725, %v723
  %v952 = vpack.c.b16 %v728, %v726
  %v953 = vpack.c.b16 %v729, %v727
  %v954 = vpack.c.b16 %v732, %v730
  %v955 = vpack.c.b16 %v733, %v731
  %v956 = vpack.c.b16 %v736, %v734
  %v957 = vpack.c.b16 %v737, %v735
  %v958 = vpack.c.b16 %v740, %v738
  %v959 = vpack.c.b16 %v741, %v739
  %v960 = vpack.c.b16 %v744, %v742
  %v961 = vpack.c.b16 %v745, %v743
  %v962 = vpack.c.b16 %v748, %v746
  %v963 = vpack.c.b16 %v749, %v747
  %v964 = vpack.c.b16 %v752, %v750
  %v965 = vpack.c.b16 %v753, %v751
  %v966 = vpack.c.b16 %v756, %v754
  %v967 = vpack.c.b16 %v757, %v755
  %v968 = vpack.c.b16 %v760, %v758
  %v969 = vpack.c.b16 %v761, %v759
  %v970 = vpack.c.b16 %v764, %v762
  %v971 = vpack.c.b16 %v765, %v763
  %v972 = vpack.c.b16 %v768, %v766
  %v973 = vpack.c.b16 %v769, %v767
  %v974 = vpack.c.b16 %v772, %v770
  %v975 = vpack.c.b16 %v773, %v771
  %v976 = vpack.c.b16 %v776, %v774
  %v977 = vpack.c.b16 %v777, %v775
  %v978 = vpack.c.b16 %v780, %v778
  %v979 = vpack.c.b16 %v781, %v779
  %v980 = vpack.c.b16 %v784, %v782
  %v981 = vpack.c.b16 %v785, %v783
  %v982 = vpack.c.b16 %v788, %v786
  %v983 = vpack.c.b16 %v789, %v787
  %v984 = vpack.c.b16 %v792, %v790
  %v985 = vpack.c.b16 %v793, %v791
  %v986 = vpack.c.b16 %v796, %v794
  %v987 = vpack.c.b16 %v797, %v795
  %v988 = vpack.c.b16 %v800, %v798
  %v989 = vpack.c.b16 %v801, %v799
  %v990 = vpack.c.b16 %v804, %v802
  %v991 = vpack.c.b16 %v805, %v803
  %v992 = vpack.c.b16 %v808, %v806
  %v993 = vpack.c.b16 %v809, %v807
  %v994 = vpack.c.b16 %v812, %v810
  %v995 = vpack.c.b16 %v813, %v811
  %v996 = vpack.c.b16 %v816, %v814
  %v997 = vpack.c.b16 %v817, %v815
  %v998 = vpack.c.b16 %v820, %v818
  %v999 = vpack.c.b16 %v821, %v819
  %v1000 = vpack.c.b16 %v824, %v822
  %v1001 = vpack.c.b16 %v825, %v823
  %v1002 = vpack.c.b16 %v828, %v826
  %v1003 = vpack.c.b16 %v829, %v827
  %v1004 = vpack.c.b16 %v832, %v830
  %v1005 = vpack.c.b16 %v833, %v831
  %v1006 = vpack.c.b16 %v836, %v834
  %v1007 = vpack.c.b16 %v837, %v835
  %v1008 = vpack.c.b16 %v840, %v838
  %v1009 = vpack.c.b16 %v841, %v839
  %v1010 = vpack.c.b16 %v844, %v842
  %v1011 = vpack.c.b16 %v845, %v843
  %v1012 = vpack.c.b16 %v848, %v846
  %v1013 = vpack.c.b16 %v849, %v847
  %v1014 = vpack.c.b16 %v852, %v850
  %v1015 = vpack.c.b16 %v853, %v851
  %v1016 = vpack.c.b16 %v856, %v854
  %v1017 = vpack.c.b16 %v857, %v855
  %v1018 = vpack.c.b16 %v860, %v858
  %v1019 = vpack.c.b16 %v861, %v859
  %v1020 = vpack.c.b16 %v864, %v862
  %v1021 = vpack.c.b16 %v865, %v863
  %v1022 = vpack.c.b16 %v868, %v866
  %v1023 = vpack.c.b16 %v869, %v867
  %v1024 = vpack.c.b16 %v872, %v870
  %v1025 = vpack.c.b16 %v873, %v871
  %v1026 = vpack.c.b16 %v876, %v874
  %v1027 = vpack.c.b16 %v877, %v875
  %v1028 = vpack.c.b16 %v880, %v878
  %v1029 = vpack.c.b16 %v881, %v879
  %v1030 = vpack.c.b16 %v884, %v882
  %v1031 = vpack.c.b16 %v885, %v883
  %v1032 = vpack.c.b16 %v888, %v886
  %v1033 = vpack.c.b16 %v889, %v887
  %v1034 = vpack.c.b16 %v892, %v890
  %v1035 = vpack.c.b16 %v893, %v891
  %v1036 = vpack.c.b16 %v896, %v894
  %v1037 = vpack.c.b16 %v897, %v895
  %v1038 = vpack.c.b16 %v900, %v898
  %v1039 = vpack.c.b16 %v901, %v899
  %v1040 = vpack.c.b16 %v904, %v902
  %v1041 = vpack.c.b16 %v905, %v903
  %v1042 = vpack.c.b16 %v908, %v906
  %v1043 = vpack.c.b16 %v909, %v907
  %v1044 = vpack.c.b16 %v912, %v910
  %v1045 = vpack.c.b16 %v913, %v911
  %v1046 = vpack.c.b16 %v916, %v914
  %v1047 = vpack.c.b16 %v917, %v915
  %v1048 = vpack.c.b16 %v920, %v918
  %v1049 = vpack.c.b16 %v921, %v919
  %1178 = vmatprep.subr.bf16.mxu0 %v937
  %1179 = vmatpush1.bf16.msra.mxu0 %v936
  %1180 = vmatprep.subr.bf16.mxu0 %v935
  %1181 = vmatpush1.bf16.msra.mxu0 %v934
  %1182 = vmatprep.subr.bf16.mxu0 %v933
  %1183 = vmatpush1.bf16.msra.mxu0 %v932
  %1184 = vmatprep.subr.bf16.mxu0 %v931
  %1185 = vmatpush1.bf16.msra.mxu0 %v930
  %1186 = vmatprep.subr.bf16.mxu0 %v929
  %1187 = vmatpush1.bf16.msra.mxu0 %v928
  %1188 = vmatprep.subr.bf16.mxu0 %v927
  %1189 = vmatpush1.bf16.msra.mxu0 %v926
  %1190 = vmatprep.subr.bf16.mxu0 %v925
  %1191 = vmatpush1.bf16.msra.mxu0 %v924
  %1192 = vmatprep.subr.bf16.mxu0 %v923
  %1193 = vmatpush1.bf16.msra.mxu0 %v922
  %1194 = vmatprep.subr.bf16.mxu0 %v953
  %1195 = vmatpush2.bf16.msra.mxu0 %v952
  %1196 = vmatprep.subr.bf16.mxu0 %v951
  %1197 = vmatpush2.bf16.msra.mxu0 %v950
  %1198 = vmatprep.subr.bf16.mxu0 %v949
  %1199 = vmatpush2.bf16.msra.mxu0 %v948
  %1200 = vmatprep.subr.bf16.mxu0 %v947
  %1201 = vmatpush2.bf16.msra.mxu0 %v946
  %1202 = vmatprep.subr.bf16.mxu0 %v945
  %1203 = vmatpush2.bf16.msra.mxu0 %v944
  %1204 = vmatprep.subr.bf16.mxu0 %v943
  %1205 = vmatpush2.bf16.msra.mxu0 %v942
  %1206 = vmatprep.subr.bf16.mxu0 %v941
  %1207 = vmatpush2.bf16.msra.mxu0 %v940
  %1208 = vmatprep.subr.bf16.mxu0 %v939
  %1209 = vmatpush2.bf16.msra.mxu0 %v938
  %1210 = vmatprep.mubr.bf16.mxu0 %v411
  %1211 = vmatmul.mubr.bf16.gmra.mxu0 %v410
  %v1212 = vpop.f32.mrf.mxu0
  %v1213 = vadd.f32 %v211, %v1212
  %v1214 = vpop.f32.mrf.mxu0
  %v1215 = vadd.f32 %v215, %v1214
  %v1216 = vpop.f32.mrf.mxu0
  %v1217 = vadd.f32 %v211, %v1216
  %v1218 = vpop.f32.mrf.mxu0
  %v1219 = vadd.f32 %v215, %v1218
  %1220 = vmatprep.mubr.bf16.mxu0 %v419
  %1221 = vmatmul.mubr.bf16.gmra.mxu0 %v418
  %v1222 = vpop.f32.mrf.mxu0
  %v1223 = vadd.f32 %v211, %v1222
  %v1224 = vpop.f32.mrf.mxu0
  %v1225 = vadd.f32 %v215, %v1224
  %v1226 = vpop.f32.mrf.mxu0
  %v1227 = vadd.f32 %v211, %v1226
  %v1228 = vpop.f32.mrf.mxu0
  %v1229 = vadd.f32 %v215, %v1228
  %1230 = vmatprep.mubr.bf16.mxu0 %v427
  %1231 = vmatmul.mubr.bf16.gmra.mxu0 %v426
  %v1232 = vpop.f32.mrf.mxu0
  %v1233 = vadd.f32 %v211, %v1232
  %v1234 = vpop.f32.mrf.mxu0
  %v1235 = vadd.f32 %v215, %v1234
  %v1236 = vpop.f32.mrf.mxu0
  %v1237 = vadd.f32 %v211, %v1236
  %v1238 = vpop.f32.mrf.mxu0
  %v1239 = vadd.f32 %v215, %v1238
  %1240 = vmatprep.mubr.bf16.mxu0 %v435
  %1241 = vmatmul.mubr.bf16.gmra.mxu0 %v434
  %v1242 = vpop.f32.mrf.mxu0
  %v1243 = vadd.f32 %v211, %v1242
  %v1244 = vpop.f32.mrf.mxu0
  %v1245 = vadd.f32 %v215, %v1244
  %v1246 = vpop.f32.mrf.mxu0
  %v1247 = vadd.f32 %v211, %v1246
  %v1248 = vpop.f32.mrf.mxu0
  %v1249 = vadd.f32 %v215, %v1248
  %1250 = vmatprep.mubr.bf16.mxu0 %v443
  %1251 = vmatmul.mubr.bf16.gmra.mxu0 %v442
  %v1252 = vpop.f32.mrf.mxu0
  %v1253 = vadd.f32 %v211, %v1252
  %v1254 = vpop.f32.mrf.mxu0
  %v1255 = vadd.f32 %v215, %v1254
  %v1256 = vpop.f32.mrf.mxu0
  %v1257 = vadd.f32 %v211, %v1256
  %v1258 = vpop.f32.mrf.mxu0
  %v1259 = vadd.f32 %v215, %v1258
  %1260 = vmatprep.mubr.bf16.mxu0 %v451
  %1261 = vmatmul.mubr.bf16.gmra.mxu0 %v450
  %v1262 = vpop.f32.mrf.mxu0
  %v1263 = vadd.f32 %v211, %v1262
  %v1264 = vpop.f32.mrf.mxu0
  %v1265 = vadd.f32 %v215, %v1264
  %v1266 = vpop.f32.mrf.mxu0
  %v1267 = vadd.f32 %v211, %v1266
  %v1268 = vpop.f32.mrf.mxu0
  %v1269 = vadd.f32 %v215, %v1268
  %1270 = vmatprep.mubr.bf16.mxu0 %v459
  %1271 = vmatmul.mubr.bf16.gmra.mxu0 %v458
  %v1272 = vpop.f32.mrf.mxu0
  %v1273 = vadd.f32 %v211, %v1272
  %v1274 = vpop.f32.mrf.mxu0
  %v1275 = vadd.f32 %v215, %v1274
  %v1276 = vpop.f32.mrf.mxu0
  %v1277 = vadd.f32 %v211, %v1276
  %v1278 = vpop.f32.mrf.mxu0
  %v1279 = vadd.f32 %v215, %v1278
  %1280 = vmatprep.mubr.bf16.mxu0 %v467
  %1281 = vmatmul.mubr.bf16.gmra.mxu0 %v466
  %v1282 = vpop.f32.mrf.mxu0
  %v1283 = vadd.f32 %v211, %v1282
  %v1284 = vpop.f32.mrf.mxu0
  %v1285 = vadd.f32 %v215, %v1284
  %v1286 = vpop.f32.mrf.mxu0
  %v1287 = vadd.f32 %v211, %v1286
  %v1288 = vpop.f32.mrf.mxu0
  %v1289 = vadd.f32 %v215, %v1288
  %1290 = vdwg.mxu0
  %1291 = vmatprep.subr.bf16.mxu0 %v969
  %1292 = vmatpush1.bf16.msra.mxu0 %v968
  %1293 = vmatprep.subr.bf16.mxu0 %v967
  %1294 = vmatpush1.bf16.msra.mxu0 %v966
  %1295 = vmatprep.subr.bf16.mxu0 %v965
  %1296 = vmatpush1.bf16.msra.mxu0 %v964
  %1297 = vmatprep.subr.bf16.mxu0 %v963
  %1298 = vmatpush1.bf16.msra.mxu0 %v962
  %1299 = vmatprep.subr.bf16.mxu0 %v961
  %1300 = vmatpush1.bf16.msra.mxu0 %v960
  %1301 = vmatprep.subr.bf16.mxu0 %v959
  %1302 = vmatpush1.bf16.msra.mxu0 %v958
  %1303 = vmatprep.subr.bf16.mxu0 %v957
  %1304 = vmatpush1.bf16.msra.mxu0 %v956
  %1305 = vmatprep.subr.bf16.mxu0 %v955
  %1306 = vmatpush1.bf16.msra.mxu0 %v954
  %1307 = vmatprep.subr.bf16.mxu0 %v985
  %1308 = vmatpush2.bf16.msra.mxu0 %v984
  %1309 = vmatprep.subr.bf16.mxu0 %v983
  %1310 = vmatpush2.bf16.msra.mxu0 %v982
  %1311 = vmatprep.subr.bf16.mxu0 %v981
  %1312 = vmatpush2.bf16.msra.mxu0 %v980
  %1313 = vmatprep.subr.bf16.mxu0 %v979
  %1314 = vmatpush2.bf16.msra.mxu0 %v978
  %1315 = vmatprep.subr.bf16.mxu0 %v977
  %1316 = vmatpush2.bf16.msra.mxu0 %v976
  %1317 = vmatprep.subr.bf16.mxu0 %v975
  %1318 = vmatpush2.bf16.msra.mxu0 %v974
  %1319 = vmatprep.subr.bf16.mxu0 %v973
  %1320 = vmatpush2.bf16.msra.mxu0 %v972
  %1321 = vmatprep.subr.bf16.mxu0 %v971
  %1322 = vmatpush2.bf16.msra.mxu0 %v970
  %1323 = vmatprep.mubr.bf16.mxu0 %v413
  %1324 = vmatmul.mubr.bf16.gmra.mxu0 %v412
  %v1325 = vpop.f32.mrf.mxu0
  %v1326 = vadd.f32 %v1213, %v1325
  %v1327 = vpop.f32.mrf.mxu0
  %v1328 = vadd.f32 %v1215, %v1327
  %v1329 = vpop.f32.mrf.mxu0
  %v1330 = vadd.f32 %v1217, %v1329
  %v1331 = vpop.f32.mrf.mxu0
  %v1332 = vadd.f32 %v1219, %v1331
  %1333 = vmatprep.mubr.bf16.mxu0 %v421
  %1334 = vmatmul.mubr.bf16.gmra.mxu0 %v420
  %v1335 = vpop.f32.mrf.mxu0
  %v1336 = vadd.f32 %v1223, %v1335
  %v1337 = vpop.f32.mrf.mxu0
  %v1338 = vadd.f32 %v1225, %v1337
  %v1339 = vpop.f32.mrf.mxu0
  %v1340 = vadd.f32 %v1227, %v1339
  %v1341 = vpop.f32.mrf.mxu0
  %v1342 = vadd.f32 %v1229, %v1341
  %1343 = vmatprep.mubr.bf16.mxu0 %v429
  %1344 = vmatmul.mubr.bf16.gmra.mxu0 %v428
  %v1345 = vpop.f32.mrf.mxu0
  %v1346 = vadd.f32 %v1233, %v1345
  %v1347 = vpop.f32.mrf.mxu0
  %v1348 = vadd.f32 %v1235, %v1347
  %v1349 = vpop.f32.mrf.mxu0
  %v1350 = vadd.f32 %v1237, %v1349
  %v1351 = vpop.f32.mrf.mxu0
  %v1352 = vadd.f32 %v1239, %v1351
  %1353 = vmatprep.mubr.bf16.mxu0 %v437
  %1354 = vmatmul.mubr.bf16.gmra.mxu0 %v436
  %v1355 = vpop.f32.mrf.mxu0
  %v1356 = vadd.f32 %v1243, %v1355
  %v1357 = vpop.f32.mrf.mxu0
  %v1358 = vadd.f32 %v1245, %v1357
  %v1359 = vpop.f32.mrf.mxu0
  %v1360 = vadd.f32 %v1247, %v1359
  %v1361 = vpop.f32.mrf.mxu0
  %v1362 = vadd.f32 %v1249, %v1361
  %1363 = vmatprep.mubr.bf16.mxu0 %v445
  %1364 = vmatmul.mubr.bf16.gmra.mxu0 %v444
  %v1365 = vpop.f32.mrf.mxu0
  %v1366 = vadd.f32 %v1253, %v1365
  %v1367 = vpop.f32.mrf.mxu0
  %v1368 = vadd.f32 %v1255, %v1367
  %v1369 = vpop.f32.mrf.mxu0
  %v1370 = vadd.f32 %v1257, %v1369
  %v1371 = vpop.f32.mrf.mxu0
  %v1372 = vadd.f32 %v1259, %v1371
  %1373 = vmatprep.mubr.bf16.mxu0 %v453
  %1374 = vmatmul.mubr.bf16.gmra.mxu0 %v452
  %v1375 = vpop.f32.mrf.mxu0
  %v1376 = vadd.f32 %v1263, %v1375
  %v1377 = vpop.f32.mrf.mxu0
  %v1378 = vadd.f32 %v1265, %v1377
  %v1379 = vpop.f32.mrf.mxu0
  %v1380 = vadd.f32 %v1267, %v1379
  %v1381 = vpop.f32.mrf.mxu0
  %v1382 = vadd.f32 %v1269, %v1381
  %1383 = vmatprep.mubr.bf16.mxu0 %v461
  %1384 = vmatmul.mubr.bf16.gmra.mxu0 %v460
  %v1385 = vpop.f32.mrf.mxu0
  %v1386 = vadd.f32 %v1273, %v1385
  %v1387 = vpop.f32.mrf.mxu0
  %v1388 = vadd.f32 %v1275, %v1387
  %v1389 = vpop.f32.mrf.mxu0
  %v1390 = vadd.f32 %v1277, %v1389
  %v1391 = vpop.f32.mrf.mxu0
  %v1392 = vadd.f32 %v1279, %v1391
  %1393 = vmatprep.mubr.bf16.mxu0 %v469
  %1394 = vmatmul.mubr.bf16.gmra.mxu0 %v468
  %v1395 = vpop.f32.mrf.mxu0
  %v1396 = vadd.f32 %v1283, %v1395
  %v1397 = vpop.f32.mrf.mxu0
  %v1398 = vadd.f32 %v1285, %v1397
  %v1399 = vpop.f32.mrf.mxu0
  %v1400 = vadd.f32 %v1287, %v1399
  %v1401 = vpop.f32.mrf.mxu0
  %v1402 = vadd.f32 %v1289, %v1401
  %1403 = vdwg.mxu0
  %1404 = vmatprep.subr.bf16.mxu0 %v1001
  %1405 = vmatpush1.bf16.msra.mxu0 %v1000
  %1406 = vmatprep.subr.bf16.mxu0 %v999
  %1407 = vmatpush1.bf16.msra.mxu0 %v998
  %1408 = vmatprep.subr.bf16.mxu0 %v997
  %1409 = vmatpush1.bf16.msra.mxu0 %v996
  %1410 = vmatprep.subr.bf16.mxu0 %v995
  %1411 = vmatpush1.bf16.msra.mxu0 %v994
  %1412 = vmatprep.subr.bf16.mxu0 %v993
  %1413 = vmatpush1.bf16.msra.mxu0 %v992
  %1414 = vmatprep.subr.bf16.mxu0 %v991
  %1415 = vmatpush1.bf16.msra.mxu0 %v990
  %1416 = vmatprep.subr.bf16.mxu0 %v989
  %1417 = vmatpush1.bf16.msra.mxu0 %v988
  %1418 = vmatprep.subr.bf16.mxu0 %v987
  %1419 = vmatpush1.bf16.msra.mxu0 %v986
  %1420 = vmatprep.subr.bf16.mxu0 %v1017
  %1421 = vmatpush2.bf16.msra.mxu0 %v1016
  %1422 = vmatprep.subr.bf16.mxu0 %v1015
  %1423 = vmatpush2.bf16.msra.mxu0 %v1014
  %1424 = vmatprep.subr.bf16.mxu0 %v1013
  %1425 = vmatpush2.bf16.msra.mxu0 %v1012
  %1426 = vmatprep.subr.bf16.mxu0 %v1011
  %1427 = vmatpush2.bf16.msra.mxu0 %v1010
  %1428 = vmatprep.subr.bf16.mxu0 %v1009
  %1429 = vmatpush2.bf16.msra.mxu0 %v1008
  %1430 = vmatprep.subr.bf16.mxu0 %v1007
  %1431 = vmatpush2.bf16.msra.mxu0 %v1006
  %1432 = vmatprep.subr.bf16.mxu0 %v1005
  %1433 = vmatpush2.bf16.msra.mxu0 %v1004
  %1434 = vmatprep.subr.bf16.mxu0 %v1003
  %1435 = vmatpush2.bf16.msra.mxu0 %v1002
  %1436 = vmatprep.mubr.bf16.mxu0 %v415
  %1437 = vmatmul.mubr.bf16.gmra.mxu0 %v414
  %v1438 = vpop.f32.mrf.mxu0
  %v1439 = vadd.f32 %v1326, %v1438
  %v1440 = vpop.f32.mrf.mxu0
  %v1441 = vadd.f32 %v1328, %v1440
  %v1442 = vpop.f32.mrf.mxu0
  %v1443 = vadd.f32 %v1330, %v1442
  %v1444 = vpop.f32.mrf.mxu0
  %v1445 = vadd.f32 %v1332, %v1444
  %1446 = vmatprep.mubr.bf16.mxu0 %v423
  %1447 = vmatmul.mubr.bf16.gmra.mxu0 %v422
  %v1448 = vpop.f32.mrf.mxu0
  %v1449 = vadd.f32 %v1336, %v1448
  %v1450 = vpop.f32.mrf.mxu0
  %v1451 = vadd.f32 %v1338, %v1450
  %v1452 = vpop.f32.mrf.mxu0
  %v1453 = vadd.f32 %v1340, %v1452
  %v1454 = vpop.f32.mrf.mxu0
  %v1455 = vadd.f32 %v1342, %v1454
  %1456 = vmatprep.mubr.bf16.mxu0 %v431
  %1457 = vmatmul.mubr.bf16.gmra.mxu0 %v430
  %v1458 = vpop.f32.mrf.mxu0
  %v1459 = vadd.f32 %v1346, %v1458
  %v1460 = vpop.f32.mrf.mxu0
  %v1461 = vadd.f32 %v1348, %v1460
  %v1462 = vpop.f32.mrf.mxu0
  %v1463 = vadd.f32 %v1350, %v1462
  %v1464 = vpop.f32.mrf.mxu0
  %v1465 = vadd.f32 %v1352, %v1464
  %1466 = vmatprep.mubr.bf16.mxu0 %v439
  %1467 = vmatmul.mubr.bf16.gmra.mxu0 %v438
  %v1468 = vpop.f32.mrf.mxu0
  %v1469 = vadd.f32 %v1356, %v1468
  %v1470 = vpop.f32.mrf.mxu0
  %v1471 = vadd.f32 %v1358, %v1470
  %v1472 = vpop.f32.mrf.mxu0
  %v1473 = vadd.f32 %v1360, %v1472
  %v1474 = vpop.f32.mrf.mxu0
  %v1475 = vadd.f32 %v1362, %v1474
  %1476 = vmatprep.mubr.bf16.mxu0 %v447
  %1477 = vmatmul.mubr.bf16.gmra.mxu0 %v446
  %v1478 = vpop.f32.mrf.mxu0
  %v1479 = vadd.f32 %v1366, %v1478
  %v1480 = vpop.f32.mrf.mxu0
  %v1481 = vadd.f32 %v1368, %v1480
  %v1482 = vpop.f32.mrf.mxu0
  %v1483 = vadd.f32 %v1370, %v1482
  %v1484 = vpop.f32.mrf.mxu0
  %v1485 = vadd.f32 %v1372, %v1484
  %1486 = vmatprep.mubr.bf16.mxu0 %v455
  %1487 = vmatmul.mubr.bf16.gmra.mxu0 %v454
  %v1488 = vpop.f32.mrf.mxu0
  %v1489 = vadd.f32 %v1376, %v1488
  %v1490 = vpop.f32.mrf.mxu0
  %v1491 = vadd.f32 %v1378, %v1490
  %v1492 = vpop.f32.mrf.mxu0
  %v1493 = vadd.f32 %v1380, %v1492
  %v1494 = vpop.f32.mrf.mxu0
  %v1495 = vadd.f32 %v1382, %v1494
  %1496 = vmatprep.mubr.bf16.mxu0 %v463
  %1497 = vmatmul.mubr.bf16.gmra.mxu0 %v462
  %v1498 = vpop.f32.mrf.mxu0
  %v1499 = vadd.f32 %v1386, %v1498
  %v1500 = vpop.f32.mrf.mxu0
  %v1501 = vadd.f32 %v1388, %v1500
  %v1502 = vpop.f32.mrf.mxu0
  %v1503 = vadd.f32 %v1390, %v1502
  %v1504 = vpop.f32.mrf.mxu0
  %v1505 = vadd.f32 %v1392, %v1504
  %1506 = vmatprep.mubr.bf16.mxu0 %v471
  %1507 = vmatmul.mubr.bf16.gmra.mxu0 %v470
  %v1508 = vpop.f32.mrf.mxu0
  %v1509 = vadd.f32 %v1396, %v1508
  %v1510 = vpop.f32.mrf.mxu0
  %v1511 = vadd.f32 %v1398, %v1510
  %v1512 = vpop.f32.mrf.mxu0
  %v1513 = vadd.f32 %v1400, %v1512
  %v1514 = vpop.f32.mrf.mxu0
  %v1515 = vadd.f32 %v1402, %v1514
  %1516 = vdwg.mxu0
  %1517 = vmatprep.subr.bf16.mxu0 %v1033
  %1518 = vmatpush1.bf16.msra.mxu0 %v1032
  %1519 = vmatprep.subr.bf16.mxu0 %v1031
  %1520 = vmatpush1.bf16.msra.mxu0 %v1030
  %1521 = vmatprep.subr.bf16.mxu0 %v1029
  %1522 = vmatpush1.bf16.msra.mxu0 %v1028
  %1523 = vmatprep.subr.bf16.mxu0 %v1027
  %1524 = vmatpush1.bf16.msra.mxu0 %v1026
  %1525 = vmatprep.subr.bf16.mxu0 %v1025
  %1526 = vmatpush1.bf16.msra.mxu0 %v1024
  %1527 = vmatprep.subr.bf16.mxu0 %v1023
  %1528 = vmatpush1.bf16.msra.mxu0 %v1022
  %1529 = vmatprep.subr.bf16.mxu0 %v1021
  %1530 = vmatpush1.bf16.msra.mxu0 %v1020
  %1531 = vmatprep.subr.bf16.mxu0 %v1019
  %1532 = vmatpush1.bf16.msra.mxu0 %v1018
  %1533 = vmatprep.subr.bf16.mxu0 %v1049
  %1534 = vmatpush2.bf16.msra.mxu0 %v1048
  %1535 = vmatprep.subr.bf16.mxu0 %v1047
  %1536 = vmatpush2.bf16.msra.mxu0 %v1046
  %1537 = vmatprep.subr.bf16.mxu0 %v1045
  %1538 = vmatpush2.bf16.msra.mxu0 %v1044
  %1539 = vmatprep.subr.bf16.mxu0 %v1043
  %1540 = vmatpush2.bf16.msra.mxu0 %v1042
  %1541 = vmatprep.subr.bf16.mxu0 %v1041
  %1542 = vmatpush2.bf16.msra.mxu0 %v1040
  %1543 = vmatprep.subr.bf16.mxu0 %v1039
  %1544 = vmatpush2.bf16.msra.mxu0 %v1038
  %1545 = vmatprep.subr.bf16.mxu0 %v1037
  %1546 = vmatpush2.bf16.msra.mxu0 %v1036
  %1547 = vmatprep.subr.bf16.mxu0 %v1035
  %1548 = vmatpush2.bf16.msra.mxu0 %v1034
  %1549 = vmatprep.mubr.bf16.mxu0 %v417
  %1550 = vmatmul.mubr.bf16.gmra.mxu0 %v416
  %v1551 = vpop.f32.mrf.mxu0
  %v1552 = vadd.f32 %v1439, %v1551
  %v1553 = vpop.f32.mrf.mxu0
  %v1554 = vadd.f32 %v1441, %v1553
  %v1555 = vpop.f32.mrf.mxu0
  %v1556 = vadd.f32 %v1443, %v1555
  %v1557 = vpop.f32.mrf.mxu0
  %v1558 = vadd.f32 %v1445, %v1557
  %1559 = vmatprep.mubr.bf16.mxu0 %v425
  %1560 = vmatmul.mubr.bf16.gmra.mxu0 %v424
  %v1561 = vpop.f32.mrf.mxu0
  %v1562 = vadd.f32 %v1449, %v1561
  %v1563 = vpop.f32.mrf.mxu0
  %v1564 = vadd.f32 %v1451, %v1563
  %v1565 = vpop.f32.mrf.mxu0
  %v1566 = vadd.f32 %v1453, %v1565
  %v1567 = vpop.f32.mrf.mxu0
  %v1568 = vadd.f32 %v1455, %v1567
  %1569 = vmatprep.mubr.bf16.mxu0 %v433
  %1570 = vmatmul.mubr.bf16.gmra.mxu0 %v432
  %v1571 = vpop.f32.mrf.mxu0
  %v1572 = vadd.f32 %v1459, %v1571
  %v1573 = vpop.f32.mrf.mxu0
  %v1574 = vadd.f32 %v1461, %v1573
  %v1575 = vpop.f32.mrf.mxu0
  %v1576 = vadd.f32 %v1463, %v1575
  %v1577 = vpop.f32.mrf.mxu0
  %v1578 = vadd.f32 %v1465, %v1577
  %1579 = vmatprep.mubr.bf16.mxu0 %v441
  %1580 = vmatmul.mubr.bf16.gmra.mxu0 %v440
  %v1581 = vpop.f32.mrf.mxu0
  %v1582 = vadd.f32 %v1469, %v1581
  %v1583 = vpop.f32.mrf.mxu0
  %v1584 = vadd.f32 %v1471, %v1583
  %v1585 = vpop.f32.mrf.mxu0
  %v1586 = vadd.f32 %v1473, %v1585
  %v1587 = vpop.f32.mrf.mxu0
  %v1588 = vadd.f32 %v1475, %v1587
  %1589 = vmatprep.mubr.bf16.mxu0 %v449
  %1590 = vmatmul.mubr.bf16.gmra.mxu0 %v448
  %v1591 = vpop.f32.mrf.mxu0
  %v1592 = vadd.f32 %v1479, %v1591
  %v1593 = vpop.f32.mrf.mxu0
  %v1594 = vadd.f32 %v1481, %v1593
  %v1595 = vpop.f32.mrf.mxu0
  %v1596 = vadd.f32 %v1483, %v1595
  %v1597 = vpop.f32.mrf.mxu0
  %v1598 = vadd.f32 %v1485, %v1597
  %1599 = vmatprep.mubr.bf16.mxu0 %v457
  %1600 = vmatmul.mubr.bf16.gmra.mxu0 %v456
  %v1601 = vpop.f32.mrf.mxu0
  %v1602 = vadd.f32 %v1489, %v1601
  %v1603 = vpop.f32.mrf.mxu0
  %v1604 = vadd.f32 %v1491, %v1603
  %v1605 = vpop.f32.mrf.mxu0
  %v1606 = vadd.f32 %v1493, %v1605
  %v1607 = vpop.f32.mrf.mxu0
  %v1608 = vadd.f32 %v1495, %v1607
  %1609 = vmatprep.mubr.bf16.mxu0 %v465
  %1610 = vmatmul.mubr.bf16.gmra.mxu0 %v464
  %v1611 = vpop.f32.mrf.mxu0
  %v1612 = vadd.f32 %v1499, %v1611
  %v1613 = vpop.f32.mrf.mxu0
  %v1614 = vadd.f32 %v1501, %v1613
  %v1615 = vpop.f32.mrf.mxu0
  %v1616 = vadd.f32 %v1503, %v1615
  %v1617 = vpop.f32.mrf.mxu0
  %v1618 = vadd.f32 %v1505, %v1617
  %1619 = vmatprep.mubr.bf16.mxu0 %v473
  %1620 = vmatmul.mubr.bf16.gmra.mxu0 %v472
  %v1621 = vpop.f32.mrf.mxu0
  %v1622 = vadd.f32 %v1509, %v1621
  %v1623 = vpop.f32.mrf.mxu0
  %v1624 = vadd.f32 %v1511, %v1623
  %v1625 = vpop.f32.mrf.mxu0
  %v1626 = vadd.f32 %v1513, %v1625
  %v1627 = vpop.f32.mrf.mxu0
  %v1628 = vadd.f32 %v1515, %v1627
  %1629 = vdwg.mxu0
  %v1630 = vmul.f32 %v1552, 0.01
  %v1631 = vmul.f32 %v1554, 0.01
  %v1632 = vmul.f32 %v1556, 0.01
  %v1633 = vmul.f32 %v1558, 0.01
  %v1634 = vmul.f32 %v1562, 0.01
  %v1635 = vmul.f32 %v1564, 0.01
  %v1636 = vmul.f32 %v1566, 0.01
  %v1637 = vmul.f32 %v1568, 0.01
  %v1638 = vmul.f32 %v1572, 0.01
  %v1639 = vmul.f32 %v1574, 0.01
  %v1640 = vmul.f32 %v1576, 0.01
  %v1641 = vmul.f32 %v1578, 0.01
  %v1642 = vmul.f32 %v1582, 0.01
  %v1643 = vmul.f32 %v1584, 0.01
  %v1644 = vmul.f32 %v1586, 0.01
  %v1645 = vmul.f32 %v1588, 0.01
  %v1646 = vmul.f32 %v1592, 0.01
  %v1647 = vmul.f32 %v1594, 0.01
  %v1648 = vmul.f32 %v1596, 0.01
  %v1649 = vmul.f32 %v1598, 0.01
  %v1650 = vmul.f32 %v1602, 0.01
  %v1651 = vmul.f32 %v1604, 0.01
  %v1652 = vmul.f32 %v1606, 0.01
  %v1653 = vmul.f32 %v1608, 0.01
  %v1654 = vmul.f32 %v1612, 0.01
  %v1655 = vmul.f32 %v1614, 0.01
  %v1656 = vmul.f32 %v1616, 0.01
  %v1657 = vmul.f32 %v1618, 0.01
  %v1658 = vmul.f32 %v1622, 0.01
  %v1659 = vmul.f32 %v1624, 0.01
  %v1660 = vmul.f32 %v1626, 0.01
  %v1661 = vmul.f32 %v1628, 0.01
  %v1662 = vmax.f32 %v1552, %v1630
  %v1663 = vmax.f32 %v1554, %v1631
  %v1664 = vmax.f32 %v1556, %v1632
  %v1665 = vmax.f32 %v1558, %v1633
  %v1666 = vmax.f32 %v1562, %v1634
  %v1667 = vmax.f32 %v1564, %v1635
  %v1668 = vmax.f32 %v1566, %v1636
  %v1669 = vmax.f32 %v1568, %v1637
  %v1670 = vmax.f32 %v1572, %v1638
  %v1671 = vmax.f32 %v1574, %v1639
  %v1672 = vmax.f32 %v1576, %v1640
  %v1673 = vmax.f32 %v1578, %v1641
  %v1674 = vmax.f32 %v1582, %v1642
  %v1675 = vmax.f32 %v1584, %v1643
  %v1676 = vmax.f32 %v1586, %v1644
  %v1677 = vmax.f32 %v1588, %v1645
  %v1678 = vmax.f32 %v1592, %v1646
  %v1679 = vmax.f32 %v1594, %v1647
  %v1680 = vmax.f32 %v1596, %v1648
  %v1681 = vmax.f32 %v1598, %v1649
  %v1682 = vmax.f32 %v1602, %v1650
  %v1683 = vmax.f32 %v1604, %v1651
  %v1684 = vmax.f32 %v1606, %v1652
  %v1685 = vmax.f32 %v1608, %v1653
  %v1686 = vmax.f32 %v1612, %v1654
  %v1687 = vmax.f32 %v1614, %v1655
  %v1688 = vmax.f32 %v1616, %v1656
  %v1689 = vmax.f32 %v1618, %v1657
  %v1690 = vmax.f32 %v1622, %v1658
  %v1691 = vmax.f32 %v1624, %v1659
  %v1692 = vmax.f32 %v1626, %v1660
  %v1693 = vmax.f32 %v1628, %v1661
  %1694 = vst [vmem:[%s3] sm:$0xff] %v1662
  %1695 = vst [vmem:[%s3 + $0x8] sm:$0xff] %v1663
  %1696 = vst [vmem:[%s3 + $0x10] sm:$0xff] %v1664
  %1697 = vst [vmem:[%s3 + $0x18] sm:$0xff] %v1665
  %1698 = vst [vmem:[%s3 + $0x20] sm:$0xff] %v1666
  %1699 = vst [vmem:[%s3 + $0x28] sm:$0xff] %v1667
  %1700 = vst [vmem:[%s3 + $0x30] sm:$0xff] %v1668
  %1701 = vst [vmem:[%s3 + $0x38] sm:$0xff] %v1669
  %1702 = vst [vmem:[%s3 + $0x40] sm:$0xff] %v1670
  %1703 = vst [vmem:[%s3 + $0x48] sm:$0xff] %v1671
  %1704 = vst [vmem:[%s3 + $0x50] sm:$0xff] %v1672
  %1705 = vst [vmem:[%s3 + $0x58] sm:$0xff] %v1673
  %1706 = vst [vmem:[%s3 + $0x60] sm:$0xff] %v1674
  %1707 = vst [vmem:[%s3 + $0x68] sm:$0xff] %v1675
  %1708 = vst [vmem:[%s3 + $0x70] sm:$0xff] %v1676
  %1709 = vst [vmem:[%s3 + $0x78] sm:$0xff] %v1677
  %1710 = vst [vmem:[%s3 + $0x80] sm:$0xff] %v1678
  %1711 = vst [vmem:[%s3 + $0x88] sm:$0xff] %v1679
  %1712 = vst [vmem:[%s3 + $0x90] sm:$0xff] %v1680
  %1713 = vst [vmem:[%s3 + $0x98] sm:$0xff] %v1681
  %1714 = vst [vmem:[%s3 + $0xa0] sm:$0xff] %v1682
  %1715 = vst [vmem:[%s3 + $0xa8] sm:$0xff] %v1683
  %1716 = vst [vmem:[%s3 + $0xb0] sm:$0xff] %v1684
  %1717 = vst [vmem:[%s3 + $0xb8] sm:$0xff] %v1685
  %1718 = vst [vmem:[%s3 + $0xc0] sm:$0xff] %v1686
  %1719 = vst [vmem:[%s3 + $0xc8] sm:$0xff] %v1687
  %1720 = vst [vmem:[%s3 + $0xd0] sm:$0xff] %v1688
  %1721 = vst [vmem:[%s3 + $0xd8] sm:$0xff] %v1689
  %1722 = vst [vmem:[%s3 + $0xe0] sm:$0xff] %v1690
  %1723 = vst [vmem:[%s3 + $0xe8] sm:$0xff] %v1691
  %1724 = vst [vmem:[%s3 + $0xf0] sm:$0xff] %v1692
  %1725 = vst [vmem:[%s3 + $0xf8] sm:$0xff] %v1693
  // Predicated region
  $region14: #{forward.19} parent=0 // pred_check
    _
  $region15: #{forward.19} parent=0 // pred_check_branch
    %1727 = sbr.rel (0) target = $region17
  $region16: #{forward.19} parent=0 // pred_region
    _
  $region17: #{forward.19} parent=0 // pred_fallthru
    _
  // Predicated region
  $region18: #{forward.19} parent=0 // pred_check
    _
  $region19: #{forward.19} parent=0 // pred_check_branch
    %1729 = sbr.rel (0) target = $region21
  $region20: #{forward.19} parent=0 // pred_region
    _
  $region21: #{forward.19} parent=0 // pred_fallthru
    _

// kernel: forward.20
$region0: #{forward.20}
  #allocation0 [shape = 'u32[]', space=smem, size = 0x4, offset = 0x4, fixed_abs, tag = 'smem constant byte address 0x4 - core index']
  #allocation1 [shape = 'u32[144,128]{1,0:T(1,128)}', space=vmem, size = 0x12000, scoped, tag = 'internal scratch']
  %s0 = inlined_call_operand.vmem [shape: bf16[32,1024], index: 0, kind: input, shape index: {}]
  %s1 = inlined_call_operand.vmem [shape: bf16[1024,256], index: 1, kind: input, shape index: {}]
  %s2 = inlined_call_operand.vmem [shape: f32[1,256], index: 2, kind: input, shape index: {}]
  %s3 = inlined_call_operand.vmem [shape: f32[32,256], index: 3, kind: output, shape index: {}]
  %s4 = sld [smem:[#allocation0]]
  $region22: #{forward.20} parent=0
    _
  %s6 = ssub.s32 1, %s4
  %s7 = scalar_select 0, %s6, %s4
  // Predicated region
  $region2: #{forward.20} parent=0 // pred_check
    _
  $region3: #{forward.20} parent=0 // pred_check_branch
    %9 = sbr.rel (0) target = $region5
  $region4: #{forward.20} parent=0 // pred_region
    _
  $region5: #{forward.20} parent=0 // pred_fallthru
    _
  // Predicated region
  $region6: #{forward.20} parent=0 // pred_check
    _
  $region7: #{forward.20} parent=0 // pred_check_branch
    %11 = sbr.rel (0) target = $region9
  $region8: #{forward.20} parent=0 // pred_region
    _
  $region9: #{forward.20} parent=0 // pred_fallthru
    _
  // Predicated region
  $region10: #{forward.20} parent=0 // pred_check
    _
  $region11: #{forward.20} parent=0 // pred_check_branch
    %13 = sbr.rel (0) target = $region13
  $region12: #{forward.20} parent=0 // pred_region
    _
  $region13: #{forward.20} parent=0 // pred_fallthru
    _
  %v14 = vld [vmem:[%s0] sm:$0xff]
  %v15 = vld [vmem:[%s0 + $0x8] sm:$0xff]
  %v16 = vld [vmem:[%s0 + $0x10] sm:$0xff]
  %v17 = vld [vmem:[%s0 + $0x18] sm:$0xff]
  %v18 = vld [vmem:[%s0 + $0x20] sm:$0xff]
  %v19 = vld [vmem:[%s0 + $0x28] sm:$0xff]
  %v20 = vld [vmem:[%s0 + $0x30] sm:$0xff]
  %v21 = vld [vmem:[%s0 + $0x38] sm:$0xff]
  %v22 = vld [vmem:[%s0 + $0x40] sm:$0xff]
  %v23 = vld [vmem:[%s0 + $0x48] sm:$0xff]
  %v24 = vld [vmem:[%s0 + $0x50] sm:$0xff]
  %v25 = vld [vmem:[%s0 + $0x58] sm:$0xff]
  %v26 = vld [vmem:[%s0 + $0x60] sm:$0xff]
  %v27 = vld [vmem:[%s0 + $0x68] sm:$0xff]
  %v28 = vld [vmem:[%s0 + $0x70] sm:$0xff]
  %v29 = vld [vmem:[%s0 + $0x78] sm:$0xff]
  %v30 = vld [vmem:[%s1] sm:$0xff]
  %v31 = vld [vmem:[%s1 + $0x8] sm:$0xff]
  %v32 = vld [vmem:[%s1 + $0x10] sm:$0xff]
  %v33 = vld [vmem:[%s1 + $0x18] sm:$0xff]
  %v34 = vld [vmem:[%s1 + $0x20] sm:$0xff]
  %v35 = vld [vmem:[%s1 + $0x28] sm:$0xff]
  %v36 = vld [vmem:[%s1 + $0x30] sm:$0xff]
  %v37 = vld [vmem:[%s1 + $0x38] sm:$0xff]
  %v38 = vld [vmem:[%s1 + $0x40] sm:$0xff]
  %v39 = vld [vmem:[%s1 + $0x48] sm:$0xff]
  %v40 = vld [vmem:[%s1 + $0x50] sm:$0xff]
  %v41 = vld [vmem:[%s1 + $0x58] sm:$0xff]
  %v42 = vld [vmem:[%s1 + $0x60] sm:$0xff]
  %v43 = vld [vmem:[%s1 + $0x68] sm:$0xff]
  %v44 = vld [vmem:[%s1 + $0x70] sm:$0xff]
  %v45 = vld [vmem:[%s1 + $0x78] sm:$0xff]
  %v46 = vld [vmem:[%s1 + $0x80] sm:$0xff]
  %v47 = vld [vmem:[%s1 + $0x88] sm:$0xff]
  %v48 = vld [vmem:[%s1 + $0x90] sm:$0xff]
  %v49 = vld [vmem:[%s1 + $0x98] sm:$0xff]
  %v50 = vld [vmem:[%s1 + $0xa0] sm:$0xff]
  %v51 = vld [vmem:[%s1 + $0xa8] sm:$0xff]
  %v52 = vld [vmem:[%s1 + $0xb0] sm:$0xff]
  %v53 = vld [vmem:[%s1 + $0xb8] sm:$0xff]
  %v54 = vld [vmem:[%s1 + $0xc0] sm:$0xff]
  %v55 = vld [vmem:[%s1 + $0xc8] sm:$0xff]
  %v56 = vld [vmem:[%s1 + $0xd0] sm:$0xff]
  %v57 = vld [vmem:[%s1 + $0xd8] sm:$0xff]
  %v58 = vld [vmem:[%s1 + $0xe0] sm:$0xff]
  %v59 = vld [vmem:[%s1 + $0xe8] sm:$0xff]
  %v60 = vld [vmem:[%s1 + $0xf0] sm:$0xff]
  %v61 = vld [vmem:[%s1 + $0xf8] sm:$0xff]
  %v62 = vld [vmem:[%s1 + $0x100] sm:$0xff]
  %v63 = vld [vmem:[%s1 + $0x108] sm:$0xff]
  %v64 = vld [vmem:[%s1 + $0x110] sm:$0xff]
  %v65 = vld [vmem:[%s1 + $0x118] sm:$0xff]
  %v66 = vld [vmem:[%s1 + $0x120] sm:$0xff]
  %v67 = vld [vmem:[%s1 + $0x128] sm:$0xff]
  %v68 = vld [vmem:[%s1 + $0x130] sm:$0xff]
  %v69 = vld [vmem:[%s1 + $0x138] sm:$0xff]
  %v70 = vld [vmem:[%s1 + $0x140] sm:$0xff]
  %v71 = vld [vmem:[%s1 + $0x148] sm:$0xff]
  %v72 = vld [vmem:[%s1 + $0x150] sm:$0xff]
  %v73 = vld [vmem:[%s1 + $0x158] sm:$0xff]
  %v74 = vld [vmem:[%s1 + $0x160] sm:$0xff]
  %v75 = vld [vmem:[%s1 + $0x168] sm:$0xff]
  %v76 = vld [vmem:[%s1 + $0x170] sm:$0xff]
  %v77 = vld [vmem:[%s1 + $0x178] sm:$0xff]
  %v78 = vld [vmem:[%s1 + $0x180] sm:$0xff]
  %v79 = vld [vmem:[%s1 + $0x188] sm:$0xff]
  %v80 = vld [vmem:[%s1 + $0x190] sm:$0xff]
  %v81 = vld [vmem:[%s1 + $0x198] sm:$0xff]
  %v82 = vld [vmem:[%s1 + $0x1a0] sm:$0xff]
  %v83 = vld [vmem:[%s1 + $0x1a8] sm:$0xff]
  %v84 = vld [vmem:[%s1 + $0x1b0] sm:$0xff]
  %v85 = vld [vmem:[%s1 + $0x1b8] sm:$0xff]
  %v86 = vld [vmem:[%s1 + $0x1c0] sm:$0xff]
  %v87 = vld [vmem:[%s1 + $0x1c8] sm:$0xff]
  %v88 = vld [vmem:[%s1 + $0x1d0] sm:$0xff]
  %v89 = vld [vmem:[%s1 + $0x1d8] sm:$0xff]
  %v90 = vld [vmem:[%s1 + $0x1e0] sm:$0xff]
  %v91 = vld [vmem:[%s1 + $0x1e8] sm:$0xff]
  %v92 = vld [vmem:[%s1 + $0x1f0] sm:$0xff]
  %v93 = vld [vmem:[%s1 + $0x1f8] sm:$0xff]
  %v94 = vld [vmem:[%s1 + $0x200] sm:$0xff]
  %v95 = vld [vmem:[%s1 + $0x208] sm:$0xff]
  %v96 = vld [vmem:[%s1 + $0x210] sm:$0xff]
  %v97 = vld [vmem:[%s1 + $0x218] sm:$0xff]
  %v98 = vld [vmem:[%s1 + $0x220] sm:$0xff]
  %v99 = vld [vmem:[%s1 + $0x228] sm:$0xff]
  %v100 = vld [vmem:[%s1 + $0x230] sm:$0xff]
  %v101 = vld [vmem:[%s1 + $0x238] sm:$0xff]
  %v102 = vld [vmem:[%s1 + $0x240] sm:$0xff]
  %v103 = vld [vmem:[%s1 + $0x248] sm:$0xff]
  %v104 = vld [vmem:[%s1 + $0x250] sm:$0xff]
  %v105 = vld [vmem:[%s1 + $0x258] sm:$0xff]
  %v106 = vld [vmem:[%s1 + $0x260] sm:$0xff]
  %v107 = vld [vmem:[%s1 + $0x268] sm:$0xff]
  %v108 = vld [vmem:[%s1 + $0x270] sm:$0xff]
  %v109 = vld [vmem:[%s1 + $0x278] sm:$0xff]
  %v110 = vld [vmem:[%s1 + $0x280] sm:$0xff]
  %v111 = vld [vmem:[%s1 + $0x288] sm:$0xff]
  %v112 = vld [vmem:[%s1 + $0x290] sm:$0xff]
  %v113 = vld [vmem:[%s1 + $0x298] sm:$0xff]
  %v114 = vld [vmem:[%s1 + $0x2a0] sm:$0xff]
  %v115 = vld [vmem:[%s1 + $0x2a8] sm:$0xff]
  %v116 = vld [vmem:[%s1 + $0x2b0] sm:$0xff]
  %v117 = vld [vmem:[%s1 + $0x2b8] sm:$0xff]
  %v118 = vld [vmem:[%s1 + $0x2c0] sm:$0xff]
  %v119 = vld [vmem:[%s1 + $0x2c8] sm:$0xff]
  %v120 = vld [vmem:[%s1 + $0x2d0] sm:$0xff]
  %v121 = vld [vmem:[%s1 + $0x2d8] sm:$0xff]
  %v122 = vld [vmem:[%s1 + $0x2e0] sm:$0xff]
  %v123 = vld [vmem:[%s1 + $0x2e8] sm:$0xff]
  %v124 = vld [vmem:[%s1 + $0x2f0] sm:$0xff]
  %v125 = vld [vmem:[%s1 + $0x2f8] sm:$0xff]
  %v126 = vld [vmem:[%s1 + $0x300] sm:$0xff]
  %v127 = vld [vmem:[%s1 + $0x308] sm:$0xff]
  %v128 = vld [vmem:[%s1 + $0x310] sm:$0xff]
  %v129 = vld [vmem:[%s1 + $0x318] sm:$0xff]
  %v130 = vld [vmem:[%s1 + $0x320] sm:$0xff]
  %v131 = vld [vmem:[%s1 + $0x328] sm:$0xff]
  %v132 = vld [vmem:[%s1 + $0x330] sm:$0xff]
  %v133 = vld [vmem:[%s1 + $0x338] sm:$0xff]
  %v134 = vld [vmem:[%s1 + $0x340] sm:$0xff]
  %v135 = vld [vmem:[%s1 + $0x348] sm:$0xff]
  %v136 = vld [vmem:[%s1 + $0x350] sm:$0xff]
  %v137 = vld [vmem:[%s1 + $0x358] sm:$0xff]
  %v138 = vld [vmem:[%s1 + $0x360] sm:$0xff]
  %v139 = vld [vmem:[%s1 + $0x368] sm:$0xff]
  %v140 = vld [vmem:[%s1 + $0x370] sm:$0xff]
  %v141 = vld [vmem:[%s1 + $0x378] sm:$0xff]
  %v142 = vld [vmem:[%s1 + $0x380] sm:$0xff]
  %v143 = vld [vmem:[%s1 + $0x388] sm:$0xff]
  %v144 = vld [vmem:[%s1 + $0x390] sm:$0xff]
  %v145 = vld [vmem:[%s1 + $0x398] sm:$0xff]
  %v146 = vld [vmem:[%s1 + $0x3a0] sm:$0xff]
  %v147 = vld [vmem:[%s1 + $0x3a8] sm:$0xff]
  %v148 = vld [vmem:[%s1 + $0x3b0] sm:$0xff]
  %v149 = vld [vmem:[%s1 + $0x3b8] sm:$0xff]
  %v150 = vld [vmem:[%s1 + $0x3c0] sm:$0xff]
  %v151 = vld [vmem:[%s1 + $0x3c8] sm:$0xff]
  %v152 = vld [vmem:[%s1 + $0x3d0] sm:$0xff]
  %v153 = vld [vmem:[%s1 + $0x3d8] sm:$0xff]
  %v154 = vld [vmem:[%s1 + $0x3e0] sm:$0xff]
  %v155 = vld [vmem:[%s1 + $0x3e8] sm:$0xff]
  %v156 = vld [vmem:[%s1 + $0x3f0] sm:$0xff]
  %v157 = vld [vmem:[%s1 + $0x3f8] sm:$0xff]
  %v158 = vld [vmem:[%s2] sm:$0x3]
  %v160 = vlaneseq
  %v161 = vshrl.u32 %v160, 7
  %v162 = vsub.s32 0, %v161
  %v163 = vrot.slane %v158, %v162
  %v164 = vlaneseq
  %v165 = vshrl.u32 %v164, 7
  %v166 = vsub.s32 1, %v165
  %v167 = vrot.slane %v158, %v166
  %v186 = vunpack.c.l.b16 %v14
  %v187 = vunpack.c.h.b16 %v14
  %v188 = vunpack.c.l.b16 %v15
  %v189 = vunpack.c.h.b16 %v15
  %v190 = vunpack.c.l.b16 %v16
  %v191 = vunpack.c.h.b16 %v16
  %v192 = vunpack.c.l.b16 %v17
  %v193 = vunpack.c.h.b16 %v17
  %v194 = vunpack.c.l.b16 %v18
  %v195 = vunpack.c.h.b16 %v18
  %v196 = vunpack.c.l.b16 %v19
  %v197 = vunpack.c.h.b16 %v19
  %v198 = vunpack.c.l.b16 %v20
  %v199 = vunpack.c.h.b16 %v20
  %v200 = vunpack.c.l.b16 %v21
  %v201 = vunpack.c.h.b16 %v21
  %v202 = vunpack.c.l.b16 %v22
  %v203 = vunpack.c.h.b16 %v22
  %v204 = vunpack.c.l.b16 %v23
  %v205 = vunpack.c.h.b16 %v23
  %v206 = vunpack.c.l.b16 %v24
  %v207 = vunpack.c.h.b16 %v24
  %v208 = vunpack.c.l.b16 %v25
  %v209 = vunpack.c.h.b16 %v25
  %v210 = vunpack.c.l.b16 %v26
  %v211 = vunpack.c.h.b16 %v26
  %v212 = vunpack.c.l.b16 %v27
  %v213 = vunpack.c.h.b16 %v27
  %v214 = vunpack.c.l.b16 %v28
  %v215 = vunpack.c.h.b16 %v28
  %v216 = vunpack.c.l.b16 %v29
  %v217 = vunpack.c.h.b16 %v29
  %v218 = vpack.c.b16 %v194, %v186
  %v219 = vpack.c.b16 %v195, %v187
  %v220 = vpack.c.b16 %v196, %v188
  %v221 = vpack.c.b16 %v197, %v189
  %v222 = vpack.c.b16 %v198, %v190
  %v223 = vpack.c.b16 %v199, %v191
  %v224 = vpack.c.b16 %v200, %v192
  %v225 = vpack.c.b16 %v201, %v193
  %v226 = vpack.c.b16 %v210, %v202
  %v227 = vpack.c.b16 %v211, %v203
  %v228 = vpack.c.b16 %v212, %v204
  %v229 = vpack.c.b16 %v213, %v205
  %v230 = vpack.c.b16 %v214, %v206
  %v231 = vpack.c.b16 %v215, %v207
  %v232 = vpack.c.b16 %v216, %v208
  %v233 = vpack.c.b16 %v217, %v209
  %v378 = vunpack.c.l.b16 %v30
  %v379 = vunpack.c.h.b16 %v30
  %v380 = vunpack.c.l.b16 %v31
  %v381 = vunpack.c.h.b16 %v31
  %v382 = vunpack.c.l.b16 %v32
  %v383 = vunpack.c.h.b16 %v32
  %v384 = vunpack.c.l.b16 %v33
  %v385 = vunpack.c.h.b16 %v33
  %v386 = vunpack.c.l.b16 %v34
  %v387 = vunpack.c.h.b16 %v34
  %v388 = vunpack.c.l.b16 %v35
  %v389 = vunpack.c.h.b16 %v35
  %v390 = vunpack.c.l.b16 %v36
  %v391 = vunpack.c.h.b16 %v36
  %v392 = vunpack.c.l.b16 %v37
  %v393 = vunpack.c.h.b16 %v37
  %v394 = vunpack.c.l.b16 %v38
  %v395 = vunpack.c.h.b16 %v38
  %v396 = vunpack.c.l.b16 %v39
  %v397 = vunpack.c.h.b16 %v39
  %v398 = vunpack.c.l.b16 %v40
  %v399 = vunpack.c.h.b16 %v40
  %v400 = vunpack.c.l.b16 %v41
  %v401 = vunpack.c.h.b16 %v41
  %v402 = vunpack.c.l.b16 %v42
  %v403 = vunpack.c.h.b16 %v42
  %v404 = vunpack.c.l.b16 %v43
  %v405 = vunpack.c.h.b16 %v43
  %v406 = vunpack.c.l.b16 %v44
  %v407 = vunpack.c.h.b16 %v44
  %v408 = vunpack.c.l.b16 %v45
  %v409 = vunpack.c.h.b16 %v45
  %v410 = vunpack.c.l.b16 %v46
  %v411 = vunpack.c.h.b16 %v46
  %v412 = vunpack.c.l.b16 %v47
  %v413 = vunpack.c.h.b16 %v47
  %v414 = vunpack.c.l.b16 %v48
  %v415 = vunpack.c.h.b16 %v48
  %v416 = vunpack.c.l.b16 %v49
  %v417 = vunpack.c.h.b16 %v49
  %v418 = vunpack.c.l.b16 %v50
  %v419 = vunpack.c.h.b16 %v50
  %v420 = vunpack.c.l.b16 %v51
  %v421 = vunpack.c.h.b16 %v51
  %v422 = vunpack.c.l.b16 %v52
  %v423 = vunpack.c.h.b16 %v52
  %v424 = vunpack.c.l.b16 %v53
  %v425 = vunpack.c.h.b16 %v53
  %v426 = vunpack.c.l.b16 %v54
  %v427 = vunpack.c.h.b16 %v54
  %v428 = vunpack.c.l.b16 %v55
  %v429 = vunpack.c.h.b16 %v55
  %v430 = vunpack.c.l.b16 %v56
  %v431 = vunpack.c.h.b16 %v56
  %v432 = vunpack.c.l.b16 %v57
  %v433 = vunpack.c.h.b16 %v57
  %v434 = vunpack.c.l.b16 %v58
  %v435 = vunpack.c.h.b16 %v58
  %v436 = vunpack.c.l.b16 %v59
  %v437 = vunpack.c.h.b16 %v59
  %v438 = vunpack.c.l.b16 %v60
  %v439 = vunpack.c.h.b16 %v60
  %v440 = vunpack.c.l.b16 %v61
  %v441 = vunpack.c.h.b16 %v61
  %v442 = vunpack.c.l.b16 %v62
  %v443 = vunpack.c.h.b16 %v62
  %v444 = vunpack.c.l.b16 %v63
  %v445 = vunpack.c.h.b16 %v63
  %v446 = vunpack.c.l.b16 %v64
  %v447 = vunpack.c.h.b16 %v64
  %v448 = vunpack.c.l.b16 %v65
  %v449 = vunpack.c.h.b16 %v65
  %v450 = vunpack.c.l.b16 %v66
  %v451 = vunpack.c.h.b16 %v66
  %v452 = vunpack.c.l.b16 %v67
  %v453 = vunpack.c.h.b16 %v67
  %v454 = vunpack.c.l.b16 %v68
  %v455 = vunpack.c.h.b16 %v68
  %v456 = vunpack.c.l.b16 %v69
  %v457 = vunpack.c.h.b16 %v69
  %v458 = vunpack.c.l.b16 %v70
  %v459 = vunpack.c.h.b16 %v70
  %v460 = vunpack.c.l.b16 %v71
  %v461 = vunpack.c.h.b16 %v71
  %v462 = vunpack.c.l.b16 %v72
  %v463 = vunpack.c.h.b16 %v72
  %v464 = vunpack.c.l.b16 %v73
  %v465 = vunpack.c.h.b16 %v73
  %v466 = vunpack.c.l.b16 %v74
  %v467 = vunpack.c.h.b16 %v74
  %v468 = vunpack.c.l.b16 %v75
  %v469 = vunpack.c.h.b16 %v75
  %v470 = vunpack.c.l.b16 %v76
  %v471 = vunpack.c.h.b16 %v76
  %v472 = vunpack.c.l.b16 %v77
  %v473 = vunpack.c.h.b16 %v77
  %v474 = vunpack.c.l.b16 %v78
  %v475 = vunpack.c.h.b16 %v78
  %v476 = vunpack.c.l.b16 %v79
  %v477 = vunpack.c.h.b16 %v79
  %v478 = vunpack.c.l.b16 %v80
  %v479 = vunpack.c.h.b16 %v80
  %v480 = vunpack.c.l.b16 %v81
  %v481 = vunpack.c.h.b16 %v81
  %v482 = vunpack.c.l.b16 %v82
  %v483 = vunpack.c.h.b16 %v82
  %v484 = vunpack.c.l.b16 %v83
  %v485 = vunpack.c.h.b16 %v83
  %v486 = vunpack.c.l.b16 %v84
  %v487 = vunpack.c.h.b16 %v84
  %v488 = vunpack.c.l.b16 %v85
  %v489 = vunpack.c.h.b16 %v85
  %v490 = vunpack.c.l.b16 %v86
  %v491 = vunpack.c.h.b16 %v86
  %v492 = vunpack.c.l.b16 %v87
  %v493 = vunpack.c.h.b16 %v87
  %v494 = vunpack.c.l.b16 %v88
  %v495 = vunpack.c.h.b16 %v88
  %v496 = vunpack.c.l.b16 %v89
  %v497 = vunpack.c.h.b16 %v89
  %v498 = vunpack.c.l.b16 %v90
  %v499 = vunpack.c.h.b16 %v90
  %v500 = vunpack.c.l.b16 %v91
  %v501 = vunpack.c.h.b16 %v91
  %v502 = vunpack.c.l.b16 %v92
  %v503 = vunpack.c.h.b16 %v92
  %v504 = vunpack.c.l.b16 %v93
  %v505 = vunpack.c.h.b16 %v93
  %v506 = vunpack.c.l.b16 %v94
  %v507 = vunpack.c.h.b16 %v94
  %v508 = vunpack.c.l.b16 %v95
  %v509 = vunpack.c.h.b16 %v95
  %v510 = vunpack.c.l.b16 %v96
  %v511 = vunpack.c.h.b16 %v96
  %v512 = vunpack.c.l.b16 %v97
  %v513 = vunpack.c.h.b16 %v97
  %v514 = vunpack.c.l.b16 %v98
  %v515 = vunpack.c.h.b16 %v98
  %v516 = vunpack.c.l.b16 %v99
  %v517 = vunpack.c.h.b16 %v99
  %v518 = vunpack.c.l.b16 %v100
  %v519 = vunpack.c.h.b16 %v100
  %v520 = vunpack.c.l.b16 %v101
  %v521 = vunpack.c.h.b16 %v101
  %v522 = vunpack.c.l.b16 %v102
  %v523 = vunpack.c.h.b16 %v102
  %v524 = vunpack.c.l.b16 %v103
  %v525 = vunpack.c.h.b16 %v103
  %v526 = vunpack.c.l.b16 %v104
  %v527 = vunpack.c.h.b16 %v104
  %v528 = vunpack.c.l.b16 %v105
  %v529 = vunpack.c.h.b16 %v105
  %v530 = vunpack.c.l.b16 %v106
  %v531 = vunpack.c.h.b16 %v106
  %v532 = vunpack.c.l.b16 %v107
  %v533 = vunpack.c.h.b16 %v107
  %v534 = vunpack.c.l.b16 %v108
  %v535 = vunpack.c.h.b16 %v108
  %v536 = vunpack.c.l.b16 %v109
  %v537 = vunpack.c.h.b16 %v109
  %v538 = vunpack.c.l.b16 %v110
  %v539 = vunpack.c.h.b16 %v110
  %v540 = vunpack.c.l.b16 %v111
  %v541 = vunpack.c.h.b16 %v111
  %v542 = vunpack.c.l.b16 %v112
  %v543 = vunpack.c.h.b16 %v112
  %v544 = vunpack.c.l.b16 %v113
  %v545 = vunpack.c.h.b16 %v113
  %v546 = vunpack.c.l.b16 %v114
  %v547 = vunpack.c.h.b16 %v114
  %v548 = vunpack.c.l.b16 %v115
  %v549 = vunpack.c.h.b16 %v115
  %v550 = vunpack.c.l.b16 %v116
  %v551 = vunpack.c.h.b16 %v116
  %v552 = vunpack.c.l.b16 %v117
  %v553 = vunpack.c.h.b16 %v117
  %v554 = vunpack.c.l.b16 %v118
  %v555 = vunpack.c.h.b16 %v118
  %v556 = vunpack.c.l.b16 %v119
  %v557 = vunpack.c.h.b16 %v119
  %v558 = vunpack.c.l.b16 %v120
  %v559 = vunpack.c.h.b16 %v120
  %v560 = vunpack.c.l.b16 %v121
  %v561 = vunpack.c.h.b16 %v121
  %v562 = vunpack.c.l.b16 %v122
  %v563 = vunpack.c.h.b16 %v122
  %v564 = vunpack.c.l.b16 %v123
  %v565 = vunpack.c.h.b16 %v123
  %v566 = vunpack.c.l.b16 %v124
  %v567 = vunpack.c.h.b16 %v124
  %v568 = vunpack.c.l.b16 %v125
  %v569 = vunpack.c.h.b16 %v125
  %v570 = vunpack.c.l.b16 %v126
  %v571 = vunpack.c.h.b16 %v126
  %v572 = vunpack.c.l.b16 %v127
  %v573 = vunpack.c.h.b16 %v127
  %v574 = vunpack.c.l.b16 %v128
  %v575 = vunpack.c.h.b16 %v128
  %v576 = vunpack.c.l.b16 %v129
  %v577 = vunpack.c.h.b16 %v129
  %v578 = vunpack.c.l.b16 %v130
  %v579 = vunpack.c.h.b16 %v130
  %v580 = vunpack.c.l.b16 %v131
  %v581 = vunpack.c.h.b16 %v131
  %v582 = vunpack.c.l.b16 %v132
  %v583 = vunpack.c.h.b16 %v132
  %v584 = vunpack.c.l.b16 %v133
  %v585 = vunpack.c.h.b16 %v133
  %v586 = vunpack.c.l.b16 %v134
  %v587 = vunpack.c.h.b16 %v134
  %v588 = vunpack.c.l.b16 %v135
  %v589 = vunpack.c.h.b16 %v135
  %v590 = vunpack.c.l.b16 %v136
  %v591 = vunpack.c.h.b16 %v136
  %v592 = vunpack.c.l.b16 %v137
  %v593 = vunpack.c.h.b16 %v137
  %v594 = vunpack.c.l.b16 %v138
  %v595 = vunpack.c.h.b16 %v138
  %v596 = vunpack.c.l.b16 %v139
  %v597 = vunpack.c.h.b16 %v139
  %v598 = vunpack.c.l.b16 %v140
  %v599 = vunpack.c.h.b16 %v140
  %v600 = vunpack.c.l.b16 %v141
  %v601 = vunpack.c.h.b16 %v141
  %v602 = vunpack.c.l.b16 %v142
  %v603 = vunpack.c.h.b16 %v142
  %v604 = vunpack.c.l.b16 %v143
  %v605 = vunpack.c.h.b16 %v143
  %v606 = vunpack.c.l.b16 %v144
  %v607 = vunpack.c.h.b16 %v144
  %v608 = vunpack.c.l.b16 %v145
  %v609 = vunpack.c.h.b16 %v145
  %v610 = vunpack.c.l.b16 %v146
  %v611 = vunpack.c.h.b16 %v146
  %v612 = vunpack.c.l.b16 %v147
  %v613 = vunpack.c.h.b16 %v147
  %v614 = vunpack.c.l.b16 %v148
  %v615 = vunpack.c.h.b16 %v148
  %v616 = vunpack.c.l.b16 %v149
  %v617 = vunpack.c.h.b16 %v149
  %v618 = vunpack.c.l.b16 %v150
  %v619 = vunpack.c.h.b16 %v150
  %v620 = vunpack.c.l.b16 %v151
  %v621 = vunpack.c.h.b16 %v151
  %v622 = vunpack.c.l.b16 %v152
  %v623 = vunpack.c.h.b16 %v152
  %v624 = vunpack.c.l.b16 %v153
  %v625 = vunpack.c.h.b16 %v153
  %v626 = vunpack.c.l.b16 %v154
  %v627 = vunpack.c.h.b16 %v154
  %v628 = vunpack.c.l.b16 %v155
  %v629 = vunpack.c.h.b16 %v155
  %v630 = vunpack.c.l.b16 %v156
  %v631 = vunpack.c.h.b16 %v156
  %v632 = vunpack.c.l.b16 %v157
  %v633 = vunpack.c.h.b16 %v157
  %v634 = vpack.c.b16 %v380, %v378
  %v635 = vpack.c.b16 %v381, %v379
  %v636 = vpack.c.b16 %v384, %v382
  %v637 = vpack.c.b16 %v385, %v383
  %v638 = vpack.c.b16 %v388, %v386
  %v639 = vpack.c.b16 %v389, %v387
  %v640 = vpack.c.b16 %v392, %v390
  %v641 = vpack.c.b16 %v393, %v391
  %v642 = vpack.c.b16 %v396, %v394
  %v643 = vpack.c.b16 %v397, %v395
  %v644 = vpack.c.b16 %v400, %v398
  %v645 = vpack.c.b16 %v401, %v399
  %v646 = vpack.c.b16 %v404, %v402
  %v647 = vpack.c.b16 %v405, %v403
  %v648 = vpack.c.b16 %v408, %v406
  %v649 = vpack.c.b16 %v409, %v407
  %v650 = vpack.c.b16 %v412, %v410
  %v651 = vpack.c.b16 %v413, %v411
  %v652 = vpack.c.b16 %v416, %v414
  %v653 = vpack.c.b16 %v417, %v415
  %v654 = vpack.c.b16 %v420, %v418
  %v655 = vpack.c.b16 %v421, %v419
  %v656 = vpack.c.b16 %v424, %v422
  %v657 = vpack.c.b16 %v425, %v423
  %v658 = vpack.c.b16 %v428, %v426
  %v659 = vpack.c.b16 %v429, %v427
  %v660 = vpack.c.b16 %v432, %v430
  %v661 = vpack.c.b16 %v433, %v431
  %v662 = vpack.c.b16 %v436, %v434
  %v663 = vpack.c.b16 %v437, %v435
  %v664 = vpack.c.b16 %v440, %v438
  %v665 = vpack.c.b16 %v441, %v439
  %v666 = vpack.c.b16 %v444, %v442
  %v667 = vpack.c.b16 %v445, %v443
  %v668 = vpack.c.b16 %v448, %v446
  %v669 = vpack.c.b16 %v449, %v447
  %v670 = vpack.c.b16 %v452, %v450
  %v671 = vpack.c.b16 %v453, %v451
  %v672 = vpack.c.b16 %v456, %v454
  %v673 = vpack.c.b16 %v457, %v455
  %v674 = vpack.c.b16 %v460, %v458
  %v675 = vpack.c.b16 %v461, %v459
  %v676 = vpack.c.b16 %v464, %v462
  %v677 = vpack.c.b16 %v465, %v463
  %v678 = vpack.c.b16 %v468, %v466
  %v679 = vpack.c.b16 %v469, %v467
  %v680 = vpack.c.b16 %v472, %v470
  %v681 = vpack.c.b16 %v473, %v471
  %v682 = vpack.c.b16 %v476, %v474
  %v683 = vpack.c.b16 %v477, %v475
  %v684 = vpack.c.b16 %v480, %v478
  %v685 = vpack.c.b16 %v481, %v479
  %v686 = vpack.c.b16 %v484, %v482
  %v687 = vpack.c.b16 %v485, %v483
  %v688 = vpack.c.b16 %v488, %v486
  %v689 = vpack.c.b16 %v489, %v487
  %v690 = vpack.c.b16 %v492, %v490
  %v691 = vpack.c.b16 %v493, %v491
  %v692 = vpack.c.b16 %v496, %v494
  %v693 = vpack.c.b16 %v497, %v495
  %v694 = vpack.c.b16 %v500, %v498
  %v695 = vpack.c.b16 %v501, %v499
  %v696 = vpack.c.b16 %v504, %v502
  %v697 = vpack.c.b16 %v505, %v503
  %v698 = vpack.c.b16 %v508, %v506
  %v699 = vpack.c.b16 %v509, %v507
  %v700 = vpack.c.b16 %v512, %v510
  %v701 = vpack.c.b16 %v513, %v511
  %v702 = vpack.c.b16 %v516, %v514
  %v703 = vpack.c.b16 %v517, %v515
  %v704 = vpack.c.b16 %v520, %v518
  %v705 = vpack.c.b16 %v521, %v519
  %v706 = vpack.c.b16 %v524, %v522
  %v707 = vpack.c.b16 %v525, %v523
  %v708 = vpack.c.b16 %v528, %v526
  %v709 = vpack.c.b16 %v529, %v527
  %v710 = vpack.c.b16 %v532, %v530
  %v711 = vpack.c.b16 %v533, %v531
  %v712 = vpack.c.b16 %v536, %v534
  %v713 = vpack.c.b16 %v537, %v535
  %v714 = vpack.c.b16 %v540, %v538
  %v715 = vpack.c.b16 %v541, %v539
  %v716 = vpack.c.b16 %v544, %v542
  %v717 = vpack.c.b16 %v545, %v543
  %v718 = vpack.c.b16 %v548, %v546
  %v719 = vpack.c.b16 %v549, %v547
  %v720 = vpack.c.b16 %v552, %v550
  %v721 = vpack.c.b16 %v553, %v551
  %v722 = vpack.c.b16 %v556, %v554
  %v723 = vpack.c.b16 %v557, %v555
  %v724 = vpack.c.b16 %v560, %v558
  %v725 = vpack.c.b16 %v561, %v559
  %v726 = vpack.c.b16 %v564, %v562
  %v727 = vpack.c.b16 %v565, %v563
  %v728 = vpack.c.b16 %v568, %v566
  %v729 = vpack.c.b16 %v569, %v567
  %v730 = vpack.c.b16 %v572, %v570
  %v731 = vpack.c.b16 %v573, %v571
  %v732 = vpack.c.b16 %v576, %v574
  %v733 = vpack.c.b16 %v577, %v575
  %v734 = vpack.c.b16 %v580, %v578
  %v735 = vpack.c.b16 %v581, %v579
  %v736 = vpack.c.b16 %v584, %v582
  %v737 = vpack.c.b16 %v585, %v583
  %v738 = vpack.c.b16 %v588, %v586
  %v739 = vpack.c.b16 %v589, %v587
  %v740 = vpack.c.b16 %v592, %v590
  %v741 = vpack.c.b16 %v593, %v591
  %v742 = vpack.c.b16 %v596, %v594
  %v743 = vpack.c.b16 %v597, %v595
  %v744 = vpack.c.b16 %v600, %v598
  %v745 = vpack.c.b16 %v601, %v599
  %v746 = vpack.c.b16 %v604, %v602
  %v747 = vpack.c.b16 %v605, %v603
  %v748 = vpack.c.b16 %v608, %v606
  %v749 = vpack.c.b16 %v609, %v607
  %v750 = vpack.c.b16 %v612, %v610
  %v751 = vpack.c.b16 %v613, %v611
  %v752 = vpack.c.b16 %v616, %v614
  %v753 = vpack.c.b16 %v617, %v615
  %v754 = vpack.c.b16 %v620, %v618
  %v755 = vpack.c.b16 %v621, %v619
  %v756 = vpack.c.b16 %v624, %v622
  %v757 = vpack.c.b16 %v625, %v623
  %v758 = vpack.c.b16 %v628, %v626
  %v759 = vpack.c.b16 %v629, %v627
  %v760 = vpack.c.b16 %v632, %v630
  %v761 = vpack.c.b16 %v633, %v631
  %890 = vmatprep.subr.bf16.mxu0 %v649
  %891 = vmatpush1.bf16.msra.mxu0 %v648
  %892 = vmatprep.subr.bf16.mxu0 %v647
  %893 = vmatpush1.bf16.msra.mxu0 %v646
  %894 = vmatprep.subr.bf16.mxu0 %v645
  %895 = vmatpush1.bf16.msra.mxu0 %v644
  %896 = vmatprep.subr.bf16.mxu0 %v643
  %897 = vmatpush1.bf16.msra.mxu0 %v642
  %898 = vmatprep.subr.bf16.mxu0 %v641
  %899 = vmatpush1.bf16.msra.mxu0 %v640
  %900 = vmatprep.subr.bf16.mxu0 %v639
  %901 = vmatpush1.bf16.msra.mxu0 %v638
  %902 = vmatprep.subr.bf16.mxu0 %v637
  %903 = vmatpush1.bf16.msra.mxu0 %v636
  %904 = vmatprep.subr.bf16.mxu0 %v635
  %905 = vmatpush1.bf16.msra.mxu0 %v634
  %906 = vmatprep.subr.bf16.mxu0 %v665
  %907 = vmatpush2.bf16.msra.mxu0 %v664
  %908 = vmatprep.subr.bf16.mxu0 %v663
  %909 = vmatpush2.bf16.msra.mxu0 %v662
  %910 = vmatprep.subr.bf16.mxu0 %v661
  %911 = vmatpush2.bf16.msra.mxu0 %v660
  %912 = vmatprep.subr.bf16.mxu0 %v659
  %913 = vmatpush2.bf16.msra.mxu0 %v658
  %914 = vmatprep.subr.bf16.mxu0 %v657
  %915 = vmatpush2.bf16.msra.mxu0 %v656
  %916 = vmatprep.subr.bf16.mxu0 %v655
  %917 = vmatpush2.bf16.msra.mxu0 %v654
  %918 = vmatprep.subr.bf16.mxu0 %v653
  %919 = vmatpush2.bf16.msra.mxu0 %v652
  %920 = vmatprep.subr.bf16.mxu0 %v651
  %921 = vmatpush2.bf16.msra.mxu0 %v650
  %922 = vmatprep.mubr.bf16.mxu0 %v219
  %923 = vmatmul.mubr.bf16.gmra.mxu0 %v218
  %v924 = vpop.f32.mrf.mxu0
  %v925 = vadd.f32 %v163, %v924
  %v926 = vpop.f32.mrf.mxu0
  %v927 = vadd.f32 %v167, %v926
  %v928 = vpop.f32.mrf.mxu0
  %v929 = vadd.f32 %v163, %v928
  %v930 = vpop.f32.mrf.mxu0
  %v931 = vadd.f32 %v167, %v930
  %932 = vmatprep.mubr.bf16.mxu0 %v227
  %933 = vmatmul.mubr.bf16.gmra.mxu0 %v226
  %v934 = vpop.f32.mrf.mxu0
  %v935 = vadd.f32 %v163, %v934
  %v936 = vpop.f32.mrf.mxu0
  %v937 = vadd.f32 %v167, %v936
  %v938 = vpop.f32.mrf.mxu0
  %v939 = vadd.f32 %v163, %v938
  %v940 = vpop.f32.mrf.mxu0
  %v941 = vadd.f32 %v167, %v940
  %942 = vdwg.mxu0
  %943 = vmatprep.subr.bf16.mxu0 %v681
  %944 = vmatpush1.bf16.msra.mxu0 %v680
  %945 = vmatprep.subr.bf16.mxu0 %v679
  %946 = vmatpush1.bf16.msra.mxu0 %v678
  %947 = vmatprep.subr.bf16.mxu0 %v677
  %948 = vmatpush1.bf16.msra.mxu0 %v676
  %949 = vmatprep.subr.bf16.mxu0 %v675
  %950 = vmatpush1.bf16.msra.mxu0 %v674
  %951 = vmatprep.subr.bf16.mxu0 %v673
  %952 = vmatpush1.bf16.msra.mxu0 %v672
  %953 = vmatprep.subr.bf16.mxu0 %v671
  %954 = vmatpush1.bf16.msra.mxu0 %v670
  %955 = vmatprep.subr.bf16.mxu0 %v669
  %956 = vmatpush1.bf16.msra.mxu0 %v668
  %957 = vmatprep.subr.bf16.mxu0 %v667
  %958 = vmatpush1.bf16.msra.mxu0 %v666
  %959 = vmatprep.subr.bf16.mxu0 %v697
  %960 = vmatpush2.bf16.msra.mxu0 %v696
  %961 = vmatprep.subr.bf16.mxu0 %v695
  %962 = vmatpush2.bf16.msra.mxu0 %v694
  %963 = vmatprep.subr.bf16.mxu0 %v693
  %964 = vmatpush2.bf16.msra.mxu0 %v692
  %965 = vmatprep.subr.bf16.mxu0 %v691
  %966 = vmatpush2.bf16.msra.mxu0 %v690
  %967 = vmatprep.subr.bf16.mxu0 %v689
  %968 = vmatpush2.bf16.msra.mxu0 %v688
  %969 = vmatprep.subr.bf16.mxu0 %v687
  %970 = vmatpush2.bf16.msra.mxu0 %v686
  %971 = vmatprep.subr.bf16.mxu0 %v685
  %972 = vmatpush2.bf16.msra.mxu0 %v684
  %973 = vmatprep.subr.bf16.mxu0 %v683
  %974 = vmatpush2.bf16.msra.mxu0 %v682
  %975 = vmatprep.mubr.bf16.mxu0 %v221
  %976 = vmatmul.mubr.bf16.gmra.mxu0 %v220
  %v977 = vpop.f32.mrf.mxu0
  %v978 = vadd.f32 %v925, %v977
  %v979 = vpop.f32.mrf.mxu0
  %v980 = vadd.f32 %v927, %v979
  %v981 = vpop.f32.mrf.mxu0
  %v982 = vadd.f32 %v929, %v981
  %v983 = vpop.f32.mrf.mxu0
  %v984 = vadd.f32 %v931, %v983
  %985 = vmatprep.mubr.bf16.mxu0 %v229
  %986 = vmatmul.mubr.bf16.gmra.mxu0 %v228
  %v987 = vpop.f32.mrf.mxu0
  %v988 = vadd.f32 %v935, %v987
  %v989 = vpop.f32.mrf.mxu0
  %v990 = vadd.f32 %v937, %v989
  %v991 = vpop.f32.mrf.mxu0
  %v992 = vadd.f32 %v939, %v991
  %v993 = vpop.f32.mrf.mxu0
  %v994 = vadd.f32 %v941, %v993
  %995 = vdwg.mxu0
  %996 = vmatprep.subr.bf16.mxu0 %v713
  %997 = vmatpush1.bf16.msra.mxu0 %v712
  %998 = vmatprep.subr.bf16.mxu0 %v711
  %999 = vmatpush1.bf16.msra.mxu0 %v710
  %1000 = vmatprep.subr.bf16.mxu0 %v709
  %1001 = vmatpush1.bf16.msra.mxu0 %v708
  %1002 = vmatprep.subr.bf16.mxu0 %v707
  %1003 = vmatpush1.bf16.msra.mxu0 %v706
  %1004 = vmatprep.subr.bf16.mxu0 %v705
  %1005 = vmatpush1.bf16.msra.mxu0 %v704
  %1006 = vmatprep.subr.bf16.mxu0 %v703
  %1007 = vmatpush1.bf16.msra.mxu0 %v702
  %1008 = vmatprep.subr.bf16.mxu0 %v701
  %1009 = vmatpush1.bf16.msra.mxu0 %v700
  %1010 = vmatprep.subr.bf16.mxu0 %v699
  %1011 = vmatpush1.bf16.msra.mxu0 %v698
  %1012 = vmatprep.subr.bf16.mxu0 %v729
  %1013 = vmatpush2.bf16.msra.mxu0 %v728
  %1014 = vmatprep.subr.bf16.mxu0 %v727
  %1015 = vmatpush2.bf16.msra.mxu0 %v726
  %1016 = vmatprep.subr.bf16.mxu0 %v725
  %1017 = vmatpush2.bf16.msra.mxu0 %v724
  %1018 = vmatprep.subr.bf16.mxu0 %v723
  %1019 = vmatpush2.bf16.msra.mxu0 %v722
  %1020 = vmatprep.subr.bf16.mxu0 %v721
  %1021 = vmatpush2.bf16.msra.mxu0 %v720
  %1022 = vmatprep.subr.bf16.mxu0 %v719
  %1023 = vmatpush2.bf16.msra.mxu0 %v718
  %1024 = vmatprep.subr.bf16.mxu0 %v717
  %1025 = vmatpush2.bf16.msra.mxu0 %v716
  %1026 = vmatprep.subr.bf16.mxu0 %v715
  %1027 = vmatpush2.bf16.msra.mxu0 %v714
  %1028 = vmatprep.mubr.bf16.mxu0 %v223
  %1029 = vmatmul.mubr.bf16.gmra.mxu0 %v222
  %v1030 = vpop.f32.mrf.mxu0
  %v1031 = vadd.f32 %v978, %v1030
  %v1032 = vpop.f32.mrf.mxu0
  %v1033 = vadd.f32 %v980, %v1032
  %v1034 = vpop.f32.mrf.mxu0
  %v1035 = vadd.f32 %v982, %v1034
  %v1036 = vpop.f32.mrf.mxu0
  %v1037 = vadd.f32 %v984, %v1036
  %1038 = vmatprep.mubr.bf16.mxu0 %v231
  %1039 = vmatmul.mubr.bf16.gmra.mxu0 %v230
  %v1040 = vpop.f32.mrf.mxu0
  %v1041 = vadd.f32 %v988, %v1040
  %v1042 = vpop.f32.mrf.mxu0
  %v1043 = vadd.f32 %v990, %v1042
  %v1044 = vpop.f32.mrf.mxu0
  %v1045 = vadd.f32 %v992, %v1044
  %v1046 = vpop.f32.mrf.mxu0
  %v1047 = vadd.f32 %v994, %v1046
  %1048 = vdwg.mxu0
  %1049 = vmatprep.subr.bf16.mxu0 %v745
  %1050 = vmatpush1.bf16.msra.mxu0 %v744
  %1051 = vmatprep.subr.bf16.mxu0 %v743
  %1052 = vmatpush1.bf16.msra.mxu0 %v742
  %1053 = vmatprep.subr.bf16.mxu0 %v741
  %1054 = vmatpush1.bf16.msra.mxu0 %v740
  %1055 = vmatprep.subr.bf16.mxu0 %v739
  %1056 = vmatpush1.bf16.msra.mxu0 %v738
  %1057 = vmatprep.subr.bf16.mxu0 %v737
  %1058 = vmatpush1.bf16.msra.mxu0 %v736
  %1059 = vmatprep.subr.bf16.mxu0 %v735
  %1060 = vmatpush1.bf16.msra.mxu0 %v734
  %1061 = vmatprep.subr.bf16.mxu0 %v733
  %1062 = vmatpush1.bf16.msra.mxu0 %v732
  %1063 = vmatprep.subr.bf16.mxu0 %v731
  %1064 = vmatpush1.bf16.msra.mxu0 %v730
  %1065 = vmatprep.subr.bf16.mxu0 %v761
  %1066 = vmatpush2.bf16.msra.mxu0 %v760
  %1067 = vmatprep.subr.bf16.mxu0 %v759
  %1068 = vmatpush2.bf16.msra.mxu0 %v758
  %1069 = vmatprep.subr.bf16.mxu0 %v757
  %1070 = vmatpush2.bf16.msra.mxu0 %v756
  %1071 = vmatprep.subr.bf16.mxu0 %v755
  %1072 = vmatpush2.bf16.msra.mxu0 %v754
  %1073 = vmatprep.subr.bf16.mxu0 %v753
  %1074 = vmatpush2.bf16.msra.mxu0 %v752
  %1075 = vmatprep.subr.bf16.mxu0 %v751
  %1076 = vmatpush2.bf16.msra.mxu0 %v750
  %1077 = vmatprep.subr.bf16.mxu0 %v749
  %1078 = vmatpush2.bf16.msra.mxu0 %v748
  %1079 = vmatprep.subr.bf16.mxu0 %v747
  %1080 = vmatpush2.bf16.msra.mxu0 %v746
  %1081 = vmatprep.mubr.bf16.mxu0 %v225
  %1082 = vmatmul.mubr.bf16.gmra.mxu0 %v224
  %v1083 = vpop.f32.mrf.mxu0
  %v1084 = vadd.f32 %v1031, %v1083
  %v1085 = vpop.f32.mrf.mxu0
  %v1086 = vadd.f32 %v1033, %v1085
  %v1087 = vpop.f32.mrf.mxu0
  %v1088 = vadd.f32 %v1035, %v1087
  %v1089 = vpop.f32.mrf.mxu0
  %v1090 = vadd.f32 %v1037, %v1089
  %1091 = vmatprep.mubr.bf16.mxu0 %v233
  %1092 = vmatmul.mubr.bf16.gmra.mxu0 %v232
  %v1093 = vpop.f32.mrf.mxu0
  %v1094 = vadd.f32 %v1041, %v1093
  %v1095 = vpop.f32.mrf.mxu0
  %v1096 = vadd.f32 %v1043, %v1095
  %v1097 = vpop.f32.mrf.mxu0
  %v1098 = vadd.f32 %v1045, %v1097
  %v1099 = vpop.f32.mrf.mxu0
  %v1100 = vadd.f32 %v1047, %v1099
  %1101 = vdwg.mxu0
  %v1102 = vmul.f32 %v1084, 0.01
  %v1103 = vmul.f32 %v1086, 0.01
  %v1104 = vmul.f32 %v1088, 0.01
  %v1105 = vmul.f32 %v1090, 0.01
  %v1106 = vmul.f32 %v1094, 0.01
  %v1107 = vmul.f32 %v1096, 0.01
  %v1108 = vmul.f32 %v1098, 0.01
  %v1109 = vmul.f32 %v1100, 0.01
  %v1110 = vmax.f32 %v1084, %v1102
  %v1111 = vmax.f32 %v1086, %v1103
  %v1112 = vmax.f32 %v1088, %v1104
  %v1113 = vmax.f32 %v1090, %v1105
  %v1114 = vmax.f32 %v1094, %v1106
  %v1115 = vmax.f32 %v1096, %v1107
  %v1116 = vmax.f32 %v1098, %v1108
  %v1117 = vmax.f32 %v1100, %v1109
  %1118 = vst [vmem:[%s3] sm:$0xff] %v1110
  %1119 = vst [vmem:[%s3 + $0x8] sm:$0xff] %v1111
  %1120 = vst [vmem:[%s3 + $0x10] sm:$0xff] %v1112
  %1121 = vst [vmem:[%s3 + $0x18] sm:$0xff] %v1113
  %1122 = vst [vmem:[%s3 + $0x20] sm:$0xff] %v1114
  %1123 = vst [vmem:[%s3 + $0x28] sm:$0xff] %v1115
  %1124 = vst [vmem:[%s3 + $0x30] sm:$0xff] %v1116
  %1125 = vst [vmem:[%s3 + $0x38] sm:$0xff] %v1117
  // Predicated region
  $region14: #{forward.20} parent=0 // pred_check
    _
  $region15: #{forward.20} parent=0 // pred_check_branch
    %1127 = sbr.rel (0) target = $region17
  $region16: #{forward.20} parent=0 // pred_region
    _
  $region17: #{forward.20} parent=0 // pred_fallthru
    _
  // Predicated region
  $region18: #{forward.20} parent=0 // pred_check
    _
  $region19: #{forward.20} parent=0 // pred_check_branch
    %1129 = sbr.rel (0) target = $region21
  $region20: #{forward.20} parent=0 // pred_region
    _
  $region21: #{forward.20} parent=0 // pred_fallthru
    _

// kernel: forward.21
$region0: #{forward.21}
  #allocation0 [shape = 'u32[]', space=smem, size = 0x4, offset = 0x4, fixed_abs, tag = 'smem constant byte address 0x4 - core index']
  #allocation1 [shape = 'u32[144,128]{1,0:T(1,128)}', space=vmem, size = 0x12000, scoped, tag = 'internal scratch']
  %s0 = inlined_call_operand.vmem [shape: bf16[32,896], index: 0, kind: input, shape index: {}]
  %s1 = inlined_call_operand.vmem [shape: bf16[896,256], index: 1, kind: input, shape index: {}]
  %s2 = inlined_call_operand.vmem [shape: f32[1,256], index: 2, kind: input, shape index: {}]
  %s3 = inlined_call_operand.vmem [shape: f32[32,256], index: 3, kind: output, shape index: {}]
  %s4 = sld [smem:[#allocation0]]
  $region22: #{forward.21} parent=0
    _
  %s6 = ssub.s32 1, %s4
  %s7 = scalar_select 0, %s6, %s4
  // Predicated region
  $region2: #{forward.21} parent=0 // pred_check
    _
  $region3: #{forward.21} parent=0 // pred_check_branch
    %9 = sbr.rel (0) target = $region5
  $region4: #{forward.21} parent=0 // pred_region
    _
  $region5: #{forward.21} parent=0 // pred_fallthru
    _
  // Predicated region
  $region6: #{forward.21} parent=0 // pred_check
    _
  $region7: #{forward.21} parent=0 // pred_check_branch
    %11 = sbr.rel (0) target = $region9
  $region8: #{forward.21} parent=0 // pred_region
    _
  $region9: #{forward.21} parent=0 // pred_fallthru
    _
  // Predicated region
  $region10: #{forward.21} parent=0 // pred_check
    _
  $region11: #{forward.21} parent=0 // pred_check_branch
    %13 = sbr.rel (0) target = $region13
  $region12: #{forward.21} parent=0 // pred_region
    _
  $region13: #{forward.21} parent=0 // pred_fallthru
    _
  %v15 = vld [vmem:[%s0] sm:$0xff]
  %v16 = vld [vmem:[%s0 + $0x8] sm:$0xff]
  %v17 = vld [vmem:[%s0 + $0x10] sm:$0xff]
  %v18 = vld [vmem:[%s0 + $0x18] sm:$0xf]
  %v19 = vld [vmem:[%s0 + $0x1c] sm:$0xff]
  %v20 = vld [vmem:[%s0 + $0x24] sm:$0xff]
  %v21 = vld [vmem:[%s0 + $0x2c] sm:$0xff]
  %v22 = vld [vmem:[%s0 + $0x34] sm:$0xf]
  %v23 = vld [vmem:[%s0 + $0x38] sm:$0xff]
  %v24 = vld [vmem:[%s0 + $0x40] sm:$0xff]
  %v25 = vld [vmem:[%s0 + $0x48] sm:$0xff]
  %v26 = vld [vmem:[%s0 + $0x50] sm:$0xf]
  %v27 = vld [vmem:[%s0 + $0x54] sm:$0xff]
  %v28 = vld [vmem:[%s0 + $0x5c] sm:$0xff]
  %v29 = vld [vmem:[%s0 + $0x64] sm:$0xff]
  %v30 = vld [vmem:[%s0 + $0x6c] sm:$0xf]
  %v31 = vld [vmem:[%s1] sm:$0xff]
  %v32 = vld [vmem:[%s1 + $0x8] sm:$0xff]
  %v33 = vld [vmem:[%s1 + $0x10] sm:$0xff]
  %v34 = vld [vmem:[%s1 + $0x18] sm:$0xff]
  %v35 = vld [vmem:[%s1 + $0x20] sm:$0xff]
  %v36 = vld [vmem:[%s1 + $0x28] sm:$0xff]
  %v37 = vld [vmem:[%s1 + $0x30] sm:$0xff]
  %v38 = vld [vmem:[%s1 + $0x38] sm:$0xff]
  %v39 = vld [vmem:[%s1 + $0x40] sm:$0xff]
  %v40 = vld [vmem:[%s1 + $0x48] sm:$0xff]
  %v41 = vld [vmem:[%s1 + $0x50] sm:$0xff]
  %v42 = vld [vmem:[%s1 + $0x58] sm:$0xff]
  %v43 = vld [vmem:[%s1 + $0x60] sm:$0xff]
  %v44 = vld [vmem:[%s1 + $0x68] sm:$0xff]
  %v45 = vld [vmem:[%s1 + $0x70] sm:$0xff]
  %v46 = vld [vmem:[%s1 + $0x78] sm:$0xff]
  %v47 = vld [vmem:[%s1 + $0x80] sm:$0xff]
  %v48 = vld [vmem:[%s1 + $0x88] sm:$0xff]
  %v49 = vld [vmem:[%s1 + $0x90] sm:$0xff]
  %v50 = vld [vmem:[%s1 + $0x98] sm:$0xff]
  %v51 = vld [vmem:[%s1 + $0xa0] sm:$0xff]
  %v52 = vld [vmem:[%s1 + $0xa8] sm:$0xff]
  %v53 = vld [vmem:[%s1 + $0xb0] sm:$0xff]
  %v54 = vld [vmem:[%s1 + $0xb8] sm:$0xff]
  %v55 = vld [vmem:[%s1 + $0xc0] sm:$0xff]
  %v56 = vld [vmem:[%s1 + $0xc8] sm:$0xff]
  %v57 = vld [vmem:[%s1 + $0xd0] sm:$0xff]
  %v58 = vld [vmem:[%s1 + $0xd8] sm:$0xff]
  %v59 = vld [vmem:[%s1 + $0xe0] sm:$0xff]
  %v60 = vld [vmem:[%s1 + $0xe8] sm:$0xff]
  %v61 = vld [vmem:[%s1 + $0xf0] sm:$0xff]
  %v62 = vld [vmem:[%s1 + $0xf8] sm:$0xff]
  %v63 = vld [vmem:[%s1 + $0x100] sm:$0xff]
  %v64 = vld [vmem:[%s1 + $0x108] sm:$0xff]
  %v65 = vld [vmem:[%s1 + $0x110] sm:$0xff]
  %v66 = vld [vmem:[%s1 + $0x118] sm:$0xff]
  %v67 = vld [vmem:[%s1 + $0x120] sm:$0xff]
  %v68 = vld [vmem:[%s1 + $0x128] sm:$0xff]
  %v69 = vld [vmem:[%s1 + $0x130] sm:$0xff]
  %v70 = vld [vmem:[%s1 + $0x138] sm:$0xff]
  %v71 = vld [vmem:[%s1 + $0x140] sm:$0xff]
  %v72 = vld [vmem:[%s1 + $0x148] sm:$0xff]
  %v73 = vld [vmem:[%s1 + $0x150] sm:$0xff]
  %v74 = vld [vmem:[%s1 + $0x158] sm:$0xff]
  %v75 = vld [vmem:[%s1 + $0x160] sm:$0xff]
  %v76 = vld [vmem:[%s1 + $0x168] sm:$0xff]
  %v77 = vld [vmem:[%s1 + $0x170] sm:$0xff]
  %v78 = vld [vmem:[%s1 + $0x178] sm:$0xff]
  %v79 = vld [vmem:[%s1 + $0x180] sm:$0xff]
  %v80 = vld [vmem:[%s1 + $0x188] sm:$0xff]
  %v81 = vld [vmem:[%s1 + $0x190] sm:$0xff]
  %v82 = vld [vmem:[%s1 + $0x198] sm:$0xff]
  %v83 = vld [vmem:[%s1 + $0x1a0] sm:$0xff]
  %v84 = vld [vmem:[%s1 + $0x1a8] sm:$0xff]
  %v85 = vld [vmem:[%s1 + $0x1b0] sm:$0xff]
  %v86 = vld [vmem:[%s1 + $0x1b8] sm:$0xff]
  %v87 = vld [vmem:[%s1 + $0x1c0] sm:$0xff]
  %v88 = vld [vmem:[%s1 + $0x1c8] sm:$0xff]
  %v89 = vld [vmem:[%s1 + $0x1d0] sm:$0xff]
  %v90 = vld [vmem:[%s1 + $0x1d8] sm:$0xff]
  %v91 = vld [vmem:[%s1 + $0x1e0] sm:$0xff]
  %v92 = vld [vmem:[%s1 + $0x1e8] sm:$0xff]
  %v93 = vld [vmem:[%s1 + $0x1f0] sm:$0xff]
  %v94 = vld [vmem:[%s1 + $0x1f8] sm:$0xff]
  %v95 = vld [vmem:[%s1 + $0x200] sm:$0xff]
  %v96 = vld [vmem:[%s1 + $0x208] sm:$0xff]
  %v97 = vld [vmem:[%s1 + $0x210] sm:$0xff]
  %v98 = vld [vmem:[%s1 + $0x218] sm:$0xff]
  %v99 = vld [vmem:[%s1 + $0x220] sm:$0xff]
  %v100 = vld [vmem:[%s1 + $0x228] sm:$0xff]
  %v101 = vld [vmem:[%s1 + $0x230] sm:$0xff]
  %v102 = vld [vmem:[%s1 + $0x238] sm:$0xff]
  %v103 = vld [vmem:[%s1 + $0x240] sm:$0xff]
  %v104 = vld [vmem:[%s1 + $0x248] sm:$0xff]
  %v105 = vld [vmem:[%s1 + $0x250] sm:$0xff]
  %v106 = vld [vmem:[%s1 + $0x258] sm:$0xff]
  %v107 = vld [vmem:[%s1 + $0x260] sm:$0xff]
  %v108 = vld [vmem:[%s1 + $0x268] sm:$0xff]
  %v109 = vld [vmem:[%s1 + $0x270] sm:$0xff]
  %v110 = vld [vmem:[%s1 + $0x278] sm:$0xff]
  %v111 = vld [vmem:[%s1 + $0x280] sm:$0xff]
  %v112 = vld [vmem:[%s1 + $0x288] sm:$0xff]
  %v113 = vld [vmem:[%s1 + $0x290] sm:$0xff]
  %v114 = vld [vmem:[%s1 + $0x298] sm:$0xff]
  %v115 = vld [vmem:[%s1 + $0x2a0] sm:$0xff]
  %v116 = vld [vmem:[%s1 + $0x2a8] sm:$0xff]
  %v117 = vld [vmem:[%s1 + $0x2b0] sm:$0xff]
  %v118 = vld [vmem:[%s1 + $0x2b8] sm:$0xff]
  %v119 = vld [vmem:[%s1 + $0x2c0] sm:$0xff]
  %v120 = vld [vmem:[%s1 + $0x2c8] sm:$0xff]
  %v121 = vld [vmem:[%s1 + $0x2d0] sm:$0xff]
  %v122 = vld [vmem:[%s1 + $0x2d8] sm:$0xff]
  %v123 = vld [vmem:[%s1 + $0x2e0] sm:$0xff]
  %v124 = vld [vmem:[%s1 + $0x2e8] sm:$0xff]
  %v125 = vld [vmem:[%s1 + $0x2f0] sm:$0xff]
  %v126 = vld [vmem:[%s1 + $0x2f8] sm:$0xff]
  %v127 = vld [vmem:[%s1 + $0x300] sm:$0xff]
  %v128 = vld [vmem:[%s1 + $0x308] sm:$0xff]
  %v129 = vld [vmem:[%s1 + $0x310] sm:$0xff]
  %v130 = vld [vmem:[%s1 + $0x318] sm:$0xff]
  %v131 = vld [vmem:[%s1 + $0x320] sm:$0xff]
  %v132 = vld [vmem:[%s1 + $0x328] sm:$0xff]
  %v133 = vld [vmem:[%s1 + $0x330] sm:$0xff]
  %v134 = vld [vmem:[%s1 + $0x338] sm:$0xff]
  %v135 = vld [vmem:[%s1 + $0x340] sm:$0xff]
  %v136 = vld [vmem:[%s1 + $0x348] sm:$0xff]
  %v137 = vld [vmem:[%s1 + $0x350] sm:$0xff]
  %v138 = vld [vmem:[%s1 + $0x358] sm:$0xff]
  %v139 = vld [vmem:[%s1 + $0x360] sm:$0xff]
  %v140 = vld [vmem:[%s1 + $0x368] sm:$0xff]
  %v141 = vld [vmem:[%s1 + $0x370] sm:$0xff]
  %v142 = vld [vmem:[%s1 + $0x378] sm:$0xff]
  %v143 = vld [vmem:[%s2] sm:$0x3]
  %v145 = vlaneseq
  %v146 = vshrl.u32 %v145, 7
  %v147 = vsub.s32 0, %v146
  %v148 = vrot.slane %v143, %v147
  %v149 = vlaneseq
  %v150 = vshrl.u32 %v149, 7
  %v151 = vsub.s32 1, %v150
  %v152 = vrot.slane %v143, %v151
  %v171 = vunpack.c.l.b16 %v15
  %v172 = vunpack.c.h.b16 %v15
  %v173 = vunpack.c.l.b16 %v16
  %v174 = vunpack.c.h.b16 %v16
  %v175 = vunpack.c.l.b16 %v17
  %v176 = vunpack.c.h.b16 %v17
  %v177 = vunpack.c.l.b16 %v18
  %v178 = vunpack.c.l.b16 %v19
  %v179 = vunpack.c.h.b16 %v19
  %v180 = vunpack.c.l.b16 %v20
  %v181 = vunpack.c.h.b16 %v20
  %v182 = vunpack.c.l.b16 %v21
  %v183 = vunpack.c.h.b16 %v21
  %v184 = vunpack.c.l.b16 %v22
  %v185 = vunpack.c.l.b16 %v23
  %v186 = vunpack.c.h.b16 %v23
  %v187 = vunpack.c.l.b16 %v24
  %v188 = vunpack.c.h.b16 %v24
  %v189 = vunpack.c.l.b16 %v25
  %v190 = vunpack.c.h.b16 %v25
  %v191 = vunpack.c.l.b16 %v26
  %v192 = vunpack.c.l.b16 %v27
  %v193 = vunpack.c.h.b16 %v27
  %v194 = vunpack.c.l.b16 %v28
  %v195 = vunpack.c.h.b16 %v28
  %v196 = vunpack.c.l.b16 %v29
  %v197 = vunpack.c.h.b16 %v29
  %v198 = vunpack.c.l.b16 %v30
  %v199 = vpack.c.b16 %v178, %v171
  %v200 = vpack.c.b16 %v179, %v172
  %v201 = vpack.c.b16 %v180, %v173
  %v202 = vpack.c.b16 %v181, %v174
  %v203 = vpack.c.b16 %v182, %v175
  %v204 = vpack.c.b16 %v183, %v176
  %v205 = vpack.c.b16 %v184, %v177
  %v206 = vpack.c.b16 %v192, %v185
  %v207 = vpack.c.b16 %v193, %v186
  %v208 = vpack.c.b16 %v194, %v187
  %v209 = vpack.c.b16 %v195, %v188
  %v210 = vpack.c.b16 %v196, %v189
  %v211 = vpack.c.b16 %v197, %v190
  %v212 = vpack.c.b16 %v198, %v191
  %v339 = vunpack.c.l.b16 %v31
  %v340 = vunpack.c.h.b16 %v31
  %v341 = vunpack.c.l.b16 %v32
  %v342 = vunpack.c.h.b16 %v32
  %v343 = vunpack.c.l.b16 %v33
  %v344 = vunpack.c.h.b16 %v33
  %v345 = vunpack.c.l.b16 %v34
  %v346 = vunpack.c.h.b16 %v34
  %v347 = vunpack.c.l.b16 %v35
  %v348 = vunpack.c.h.b16 %v35
  %v349 = vunpack.c.l.b16 %v36
  %v350 = vunpack.c.h.b16 %v36
  %v351 = vunpack.c.l.b16 %v37
  %v352 = vunpack.c.h.b16 %v37
  %v353 = vunpack.c.l.b16 %v38
  %v354 = vunpack.c.h.b16 %v38
  %v355 = vunpack.c.l.b16 %v39
  %v356 = vunpack.c.h.b16 %v39
  %v357 = vunpack.c.l.b16 %v40
  %v358 = vunpack.c.h.b16 %v40
  %v359 = vunpack.c.l.b16 %v41
  %v360 = vunpack.c.h.b16 %v41
  %v361 = vunpack.c.l.b16 %v42
  %v362 = vunpack.c.h.b16 %v42
  %v363 = vunpack.c.l.b16 %v43
  %v364 = vunpack.c.h.b16 %v43
  %v365 = vunpack.c.l.b16 %v44
  %v366 = vunpack.c.h.b16 %v44
  %v367 = vunpack.c.l.b16 %v45
  %v368 = vunpack.c.h.b16 %v45
  %v369 = vunpack.c.l.b16 %v46
  %v370 = vunpack.c.h.b16 %v46
  %v371 = vunpack.c.l.b16 %v47
  %v372 = vunpack.c.h.b16 %v47
  %v373 = vunpack.c.l.b16 %v48
  %v374 = vunpack.c.h.b16 %v48
  %v375 = vunpack.c.l.b16 %v49
  %v376 = vunpack.c.h.b16 %v49
  %v377 = vunpack.c.l.b16 %v50
  %v378 = vunpack.c.h.b16 %v50
  %v379 = vunpack.c.l.b16 %v51
  %v380 = vunpack.c.h.b16 %v51
  %v381 = vunpack.c.l.b16 %v52
  %v382 = vunpack.c.h.b16 %v52
  %v383 = vunpack.c.l.b16 %v53
  %v384 = vunpack.c.h.b16 %v53
  %v385 = vunpack.c.l.b16 %v54
  %v386 = vunpack.c.h.b16 %v54
  %v387 = vunpack.c.l.b16 %v55
  %v388 = vunpack.c.h.b16 %v55
  %v389 = vunpack.c.l.b16 %v56
  %v390 = vunpack.c.h.b16 %v56
  %v391 = vunpack.c.l.b16 %v57
  %v392 = vunpack.c.h.b16 %v57
  %v393 = vunpack.c.l.b16 %v58
  %v394 = vunpack.c.h.b16 %v58
  %v395 = vunpack.c.l.b16 %v59
  %v396 = vunpack.c.h.b16 %v59
  %v397 = vunpack.c.l.b16 %v60
  %v398 = vunpack.c.h.b16 %v60
  %v399 = vunpack.c.l.b16 %v61
  %v400 = vunpack.c.h.b16 %v61
  %v401 = vunpack.c.l.b16 %v62
  %v402 = vunpack.c.h.b16 %v62
  %v403 = vunpack.c.l.b16 %v63
  %v404 = vunpack.c.h.b16 %v63
  %v405 = vunpack.c.l.b16 %v64
  %v406 = vunpack.c.h.b16 %v64
  %v407 = vunpack.c.l.b16 %v65
  %v408 = vunpack.c.h.b16 %v65
  %v409 = vunpack.c.l.b16 %v66
  %v410 = vunpack.c.h.b16 %v66
  %v411 = vunpack.c.l.b16 %v67
  %v412 = vunpack.c.h.b16 %v67
  %v413 = vunpack.c.l.b16 %v68
  %v414 = vunpack.c.h.b16 %v68
  %v415 = vunpack.c.l.b16 %v69
  %v416 = vunpack.c.h.b16 %v69
  %v417 = vunpack.c.l.b16 %v70
  %v418 = vunpack.c.h.b16 %v70
  %v419 = vunpack.c.l.b16 %v71
  %v420 = vunpack.c.h.b16 %v71
  %v421 = vunpack.c.l.b16 %v72
  %v422 = vunpack.c.h.b16 %v72
  %v423 = vunpack.c.l.b16 %v73
  %v424 = vunpack.c.h.b16 %v73
  %v425 = vunpack.c.l.b16 %v74
  %v426 = vunpack.c.h.b16 %v74
  %v427 = vunpack.c.l.b16 %v75
  %v428 = vunpack.c.h.b16 %v75
  %v429 = vunpack.c.l.b16 %v76
  %v430 = vunpack.c.h.b16 %v76
  %v431 = vunpack.c.l.b16 %v77
  %v432 = vunpack.c.h.b16 %v77
  %v433 = vunpack.c.l.b16 %v78
  %v434 = vunpack.c.h.b16 %v78
  %v435 = vunpack.c.l.b16 %v79
  %v436 = vunpack.c.h.b16 %v79
  %v437 = vunpack.c.l.b16 %v80
  %v438 = vunpack.c.h.b16 %v80
  %v439 = vunpack.c.l.b16 %v81
  %v440 = vunpack.c.h.b16 %v81
  %v441 = vunpack.c.l.b16 %v82
  %v442 = vunpack.c.h.b16 %v82
  %v443 = vunpack.c.l.b16 %v83
  %v444 = vunpack.c.h.b16 %v83
  %v445 = vunpack.c.l.b16 %v84
  %v446 = vunpack.c.h.b16 %v84
  %v447 = vunpack.c.l.b16 %v85
  %v448 = vunpack.c.h.b16 %v85
  %v449 = vunpack.c.l.b16 %v86
  %v450 = vunpack.c.h.b16 %v86
  %v451 = vunpack.c.l.b16 %v87
  %v452 = vunpack.c.h.b16 %v87
  %v453 = vunpack.c.l.b16 %v88
  %v454 = vunpack.c.h.b16 %v88
  %v455 = vunpack.c.l.b16 %v89
  %v456 = vunpack.c.h.b16 %v89
  %v457 = vunpack.c.l.b16 %v90
  %v458 = vunpack.c.h.b16 %v90
  %v459 = vunpack.c.l.b16 %v91
  %v460 = vunpack.c.h.b16 %v91
  %v461 = vunpack.c.l.b16 %v92
  %v462 = vunpack.c.h.b16 %v92
  %v463 = vunpack.c.l.b16 %v93
  %v464 = vunpack.c.h.b16 %v93
  %v465 = vunpack.c.l.b16 %v94
  %v466 = vunpack.c.h.b16 %v94
  %v467 = vunpack.c.l.b16 %v95
  %v468 = vunpack.c.h.b16 %v95
  %v469 = vunpack.c.l.b16 %v96
  %v470 = vunpack.c.h.b16 %v96
  %v471 = vunpack.c.l.b16 %v97
  %v472 = vunpack.c.h.b16 %v97
  %v473 = vunpack.c.l.b16 %v98
  %v474 = vunpack.c.h.b16 %v98
  %v475 = vunpack.c.l.b16 %v99
  %v476 = vunpack.c.h.b16 %v99
  %v477 = vunpack.c.l.b16 %v100
  %v478 = vunpack.c.h.b16 %v100
  %v479 = vunpack.c.l.b16 %v101
  %v480 = vunpack.c.h.b16 %v101
  %v481 = vunpack.c.l.b16 %v102
  %v482 = vunpack.c.h.b16 %v102
  %v483 = vunpack.c.l.b16 %v103
  %v484 = vunpack.c.h.b16 %v103
  %v485 = vunpack.c.l.b16 %v104
  %v486 = vunpack.c.h.b16 %v104
  %v487 = vunpack.c.l.b16 %v105
  %v488 = vunpack.c.h.b16 %v105
  %v489 = vunpack.c.l.b16 %v106
  %v490 = vunpack.c.h.b16 %v106
  %v491 = vunpack.c.l.b16 %v107
  %v492 = vunpack.c.h.b16 %v107
  %v493 = vunpack.c.l.b16 %v108
  %v494 = vunpack.c.h.b16 %v108
  %v495 = vunpack.c.l.b16 %v109
  %v496 = vunpack.c.h.b16 %v109
  %v497 = vunpack.c.l.b16 %v110
  %v498 = vunpack.c.h.b16 %v110
  %v499 = vunpack.c.l.b16 %v111
  %v500 = vunpack.c.h.b16 %v111
  %v501 = vunpack.c.l.b16 %v112
  %v502 = vunpack.c.h.b16 %v112
  %v503 = vunpack.c.l.b16 %v113
  %v504 = vunpack.c.h.b16 %v113
  %v505 = vunpack.c.l.b16 %v114
  %v506 = vunpack.c.h.b16 %v114
  %v507 = vunpack.c.l.b16 %v115
  %v508 = vunpack.c.h.b16 %v115
  %v509 = vunpack.c.l.b16 %v116
  %v510 = vunpack.c.h.b16 %v116
  %v511 = vunpack.c.l.b16 %v117
  %v512 = vunpack.c.h.b16 %v117
  %v513 = vunpack.c.l.b16 %v118
  %v514 = vunpack.c.h.b16 %v118
  %v515 = vunpack.c.l.b16 %v119
  %v516 = vunpack.c.h.b16 %v119
  %v517 = vunpack.c.l.b16 %v120
  %v518 = vunpack.c.h.b16 %v120
  %v519 = vunpack.c.l.b16 %v121
  %v520 = vunpack.c.h.b16 %v121
  %v521 = vunpack.c.l.b16 %v122
  %v522 = vunpack.c.h.b16 %v122
  %v523 = vunpack.c.l.b16 %v123
  %v524 = vunpack.c.h.b16 %v123
  %v525 = vunpack.c.l.b16 %v124
  %v526 = vunpack.c.h.b16 %v124
  %v527 = vunpack.c.l.b16 %v125
  %v528 = vunpack.c.h.b16 %v125
  %v529 = vunpack.c.l.b16 %v126
  %v530 = vunpack.c.h.b16 %v126
  %v531 = vunpack.c.l.b16 %v127
  %v532 = vunpack.c.h.b16 %v127
  %v533 = vunpack.c.l.b16 %v128
  %v534 = vunpack.c.h.b16 %v128
  %v535 = vunpack.c.l.b16 %v129
  %v536 = vunpack.c.h.b16 %v129
  %v537 = vunpack.c.l.b16 %v130
  %v538 = vunpack.c.h.b16 %v130
  %v539 = vunpack.c.l.b16 %v131
  %v540 = vunpack.c.h.b16 %v131
  %v541 = vunpack.c.l.b16 %v132
  %v542 = vunpack.c.h.b16 %v132
  %v543 = vunpack.c.l.b16 %v133
  %v544 = vunpack.c.h.b16 %v133
  %v545 = vunpack.c.l.b16 %v134
  %v546 = vunpack.c.h.b16 %v134
  %v547 = vunpack.c.l.b16 %v135
  %v548 = vunpack.c.h.b16 %v135
  %v549 = vunpack.c.l.b16 %v136
  %v550 = vunpack.c.h.b16 %v136
  %v551 = vunpack.c.l.b16 %v137
  %v552 = vunpack.c.h.b16 %v137
  %v553 = vunpack.c.l.b16 %v138
  %v554 = vunpack.c.h.b16 %v138
  %v555 = vunpack.c.l.b16 %v139
  %v556 = vunpack.c.h.b16 %v139
  %v557 = vunpack.c.l.b16 %v140
  %v558 = vunpack.c.h.b16 %v140
  %v559 = vunpack.c.l.b16 %v141
  %v560 = vunpack.c.h.b16 %v141
  %v561 = vunpack.c.l.b16 %v142
  %v562 = vunpack.c.h.b16 %v142
  %v563 = vpack.c.b16 %v341, %v339
  %v564 = vpack.c.b16 %v342, %v340
  %v565 = vpack.c.b16 %v345, %v343
  %v566 = vpack.c.b16 %v346, %v344
  %v567 = vpack.c.b16 %v349, %v347
  %v568 = vpack.c.b16 %v350, %v348
  %v569 = vpack.c.b16 %v353, %v351
  %v570 = vpack.c.b16 %v354, %v352
  %v571 = vpack.c.b16 %v357, %v355
  %v572 = vpack.c.b16 %v358, %v356
  %v573 = vpack.c.b16 %v361, %v359
  %v574 = vpack.c.b16 %v362, %v360
  %v575 = vpack.c.b16 %v365, %v363
  %v576 = vpack.c.b16 %v366, %v364
  %v577 = vpack.c.b16 %v369, %v367
  %v578 = vpack.c.b16 %v370, %v368
  %v579 = vpack.c.b16 %v373, %v371
  %v580 = vpack.c.b16 %v374, %v372
  %v581 = vpack.c.b16 %v377, %v375
  %v582 = vpack.c.b16 %v378, %v376
  %v583 = vpack.c.b16 %v381, %v379
  %v584 = vpack.c.b16 %v382, %v380
  %v585 = vpack.c.b16 %v385, %v383
  %v586 = vpack.c.b16 %v386, %v384
  %v587 = vpack.c.b16 %v389, %v387
  %v588 = vpack.c.b16 %v390, %v388
  %v589 = vpack.c.b16 %v393, %v391
  %v590 = vpack.c.b16 %v394, %v392
  %v591 = vpack.c.b16 %v397, %v395
  %v592 = vpack.c.b16 %v398, %v396
  %v593 = vpack.c.b16 %v401, %v399
  %v594 = vpack.c.b16 %v402, %v400
  %v595 = vpack.c.b16 %v405, %v403
  %v596 = vpack.c.b16 %v406, %v404
  %v597 = vpack.c.b16 %v409, %v407
  %v598 = vpack.c.b16 %v410, %v408
  %v599 = vpack.c.b16 %v413, %v411
  %v600 = vpack.c.b16 %v414, %v412
  %v601 = vpack.c.b16 %v417, %v415
  %v602 = vpack.c.b16 %v418, %v416
  %v603 = vpack.c.b16 %v421, %v419
  %v604 = vpack.c.b16 %v422, %v420
  %v605 = vpack.c.b16 %v425, %v423
  %v606 = vpack.c.b16 %v426, %v424
  %v607 = vpack.c.b16 %v429, %v427
  %v608 = vpack.c.b16 %v430, %v428
  %v609 = vpack.c.b16 %v433, %v431
  %v610 = vpack.c.b16 %v434, %v432
  %v611 = vpack.c.b16 %v437, %v435
  %v612 = vpack.c.b16 %v438, %v436
  %v613 = vpack.c.b16 %v441, %v439
  %v614 = vpack.c.b16 %v442, %v440
  %v615 = vpack.c.b16 %v445, %v443
  %v616 = vpack.c.b16 %v446, %v444
  %v617 = vpack.c.b16 %v449, %v447
  %v618 = vpack.c.b16 %v450, %v448
  %v619 = vpack.c.b16 %v453, %v451
  %v620 = vpack.c.b16 %v454, %v452
  %v621 = vpack.c.b16 %v457, %v455
  %v622 = vpack.c.b16 %v458, %v456
  %v623 = vpack.c.b16 %v461, %v459
  %v624 = vpack.c.b16 %v462, %v460
  %v625 = vpack.c.b16 %v465, %v463
  %v626 = vpack.c.b16 %v466, %v464
  %v627 = vpack.c.b16 %v469, %v467
  %v628 = vpack.c.b16 %v470, %v468
  %v629 = vpack.c.b16 %v473, %v471
  %v630 = vpack.c.b16 %v474, %v472
  %v631 = vpack.c.b16 %v477, %v475
  %v632 = vpack.c.b16 %v478, %v476
  %v633 = vpack.c.b16 %v481, %v479
  %v634 = vpack.c.b16 %v482, %v480
  %v635 = vpack.c.b16 %v485, %v483
  %v636 = vpack.c.b16 %v486, %v484
  %v637 = vpack.c.b16 %v489, %v487
  %v638 = vpack.c.b16 %v490, %v488
  %v639 = vpack.c.b16 %v493, %v491
  %v640 = vpack.c.b16 %v494, %v492
  %v641 = vpack.c.b16 %v497, %v495
  %v642 = vpack.c.b16 %v498, %v496
  %v643 = vpack.c.b16 %v501, %v499
  %v644 = vpack.c.b16 %v502, %v500
  %v645 = vpack.c.b16 %v505, %v503
  %v646 = vpack.c.b16 %v506, %v504
  %v647 = vpack.c.b16 %v509, %v507
  %v648 = vpack.c.b16 %v510, %v508
  %v649 = vpack.c.b16 %v513, %v511
  %v650 = vpack.c.b16 %v514, %v512
  %v651 = vpack.c.b16 %v517, %v515
  %v652 = vpack.c.b16 %v518, %v516
  %v653 = vpack.c.b16 %v521, %v519
  %v654 = vpack.c.b16 %v522, %v520
  %v655 = vpack.c.b16 %v525, %v523
  %v656 = vpack.c.b16 %v526, %v524
  %v657 = vpack.c.b16 %v529, %v527
  %v658 = vpack.c.b16 %v530, %v528
  %v659 = vpack.c.b16 %v533, %v531
  %v660 = vpack.c.b16 %v534, %v532
  %v661 = vpack.c.b16 %v537, %v535
  %v662 = vpack.c.b16 %v538, %v536
  %v663 = vpack.c.b16 %v541, %v539
  %v664 = vpack.c.b16 %v542, %v540
  %v665 = vpack.c.b16 %v545, %v543
  %v666 = vpack.c.b16 %v546, %v544
  %v667 = vpack.c.b16 %v549, %v547
  %v668 = vpack.c.b16 %v550, %v548
  %v669 = vpack.c.b16 %v553, %v551
  %v670 = vpack.c.b16 %v554, %v552
  %v671 = vpack.c.b16 %v557, %v555
  %v672 = vpack.c.b16 %v558, %v556
  %v673 = vpack.c.b16 %v561, %v559
  %v674 = vpack.c.b16 %v562, %v560
  %787 = vmatprep.subr.bf16.mxu0 %v578
  %788 = vmatpush1.bf16.msra.mxu0 %v577
  %789 = vmatprep.subr.bf16.mxu0 %v576
  %790 = vmatpush1.bf16.msra.mxu0 %v575
  %791 = vmatprep.subr.bf16.mxu0 %v574
  %792 = vmatpush1.bf16.msra.mxu0 %v573
  %793 = vmatprep.subr.bf16.mxu0 %v572
  %794 = vmatpush1.bf16.msra.mxu0 %v571
  %795 = vmatprep.subr.bf16.mxu0 %v570
  %796 = vmatpush1.bf16.msra.mxu0 %v569
  %797 = vmatprep.subr.bf16.mxu0 %v568
  %798 = vmatpush1.bf16.msra.mxu0 %v567
  %799 = vmatprep.subr.bf16.mxu0 %v566
  %800 = vmatpush1.bf16.msra.mxu0 %v565
  %801 = vmatprep.subr.bf16.mxu0 %v564
  %802 = vmatpush1.bf16.msra.mxu0 %v563
  %803 = vmatprep.subr.bf16.mxu0 %v594
  %804 = vmatpush2.bf16.msra.mxu0 %v593
  %805 = vmatprep.subr.bf16.mxu0 %v592
  %806 = vmatpush2.bf16.msra.mxu0 %v591
  %807 = vmatprep.subr.bf16.mxu0 %v590
  %808 = vmatpush2.bf16.msra.mxu0 %v589
  %809 = vmatprep.subr.bf16.mxu0 %v588
  %810 = vmatpush2.bf16.msra.mxu0 %v587
  %811 = vmatprep.subr.bf16.mxu0 %v586
  %812 = vmatpush2.bf16.msra.mxu0 %v585
  %813 = vmatprep.subr.bf16.mxu0 %v584
  %814 = vmatpush2.bf16.msra.mxu0 %v583
  %815 = vmatprep.subr.bf16.mxu0 %v582
  %816 = vmatpush2.bf16.msra.mxu0 %v581
  %817 = vmatprep.subr.bf16.mxu0 %v580
  %818 = vmatpush2.bf16.msra.mxu0 %v579
  %819 = vmatprep.mubr.bf16.mxu0 %v200
  %820 = vmatmul.mubr.bf16.gmra.mxu0 %v199
  %v821 = vpop.f32.mrf.mxu0
  %v822 = vadd.f32 %v148, %v821
  %v823 = vpop.f32.mrf.mxu0
  %v824 = vadd.f32 %v152, %v823
  %v825 = vpop.f32.mrf.mxu0
  %v826 = vadd.f32 %v148, %v825
  %v827 = vpop.f32.mrf.mxu0
  %v828 = vadd.f32 %v152, %v827
  %829 = vmatprep.mubr.bf16.mxu0 %v207
  %830 = vmatmul.mubr.bf16.gmra.mxu0 %v206
  %v831 = vpop.f32.mrf.mxu0
  %v832 = vadd.f32 %v148, %v831
  %v833 = vpop.f32.mrf.mxu0
  %v834 = vadd.f32 %v152, %v833
  %v835 = vpop.f32.mrf.mxu0
  %v836 = vadd.f32 %v148, %v835
  %v837 = vpop.f32.mrf.mxu0
  %v838 = vadd.f32 %v152, %v837
  %839 = vdwg.mxu0
  %840 = vmatprep.subr.bf16.mxu0 %v610
  %841 = vmatpush1.bf16.msra.mxu0 %v609
  %842 = vmatprep.subr.bf16.mxu0 %v608
  %843 = vmatpush1.bf16.msra.mxu0 %v607
  %844 = vmatprep.subr.bf16.mxu0 %v606
  %845 = vmatpush1.bf16.msra.mxu0 %v605
  %846 = vmatprep.subr.bf16.mxu0 %v604
  %847 = vmatpush1.bf16.msra.mxu0 %v603
  %848 = vmatprep.subr.bf16.mxu0 %v602
  %849 = vmatpush1.bf16.msra.mxu0 %v601
  %850 = vmatprep.subr.bf16.mxu0 %v600
  %851 = vmatpush1.bf16.msra.mxu0 %v599
  %852 = vmatprep.subr.bf16.mxu0 %v598
  %853 = vmatpush1.bf16.msra.mxu0 %v597
  %854 = vmatprep.subr.bf16.mxu0 %v596
  %855 = vmatpush1.bf16.msra.mxu0 %v595
  %856 = vmatprep.subr.bf16.mxu0 %v626
  %857 = vmatpush2.bf16.msra.mxu0 %v625
  %858 = vmatprep.subr.bf16.mxu0 %v624
  %859 = vmatpush2.bf16.msra.mxu0 %v623
  %860 = vmatprep.subr.bf16.mxu0 %v622
  %861 = vmatpush2.bf16.msra.mxu0 %v621
  %862 = vmatprep.subr.bf16.mxu0 %v620
  %863 = vmatpush2.bf16.msra.mxu0 %v619
  %864 = vmatprep.subr.bf16.mxu0 %v618
  %865 = vmatpush2.bf16.msra.mxu0 %v617
  %866 = vmatprep.subr.bf16.mxu0 %v616
  %867 = vmatpush2.bf16.msra.mxu0 %v615
  %868 = vmatprep.subr.bf16.mxu0 %v614
  %869 = vmatpush2.bf16.msra.mxu0 %v613
  %870 = vmatprep.subr.bf16.mxu0 %v612
  %871 = vmatpush2.bf16.msra.mxu0 %v611
  %872 = vmatprep.mubr.bf16.mxu0 %v202
  %873 = vmatmul.mubr.bf16.gmra.mxu0 %v201
  %v874 = vpop.f32.mrf.mxu0
  %v875 = vadd.f32 %v822, %v874
  %v876 = vpop.f32.mrf.mxu0
  %v877 = vadd.f32 %v824, %v876
  %v878 = vpop.f32.mrf.mxu0
  %v879 = vadd.f32 %v826, %v878
  %v880 = vpop.f32.mrf.mxu0
  %v881 = vadd.f32 %v828, %v880
  %882 = vmatprep.mubr.bf16.mxu0 %v209
  %883 = vmatmul.mubr.bf16.gmra.mxu0 %v208
  %v884 = vpop.f32.mrf.mxu0
  %v885 = vadd.f32 %v832, %v884
  %v886 = vpop.f32.mrf.mxu0
  %v887 = vadd.f32 %v834, %v886
  %v888 = vpop.f32.mrf.mxu0
  %v889 = vadd.f32 %v836, %v888
  %v890 = vpop.f32.mrf.mxu0
  %v891 = vadd.f32 %v838, %v890
  %892 = vdwg.mxu0
  %893 = vmatprep.subr.bf16.mxu0 %v642
  %894 = vmatpush1.bf16.msra.mxu0 %v641
  %895 = vmatprep.subr.bf16.mxu0 %v640
  %896 = vmatpush1.bf16.msra.mxu0 %v639
  %897 = vmatprep.subr.bf16.mxu0 %v638
  %898 = vmatpush1.bf16.msra.mxu0 %v637
  %899 = vmatprep.subr.bf16.mxu0 %v636
  %900 = vmatpush1.bf16.msra.mxu0 %v635
  %901 = vmatprep.subr.bf16.mxu0 %v634
  %902 = vmatpush1.bf16.msra.mxu0 %v633
  %903 = vmatprep.subr.bf16.mxu0 %v632
  %904 = vmatpush1.bf16.msra.mxu0 %v631
  %905 = vmatprep.subr.bf16.mxu0 %v630
  %906 = vmatpush1.bf16.msra.mxu0 %v629
  %907 = vmatprep.subr.bf16.mxu0 %v628
  %908 = vmatpush1.bf16.msra.mxu0 %v627
  %909 = vmatprep.subr.bf16.mxu0 %v658
  %910 = vmatpush2.bf16.msra.mxu0 %v657
  %911 = vmatprep.subr.bf16.mxu0 %v656
  %912 = vmatpush2.bf16.msra.mxu0 %v655
  %913 = vmatprep.subr.bf16.mxu0 %v654
  %914 = vmatpush2.bf16.msra.mxu0 %v653
  %915 = vmatprep.subr.bf16.mxu0 %v652
  %916 = vmatpush2.bf16.msra.mxu0 %v651
  %917 = vmatprep.subr.bf16.mxu0 %v650
  %918 = vmatpush2.bf16.msra.mxu0 %v649
  %919 = vmatprep.subr.bf16.mxu0 %v648
  %920 = vmatpush2.bf16.msra.mxu0 %v647
  %921 = vmatprep.subr.bf16.mxu0 %v646
  %922 = vmatpush2.bf16.msra.mxu0 %v645
  %923 = vmatprep.subr.bf16.mxu0 %v644
  %924 = vmatpush2.bf16.msra.mxu0 %v643
  %925 = vmatprep.mubr.bf16.mxu0 %v204
  %926 = vmatmul.mubr.bf16.gmra.mxu0 %v203
  %v927 = vpop.f32.mrf.mxu0
  %v928 = vadd.f32 %v875, %v927
  %v929 = vpop.f32.mrf.mxu0
  %v930 = vadd.f32 %v877, %v929
  %v931 = vpop.f32.mrf.mxu0
  %v932 = vadd.f32 %v879, %v931
  %v933 = vpop.f32.mrf.mxu0
  %v934 = vadd.f32 %v881, %v933
  %935 = vmatprep.mubr.bf16.mxu0 %v211
  %936 = vmatmul.mubr.bf16.gmra.mxu0 %v210
  %v937 = vpop.f32.mrf.mxu0
  %v938 = vadd.f32 %v885, %v937
  %v939 = vpop.f32.mrf.mxu0
  %v940 = vadd.f32 %v887, %v939
  %v941 = vpop.f32.mrf.mxu0
  %v942 = vadd.f32 %v889, %v941
  %v943 = vpop.f32.mrf.mxu0
  %v944 = vadd.f32 %v891, %v943
  %945 = vdwg.mxu0
  %946 = vmatprep.subr.bf16.mxu0 %v674
  %947 = vmatpush1.bf16.msra.mxu0 %v673
  %948 = vmatprep.subr.bf16.mxu0 %v672
  %949 = vmatpush1.bf16.msra.mxu0 %v671
  %950 = vmatprep.subr.bf16.mxu0 %v670
  %951 = vmatpush1.bf16.msra.mxu0 %v669
  %952 = vmatprep.subr.bf16.mxu0 %v668
  %953 = vmatpush1.bf16.msra.mxu0 %v667
  %954 = vmatprep.subr.bf16.mxu0 %v666
  %955 = vmatpush1.bf16.msra.mxu0 %v665
  %956 = vmatprep.subr.bf16.mxu0 %v664
  %957 = vmatpush1.bf16.msra.mxu0 %v663
  %958 = vmatprep.subr.bf16.mxu0 %v662
  %959 = vmatpush1.bf16.msra.mxu0 %v661
  %960 = vmatprep.subr.bf16.mxu0 %v660
  %961 = vmatpush1.bf16.msra.mxu0 %v659
  %962 = vmatprep.subr.bf16.mxu0 0
  %963 = vmatpush2.bf16.msra.mxu0 0
  %964 = vmatprep.subr.bf16.mxu0 0
  %965 = vmatpush2.bf16.msra.mxu0 0
  %966 = vmatprep.subr.bf16.mxu0 0
  %967 = vmatpush2.bf16.msra.mxu0 0
  %968 = vmatprep.subr.bf16.mxu0 0
  %969 = vmatpush2.bf16.msra.mxu0 0
  %970 = vmatprep.subr.bf16.mxu0 0
  %971 = vmatpush2.bf16.msra.mxu0 0
  %972 = vmatprep.subr.bf16.mxu0 0
  %973 = vmatpush2.bf16.msra.mxu0 0
  %974 = vmatprep.subr.bf16.mxu0 0
  %975 = vmatpush2.bf16.msra.mxu0 0
  %976 = vmatprep.subr.bf16.mxu0 0
  %977 = vmatpush2.bf16.msra.mxu0 0
  %978 = vmatprep.mubr.bf16.mxu0 0
  %979 = vmatmul.mubr.bf16.gmra.mxu0 %v205
  %v980 = vpop.f32.mrf.mxu0
  %v981 = vadd.f32 %v928, %v980
  %v982 = vpop.f32.mrf.mxu0
  %v983 = vadd.f32 %v930, %v982
  %v984 = vpop.f32.mrf.mxu0
  %v985 = vadd.f32 %v932, %v984
  %v986 = vpop.f32.mrf.mxu0
  %v987 = vadd.f32 %v934, %v986
  %988 = vmatprep.mubr.bf16.mxu0 0
  %989 = vmatmul.mubr.bf16.gmra.mxu0 %v212
  %v990 = vpop.f32.mrf.mxu0
  %v991 = vadd.f32 %v938, %v990
  %v992 = vpop.f32.mrf.mxu0
  %v993 = vadd.f32 %v940, %v992
  %v994 = vpop.f32.mrf.mxu0
  %v995 = vadd.f32 %v942, %v994
  %v996 = vpop.f32.mrf.mxu0
  %v997 = vadd.f32 %v944, %v996
  %998 = vdwg.mxu0
  %v999 = vmul.f32 %v981, 0.01
  %v1000 = vmul.f32 %v983, 0.01
  %v1001 = vmul.f32 %v985, 0.01
  %v1002 = vmul.f32 %v987, 0.01
  %v1003 = vmul.f32 %v991, 0.01
  %v1004 = vmul.f32 %v993, 0.01
  %v1005 = vmul.f32 %v995, 0.01
  %v1006 = vmul.f32 %v997, 0.01
  %v1007 = vmax.f32 %v981, %v999
  %v1008 = vmax.f32 %v983, %v1000
  %v1009 = vmax.f32 %v985, %v1001
  %v1010 = vmax.f32 %v987, %v1002
  %v1011 = vmax.f32 %v991, %v1003
  %v1012 = vmax.f32 %v993, %v1004
  %v1013 = vmax.f32 %v995, %v1005
  %v1014 = vmax.f32 %v997, %v1006
  %1015 = vst [vmem:[%s3] sm:$0xff] %v1007
  %1016 = vst [vmem:[%s3 + $0x8] sm:$0xff] %v1008
  %1017 = vst [vmem:[%s3 + $0x10] sm:$0xff] %v1009
  %1018 = vst [vmem:[%s3 + $0x18] sm:$0xff] %v1010
  %1019 = vst [vmem:[%s3 + $0x20] sm:$0xff] %v1011
  %1020 = vst [vmem:[%s3 + $0x28] sm:$0xff] %v1012
  %1021 = vst [vmem:[%s3 + $0x30] sm:$0xff] %v1013
  %1022 = vst [vmem:[%s3 + $0x38] sm:$0xff] %v1014
  // Predicated region
  $region14: #{forward.21} parent=0 // pred_check
    _
  $region15: #{forward.21} parent=0 // pred_check_branch
    %1024 = sbr.rel (0) target = $region17
  $region16: #{forward.21} parent=0 // pred_region
    _
  $region17: #{forward.21} parent=0 // pred_fallthru
    _
  // Predicated region
  $region18: #{forward.21} parent=0 // pred_check
    _
  $region19: #{forward.21} parent=0 // pred_check_branch
    %1026 = sbr.rel (0) target = $region21
  $region20: #{forward.21} parent=0 // pred_region
    _
  $region21: #{forward.21} parent=0 // pred_fallthru
    _

// kernel: forward.22
$region0: #{forward.22}
  #allocation0 [shape = 'u32[]', space=smem, size = 0x4, offset = 0x4, fixed_abs, tag = 'smem constant byte address 0x4 - core index']
  #allocation1 [shape = 'u32[144,128]{1,0:T(1,128)}', space=vmem, size = 0x12000, scoped, tag = 'internal scratch']
  %s0 = inlined_call_operand.vmem [shape: bf16[16,896], index: 0, kind: input, shape index: {}]
  %s1 = inlined_call_operand.vmem [shape: bf16[896,256], index: 1, kind: input, shape index: {}]
  %s2 = inlined_call_operand.vmem [shape: f32[1,256], index: 2, kind: input, shape index: {}]
  %s3 = inlined_call_operand.vmem [shape: f32[16,256], index: 3, kind: output, shape index: {}]
  %s4 = sld [smem:[#allocation0]]
  $region22: #{forward.22} parent=0
    _
  %s6 = ssub.s32 1, %s4
  %s7 = scalar_select 0, %s6, %s4
  // Predicated region
  $region2: #{forward.22} parent=0 // pred_check
    _
  $region3: #{forward.22} parent=0 // pred_check_branch
    %9 = sbr.rel (0) target = $region5
  $region4: #{forward.22} parent=0 // pred_region
    _
  $region5: #{forward.22} parent=0 // pred_fallthru
    _
  // Predicated region
  $region6: #{forward.22} parent=0 // pred_check
    _
  $region7: #{forward.22} parent=0 // pred_check_branch
    %11 = sbr.rel (0) target = $region9
  $region8: #{forward.22} parent=0 // pred_region
    _
  $region9: #{forward.22} parent=0 // pred_fallthru
    _
  // Predicated region
  $region10: #{forward.22} parent=0 // pred_check
    _
  $region11: #{forward.22} parent=0 // pred_check_branch
    %13 = sbr.rel (0) target = $region13
  $region12: #{forward.22} parent=0 // pred_region
    _
  $region13: #{forward.22} parent=0 // pred_fallthru
    _
  %v15 = vld [vmem:[%s0] sm:$0xff]
  %v16 = vld [vmem:[%s0 + $0x8] sm:$0xff]
  %v17 = vld [vmem:[%s0 + $0x10] sm:$0xff]
  %v18 = vld [vmem:[%s0 + $0x18] sm:$0xf]
  %v19 = vld [vmem:[%s0 + $0x1c] sm:$0xff]
  %v20 = vld [vmem:[%s0 + $0x24] sm:$0xff]
  %v21 = vld [vmem:[%s0 + $0x2c] sm:$0xff]
  %v22 = vld [vmem:[%s0 + $0x34] sm:$0xf]
  %v23 = vld [vmem:[%s1] sm:$0xff]
  %v24 = vld [vmem:[%s1 + $0x8] sm:$0xff]
  %v25 = vld [vmem:[%s1 + $0x10] sm:$0xff]
  %v26 = vld [vmem:[%s1 + $0x18] sm:$0xff]
  %v27 = vld [vmem:[%s1 + $0x20] sm:$0xff]
  %v28 = vld [vmem:[%s1 + $0x28] sm:$0xff]
  %v29 = vld [vmem:[%s1 + $0x30] sm:$0xff]
  %v30 = vld [vmem:[%s1 + $0x38] sm:$0xff]
  %v31 = vld [vmem:[%s1 + $0x40] sm:$0xff]
  %v32 = vld [vmem:[%s1 + $0x48] sm:$0xff]
  %v33 = vld [vmem:[%s1 + $0x50] sm:$0xff]
  %v34 = vld [vmem:[%s1 + $0x58] sm:$0xff]
  %v35 = vld [vmem:[%s1 + $0x60] sm:$0xff]
  %v36 = vld [vmem:[%s1 + $0x68] sm:$0xff]
  %v37 = vld [vmem:[%s1 + $0x70] sm:$0xff]
  %v38 = vld [vmem:[%s1 + $0x78] sm:$0xff]
  %v39 = vld [vmem:[%s1 + $0x80] sm:$0xff]
  %v40 = vld [vmem:[%s1 + $0x88] sm:$0xff]
  %v41 = vld [vmem:[%s1 + $0x90] sm:$0xff]
  %v42 = vld [vmem:[%s1 + $0x98] sm:$0xff]
  %v43 = vld [vmem:[%s1 + $0xa0] sm:$0xff]
  %v44 = vld [vmem:[%s1 + $0xa8] sm:$0xff]
  %v45 = vld [vmem:[%s1 + $0xb0] sm:$0xff]
  %v46 = vld [vmem:[%s1 + $0xb8] sm:$0xff]
  %v47 = vld [vmem:[%s1 + $0xc0] sm:$0xff]
  %v48 = vld [vmem:[%s1 + $0xc8] sm:$0xff]
  %v49 = vld [vmem:[%s1 + $0xd0] sm:$0xff]
  %v50 = vld [vmem:[%s1 + $0xd8] sm:$0xff]
  %v51 = vld [vmem:[%s1 + $0xe0] sm:$0xff]
  %v52 = vld [vmem:[%s1 + $0xe8] sm:$0xff]
  %v53 = vld [vmem:[%s1 + $0xf0] sm:$0xff]
  %v54 = vld [vmem:[%s1 + $0xf8] sm:$0xff]
  %v55 = vld [vmem:[%s1 + $0x100] sm:$0xff]
  %v56 = vld [vmem:[%s1 + $0x108] sm:$0xff]
  %v57 = vld [vmem:[%s1 + $0x110] sm:$0xff]
  %v58 = vld [vmem:[%s1 + $0x118] sm:$0xff]
  %v59 = vld [vmem:[%s1 + $0x120] sm:$0xff]
  %v60 = vld [vmem:[%s1 + $0x128] sm:$0xff]
  %v61 = vld [vmem:[%s1 + $0x130] sm:$0xff]
  %v62 = vld [vmem:[%s1 + $0x138] sm:$0xff]
  %v63 = vld [vmem:[%s1 + $0x140] sm:$0xff]
  %v64 = vld [vmem:[%s1 + $0x148] sm:$0xff]
  %v65 = vld [vmem:[%s1 + $0x150] sm:$0xff]
  %v66 = vld [vmem:[%s1 + $0x158] sm:$0xff]
  %v67 = vld [vmem:[%s1 + $0x160] sm:$0xff]
  %v68 = vld [vmem:[%s1 + $0x168] sm:$0xff]
  %v69 = vld [vmem:[%s1 + $0x170] sm:$0xff]
  %v70 = vld [vmem:[%s1 + $0x178] sm:$0xff]
  %v71 = vld [vmem:[%s1 + $0x180] sm:$0xff]
  %v72 = vld [vmem:[%s1 + $0x188] sm:$0xff]
  %v73 = vld [vmem:[%s1 + $0x190] sm:$0xff]
  %v74 = vld [vmem:[%s1 + $0x198] sm:$0xff]
  %v75 = vld [vmem:[%s1 + $0x1a0] sm:$0xff]
  %v76 = vld [vmem:[%s1 + $0x1a8] sm:$0xff]
  %v77 = vld [vmem:[%s1 + $0x1b0] sm:$0xff]
  %v78 = vld [vmem:[%s1 + $0x1b8] sm:$0xff]
  %v79 = vld [vmem:[%s1 + $0x1c0] sm:$0xff]
  %v80 = vld [vmem:[%s1 + $0x1c8] sm:$0xff]
  %v81 = vld [vmem:[%s1 + $0x1d0] sm:$0xff]
  %v82 = vld [vmem:[%s1 + $0x1d8] sm:$0xff]
  %v83 = vld [vmem:[%s1 + $0x1e0] sm:$0xff]
  %v84 = vld [vmem:[%s1 + $0x1e8] sm:$0xff]
  %v85 = vld [vmem:[%s1 + $0x1f0] sm:$0xff]
  %v86 = vld [vmem:[%s1 + $0x1f8] sm:$0xff]
  %v87 = vld [vmem:[%s1 + $0x200] sm:$0xff]
  %v88 = vld [vmem:[%s1 + $0x208] sm:$0xff]
  %v89 = vld [vmem:[%s1 + $0x210] sm:$0xff]
  %v90 = vld [vmem:[%s1 + $0x218] sm:$0xff]
  %v91 = vld [vmem:[%s1 + $0x220] sm:$0xff]
  %v92 = vld [vmem:[%s1 + $0x228] sm:$0xff]
  %v93 = vld [vmem:[%s1 + $0x230] sm:$0xff]
  %v94 = vld [vmem:[%s1 + $0x238] sm:$0xff]
  %v95 = vld [vmem:[%s1 + $0x240] sm:$0xff]
  %v96 = vld [vmem:[%s1 + $0x248] sm:$0xff]
  %v97 = vld [vmem:[%s1 + $0x250] sm:$0xff]
  %v98 = vld [vmem:[%s1 + $0x258] sm:$0xff]
  %v99 = vld [vmem:[%s1 + $0x260] sm:$0xff]
  %v100 = vld [vmem:[%s1 + $0x268] sm:$0xff]
  %v101 = vld [vmem:[%s1 + $0x270] sm:$0xff]
  %v102 = vld [vmem:[%s1 + $0x278] sm:$0xff]
  %v103 = vld [vmem:[%s1 + $0x280] sm:$0xff]
  %v104 = vld [vmem:[%s1 + $0x288] sm:$0xff]
  %v105 = vld [vmem:[%s1 + $0x290] sm:$0xff]
  %v106 = vld [vmem:[%s1 + $0x298] sm:$0xff]
  %v107 = vld [vmem:[%s1 + $0x2a0] sm:$0xff]
  %v108 = vld [vmem:[%s1 + $0x2a8] sm:$0xff]
  %v109 = vld [vmem:[%s1 + $0x2b0] sm:$0xff]
  %v110 = vld [vmem:[%s1 + $0x2b8] sm:$0xff]
  %v111 = vld [vmem:[%s1 + $0x2c0] sm:$0xff]
  %v112 = vld [vmem:[%s1 + $0x2c8] sm:$0xff]
  %v113 = vld [vmem:[%s1 + $0x2d0] sm:$0xff]
  %v114 = vld [vmem:[%s1 + $0x2d8] sm:$0xff]
  %v115 = vld [vmem:[%s1 + $0x2e0] sm:$0xff]
  %v116 = vld [vmem:[%s1 + $0x2e8] sm:$0xff]
  %v117 = vld [vmem:[%s1 + $0x2f0] sm:$0xff]
  %v118 = vld [vmem:[%s1 + $0x2f8] sm:$0xff]
  %v119 = vld [vmem:[%s1 + $0x300] sm:$0xff]
  %v120 = vld [vmem:[%s1 + $0x308] sm:$0xff]
  %v121 = vld [vmem:[%s1 + $0x310] sm:$0xff]
  %v122 = vld [vmem:[%s1 + $0x318] sm:$0xff]
  %v123 = vld [vmem:[%s1 + $0x320] sm:$0xff]
  %v124 = vld [vmem:[%s1 + $0x328] sm:$0xff]
  %v125 = vld [vmem:[%s1 + $0x330] sm:$0xff]
  %v126 = vld [vmem:[%s1 + $0x338] sm:$0xff]
  %v127 = vld [vmem:[%s1 + $0x340] sm:$0xff]
  %v128 = vld [vmem:[%s1 + $0x348] sm:$0xff]
  %v129 = vld [vmem:[%s1 + $0x350] sm:$0xff]
  %v130 = vld [vmem:[%s1 + $0x358] sm:$0xff]
  %v131 = vld [vmem:[%s1 + $0x360] sm:$0xff]
  %v132 = vld [vmem:[%s1 + $0x368] sm:$0xff]
  %v133 = vld [vmem:[%s1 + $0x370] sm:$0xff]
  %v134 = vld [vmem:[%s1 + $0x378] sm:$0xff]
  %v135 = vld [vmem:[%s2] sm:$0x3]
  %v137 = vlaneseq
  %v138 = vshrl.u32 %v137, 7
  %v139 = vsub.s32 0, %v138
  %v140 = vrot.slane %v135, %v139
  %v141 = vlaneseq
  %v142 = vshrl.u32 %v141, 7
  %v143 = vsub.s32 1, %v142
  %v144 = vrot.slane %v135, %v143
  %v155 = vunpack.c.l.b16 %v15
  %v156 = vunpack.c.h.b16 %v15
  %v157 = vunpack.c.l.b16 %v16
  %v158 = vunpack.c.h.b16 %v16
  %v159 = vunpack.c.l.b16 %v17
  %v160 = vunpack.c.h.b16 %v17
  %v161 = vunpack.c.l.b16 %v18
  %v162 = vunpack.c.l.b16 %v19
  %v163 = vunpack.c.h.b16 %v19
  %v164 = vunpack.c.l.b16 %v20
  %v165 = vunpack.c.h.b16 %v20
  %v166 = vunpack.c.l.b16 %v21
  %v167 = vunpack.c.h.b16 %v21
  %v168 = vunpack.c.l.b16 %v22
  %v169 = vpack.c.b16 %v162, %v155
  %v170 = vpack.c.b16 %v163, %v156
  %v171 = vpack.c.b16 %v164, %v157
  %v172 = vpack.c.b16 %v165, %v158
  %v173 = vpack.c.b16 %v166, %v159
  %v174 = vpack.c.b16 %v167, %v160
  %v175 = vpack.c.b16 %v168, %v161
  %v295 = vunpack.c.l.b16 %v23
  %v296 = vunpack.c.h.b16 %v23
  %v297 = vunpack.c.l.b16 %v24
  %v298 = vunpack.c.h.b16 %v24
  %v299 = vunpack.c.l.b16 %v25
  %v300 = vunpack.c.h.b16 %v25
  %v301 = vunpack.c.l.b16 %v26
  %v302 = vunpack.c.h.b16 %v26
  %v303 = vunpack.c.l.b16 %v27
  %v304 = vunpack.c.h.b16 %v27
  %v305 = vunpack.c.l.b16 %v28
  %v306 = vunpack.c.h.b16 %v28
  %v307 = vunpack.c.l.b16 %v29
  %v308 = vunpack.c.h.b16 %v29
  %v309 = vunpack.c.l.b16 %v30
  %v310 = vunpack.c.h.b16 %v30
  %v311 = vunpack.c.l.b16 %v31
  %v312 = vunpack.c.h.b16 %v31
  %v313 = vunpack.c.l.b16 %v32
  %v314 = vunpack.c.h.b16 %v32
  %v315 = vunpack.c.l.b16 %v33
  %v316 = vunpack.c.h.b16 %v33
  %v317 = vunpack.c.l.b16 %v34
  %v318 = vunpack.c.h.b16 %v34
  %v319 = vunpack.c.l.b16 %v35
  %v320 = vunpack.c.h.b16 %v35
  %v321 = vunpack.c.l.b16 %v36
  %v322 = vunpack.c.h.b16 %v36
  %v323 = vunpack.c.l.b16 %v37
  %v324 = vunpack.c.h.b16 %v37
  %v325 = vunpack.c.l.b16 %v38
  %v326 = vunpack.c.h.b16 %v38
  %v327 = vunpack.c.l.b16 %v39
  %v328 = vunpack.c.h.b16 %v39
  %v329 = vunpack.c.l.b16 %v40
  %v330 = vunpack.c.h.b16 %v40
  %v331 = vunpack.c.l.b16 %v41
  %v332 = vunpack.c.h.b16 %v41
  %v333 = vunpack.c.l.b16 %v42
  %v334 = vunpack.c.h.b16 %v42
  %v335 = vunpack.c.l.b16 %v43
  %v336 = vunpack.c.h.b16 %v43
  %v337 = vunpack.c.l.b16 %v44
  %v338 = vunpack.c.h.b16 %v44
  %v339 = vunpack.c.l.b16 %v45
  %v340 = vunpack.c.h.b16 %v45
  %v341 = vunpack.c.l.b16 %v46
  %v342 = vunpack.c.h.b16 %v46
  %v343 = vunpack.c.l.b16 %v47
  %v344 = vunpack.c.h.b16 %v47
  %v345 = vunpack.c.l.b16 %v48
  %v346 = vunpack.c.h.b16 %v48
  %v347 = vunpack.c.l.b16 %v49
  %v348 = vunpack.c.h.b16 %v49
  %v349 = vunpack.c.l.b16 %v50
  %v350 = vunpack.c.h.b16 %v50
  %v351 = vunpack.c.l.b16 %v51
  %v352 = vunpack.c.h.b16 %v51
  %v353 = vunpack.c.l.b16 %v52
  %v354 = vunpack.c.h.b16 %v52
  %v355 = vunpack.c.l.b16 %v53
  %v356 = vunpack.c.h.b16 %v53
  %v357 = vunpack.c.l.b16 %v54
  %v358 = vunpack.c.h.b16 %v54
  %v359 = vunpack.c.l.b16 %v55
  %v360 = vunpack.c.h.b16 %v55
  %v361 = vunpack.c.l.b16 %v56
  %v362 = vunpack.c.h.b16 %v56
  %v363 = vunpack.c.l.b16 %v57
  %v364 = vunpack.c.h.b16 %v57
  %v365 = vunpack.c.l.b16 %v58
  %v366 = vunpack.c.h.b16 %v58
  %v367 = vunpack.c.l.b16 %v59
  %v368 = vunpack.c.h.b16 %v59
  %v369 = vunpack.c.l.b16 %v60
  %v370 = vunpack.c.h.b16 %v60
  %v371 = vunpack.c.l.b16 %v61
  %v372 = vunpack.c.h.b16 %v61
  %v373 = vunpack.c.l.b16 %v62
  %v374 = vunpack.c.h.b16 %v62
  %v375 = vunpack.c.l.b16 %v63
  %v376 = vunpack.c.h.b16 %v63
  %v377 = vunpack.c.l.b16 %v64
  %v378 = vunpack.c.h.b16 %v64
  %v379 = vunpack.c.l.b16 %v65
  %v380 = vunpack.c.h.b16 %v65
  %v381 = vunpack.c.l.b16 %v66
  %v382 = vunpack.c.h.b16 %v66
  %v383 = vunpack.c.l.b16 %v67
  %v384 = vunpack.c.h.b16 %v67
  %v385 = vunpack.c.l.b16 %v68
  %v386 = vunpack.c.h.b16 %v68
  %v387 = vunpack.c.l.b16 %v69
  %v388 = vunpack.c.h.b16 %v69
  %v389 = vunpack.c.l.b16 %v70
  %v390 = vunpack.c.h.b16 %v70
  %v391 = vunpack.c.l.b16 %v71
  %v392 = vunpack.c.h.b16 %v71
  %v393 = vunpack.c.l.b16 %v72
  %v394 = vunpack.c.h.b16 %v72
  %v395 = vunpack.c.l.b16 %v73
  %v396 = vunpack.c.h.b16 %v73
  %v397 = vunpack.c.l.b16 %v74
  %v398 = vunpack.c.h.b16 %v74
  %v399 = vunpack.c.l.b16 %v75
  %v400 = vunpack.c.h.b16 %v75
  %v401 = vunpack.c.l.b16 %v76
  %v402 = vunpack.c.h.b16 %v76
  %v403 = vunpack.c.l.b16 %v77
  %v404 = vunpack.c.h.b16 %v77
  %v405 = vunpack.c.l.b16 %v78
  %v406 = vunpack.c.h.b16 %v78
  %v407 = vunpack.c.l.b16 %v79
  %v408 = vunpack.c.h.b16 %v79
  %v409 = vunpack.c.l.b16 %v80
  %v410 = vunpack.c.h.b16 %v80
  %v411 = vunpack.c.l.b16 %v81
  %v412 = vunpack.c.h.b16 %v81
  %v413 = vunpack.c.l.b16 %v82
  %v414 = vunpack.c.h.b16 %v82
  %v415 = vunpack.c.l.b16 %v83
  %v416 = vunpack.c.h.b16 %v83
  %v417 = vunpack.c.l.b16 %v84
  %v418 = vunpack.c.h.b16 %v84
  %v419 = vunpack.c.l.b16 %v85
  %v420 = vunpack.c.h.b16 %v85
  %v421 = vunpack.c.l.b16 %v86
  %v422 = vunpack.c.h.b16 %v86
  %v423 = vunpack.c.l.b16 %v87
  %v424 = vunpack.c.h.b16 %v87
  %v425 = vunpack.c.l.b16 %v88
  %v426 = vunpack.c.h.b16 %v88
  %v427 = vunpack.c.l.b16 %v89
  %v428 = vunpack.c.h.b16 %v89
  %v429 = vunpack.c.l.b16 %v90
  %v430 = vunpack.c.h.b16 %v90
  %v431 = vunpack.c.l.b16 %v91
  %v432 = vunpack.c.h.b16 %v91
  %v433 = vunpack.c.l.b16 %v92
  %v434 = vunpack.c.h.b16 %v92
  %v435 = vunpack.c.l.b16 %v93
  %v436 = vunpack.c.h.b16 %v93
  %v437 = vunpack.c.l.b16 %v94
  %v438 = vunpack.c.h.b16 %v94
  %v439 = vunpack.c.l.b16 %v95
  %v440 = vunpack.c.h.b16 %v95
  %v441 = vunpack.c.l.b16 %v96
  %v442 = vunpack.c.h.b16 %v96
  %v443 = vunpack.c.l.b16 %v97
  %v444 = vunpack.c.h.b16 %v97
  %v445 = vunpack.c.l.b16 %v98
  %v446 = vunpack.c.h.b16 %v98
  %v447 = vunpack.c.l.b16 %v99
  %v448 = vunpack.c.h.b16 %v99
  %v449 = vunpack.c.l.b16 %v100
  %v450 = vunpack.c.h.b16 %v100
  %v451 = vunpack.c.l.b16 %v101
  %v452 = vunpack.c.h.b16 %v101
  %v453 = vunpack.c.l.b16 %v102
  %v454 = vunpack.c.h.b16 %v102
  %v455 = vunpack.c.l.b16 %v103
  %v456 = vunpack.c.h.b16 %v103
  %v457 = vunpack.c.l.b16 %v104
  %v458 = vunpack.c.h.b16 %v104
  %v459 = vunpack.c.l.b16 %v105
  %v460 = vunpack.c.h.b16 %v105
  %v461 = vunpack.c.l.b16 %v106
  %v462 = vunpack.c.h.b16 %v106
  %v463 = vunpack.c.l.b16 %v107
  %v464 = vunpack.c.h.b16 %v107
  %v465 = vunpack.c.l.b16 %v108
  %v466 = vunpack.c.h.b16 %v108
  %v467 = vunpack.c.l.b16 %v109
  %v468 = vunpack.c.h.b16 %v109
  %v469 = vunpack.c.l.b16 %v110
  %v470 = vunpack.c.h.b16 %v110
  %v471 = vunpack.c.l.b16 %v111
  %v472 = vunpack.c.h.b16 %v111
  %v473 = vunpack.c.l.b16 %v112
  %v474 = vunpack.c.h.b16 %v112
  %v475 = vunpack.c.l.b16 %v113
  %v476 = vunpack.c.h.b16 %v113
  %v477 = vunpack.c.l.b16 %v114
  %v478 = vunpack.c.h.b16 %v114
  %v479 = vunpack.c.l.b16 %v115
  %v480 = vunpack.c.h.b16 %v115
  %v481 = vunpack.c.l.b16 %v116
  %v482 = vunpack.c.h.b16 %v116
  %v483 = vunpack.c.l.b16 %v117
  %v484 = vunpack.c.h.b16 %v117
  %v485 = vunpack.c.l.b16 %v118
  %v486 = vunpack.c.h.b16 %v118
  %v487 = vunpack.c.l.b16 %v119
  %v488 = vunpack.c.h.b16 %v119
  %v489 = vunpack.c.l.b16 %v120
  %v490 = vunpack.c.h.b16 %v120
  %v491 = vunpack.c.l.b16 %v121
  %v492 = vunpack.c.h.b16 %v121
  %v493 = vunpack.c.l.b16 %v122
  %v494 = vunpack.c.h.b16 %v122
  %v495 = vunpack.c.l.b16 %v123
  %v496 = vunpack.c.h.b16 %v123
  %v497 = vunpack.c.l.b16 %v124
  %v498 = vunpack.c.h.b16 %v124
  %v499 = vunpack.c.l.b16 %v125
  %v500 = vunpack.c.h.b16 %v125
  %v501 = vunpack.c.l.b16 %v126
  %v502 = vunpack.c.h.b16 %v126
  %v503 = vunpack.c.l.b16 %v127
  %v504 = vunpack.c.h.b16 %v127
  %v505 = vunpack.c.l.b16 %v128
  %v506 = vunpack.c.h.b16 %v128
  %v507 = vunpack.c.l.b16 %v129
  %v508 = vunpack.c.h.b16 %v129
  %v509 = vunpack.c.l.b16 %v130
  %v510 = vunpack.c.h.b16 %v130
  %v511 = vunpack.c.l.b16 %v131
  %v512 = vunpack.c.h.b16 %v131
  %v513 = vunpack.c.l.b16 %v132
  %v514 = vunpack.c.h.b16 %v132
  %v515 = vunpack.c.l.b16 %v133
  %v516 = vunpack.c.h.b16 %v133
  %v517 = vunpack.c.l.b16 %v134
  %v518 = vunpack.c.h.b16 %v134
  %v519 = vpack.c.b16 %v297, %v295
  %v520 = vpack.c.b16 %v298, %v296
  %v521 = vpack.c.b16 %v301, %v299
  %v522 = vpack.c.b16 %v302, %v300
  %v523 = vpack.c.b16 %v305, %v303
  %v524 = vpack.c.b16 %v306, %v304
  %v525 = vpack.c.b16 %v309, %v307
  %v526 = vpack.c.b16 %v310, %v308
  %v527 = vpack.c.b16 %v313, %v311
  %v528 = vpack.c.b16 %v314, %v312
  %v529 = vpack.c.b16 %v317, %v315
  %v530 = vpack.c.b16 %v318, %v316
  %v531 = vpack.c.b16 %v321, %v319
  %v532 = vpack.c.b16 %v322, %v320
  %v533 = vpack.c.b16 %v325, %v323
  %v534 = vpack.c.b16 %v326, %v324
  %v535 = vpack.c.b16 %v329, %v327
  %v536 = vpack.c.b16 %v330, %v328
  %v537 = vpack.c.b16 %v333, %v331
  %v538 = vpack.c.b16 %v334, %v332
  %v539 = vpack.c.b16 %v337, %v335
  %v540 = vpack.c.b16 %v338, %v336
  %v541 = vpack.c.b16 %v341, %v339
  %v542 = vpack.c.b16 %v342, %v340
  %v543 = vpack.c.b16 %v345, %v343
  %v544 = vpack.c.b16 %v346, %v344
  %v545 = vpack.c.b16 %v349, %v347
  %v546 = vpack.c.b16 %v350, %v348
  %v547 = vpack.c.b16 %v353, %v351
  %v548 = vpack.c.b16 %v354, %v352
  %v549 = vpack.c.b16 %v357, %v355
  %v550 = vpack.c.b16 %v358, %v356
  %v551 = vpack.c.b16 %v361, %v359
  %v552 = vpack.c.b16 %v362, %v360
  %v553 = vpack.c.b16 %v365, %v363
  %v554 = vpack.c.b16 %v366, %v364
  %v555 = vpack.c.b16 %v369, %v367
  %v556 = vpack.c.b16 %v370, %v368
  %v557 = vpack.c.b16 %v373, %v371
  %v558 = vpack.c.b16 %v374, %v372
  %v559 = vpack.c.b16 %v377, %v375
  %v560 = vpack.c.b16 %v378, %v376
  %v561 = vpack.c.b16 %v381, %v379
  %v562 = vpack.c.b16 %v382, %v380
  %v563 = vpack.c.b16 %v385, %v383
  %v564 = vpack.c.b16 %v386, %v384
  %v565 = vpack.c.b16 %v389, %v387
  %v566 = vpack.c.b16 %v390, %v388
  %v567 = vpack.c.b16 %v393, %v391
  %v568 = vpack.c.b16 %v394, %v392
  %v569 = vpack.c.b16 %v397, %v395
  %v570 = vpack.c.b16 %v398, %v396
  %v571 = vpack.c.b16 %v401, %v399
  %v572 = vpack.c.b16 %v402, %v400
  %v573 = vpack.c.b16 %v405, %v403
  %v574 = vpack.c.b16 %v406, %v404
  %v575 = vpack.c.b16 %v409, %v407
  %v576 = vpack.c.b16 %v410, %v408
  %v577 = vpack.c.b16 %v413, %v411
  %v578 = vpack.c.b16 %v414, %v412
  %v579 = vpack.c.b16 %v417, %v415
  %v580 = vpack.c.b16 %v418, %v416
  %v581 = vpack.c.b16 %v421, %v419
  %v582 = vpack.c.b16 %v422, %v420
  %v583 = vpack.c.b16 %v425, %v423
  %v584 = vpack.c.b16 %v426, %v424
  %v585 = vpack.c.b16 %v429, %v427
  %v586 = vpack.c.b16 %v430, %v428
  %v587 = vpack.c.b16 %v433, %v431
  %v588 = vpack.c.b16 %v434, %v432
  %v589 = vpack.c.b16 %v437, %v435
  %v590 = vpack.c.b16 %v438, %v436
  %v591 = vpack.c.b16 %v441, %v439
  %v592 = vpack.c.b16 %v442, %v440
  %v593 = vpack.c.b16 %v445, %v443
  %v594 = vpack.c.b16 %v446, %v444
  %v595 = vpack.c.b16 %v449, %v447
  %v596 = vpack.c.b16 %v450, %v448
  %v597 = vpack.c.b16 %v453, %v451
  %v598 = vpack.c.b16 %v454, %v452
  %v599 = vpack.c.b16 %v457, %v455
  %v600 = vpack.c.b16 %v458, %v456
  %v601 = vpack.c.b16 %v461, %v459
  %v602 = vpack.c.b16 %v462, %v460
  %v603 = vpack.c.b16 %v465, %v463
  %v604 = vpack.c.b16 %v466, %v464
  %v605 = vpack.c.b16 %v469, %v467
  %v606 = vpack.c.b16 %v470, %v468
  %v607 = vpack.c.b16 %v473, %v471
  %v608 = vpack.c.b16 %v474, %v472
  %v609 = vpack.c.b16 %v477, %v475
  %v610 = vpack.c.b16 %v478, %v476
  %v611 = vpack.c.b16 %v481, %v479
  %v612 = vpack.c.b16 %v482, %v480
  %v613 = vpack.c.b16 %v485, %v483
  %v614 = vpack.c.b16 %v486, %v484
  %v615 = vpack.c.b16 %v489, %v487
  %v616 = vpack.c.b16 %v490, %v488
  %v617 = vpack.c.b16 %v493, %v491
  %v618 = vpack.c.b16 %v494, %v492
  %v619 = vpack.c.b16 %v497, %v495
  %v620 = vpack.c.b16 %v498, %v496
  %v621 = vpack.c.b16 %v501, %v499
  %v622 = vpack.c.b16 %v502, %v500
  %v623 = vpack.c.b16 %v505, %v503
  %v624 = vpack.c.b16 %v506, %v504
  %v625 = vpack.c.b16 %v509, %v507
  %v626 = vpack.c.b16 %v510, %v508
  %v627 = vpack.c.b16 %v513, %v511
  %v628 = vpack.c.b16 %v514, %v512
  %v629 = vpack.c.b16 %v517, %v515
  %v630 = vpack.c.b16 %v518, %v516
  %743 = vmatprep.subr.bf16.mxu0 %v534
  %744 = vmatpush1.bf16.msra.mxu0 %v533
  %745 = vmatprep.subr.bf16.mxu0 %v532
  %746 = vmatpush1.bf16.msra.mxu0 %v531
  %747 = vmatprep.subr.bf16.mxu0 %v530
  %748 = vmatpush1.bf16.msra.mxu0 %v529
  %749 = vmatprep.subr.bf16.mxu0 %v528
  %750 = vmatpush1.bf16.msra.mxu0 %v527
  %751 = vmatprep.subr.bf16.mxu0 %v526
  %752 = vmatpush1.bf16.msra.mxu0 %v525
  %753 = vmatprep.subr.bf16.mxu0 %v524
  %754 = vmatpush1.bf16.msra.mxu0 %v523
  %755 = vmatprep.subr.bf16.mxu0 %v522
  %756 = vmatpush1.bf16.msra.mxu0 %v521
  %757 = vmatprep.subr.bf16.mxu0 %v520
  %758 = vmatpush1.bf16.msra.mxu0 %v519
  %759 = vmatprep.subr.bf16.mxu0 %v550
  %760 = vmatpush2.bf16.msra.mxu0 %v549
  %761 = vmatprep.subr.bf16.mxu0 %v548
  %762 = vmatpush2.bf16.msra.mxu0 %v547
  %763 = vmatprep.subr.bf16.mxu0 %v546
  %764 = vmatpush2.bf16.msra.mxu0 %v545
  %765 = vmatprep.subr.bf16.mxu0 %v544
  %766 = vmatpush2.bf16.msra.mxu0 %v543
  %767 = vmatprep.subr.bf16.mxu0 %v542
  %768 = vmatpush2.bf16.msra.mxu0 %v541
  %769 = vmatprep.subr.bf16.mxu0 %v540
  %770 = vmatpush2.bf16.msra.mxu0 %v539
  %771 = vmatprep.subr.bf16.mxu0 %v538
  %772 = vmatpush2.bf16.msra.mxu0 %v537
  %773 = vmatprep.subr.bf16.mxu0 %v536
  %774 = vmatpush2.bf16.msra.mxu0 %v535
  %775 = vmatprep.mubr.bf16.mxu0 %v170
  %776 = vmatmul.mubr.bf16.gmra.mxu0 %v169
  %v777 = vpop.f32.mrf.mxu0
  %v778 = vadd.f32 %v140, %v777
  %v779 = vpop.f32.mrf.mxu0
  %v780 = vadd.f32 %v144, %v779
  %v781 = vpop.f32.mrf.mxu0
  %v782 = vadd.f32 %v140, %v781
  %v783 = vpop.f32.mrf.mxu0
  %v784 = vadd.f32 %v144, %v783
  %785 = vdwg.mxu0
  %786 = vmatprep.subr.bf16.mxu0 %v566
  %787 = vmatpush1.bf16.msra.mxu0 %v565
  %788 = vmatprep.subr.bf16.mxu0 %v564
  %789 = vmatpush1.bf16.msra.mxu0 %v563
  %790 = vmatprep.subr.bf16.mxu0 %v562
  %791 = vmatpush1.bf16.msra.mxu0 %v561
  %792 = vmatprep.subr.bf16.mxu0 %v560
  %793 = vmatpush1.bf16.msra.mxu0 %v559
  %794 = vmatprep.subr.bf16.mxu0 %v558
  %795 = vmatpush1.bf16.msra.mxu0 %v557
  %796 = vmatprep.subr.bf16.mxu0 %v556
  %797 = vmatpush1.bf16.msra.mxu0 %v555
  %798 = vmatprep.subr.bf16.mxu0 %v554
  %799 = vmatpush1.bf16.msra.mxu0 %v553
  %800 = vmatprep.subr.bf16.mxu0 %v552
  %801 = vmatpush1.bf16.msra.mxu0 %v551
  %802 = vmatprep.subr.bf16.mxu0 %v582
  %803 = vmatpush2.bf16.msra.mxu0 %v581
  %804 = vmatprep.subr.bf16.mxu0 %v580
  %805 = vmatpush2.bf16.msra.mxu0 %v579
  %806 = vmatprep.subr.bf16.mxu0 %v578
  %807 = vmatpush2.bf16.msra.mxu0 %v577
  %808 = vmatprep.subr.bf16.mxu0 %v576
  %809 = vmatpush2.bf16.msra.mxu0 %v575
  %810 = vmatprep.subr.bf16.mxu0 %v574
  %811 = vmatpush2.bf16.msra.mxu0 %v573
  %812 = vmatprep.subr.bf16.mxu0 %v572
  %813 = vmatpush2.bf16.msra.mxu0 %v571
  %814 = vmatprep.subr.bf16.mxu0 %v570
  %815 = vmatpush2.bf16.msra.mxu0 %v569
  %816 = vmatprep.subr.bf16.mxu0 %v568
  %817 = vmatpush2.bf16.msra.mxu0 %v567
  %818 = vmatprep.mubr.bf16.mxu0 %v172
  %819 = vmatmul.mubr.bf16.gmra.mxu0 %v171
  %v820 = vpop.f32.mrf.mxu0
  %v821 = vadd.f32 %v778, %v820
  %v822 = vpop.f32.mrf.mxu0
  %v823 = vadd.f32 %v780, %v822
  %v824 = vpop.f32.mrf.mxu0
  %v825 = vadd.f32 %v782, %v824
  %v826 = vpop.f32.mrf.mxu0
  %v827 = vadd.f32 %v784, %v826
  %828 = vdwg.mxu0
  %829 = vmatprep.subr.bf16.mxu0 %v598
  %830 = vmatpush1.bf16.msra.mxu0 %v597
  %831 = vmatprep.subr.bf16.mxu0 %v596
  %832 = vmatpush1.bf16.msra.mxu0 %v595
  %833 = vmatprep.subr.bf16.mxu0 %v594
  %834 = vmatpush1.bf16.msra.mxu0 %v593
  %835 = vmatprep.subr.bf16.mxu0 %v592
  %836 = vmatpush1.bf16.msra.mxu0 %v591
  %837 = vmatprep.subr.bf16.mxu0 %v590
  %838 = vmatpush1.bf16.msra.mxu0 %v589
  %839 = vmatprep.subr.bf16.mxu0 %v588
  %840 = vmatpush1.bf16.msra.mxu0 %v587
  %841 = vmatprep.subr.bf16.mxu0 %v586
  %842 = vmatpush1.bf16.msra.mxu0 %v585
  %843 = vmatprep.subr.bf16.mxu0 %v584
  %844 = vmatpush1.bf16.msra.mxu0 %v583
  %845 = vmatprep.subr.bf16.mxu0 %v614
  %846 = vmatpush2.bf16.msra.mxu0 %v613
  %847 = vmatprep.subr.bf16.mxu0 %v612
  %848 = vmatpush2.bf16.msra.mxu0 %v611
  %849 = vmatprep.subr.bf16.mxu0 %v610
  %850 = vmatpush2.bf16.msra.mxu0 %v609
  %851 = vmatprep.subr.bf16.mxu0 %v608
  %852 = vmatpush2.bf16.msra.mxu0 %v607
  %853 = vmatprep.subr.bf16.mxu0 %v606
  %854 = vmatpush2.bf16.msra.mxu0 %v605
  %855 = vmatprep.subr.bf16.mxu0 %v604
  %856 = vmatpush2.bf16.msra.mxu0 %v603
  %857 = vmatprep.subr.bf16.mxu0 %v602
  %858 = vmatpush2.bf16.msra.mxu0 %v601
  %859 = vmatprep.subr.bf16.mxu0 %v600
  %860 = vmatpush2.bf16.msra.mxu0 %v599
  %861 = vmatprep.mubr.bf16.mxu0 %v174
  %862 = vmatmul.mubr.bf16.gmra.mxu0 %v173
  %v863 = vpop.f32.mrf.mxu0
  %v864 = vadd.f32 %v821, %v863
  %v865 = vpop.f32.mrf.mxu0
  %v866 = vadd.f32 %v823, %v865
  %v867 = vpop.f32.mrf.mxu0
  %v868 = vadd.f32 %v825, %v867
  %v869 = vpop.f32.mrf.mxu0
  %v870 = vadd.f32 %v827, %v869
  %871 = vdwg.mxu0
  %872 = vmatprep.subr.bf16.mxu0 %v630
  %873 = vmatpush1.bf16.msra.mxu0 %v629
  %874 = vmatprep.subr.bf16.mxu0 %v628
  %875 = vmatpush1.bf16.msra.mxu0 %v627
  %876 = vmatprep.subr.bf16.mxu0 %v626
  %877 = vmatpush1.bf16.msra.mxu0 %v625
  %878 = vmatprep.subr.bf16.mxu0 %v624
  %879 = vmatpush1.bf16.msra.mxu0 %v623
  %880 = vmatprep.subr.bf16.mxu0 %v622
  %881 = vmatpush1.bf16.msra.mxu0 %v621
  %882 = vmatprep.subr.bf16.mxu0 %v620
  %883 = vmatpush1.bf16.msra.mxu0 %v619
  %884 = vmatprep.subr.bf16.mxu0 %v618
  %885 = vmatpush1.bf16.msra.mxu0 %v617
  %886 = vmatprep.subr.bf16.mxu0 %v616
  %887 = vmatpush1.bf16.msra.mxu0 %v615
  %888 = vmatprep.subr.bf16.mxu0 0
  %889 = vmatpush2.bf16.msra.mxu0 0
  %890 = vmatprep.subr.bf16.mxu0 0
  %891 = vmatpush2.bf16.msra.mxu0 0
  %892 = vmatprep.subr.bf16.mxu0 0
  %893 = vmatpush2.bf16.msra.mxu0 0
  %894 = vmatprep.subr.bf16.mxu0 0
  %895 = vmatpush2.bf16.msra.mxu0 0
  %896 = vmatprep.subr.bf16.mxu0 0
  %897 = vmatpush2.bf16.msra.mxu0 0
  %898 = vmatprep.subr.bf16.mxu0 0
  %899 = vmatpush2.bf16.msra.mxu0 0
  %900 = vmatprep.subr.bf16.mxu0 0
  %901 = vmatpush2.bf16.msra.mxu0 0
  %902 = vmatprep.subr.bf16.mxu0 0
  %903 = vmatpush2.bf16.msra.mxu0 0
  %904 = vmatprep.mubr.bf16.mxu0 0
  %905 = vmatmul.mubr.bf16.gmra.mxu0 %v175
  %v906 = vpop.f32.mrf.mxu0
  %v907 = vadd.f32 %v864, %v906
  %v908 = vpop.f32.mrf.mxu0
  %v909 = vadd.f32 %v866, %v908
  %v910 = vpop.f32.mrf.mxu0
  %v911 = vadd.f32 %v868, %v910
  %v912 = vpop.f32.mrf.mxu0
  %v913 = vadd.f32 %v870, %v912
  %914 = vdwg.mxu0
  %v915 = vmul.f32 %v907, 0.01
  %v916 = vmul.f32 %v909, 0.01
  %v917 = vmul.f32 %v911, 0.01
  %v918 = vmul.f32 %v913, 0.01
  %v919 = vmax.f32 %v907, %v915
  %v920 = vmax.f32 %v909, %v916
  %v921 = vmax.f32 %v911, %v917
  %v922 = vmax.f32 %v913, %v918
  %923 = vst [vmem:[%s3] sm:$0xff] %v919
  %924 = vst [vmem:[%s3 + $0x8] sm:$0xff] %v920
  %925 = vst [vmem:[%s3 + $0x10] sm:$0xff] %v921
  %926 = vst [vmem:[%s3 + $0x18] sm:$0xff] %v922
  // Predicated region
  $region14: #{forward.22} parent=0 // pred_check
    _
  $region15: #{forward.22} parent=0 // pred_check_branch
    %928 = sbr.rel (0) target = $region17
  $region16: #{forward.22} parent=0 // pred_region
    _
  $region17: #{forward.22} parent=0 // pred_fallthru
    _
  // Predicated region
  $region18: #{forward.22} parent=0 // pred_check
    _
  $region19: #{forward.22} parent=0 // pred_check_branch
    %930 = sbr.rel (0) target = $region21
  $region20: #{forward.22} parent=0 // pred_region
    _
  $region21: #{forward.22} parent=0 // pred_fallthru
    _

// kernel: forward.26
$region0: #{forward.26}
  #allocation0 [shape = 'u32[]', space=smem, size = 0x4, offset = 0x4, fixed_abs, tag = 'smem constant byte address 0x4 - core index']
  #allocation1 [shape = 'u32[144,128]{1,0:T(1,128)}', space=vmem, size = 0x12000, scoped, tag = 'internal scratch']
  %s0 = inlined_call_operand.vmem [shape: bf16[16,384], index: 0, kind: input, shape index: {}]
  %s1 = inlined_call_operand.vmem [shape: bf16[384,256], index: 1, kind: input, shape index: {}]
  %s2 = inlined_call_operand.vmem [shape: f32[1,256], index: 2, kind: input, shape index: {}]
  %s3 = inlined_call_operand.vmem [shape: f32[16,256], index: 3, kind: output, shape index: {}]
  %s4 = sld [smem:[#allocation0]]
  $region22: #{forward.26} parent=0
    _
  %s6 = ssub.s32 1, %s4
  %s7 = scalar_select 0, %s6, %s4
  // Predicated region
  $region2: #{forward.26} parent=0 // pred_check
    _
  $region3: #{forward.26} parent=0 // pred_check_branch
    %9 = sbr.rel (0) target = $region5
  $region4: #{forward.26} parent=0 // pred_region
    _
  $region5: #{forward.26} parent=0 // pred_fallthru
    _
  // Predicated region
  $region6: #{forward.26} parent=0 // pred_check
    _
  $region7: #{forward.26} parent=0 // pred_check_branch
    %11 = sbr.rel (0) target = $region9
  $region8: #{forward.26} parent=0 // pred_region
    _
  $region9: #{forward.26} parent=0 // pred_fallthru
    _
  // Predicated region
  $region10: #{forward.26} parent=0 // pred_check
    _
  $region11: #{forward.26} parent=0 // pred_check_branch
    %13 = sbr.rel (0) target = $region13
  $region12: #{forward.26} parent=0 // pred_region
    _
  $region13: #{forward.26} parent=0 // pred_fallthru
    _
  %v15 = vld [vmem:[%s0] sm:$0xff]
  %v16 = vld [vmem:[%s0 + $0x8] sm:$0xf]
  %v17 = vld [vmem:[%s0 + $0xc] sm:$0xff]
  %v18 = vld [vmem:[%s0 + $0x14] sm:$0xf]
  %v19 = vld [vmem:[%s1] sm:$0xff]
  %v20 = vld [vmem:[%s1 + $0x8] sm:$0xff]
  %v21 = vld [vmem:[%s1 + $0x10] sm:$0xff]
  %v22 = vld [vmem:[%s1 + $0x18] sm:$0xff]
  %v23 = vld [vmem:[%s1 + $0x20] sm:$0xff]
  %v24 = vld [vmem:[%s1 + $0x28] sm:$0xff]
  %v25 = vld [vmem:[%s1 + $0x30] sm:$0xff]
  %v26 = vld [vmem:[%s1 + $0x38] sm:$0xff]
  %v27 = vld [vmem:[%s1 + $0x40] sm:$0xff]
  %v28 = vld [vmem:[%s1 + $0x48] sm:$0xff]
  %v29 = vld [vmem:[%s1 + $0x50] sm:$0xff]
  %v30 = vld [vmem:[%s1 + $0x58] sm:$0xff]
  %v31 = vld [vmem:[%s1 + $0x60] sm:$0xff]
  %v32 = vld [vmem:[%s1 + $0x68] sm:$0xff]
  %v33 = vld [vmem:[%s1 + $0x70] sm:$0xff]
  %v34 = vld [vmem:[%s1 + $0x78] sm:$0xff]
  %v35 = vld [vmem:[%s1 + $0x80] sm:$0xff]
  %v36 = vld [vmem:[%s1 + $0x88] sm:$0xff]
  %v37 = vld [vmem:[%s1 + $0x90] sm:$0xff]
  %v38 = vld [vmem:[%s1 + $0x98] sm:$0xff]
  %v39 = vld [vmem:[%s1 + $0xa0] sm:$0xff]
  %v40 = vld [vmem:[%s1 + $0xa8] sm:$0xff]
  %v41 = vld [vmem:[%s1 + $0xb0] sm:$0xff]
  %v42 = vld [vmem:[%s1 + $0xb8] sm:$0xff]
  %v43 = vld [vmem:[%s1 + $0xc0] sm:$0xff]
  %v44 = vld [vmem:[%s1 + $0xc8] sm:$0xff]
  %v45 = vld [vmem:[%s1 + $0xd0] sm:$0xff]
  %v46 = vld [vmem:[%s1 + $0xd8] sm:$0xff]
  %v47 = vld [vmem:[%s1 + $0xe0] sm:$0xff]
  %v48 = vld [vmem:[%s1 + $0xe8] sm:$0xff]
  %v49 = vld [vmem:[%s1 + $0xf0] sm:$0xff]
  %v50 = vld [vmem:[%s1 + $0xf8] sm:$0xff]
  %v51 = vld [vmem:[%s1 + $0x100] sm:$0xff]
  %v52 = vld [vmem:[%s1 + $0x108] sm:$0xff]
  %v53 = vld [vmem:[%s1 + $0x110] sm:$0xff]
  %v54 = vld [vmem:[%s1 + $0x118] sm:$0xff]
  %v55 = vld [vmem:[%s1 + $0x120] sm:$0xff]
  %v56 = vld [vmem:[%s1 + $0x128] sm:$0xff]
  %v57 = vld [vmem:[%s1 + $0x130] sm:$0xff]
  %v58 = vld [vmem:[%s1 + $0x138] sm:$0xff]
  %v59 = vld [vmem:[%s1 + $0x140] sm:$0xff]
  %v60 = vld [vmem:[%s1 + $0x148] sm:$0xff]
  %v61 = vld [vmem:[%s1 + $0x150] sm:$0xff]
  %v62 = vld [vmem:[%s1 + $0x158] sm:$0xff]
  %v63 = vld [vmem:[%s1 + $0x160] sm:$0xff]
  %v64 = vld [vmem:[%s1 + $0x168] sm:$0xff]
  %v65 = vld [vmem:[%s1 + $0x170] sm:$0xff]
  %v66 = vld [vmem:[%s1 + $0x178] sm:$0xff]
  %v67 = vld [vmem:[%s2] sm:$0x3]
  %v69 = vlaneseq
  %v70 = vshrl.u32 %v69, 7
  %v71 = vsub.s32 0, %v70
  %v72 = vrot.slane %v67, %v71
  %v73 = vlaneseq
  %v74 = vshrl.u32 %v73, 7
  %v75 = vsub.s32 1, %v74
  %v76 = vrot.slane %v67, %v75
  %v83 = vunpack.c.l.b16 %v15
  %v84 = vunpack.c.h.b16 %v15
  %v85 = vunpack.c.l.b16 %v16
  %v86 = vunpack.c.l.b16 %v17
  %v87 = vunpack.c.h.b16 %v17
  %v88 = vunpack.c.l.b16 %v18
  %v89 = vpack.c.b16 %v86, %v83
  %v90 = vpack.c.b16 %v87, %v84
  %v91 = vpack.c.b16 %v88, %v85
  %v143 = vunpack.c.l.b16 %v19
  %v144 = vunpack.c.h.b16 %v19
  %v145 = vunpack.c.l.b16 %v20
  %v146 = vunpack.c.h.b16 %v20
  %v147 = vunpack.c.l.b16 %v21
  %v148 = vunpack.c.h.b16 %v21
  %v149 = vunpack.c.l.b16 %v22
  %v150 = vunpack.c.h.b16 %v22
  %v151 = vunpack.c.l.b16 %v23
  %v152 = vunpack.c.h.b16 %v23
  %v153 = vunpack.c.l.b16 %v24
  %v154 = vunpack.c.h.b16 %v24
  %v155 = vunpack.c.l.b16 %v25
  %v156 = vunpack.c.h.b16 %v25
  %v157 = vunpack.c.l.b16 %v26
  %v158 = vunpack.c.h.b16 %v26
  %v159 = vunpack.c.l.b16 %v27
  %v160 = vunpack.c.h.b16 %v27
  %v161 = vunpack.c.l.b16 %v28
  %v162 = vunpack.c.h.b16 %v28
  %v163 = vunpack.c.l.b16 %v29
  %v164 = vunpack.c.h.b16 %v29
  %v165 = vunpack.c.l.b16 %v30
  %v166 = vunpack.c.h.b16 %v30
  %v167 = vunpack.c.l.b16 %v31
  %v168 = vunpack.c.h.b16 %v31
  %v169 = vunpack.c.l.b16 %v32
  %v170 = vunpack.c.h.b16 %v32
  %v171 = vunpack.c.l.b16 %v33
  %v172 = vunpack.c.h.b16 %v33
  %v173 = vunpack.c.l.b16 %v34
  %v174 = vunpack.c.h.b16 %v34
  %v175 = vunpack.c.l.b16 %v35
  %v176 = vunpack.c.h.b16 %v35
  %v177 = vunpack.c.l.b16 %v36
  %v178 = vunpack.c.h.b16 %v36
  %v179 = vunpack.c.l.b16 %v37
  %v180 = vunpack.c.h.b16 %v37
  %v181 = vunpack.c.l.b16 %v38
  %v182 = vunpack.c.h.b16 %v38
  %v183 = vunpack.c.l.b16 %v39
  %v184 = vunpack.c.h.b16 %v39
  %v185 = vunpack.c.l.b16 %v40
  %v186 = vunpack.c.h.b16 %v40
  %v187 = vunpack.c.l.b16 %v41
  %v188 = vunpack.c.h.b16 %v41
  %v189 = vunpack.c.l.b16 %v42
  %v190 = vunpack.c.h.b16 %v42
  %v191 = vunpack.c.l.b16 %v43
  %v192 = vunpack.c.h.b16 %v43
  %v193 = vunpack.c.l.b16 %v44
  %v194 = vunpack.c.h.b16 %v44
  %v195 = vunpack.c.l.b16 %v45
  %v196 = vunpack.c.h.b16 %v45
  %v197 = vunpack.c.l.b16 %v46
  %v198 = vunpack.c.h.b16 %v46
  %v199 = vunpack.c.l.b16 %v47
  %v200 = vunpack.c.h.b16 %v47
  %v201 = vunpack.c.l.b16 %v48
  %v202 = vunpack.c.h.b16 %v48
  %v203 = vunpack.c.l.b16 %v49
  %v204 = vunpack.c.h.b16 %v49
  %v205 = vunpack.c.l.b16 %v50
  %v206 = vunpack.c.h.b16 %v50
  %v207 = vunpack.c.l.b16 %v51
  %v208 = vunpack.c.h.b16 %v51
  %v209 = vunpack.c.l.b16 %v52
  %v210 = vunpack.c.h.b16 %v52
  %v211 = vunpack.c.l.b16 %v53
  %v212 = vunpack.c.h.b16 %v53
  %v213 = vunpack.c.l.b16 %v54
  %v214 = vunpack.c.h.b16 %v54
  %v215 = vunpack.c.l.b16 %v55
  %v216 = vunpack.c.h.b16 %v55
  %v217 = vunpack.c.l.b16 %v56
  %v218 = vunpack.c.h.b16 %v56
  %v219 = vunpack.c.l.b16 %v57
  %v220 = vunpack.c.h.b16 %v57
  %v221 = vunpack.c.l.b16 %v58
  %v222 = vunpack.c.h.b16 %v58
  %v223 = vunpack.c.l.b16 %v59
  %v224 = vunpack.c.h.b16 %v59
  %v225 = vunpack.c.l.b16 %v60
  %v226 = vunpack.c.h.b16 %v60
  %v227 = vunpack.c.l.b16 %v61
  %v228 = vunpack.c.h.b16 %v61
  %v229 = vunpack.c.l.b16 %v62
  %v230 = vunpack.c.h.b16 %v62
  %v231 = vunpack.c.l.b16 %v63
  %v232 = vunpack.c.h.b16 %v63
  %v233 = vunpack.c.l.b16 %v64
  %v234 = vunpack.c.h.b16 %v64
  %v235 = vunpack.c.l.b16 %v65
  %v236 = vunpack.c.h.b16 %v65
  %v237 = vunpack.c.l.b16 %v66
  %v238 = vunpack.c.h.b16 %v66
  %v239 = vpack.c.b16 %v145, %v143
  %v240 = vpack.c.b16 %v146, %v144
  %v241 = vpack.c.b16 %v149, %v147
  %v242 = vpack.c.b16 %v150, %v148
  %v243 = vpack.c.b16 %v153, %v151
  %v244 = vpack.c.b16 %v154, %v152
  %v245 = vpack.c.b16 %v157, %v155
  %v246 = vpack.c.b16 %v158, %v156
  %v247 = vpack.c.b16 %v161, %v159
  %v248 = vpack.c.b16 %v162, %v160
  %v249 = vpack.c.b16 %v165, %v163
  %v250 = vpack.c.b16 %v166, %v164
  %v251 = vpack.c.b16 %v169, %v167
  %v252 = vpack.c.b16 %v170, %v168
  %v253 = vpack.c.b16 %v173, %v171
  %v254 = vpack.c.b16 %v174, %v172
  %v255 = vpack.c.b16 %v177, %v175
  %v256 = vpack.c.b16 %v178, %v176
  %v257 = vpack.c.b16 %v181, %v179
  %v258 = vpack.c.b16 %v182, %v180
  %v259 = vpack.c.b16 %v185, %v183
  %v260 = vpack.c.b16 %v186, %v184
  %v261 = vpack.c.b16 %v189, %v187
  %v262 = vpack.c.b16 %v190, %v188
  %v263 = vpack.c.b16 %v193, %v191
  %v264 = vpack.c.b16 %v194, %v192
  %v265 = vpack.c.b16 %v197, %v195
  %v266 = vpack.c.b16 %v198, %v196
  %v267 = vpack.c.b16 %v201, %v199
  %v268 = vpack.c.b16 %v202, %v200
  %v269 = vpack.c.b16 %v205, %v203
  %v270 = vpack.c.b16 %v206, %v204
  %v271 = vpack.c.b16 %v209, %v207
  %v272 = vpack.c.b16 %v210, %v208
  %v273 = vpack.c.b16 %v213, %v211
  %v274 = vpack.c.b16 %v214, %v212
  %v275 = vpack.c.b16 %v217, %v215
  %v276 = vpack.c.b16 %v218, %v216
  %v277 = vpack.c.b16 %v221, %v219
  %v278 = vpack.c.b16 %v222, %v220
  %v279 = vpack.c.b16 %v225, %v223
  %v280 = vpack.c.b16 %v226, %v224
  %v281 = vpack.c.b16 %v229, %v227
  %v282 = vpack.c.b16 %v230, %v228
  %v283 = vpack.c.b16 %v233, %v231
  %v284 = vpack.c.b16 %v234, %v232
  %v285 = vpack.c.b16 %v237, %v235
  %v286 = vpack.c.b16 %v238, %v236
  %335 = vmatprep.subr.bf16.mxu0 %v254
  %336 = vmatpush1.bf16.msra.mxu0 %v253
  %337 = vmatprep.subr.bf16.mxu0 %v252
  %338 = vmatpush1.bf16.msra.mxu0 %v251
  %339 = vmatprep.subr.bf16.mxu0 %v250
  %340 = vmatpush1.bf16.msra.mxu0 %v249
  %341 = vmatprep.subr.bf16.mxu0 %v248
  %342 = vmatpush1.bf16.msra.mxu0 %v247
  %343 = vmatprep.subr.bf16.mxu0 %v246
  %344 = vmatpush1.bf16.msra.mxu0 %v245
  %345 = vmatprep.subr.bf16.mxu0 %v244
  %346 = vmatpush1.bf16.msra.mxu0 %v243
  %347 = vmatprep.subr.bf16.mxu0 %v242
  %348 = vmatpush1.bf16.msra.mxu0 %v241
  %349 = vmatprep.subr.bf16.mxu0 %v240
  %350 = vmatpush1.bf16.msra.mxu0 %v239
  %351 = vmatprep.subr.bf16.mxu0 %v270
  %352 = vmatpush2.bf16.msra.mxu0 %v269
  %353 = vmatprep.subr.bf16.mxu0 %v268
  %354 = vmatpush2.bf16.msra.mxu0 %v267
  %355 = vmatprep.subr.bf16.mxu0 %v266
  %356 = vmatpush2.bf16.msra.mxu0 %v265
  %357 = vmatprep.subr.bf16.mxu0 %v264
  %358 = vmatpush2.bf16.msra.mxu0 %v263
  %359 = vmatprep.subr.bf16.mxu0 %v262
  %360 = vmatpush2.bf16.msra.mxu0 %v261
  %361 = vmatprep.subr.bf16.mxu0 %v260
  %362 = vmatpush2.bf16.msra.mxu0 %v259
  %363 = vmatprep.subr.bf16.mxu0 %v258
  %364 = vmatpush2.bf16.msra.mxu0 %v257
  %365 = vmatprep.subr.bf16.mxu0 %v256
  %366 = vmatpush2.bf16.msra.mxu0 %v255
  %367 = vmatprep.mubr.bf16.mxu0 %v90
  %368 = vmatmul.mubr.bf16.gmra.mxu0 %v89
  %v369 = vpop.f32.mrf.mxu0
  %v370 = vadd.f32 %v72, %v369
  %v371 = vpop.f32.mrf.mxu0
  %v372 = vadd.f32 %v76, %v371
  %v373 = vpop.f32.mrf.mxu0
  %v374 = vadd.f32 %v72, %v373
  %v375 = vpop.f32.mrf.mxu0
  %v376 = vadd.f32 %v76, %v375
  %377 = vdwg.mxu0
  %378 = vmatprep.subr.bf16.mxu0 %v286
  %379 = vmatpush1.bf16.msra.mxu0 %v285
  %380 = vmatprep.subr.bf16.mxu0 %v284
  %381 = vmatpush1.bf16.msra.mxu0 %v283
  %382 = vmatprep.subr.bf16.mxu0 %v282
  %383 = vmatpush1.bf16.msra.mxu0 %v281
  %384 = vmatprep.subr.bf16.mxu0 %v280
  %385 = vmatpush1.bf16.msra.mxu0 %v279
  %386 = vmatprep.subr.bf16.mxu0 %v278
  %387 = vmatpush1.bf16.msra.mxu0 %v277
  %388 = vmatprep.subr.bf16.mxu0 %v276
  %389 = vmatpush1.bf16.msra.mxu0 %v275
  %390 = vmatprep.subr.bf16.mxu0 %v274
  %391 = vmatpush1.bf16.msra.mxu0 %v273
  %392 = vmatprep.subr.bf16.mxu0 %v272
  %393 = vmatpush1.bf16.msra.mxu0 %v271
  %394 = vmatprep.subr.bf16.mxu0 0
  %395 = vmatpush2.bf16.msra.mxu0 0
  %396 = vmatprep.subr.bf16.mxu0 0
  %397 = vmatpush2.bf16.msra.mxu0 0
  %398 = vmatprep.subr.bf16.mxu0 0
  %399 = vmatpush2.bf16.msra.mxu0 0
  %400 = vmatprep.subr.bf16.mxu0 0
  %401 = vmatpush2.bf16.msra.mxu0 0
  %402 = vmatprep.subr.bf16.mxu0 0
  %403 = vmatpush2.bf16.msra.mxu0 0
  %404 = vmatprep.subr.bf16.mxu0 0
  %405 = vmatpush2.bf16.msra.mxu0 0
  %406 = vmatprep.subr.bf16.mxu0 0
  %407 = vmatpush2.bf16.msra.mxu0 0
  %408 = vmatprep.subr.bf16.mxu0 0
  %409 = vmatpush2.bf16.msra.mxu0 0
  %410 = vmatprep.mubr.bf16.mxu0 0
  %411 = vmatmul.mubr.bf16.gmra.mxu0 %v91
  %v412 = vpop.f32.mrf.mxu0
  %v413 = vadd.f32 %v370, %v412
  %v414 = vpop.f32.mrf.mxu0
  %v415 = vadd.f32 %v372, %v414
  %v416 = vpop.f32.mrf.mxu0
  %v417 = vadd.f32 %v374, %v416
  %v418 = vpop.f32.mrf.mxu0
  %v419 = vadd.f32 %v376, %v418
  %420 = vdwg.mxu0
  %v421 = vtanh.pop %v413
  %v422 = vtanh.pop %v415
  %v423 = vtanh.pop %v417
  %v424 = vtanh.pop %v419
  %425 = vst [vmem:[%s3] sm:$0xff] %v421
  %426 = vst [vmem:[%s3 + $0x8] sm:$0xff] %v422
  %427 = vst [vmem:[%s3 + $0x10] sm:$0xff] %v423
  %428 = vst [vmem:[%s3 + $0x18] sm:$0xff] %v424
  // Predicated region
  $region14: #{forward.26} parent=0 // pred_check
    _
  $region15: #{forward.26} parent=0 // pred_check_branch
    %430 = sbr.rel (0) target = $region17
  $region16: #{forward.26} parent=0 // pred_region
    _
  $region17: #{forward.26} parent=0 // pred_fallthru
    _
  // Predicated region
  $region18: #{forward.26} parent=0 // pred_check
    _
  $region19: #{forward.26} parent=0 // pred_check_branch
    %432 = sbr.rel (0) target = $region21
  $region20: #{forward.26} parent=0 // pred_region
    _
  $region21: #{forward.26} parent=0 // pred_fallthru
    _

// kernel: forward.27
$region0: #{forward.27}
  #allocation0 [shape = 'u32[]', space=smem, size = 0x4, offset = 0x4, fixed_abs, tag = 'smem constant byte address 0x4 - core index']
  #allocation1 [shape = 'u32[144,128]{1,0:T(1,128)}', space=vmem, size = 0x12000, scoped, tag = 'internal scratch']
  %s0 = inlined_call_operand.vmem [shape: bf16[16,256], index: 0, kind: input, shape index: {}]
  %s1 = inlined_call_operand.vmem [shape: bf16[256,1536], index: 1, kind: input, shape index: {}]
  %s2 = inlined_call_operand.vmem [shape: f32[1,1536], index: 2, kind: input, shape index: {}]
  %s3 = inlined_call_operand.vmem [shape: f32[16,1536], index: 3, kind: output, shape index: {}]
  %s4 = sld [smem:[#allocation0]]
  $region22: #{forward.27} parent=0
    _
  %s6 = ssub.s32 1, %s4
  %s7 = scalar_select 0, %s6, %s4
  // Predicated region
  $region2: #{forward.27} parent=0 // pred_check
    _
  $region3: #{forward.27} parent=0 // pred_check_branch
    %9 = sbr.rel (0) target = $region5
  $region4: #{forward.27} parent=0 // pred_region
    _
  $region5: #{forward.27} parent=0 // pred_fallthru
    _
  // Predicated region
  $region6: #{forward.27} parent=0 // pred_check
    _
  $region7: #{forward.27} parent=0 // pred_check_branch
    %11 = sbr.rel (0) target = $region9
  $region8: #{forward.27} parent=0 // pred_region
    _
  $region9: #{forward.27} parent=0 // pred_fallthru
    _
  // Predicated region
  $region10: #{forward.27} parent=0 // pred_check
    _
  $region11: #{forward.27} parent=0 // pred_check_branch
    %13 = sbr.rel (0) target = $region13
  $region12: #{forward.27} parent=0 // pred_region
    _
  $region13: #{forward.27} parent=0 // pred_fallthru
    _
  %v14 = vld [vmem:[%s0] sm:$0xff]
  %v15 = vld [vmem:[%s0 + $0x8] sm:$0xff]
  %v16 = vld [vmem:[%s1] sm:$0xff]
  %v17 = vld [vmem:[%s1 + $0x8] sm:$0xff]
  %v18 = vld [vmem:[%s1 + $0x10] sm:$0xff]
  %v19 = vld [vmem:[%s1 + $0x18] sm:$0xff]
  %v20 = vld [vmem:[%s1 + $0x20] sm:$0xff]
  %v21 = vld [vmem:[%s1 + $0x28] sm:$0xff]
  %v22 = vld [vmem:[%s1 + $0x30] sm:$0xff]
  %v23 = vld [vmem:[%s1 + $0x38] sm:$0xff]
  %v24 = vld [vmem:[%s1 + $0x40] sm:$0xff]
  %v25 = vld [vmem:[%s1 + $0x48] sm:$0xff]
  %v26 = vld [vmem:[%s1 + $0x50] sm:$0xff]
  %v27 = vld [vmem:[%s1 + $0x58] sm:$0xff]
  %v28 = vld [vmem:[%s1 + $0x60] sm:$0xff]
  %v29 = vld [vmem:[%s1 + $0x68] sm:$0xff]
  %v30 = vld [vmem:[%s1 + $0x70] sm:$0xff]
  %v31 = vld [vmem:[%s1 + $0x78] sm:$0xff]
  %v32 = vld [vmem:[%s1 + $0x80] sm:$0xff]
  %v33 = vld [vmem:[%s1 + $0x88] sm:$0xff]
  %v34 = vld [vmem:[%s1 + $0x90] sm:$0xff]
  %v35 = vld [vmem:[%s1 + $0x98] sm:$0xff]
  %v36 = vld [vmem:[%s1 + $0xa0] sm:$0xff]
  %v37 = vld [vmem:[%s1 + $0xa8] sm:$0xff]
  %v38 = vld [vmem:[%s1 + $0xb0] sm:$0xff]
  %v39 = vld [vmem:[%s1 + $0xb8] sm:$0xff]
  %v40 = vld [vmem:[%s1 + $0xc0] sm:$0xff]
  %v41 = vld [vmem:[%s1 + $0xc8] sm:$0xff]
  %v42 = vld [vmem:[%s1 + $0xd0] sm:$0xff]
  %v43 = vld [vmem:[%s1 + $0xd8] sm:$0xff]
  %v44 = vld [vmem:[%s1 + $0xe0] sm:$0xff]
  %v45 = vld [vmem:[%s1 + $0xe8] sm:$0xff]
  %v46 = vld [vmem:[%s1 + $0xf0] sm:$0xff]
  %v47 = vld [vmem:[%s1 + $0xf8] sm:$0xff]
  %v48 = vld [vmem:[%s1 + $0x100] sm:$0xff]
  %v49 = vld [vmem:[%s1 + $0x108] sm:$0xff]
  %v50 = vld [vmem:[%s1 + $0x110] sm:$0xff]
  %v51 = vld [vmem:[%s1 + $0x118] sm:$0xff]
  %v52 = vld [vmem:[%s1 + $0x120] sm:$0xff]
  %v53 = vld [vmem:[%s1 + $0x128] sm:$0xff]
  %v54 = vld [vmem:[%s1 + $0x130] sm:$0xff]
  %v55 = vld [vmem:[%s1 + $0x138] sm:$0xff]
  %v56 = vld [vmem:[%s1 + $0x140] sm:$0xff]
  %v57 = vld [vmem:[%s1 + $0x148] sm:$0xff]
  %v58 = vld [vmem:[%s1 + $0x150] sm:$0xff]
  %v59 = vld [vmem:[%s1 + $0x158] sm:$0xff]
  %v60 = vld [vmem:[%s1 + $0x160] sm:$0xff]
  %v61 = vld [vmem:[%s1 + $0x168] sm:$0xff]
  %v62 = vld [vmem:[%s1 + $0x170] sm:$0xff]
  %v63 = vld [vmem:[%s1 + $0x178] sm:$0xff]
  %v64 = vld [vmem:[%s1 + $0x180] sm:$0xff]
  %v65 = vld [vmem:[%s1 + $0x188] sm:$0xff]
  %v66 = vld [vmem:[%s1 + $0x190] sm:$0xff]
  %v67 = vld [vmem:[%s1 + $0x198] sm:$0xff]
  %v68 = vld [vmem:[%s1 + $0x1a0] sm:$0xff]
  %v69 = vld [vmem:[%s1 + $0x1a8] sm:$0xff]
  %v70 = vld [vmem:[%s1 + $0x1b0] sm:$0xff]
  %v71 = vld [vmem:[%s1 + $0x1b8] sm:$0xff]
  %v72 = vld [vmem:[%s1 + $0x1c0] sm:$0xff]
  %v73 = vld [vmem:[%s1 + $0x1c8] sm:$0xff]
  %v74 = vld [vmem:[%s1 + $0x1d0] sm:$0xff]
  %v75 = vld [vmem:[%s1 + $0x1d8] sm:$0xff]
  %v76 = vld [vmem:[%s1 + $0x1e0] sm:$0xff]
  %v77 = vld [vmem:[%s1 + $0x1e8] sm:$0xff]
  %v78 = vld [vmem:[%s1 + $0x1f0] sm:$0xff]
  %v79 = vld [vmem:[%s1 + $0x1f8] sm:$0xff]
  %v80 = vld [vmem:[%s1 + $0x200] sm:$0xff]
  %v81 = vld [vmem:[%s1 + $0x208] sm:$0xff]
  %v82 = vld [vmem:[%s1 + $0x210] sm:$0xff]
  %v83 = vld [vmem:[%s1 + $0x218] sm:$0xff]
  %v84 = vld [vmem:[%s1 + $0x220] sm:$0xff]
  %v85 = vld [vmem:[%s1 + $0x228] sm:$0xff]
  %v86 = vld [vmem:[%s1 + $0x230] sm:$0xff]
  %v87 = vld [vmem:[%s1 + $0x238] sm:$0xff]
  %v88 = vld [vmem:[%s1 + $0x240] sm:$0xff]
  %v89 = vld [vmem:[%s1 + $0x248] sm:$0xff]
  %v90 = vld [vmem:[%s1 + $0x250] sm:$0xff]
  %v91 = vld [vmem:[%s1 + $0x258] sm:$0xff]
  %v92 = vld [vmem:[%s1 + $0x260] sm:$0xff]
  %v93 = vld [vmem:[%s1 + $0x268] sm:$0xff]
  %v94 = vld [vmem:[%s1 + $0x270] sm:$0xff]
  %v95 = vld [vmem:[%s1 + $0x278] sm:$0xff]
  %v96 = vld [vmem:[%s1 + $0x280] sm:$0xff]
  %v97 = vld [vmem:[%s1 + $0x288] sm:$0xff]
  %v98 = vld [vmem:[%s1 + $0x290] sm:$0xff]
  %v99 = vld [vmem:[%s1 + $0x298] sm:$0xff]
  %v100 = vld [vmem:[%s1 + $0x2a0] sm:$0xff]
  %v101 = vld [vmem:[%s1 + $0x2a8] sm:$0xff]
  %v102 = vld [vmem:[%s1 + $0x2b0] sm:$0xff]
  %v103 = vld [vmem:[%s1 + $0x2b8] sm:$0xff]
  %v104 = vld [vmem:[%s1 + $0x2c0] sm:$0xff]
  %v105 = vld [vmem:[%s1 + $0x2c8] sm:$0xff]
  %v106 = vld [vmem:[%s1 + $0x2d0] sm:$0xff]
  %v107 = vld [vmem:[%s1 + $0x2d8] sm:$0xff]
  %v108 = vld [vmem:[%s1 + $0x2e0] sm:$0xff]
  %v109 = vld [vmem:[%s1 + $0x2e8] sm:$0xff]
  %v110 = vld [vmem:[%s1 + $0x2f0] sm:$0xff]
  %v111 = vld [vmem:[%s1 + $0x2f8] sm:$0xff]
  %v112 = vld [vmem:[%s1 + $0x300] sm:$0xff]
  %v113 = vld [vmem:[%s1 + $0x308] sm:$0xff]
  %v114 = vld [vmem:[%s1 + $0x310] sm:$0xff]
  %v115 = vld [vmem:[%s1 + $0x318] sm:$0xff]
  %v116 = vld [vmem:[%s1 + $0x320] sm:$0xff]
  %v117 = vld [vmem:[%s1 + $0x328] sm:$0xff]
  %v118 = vld [vmem:[%s1 + $0x330] sm:$0xff]
  %v119 = vld [vmem:[%s1 + $0x338] sm:$0xff]
  %v120 = vld [vmem:[%s1 + $0x340] sm:$0xff]
  %v121 = vld [vmem:[%s1 + $0x348] sm:$0xff]
  %v122 = vld [vmem:[%s1 + $0x350] sm:$0xff]
  %v123 = vld [vmem:[%s1 + $0x358] sm:$0xff]
  %v124 = vld [vmem:[%s1 + $0x360] sm:$0xff]
  %v125 = vld [vmem:[%s1 + $0x368] sm:$0xff]
  %v126 = vld [vmem:[%s1 + $0x370] sm:$0xff]
  %v127 = vld [vmem:[%s1 + $0x378] sm:$0xff]
  %v128 = vld [vmem:[%s1 + $0x380] sm:$0xff]
  %v129 = vld [vmem:[%s1 + $0x388] sm:$0xff]
  %v130 = vld [vmem:[%s1 + $0x390] sm:$0xff]
  %v131 = vld [vmem:[%s1 + $0x398] sm:$0xff]
  %v132 = vld [vmem:[%s1 + $0x3a0] sm:$0xff]
  %v133 = vld [vmem:[%s1 + $0x3a8] sm:$0xff]
  %v134 = vld [vmem:[%s1 + $0x3b0] sm:$0xff]
  %v135 = vld [vmem:[%s1 + $0x3b8] sm:$0xff]
  %v136 = vld [vmem:[%s1 + $0x3c0] sm:$0xff]
  %v137 = vld [vmem:[%s1 + $0x3c8] sm:$0xff]
  %v138 = vld [vmem:[%s1 + $0x3d0] sm:$0xff]
  %v139 = vld [vmem:[%s1 + $0x3d8] sm:$0xff]
  %v140 = vld [vmem:[%s1 + $0x3e0] sm:$0xff]
  %v141 = vld [vmem:[%s1 + $0x3e8] sm:$0xff]
  %v142 = vld [vmem:[%s1 + $0x3f0] sm:$0xff]
  %v143 = vld [vmem:[%s1 + $0x3f8] sm:$0xff]
  %v144 = vld [vmem:[%s1 + $0x400] sm:$0xff]
  %v145 = vld [vmem:[%s1 + $0x408] sm:$0xff]
  %v146 = vld [vmem:[%s1 + $0x410] sm:$0xff]
  %v147 = vld [vmem:[%s1 + $0x418] sm:$0xff]
  %v148 = vld [vmem:[%s1 + $0x420] sm:$0xff]
  %v149 = vld [vmem:[%s1 + $0x428] sm:$0xff]
  %v150 = vld [vmem:[%s1 + $0x430] sm:$0xff]
  %v151 = vld [vmem:[%s1 + $0x438] sm:$0xff]
  %v152 = vld [vmem:[%s1 + $0x440] sm:$0xff]
  %v153 = vld [vmem:[%s1 + $0x448] sm:$0xff]
  %v154 = vld [vmem:[%s1 + $0x450] sm:$0xff]
  %v155 = vld [vmem:[%s1 + $0x458] sm:$0xff]
  %v156 = vld [vmem:[%s1 + $0x460] sm:$0xff]
  %v157 = vld [vmem:[%s1 + $0x468] sm:$0xff]
  %v158 = vld [vmem:[%s1 + $0x470] sm:$0xff]
  %v159 = vld [vmem:[%s1 + $0x478] sm:$0xff]
  %v160 = vld [vmem:[%s1 + $0x480] sm:$0xff]
  %v161 = vld [vmem:[%s1 + $0x488] sm:$0xff]
  %v162 = vld [vmem:[%s1 + $0x490] sm:$0xff]
  %v163 = vld [vmem:[%s1 + $0x498] sm:$0xff]
  %v164 = vld [vmem:[%s1 + $0x4a0] sm:$0xff]
  %v165 = vld [vmem:[%s1 + $0x4a8] sm:$0xff]
  %v166 = vld [vmem:[%s1 + $0x4b0] sm:$0xff]
  %v167 = vld [vmem:[%s1 + $0x4b8] sm:$0xff]
  %v168 = vld [vmem:[%s1 + $0x4c0] sm:$0xff]
  %v169 = vld [vmem:[%s1 + $0x4c8] sm:$0xff]
  %v170 = vld [vmem:[%s1 + $0x4d0] sm:$0xff]
  %v171 = vld [vmem:[%s1 + $0x4d8] sm:$0xff]
  %v172 = vld [vmem:[%s1 + $0x4e0] sm:$0xff]
  %v173 = vld [vmem:[%s1 + $0x4e8] sm:$0xff]
  %v174 = vld [vmem:[%s1 + $0x4f0] sm:$0xff]
  %v175 = vld [vmem:[%s1 + $0x4f8] sm:$0xff]
  %v176 = vld [vmem:[%s1 + $0x500] sm:$0xff]
  %v177 = vld [vmem:[%s1 + $0x508] sm:$0xff]
  %v178 = vld [vmem:[%s1 + $0x510] sm:$0xff]
  %v179 = vld [vmem:[%s1 + $0x518] sm:$0xff]
  %v180 = vld [vmem:[%s1 + $0x520] sm:$0xff]
  %v181 = vld [vmem:[%s1 + $0x528] sm:$0xff]
  %v182 = vld [vmem:[%s1 + $0x530] sm:$0xff]
  %v183 = vld [vmem:[%s1 + $0x538] sm:$0xff]
  %v184 = vld [vmem:[%s1 + $0x540] sm:$0xff]
  %v185 = vld [vmem:[%s1 + $0x548] sm:$0xff]
  %v186 = vld [vmem:[%s1 + $0x550] sm:$0xff]
  %v187 = vld [vmem:[%s1 + $0x558] sm:$0xff]
  %v188 = vld [vmem:[%s1 + $0x560] sm:$0xff]
  %v189 = vld [vmem:[%s1 + $0x568] sm:$0xff]
  %v190 = vld [vmem:[%s1 + $0x570] sm:$0xff]
  %v191 = vld [vmem:[%s1 + $0x578] sm:$0xff]
  %v192 = vld [vmem:[%s1 + $0x580] sm:$0xff]
  %v193 = vld [vmem:[%s1 + $0x588] sm:$0xff]
  %v194 = vld [vmem:[%s1 + $0x590] sm:$0xff]
  %v195 = vld [vmem:[%s1 + $0x598] sm:$0xff]
  %v196 = vld [vmem:[%s1 + $0x5a0] sm:$0xff]
  %v197 = vld [vmem:[%s1 + $0x5a8] sm:$0xff]
  %v198 = vld [vmem:[%s1 + $0x5b0] sm:$0xff]
  %v199 = vld [vmem:[%s1 + $0x5b8] sm:$0xff]
  %v200 = vld [vmem:[%s1 + $0x5c0] sm:$0xff]
  %v201 = vld [vmem:[%s1 + $0x5c8] sm:$0xff]
  %v202 = vld [vmem:[%s1 + $0x5d0] sm:$0xff]
  %v203 = vld [vmem:[%s1 + $0x5d8] sm:$0xff]
  %v204 = vld [vmem:[%s1 + $0x5e0] sm:$0xff]
  %v205 = vld [vmem:[%s1 + $0x5e8] sm:$0xff]
  %v206 = vld [vmem:[%s1 + $0x5f0] sm:$0xff]
  %v207 = vld [vmem:[%s1 + $0x5f8] sm:$0xff]
  %v208 = vld [vmem:[%s2] sm:$0xff]
  %v209 = vld [vmem:[%s2 + $0x8] sm:$0xf]
  %v212 = vlaneseq
  %v213 = vshrl.u32 %v212, 7
  %v214 = vsub.s32 0, %v213
  %v215 = vrot.slane %v208, %v214
  %v216 = vlaneseq
  %v217 = vshrl.u32 %v216, 7
  %v218 = vsub.s32 1, %v217
  %v219 = vrot.slane %v208, %v218
  %v220 = vlaneseq
  %v221 = vshrl.u32 %v220, 7
  %v222 = vsub.s32 2, %v221
  %v223 = vrot.slane %v208, %v222
  %v224 = vlaneseq
  %v225 = vshrl.u32 %v224, 7
  %v226 = vsub.s32 3, %v225
  %v227 = vrot.slane %v208, %v226
  %v228 = vlaneseq
  %v229 = vshrl.u32 %v228, 7
  %v230 = vsub.s32 4, %v229
  %v231 = vrot.slane %v208, %v230
  %v232 = vlaneseq
  %v233 = vshrl.u32 %v232, 7
  %v234 = vsub.s32 5, %v233
  %v235 = vrot.slane %v208, %v234
  %v236 = vlaneseq
  %v237 = vshrl.u32 %v236, 7
  %v238 = vsub.s32 6, %v237
  %v239 = vrot.slane %v208, %v238
  %v240 = vlaneseq
  %v241 = vshrl.u32 %v240, 7
  %v242 = vsub.s32 7, %v241
  %v243 = vrot.slane %v208, %v242
  %v244 = vlaneseq
  %v245 = vshrl.u32 %v244, 7
  %v246 = vsub.s32 0, %v245
  %v247 = vrot.slane %v209, %v246
  %v248 = vlaneseq
  %v249 = vshrl.u32 %v248, 7
  %v250 = vsub.s32 1, %v249
  %v251 = vrot.slane %v209, %v250
  %v252 = vlaneseq
  %v253 = vshrl.u32 %v252, 7
  %v254 = vsub.s32 2, %v253
  %v255 = vrot.slane %v209, %v254
  %v256 = vlaneseq
  %v257 = vshrl.u32 %v256, 7
  %v258 = vsub.s32 3, %v257
  %v259 = vrot.slane %v209, %v258
  %v274 = vunpack.c.l.b16 %v14
  %v275 = vunpack.c.h.b16 %v14
  %v276 = vunpack.c.l.b16 %v15
  %v277 = vunpack.c.h.b16 %v15
  %v278 = vpack.c.b16 %v276, %v274
  %v279 = vpack.c.b16 %v277, %v275
  %v474 = vunpack.c.l.b16 %v16
  %v475 = vunpack.c.h.b16 %v16
  %v476 = vunpack.c.l.b16 %v17
  %v477 = vunpack.c.h.b16 %v17
  %v478 = vunpack.c.l.b16 %v18
  %v479 = vunpack.c.h.b16 %v18
  %v480 = vunpack.c.l.b16 %v19
  %v481 = vunpack.c.h.b16 %v19
  %v482 = vunpack.c.l.b16 %v20
  %v483 = vunpack.c.h.b16 %v20
  %v484 = vunpack.c.l.b16 %v21
  %v485 = vunpack.c.h.b16 %v21
  %v486 = vunpack.c.l.b16 %v22
  %v487 = vunpack.c.h.b16 %v22
  %v488 = vunpack.c.l.b16 %v23
  %v489 = vunpack.c.h.b16 %v23
  %v490 = vunpack.c.l.b16 %v24
  %v491 = vunpack.c.h.b16 %v24
  %v492 = vunpack.c.l.b16 %v25
  %v493 = vunpack.c.h.b16 %v25
  %v494 = vunpack.c.l.b16 %v26
  %v495 = vunpack.c.h.b16 %v26
  %v496 = vunpack.c.l.b16 %v27
  %v497 = vunpack.c.h.b16 %v27
  %v498 = vunpack.c.l.b16 %v28
  %v499 = vunpack.c.h.b16 %v28
  %v500 = vunpack.c.l.b16 %v29
  %v501 = vunpack.c.h.b16 %v29
  %v502 = vunpack.c.l.b16 %v30
  %v503 = vunpack.c.h.b16 %v30
  %v504 = vunpack.c.l.b16 %v31
  %v505 = vunpack.c.h.b16 %v31
  %v506 = vunpack.c.l.b16 %v32
  %v507 = vunpack.c.h.b16 %v32
  %v508 = vunpack.c.l.b16 %v33
  %v509 = vunpack.c.h.b16 %v33
  %v510 = vunpack.c.l.b16 %v34
  %v511 = vunpack.c.h.b16 %v34
  %v512 = vunpack.c.l.b16 %v35
  %v513 = vunpack.c.h.b16 %v35
  %v514 = vunpack.c.l.b16 %v36
  %v515 = vunpack.c.h.b16 %v36
  %v516 = vunpack.c.l.b16 %v37
  %v517 = vunpack.c.h.b16 %v37
  %v518 = vunpack.c.l.b16 %v38
  %v519 = vunpack.c.h.b16 %v38
  %v520 = vunpack.c.l.b16 %v39
  %v521 = vunpack.c.h.b16 %v39
  %v522 = vunpack.c.l.b16 %v40
  %v523 = vunpack.c.h.b16 %v40
  %v524 = vunpack.c.l.b16 %v41
  %v525 = vunpack.c.h.b16 %v41
  %v526 = vunpack.c.l.b16 %v42
  %v527 = vunpack.c.h.b16 %v42
  %v528 = vunpack.c.l.b16 %v43
  %v529 = vunpack.c.h.b16 %v43
  %v530 = vunpack.c.l.b16 %v44
  %v531 = vunpack.c.h.b16 %v44
  %v532 = vunpack.c.l.b16 %v45
  %v533 = vunpack.c.h.b16 %v45
  %v534 = vunpack.c.l.b16 %v46
  %v535 = vunpack.c.h.b16 %v46
  %v536 = vunpack.c.l.b16 %v47
  %v537 = vunpack.c.h.b16 %v47
  %v538 = vunpack.c.l.b16 %v48
  %v539 = vunpack.c.h.b16 %v48
  %v540 = vunpack.c.l.b16 %v49
  %v541 = vunpack.c.h.b16 %v49
  %v542 = vunpack.c.l.b16 %v50
  %v543 = vunpack.c.h.b16 %v50
  %v544 = vunpack.c.l.b16 %v51
  %v545 = vunpack.c.h.b16 %v51
  %v546 = vunpack.c.l.b16 %v52
  %v547 = vunpack.c.h.b16 %v52
  %v548 = vunpack.c.l.b16 %v53
  %v549 = vunpack.c.h.b16 %v53
  %v550 = vunpack.c.l.b16 %v54
  %v551 = vunpack.c.h.b16 %v54
  %v552 = vunpack.c.l.b16 %v55
  %v553 = vunpack.c.h.b16 %v55
  %v554 = vunpack.c.l.b16 %v56
  %v555 = vunpack.c.h.b16 %v56
  %v556 = vunpack.c.l.b16 %v57
  %v557 = vunpack.c.h.b16 %v57
  %v558 = vunpack.c.l.b16 %v58
  %v559 = vunpack.c.h.b16 %v58
  %v560 = vunpack.c.l.b16 %v59
  %v561 = vunpack.c.h.b16 %v59
  %v562 = vunpack.c.l.b16 %v60
  %v563 = vunpack.c.h.b16 %v60
  %v564 = vunpack.c.l.b16 %v61
  %v565 = vunpack.c.h.b16 %v61
  %v566 = vunpack.c.l.b16 %v62
  %v567 = vunpack.c.h.b16 %v62
  %v568 = vunpack.c.l.b16 %v63
  %v569 = vunpack.c.h.b16 %v63
  %v570 = vunpack.c.l.b16 %v64
  %v571 = vunpack.c.h.b16 %v64
  %v572 = vunpack.c.l.b16 %v65
  %v573 = vunpack.c.h.b16 %v65
  %v574 = vunpack.c.l.b16 %v66
  %v575 = vunpack.c.h.b16 %v66
  %v576 = vunpack.c.l.b16 %v67
  %v577 = vunpack.c.h.b16 %v67
  %v578 = vunpack.c.l.b16 %v68
  %v579 = vunpack.c.h.b16 %v68
  %v580 = vunpack.c.l.b16 %v69
  %v581 = vunpack.c.h.b16 %v69
  %v582 = vunpack.c.l.b16 %v70
  %v583 = vunpack.c.h.b16 %v70
  %v584 = vunpack.c.l.b16 %v71
  %v585 = vunpack.c.h.b16 %v71
  %v586 = vunpack.c.l.b16 %v72
  %v587 = vunpack.c.h.b16 %v72
  %v588 = vunpack.c.l.b16 %v73
  %v589 = vunpack.c.h.b16 %v73
  %v590 = vunpack.c.l.b16 %v74
  %v591 = vunpack.c.h.b16 %v74
  %v592 = vunpack.c.l.b16 %v75
  %v593 = vunpack.c.h.b16 %v75
  %v594 = vunpack.c.l.b16 %v76
  %v595 = vunpack.c.h.b16 %v76
  %v596 = vunpack.c.l.b16 %v77
  %v597 = vunpack.c.h.b16 %v77
  %v598 = vunpack.c.l.b16 %v78
  %v599 = vunpack.c.h.b16 %v78
  %v600 = vunpack.c.l.b16 %v79
  %v601 = vunpack.c.h.b16 %v79
  %v602 = vunpack.c.l.b16 %v80
  %v603 = vunpack.c.h.b16 %v80
  %v604 = vunpack.c.l.b16 %v81
  %v605 = vunpack.c.h.b16 %v81
  %v606 = vunpack.c.l.b16 %v82
  %v607 = vunpack.c.h.b16 %v82
  %v608 = vunpack.c.l.b16 %v83
  %v609 = vunpack.c.h.b16 %v83
  %v610 = vunpack.c.l.b16 %v84
  %v611 = vunpack.c.h.b16 %v84
  %v612 = vunpack.c.l.b16 %v85
  %v613 = vunpack.c.h.b16 %v85
  %v614 = vunpack.c.l.b16 %v86
  %v615 = vunpack.c.h.b16 %v86
  %v616 = vunpack.c.l.b16 %v87
  %v617 = vunpack.c.h.b16 %v87
  %v618 = vunpack.c.l.b16 %v88
  %v619 = vunpack.c.h.b16 %v88
  %v620 = vunpack.c.l.b16 %v89
  %v621 = vunpack.c.h.b16 %v89
  %v622 = vunpack.c.l.b16 %v90
  %v623 = vunpack.c.h.b16 %v90
  %v624 = vunpack.c.l.b16 %v91
  %v625 = vunpack.c.h.b16 %v91
  %v626 = vunpack.c.l.b16 %v92
  %v627 = vunpack.c.h.b16 %v92
  %v628 = vunpack.c.l.b16 %v93
  %v629 = vunpack.c.h.b16 %v93
  %v630 = vunpack.c.l.b16 %v94
  %v631 = vunpack.c.h.b16 %v94
  %v632 = vunpack.c.l.b16 %v95
  %v633 = vunpack.c.h.b16 %v95
  %v634 = vunpack.c.l.b16 %v96
  %v635 = vunpack.c.h.b16 %v96
  %v636 = vunpack.c.l.b16 %v97
  %v637 = vunpack.c.h.b16 %v97
  %v638 = vunpack.c.l.b16 %v98
  %v639 = vunpack.c.h.b16 %v98
  %v640 = vunpack.c.l.b16 %v99
  %v641 = vunpack.c.h.b16 %v99
  %v642 = vunpack.c.l.b16 %v100
  %v643 = vunpack.c.h.b16 %v100
  %v644 = vunpack.c.l.b16 %v101
  %v645 = vunpack.c.h.b16 %v101
  %v646 = vunpack.c.l.b16 %v102
  %v647 = vunpack.c.h.b16 %v102
  %v648 = vunpack.c.l.b16 %v103
  %v649 = vunpack.c.h.b16 %v103
  %v650 = vunpack.c.l.b16 %v104
  %v651 = vunpack.c.h.b16 %v104
  %v652 = vunpack.c.l.b16 %v105
  %v653 = vunpack.c.h.b16 %v105
  %v654 = vunpack.c.l.b16 %v106
  %v655 = vunpack.c.h.b16 %v106
  %v656 = vunpack.c.l.b16 %v107
  %v657 = vunpack.c.h.b16 %v107
  %v658 = vunpack.c.l.b16 %v108
  %v659 = vunpack.c.h.b16 %v108
  %v660 = vunpack.c.l.b16 %v109
  %v661 = vunpack.c.h.b16 %v109
  %v662 = vunpack.c.l.b16 %v110
  %v663 = vunpack.c.h.b16 %v110
  %v664 = vunpack.c.l.b16 %v111
  %v665 = vunpack.c.h.b16 %v111
  %v666 = vunpack.c.l.b16 %v112
  %v667 = vunpack.c.h.b16 %v112
  %v668 = vunpack.c.l.b16 %v113
  %v669 = vunpack.c.h.b16 %v113
  %v670 = vunpack.c.l.b16 %v114
  %v671 = vunpack.c.h.b16 %v114
  %v672 = vunpack.c.l.b16 %v115
  %v673 = vunpack.c.h.b16 %v115
  %v674 = vunpack.c.l.b16 %v116
  %v675 = vunpack.c.h.b16 %v116
  %v676 = vunpack.c.l.b16 %v117
  %v677 = vunpack.c.h.b16 %v117
  %v678 = vunpack.c.l.b16 %v118
  %v679 = vunpack.c.h.b16 %v118
  %v680 = vunpack.c.l.b16 %v119
  %v681 = vunpack.c.h.b16 %v119
  %v682 = vunpack.c.l.b16 %v120
  %v683 = vunpack.c.h.b16 %v120
  %v684 = vunpack.c.l.b16 %v121
  %v685 = vunpack.c.h.b16 %v121
  %v686 = vunpack.c.l.b16 %v122
  %v687 = vunpack.c.h.b16 %v122
  %v688 = vunpack.c.l.b16 %v123
  %v689 = vunpack.c.h.b16 %v123
  %v690 = vunpack.c.l.b16 %v124
  %v691 = vunpack.c.h.b16 %v124
  %v692 = vunpack.c.l.b16 %v125
  %v693 = vunpack.c.h.b16 %v125
  %v694 = vunpack.c.l.b16 %v126
  %v695 = vunpack.c.h.b16 %v126
  %v696 = vunpack.c.l.b16 %v127
  %v697 = vunpack.c.h.b16 %v127
  %v698 = vunpack.c.l.b16 %v128
  %v699 = vunpack.c.h.b16 %v128
  %v700 = vunpack.c.l.b16 %v129
  %v701 = vunpack.c.h.b16 %v129
  %v702 = vunpack.c.l.b16 %v130
  %v703 = vunpack.c.h.b16 %v130
  %v704 = vunpack.c.l.b16 %v131
  %v705 = vunpack.c.h.b16 %v131
  %v706 = vunpack.c.l.b16 %v132
  %v707 = vunpack.c.h.b16 %v132
  %v708 = vunpack.c.l.b16 %v133
  %v709 = vunpack.c.h.b16 %v133
  %v710 = vunpack.c.l.b16 %v134
  %v711 = vunpack.c.h.b16 %v134
  %v712 = vunpack.c.l.b16 %v135
  %v713 = vunpack.c.h.b16 %v135
  %v714 = vunpack.c.l.b16 %v136
  %v715 = vunpack.c.h.b16 %v136
  %v716 = vunpack.c.l.b16 %v137
  %v717 = vunpack.c.h.b16 %v137
  %v718 = vunpack.c.l.b16 %v138
  %v719 = vunpack.c.h.b16 %v138
  %v720 = vunpack.c.l.b16 %v139
  %v721 = vunpack.c.h.b16 %v139
  %v722 = vunpack.c.l.b16 %v140
  %v723 = vunpack.c.h.b16 %v140
  %v724 = vunpack.c.l.b16 %v141
  %v725 = vunpack.c.h.b16 %v141
  %v726 = vunpack.c.l.b16 %v142
  %v727 = vunpack.c.h.b16 %v142
  %v728 = vunpack.c.l.b16 %v143
  %v729 = vunpack.c.h.b16 %v143
  %v730 = vunpack.c.l.b16 %v144
  %v731 = vunpack.c.h.b16 %v144
  %v732 = vunpack.c.l.b16 %v145
  %v733 = vunpack.c.h.b16 %v145
  %v734 = vunpack.c.l.b16 %v146
  %v735 = vunpack.c.h.b16 %v146
  %v736 = vunpack.c.l.b16 %v147
  %v737 = vunpack.c.h.b16 %v147
  %v738 = vunpack.c.l.b16 %v148
  %v739 = vunpack.c.h.b16 %v148
  %v740 = vunpack.c.l.b16 %v149
  %v741 = vunpack.c.h.b16 %v149
  %v742 = vunpack.c.l.b16 %v150
  %v743 = vunpack.c.h.b16 %v150
  %v744 = vunpack.c.l.b16 %v151
  %v745 = vunpack.c.h.b16 %v151
  %v746 = vunpack.c.l.b16 %v152
  %v747 = vunpack.c.h.b16 %v152
  %v748 = vunpack.c.l.b16 %v153
  %v749 = vunpack.c.h.b16 %v153
  %v750 = vunpack.c.l.b16 %v154
  %v751 = vunpack.c.h.b16 %v154
  %v752 = vunpack.c.l.b16 %v155
  %v753 = vunpack.c.h.b16 %v155
  %v754 = vunpack.c.l.b16 %v156
  %v755 = vunpack.c.h.b16 %v156
  %v756 = vunpack.c.l.b16 %v157
  %v757 = vunpack.c.h.b16 %v157
  %v758 = vunpack.c.l.b16 %v158
  %v759 = vunpack.c.h.b16 %v158
  %v760 = vunpack.c.l.b16 %v159
  %v761 = vunpack.c.h.b16 %v159
  %v762 = vunpack.c.l.b16 %v160
  %v763 = vunpack.c.h.b16 %v160
  %v764 = vunpack.c.l.b16 %v161
  %v765 = vunpack.c.h.b16 %v161
  %v766 = vunpack.c.l.b16 %v162
  %v767 = vunpack.c.h.b16 %v162
  %v768 = vunpack.c.l.b16 %v163
  %v769 = vunpack.c.h.b16 %v163
  %v770 = vunpack.c.l.b16 %v164
  %v771 = vunpack.c.h.b16 %v164
  %v772 = vunpack.c.l.b16 %v165
  %v773 = vunpack.c.h.b16 %v165
  %v774 = vunpack.c.l.b16 %v166
  %v775 = vunpack.c.h.b16 %v166
  %v776 = vunpack.c.l.b16 %v167
  %v777 = vunpack.c.h.b16 %v167
  %v778 = vunpack.c.l.b16 %v168
  %v779 = vunpack.c.h.b16 %v168
  %v780 = vunpack.c.l.b16 %v169
  %v781 = vunpack.c.h.b16 %v169
  %v782 = vunpack.c.l.b16 %v170
  %v783 = vunpack.c.h.b16 %v170
  %v784 = vunpack.c.l.b16 %v171
  %v785 = vunpack.c.h.b16 %v171
  %v786 = vunpack.c.l.b16 %v172
  %v787 = vunpack.c.h.b16 %v172
  %v788 = vunpack.c.l.b16 %v173
  %v789 = vunpack.c.h.b16 %v173
  %v790 = vunpack.c.l.b16 %v174
  %v791 = vunpack.c.h.b16 %v174
  %v792 = vunpack.c.l.b16 %v175
  %v793 = vunpack.c.h.b16 %v175
  %v794 = vunpack.c.l.b16 %v176
  %v795 = vunpack.c.h.b16 %v176
  %v796 = vunpack.c.l.b16 %v177
  %v797 = vunpack.c.h.b16 %v177
  %v798 = vunpack.c.l.b16 %v178
  %v799 = vunpack.c.h.b16 %v178
  %v800 = vunpack.c.l.b16 %v179
  %v801 = vunpack.c.h.b16 %v179
  %v802 = vunpack.c.l.b16 %v180
  %v803 = vunpack.c.h.b16 %v180
  %v804 = vunpack.c.l.b16 %v181
  %v805 = vunpack.c.h.b16 %v181
  %v806 = vunpack.c.l.b16 %v182
  %v807 = vunpack.c.h.b16 %v182
  %v808 = vunpack.c.l.b16 %v183
  %v809 = vunpack.c.h.b16 %v183
  %v810 = vunpack.c.l.b16 %v184
  %v811 = vunpack.c.h.b16 %v184
  %v812 = vunpack.c.l.b16 %v185
  %v813 = vunpack.c.h.b16 %v185
  %v814 = vunpack.c.l.b16 %v186
  %v815 = vunpack.c.h.b16 %v186
  %v816 = vunpack.c.l.b16 %v187
  %v817 = vunpack.c.h.b16 %v187
  %v818 = vunpack.c.l.b16 %v188
  %v819 = vunpack.c.h.b16 %v188
  %v820 = vunpack.c.l.b16 %v189
  %v821 = vunpack.c.h.b16 %v189
  %v822 = vunpack.c.l.b16 %v190
  %v823 = vunpack.c.h.b16 %v190
  %v824 = vunpack.c.l.b16 %v191
  %v825 = vunpack.c.h.b16 %v191
  %v826 = vunpack.c.l.b16 %v192
  %v827 = vunpack.c.h.b16 %v192
  %v828 = vunpack.c.l.b16 %v193
  %v829 = vunpack.c.h.b16 %v193
  %v830 = vunpack.c.l.b16 %v194
  %v831 = vunpack.c.h.b16 %v194
  %v832 = vunpack.c.l.b16 %v195
  %v833 = vunpack.c.h.b16 %v195
  %v834 = vunpack.c.l.b16 %v196
  %v835 = vunpack.c.h.b16 %v196
  %v836 = vunpack.c.l.b16 %v197
  %v837 = vunpack.c.h.b16 %v197
  %v838 = vunpack.c.l.b16 %v198
  %v839 = vunpack.c.h.b16 %v198
  %v840 = vunpack.c.l.b16 %v199
  %v841 = vunpack.c.h.b16 %v199
  %v842 = vunpack.c.l.b16 %v200
  %v843 = vunpack.c.h.b16 %v200
  %v844 = vunpack.c.l.b16 %v201
  %v845 = vunpack.c.h.b16 %v201
  %v846 = vunpack.c.l.b16 %v202
  %v847 = vunpack.c.h.b16 %v202
  %v848 = vunpack.c.l.b16 %v203
  %v849 = vunpack.c.h.b16 %v203
  %v850 = vunpack.c.l.b16 %v204
  %v851 = vunpack.c.h.b16 %v204
  %v852 = vunpack.c.l.b16 %v205
  %v853 = vunpack.c.h.b16 %v205
  %v854 = vunpack.c.l.b16 %v206
  %v855 = vunpack.c.h.b16 %v206
  %v856 = vunpack.c.l.b16 %v207
  %v857 = vunpack.c.h.b16 %v207
  %v858 = vpack.c.b16 %v486, %v474
  %v859 = vpack.c.b16 %v487, %v475
  %v860 = vpack.c.b16 %v488, %v476
  %v861 = vpack.c.b16 %v489, %v477
  %v862 = vpack.c.b16 %v490, %v478
  %v863 = vpack.c.b16 %v491, %v479
  %v864 = vpack.c.b16 %v492, %v480
  %v865 = vpack.c.b16 %v493, %v481
  %v866 = vpack.c.b16 %v494, %v482
  %v867 = vpack.c.b16 %v495, %v483
  %v868 = vpack.c.b16 %v496, %v484
  %v869 = vpack.c.b16 %v497, %v485
  %v870 = vpack.c.b16 %v510, %v498
  %v871 = vpack.c.b16 %v511, %v499
  %v872 = vpack.c.b16 %v512, %v500
  %v873 = vpack.c.b16 %v513, %v501
  %v874 = vpack.c.b16 %v514, %v502
  %v875 = vpack.c.b16 %v515, %v503
  %v876 = vpack.c.b16 %v516, %v504
  %v877 = vpack.c.b16 %v517, %v505
  %v878 = vpack.c.b16 %v518, %v506
  %v879 = vpack.c.b16 %v519, %v507
  %v880 = vpack.c.b16 %v520, %v508
  %v881 = vpack.c.b16 %v521, %v509
  %v882 = vpack.c.b16 %v534, %v522
  %v883 = vpack.c.b16 %v535, %v523
  %v884 = vpack.c.b16 %v536, %v524
  %v885 = vpack.c.b16 %v537, %v525
  %v886 = vpack.c.b16 %v538, %v526
  %v887 = vpack.c.b16 %v539, %v527
  %v888 = vpack.c.b16 %v540, %v528
  %v889 = vpack.c.b16 %v541, %v529
  %v890 = vpack.c.b16 %v542, %v530
  %v891 = vpack.c.b16 %v543, %v531
  %v892 = vpack.c.b16 %v544, %v532
  %v893 = vpack.c.b16 %v545, %v533
  %v894 = vpack.c.b16 %v558, %v546
  %v895 = vpack.c.b16 %v559, %v547
  %v896 = vpack.c.b16 %v560, %v548
  %v897 = vpack.c.b16 %v561, %v549
  %v898 = vpack.c.b16 %v562, %v550
  %v899 = vpack.c.b16 %v563, %v551
  %v900 = vpack.c.b16 %v564, %v552
  %v901 = vpack.c.b16 %v565, %v553
  %v902 = vpack.c.b16 %v566, %v554
  %v903 = vpack.c.b16 %v567, %v555
  %v904 = vpack.c.b16 %v568, %v556
  %v905 = vpack.c.b16 %v569, %v557
  %v906 = vpack.c.b16 %v582, %v570
  %v907 = vpack.c.b16 %v583, %v571
  %v908 = vpack.c.b16 %v584, %v572
  %v909 = vpack.c.b16 %v585, %v573
  %v910 = vpack.c.b16 %v586, %v574
  %v911 = vpack.c.b16 %v587, %v575
  %v912 = vpack.c.b16 %v588, %v576
  %v913 = vpack.c.b16 %v589, %v577
  %v914 = vpack.c.b16 %v590, %v578
  %v915 = vpack.c.b16 %v591, %v579
  %v916 = vpack.c.b16 %v592, %v580
  %v917 = vpack.c.b16 %v593, %v581
  %v918 = vpack.c.b16 %v606, %v594
  %v919 = vpack.c.b16 %v607, %v595
  %v920 = vpack.c.b16 %v608, %v596
  %v921 = vpack.c.b16 %v609, %v597
  %v922 = vpack.c.b16 %v610, %v598
  %v923 = vpack.c.b16 %v611, %v599
  %v924 = vpack.c.b16 %v612, %v600
  %v925 = vpack.c.b16 %v613, %v601
  %v926 = vpack.c.b16 %v614, %v602
  %v927 = vpack.c.b16 %v615, %v603
  %v928 = vpack.c.b16 %v616, %v604
  %v929 = vpack.c.b16 %v617, %v605
  %v930 = vpack.c.b16 %v630, %v618
  %v931 = vpack.c.b16 %v631, %v619
  %v932 = vpack.c.b16 %v632, %v620
  %v933 = vpack.c.b16 %v633, %v621
  %v934 = vpack.c.b16 %v634, %v622
  %v935 = vpack.c.b16 %v635, %v623
  %v936 = vpack.c.b16 %v636, %v624
  %v937 = vpack.c.b16 %v637, %v625
  %v938 = vpack.c.b16 %v638, %v626
  %v939 = vpack.c.b16 %v639, %v627
  %v940 = vpack.c.b16 %v640, %v628
  %v941 = vpack.c.b16 %v641, %v629
  %v942 = vpack.c.b16 %v654, %v642
  %v943 = vpack.c.b16 %v655, %v643
  %v944 = vpack.c.b16 %v656, %v644
  %v945 = vpack.c.b16 %v657, %v645
  %v946 = vpack.c.b16 %v658, %v646
  %v947 = vpack.c.b16 %v659, %v647
  %v948 = vpack.c.b16 %v660, %v648
  %v949 = vpack.c.b16 %v661, %v649
  %v950 = vpack.c.b16 %v662, %v650
  %v951 = vpack.c.b16 %v663, %v651
  %v952 = vpack.c.b16 %v664, %v652
  %v953 = vpack.c.b16 %v665, %v653
  %v954 = vpack.c.b16 %v678, %v666
  %v955 = vpack.c.b16 %v679, %v667
  %v956 = vpack.c.b16 %v680, %v668
  %v957 = vpack.c.b16 %v681, %v669
  %v958 = vpack.c.b16 %v682, %v670
  %v959 = vpack.c.b16 %v683, %v671
  %v960 = vpack.c.b16 %v684, %v672
  %v961 = vpack.c.b16 %v685, %v673
  %v962 = vpack.c.b16 %v686, %v674
  %v963 = vpack.c.b16 %v687, %v675
  %v964 = vpack.c.b16 %v688, %v676
  %v965 = vpack.c.b16 %v689, %v677
  %v966 = vpack.c.b16 %v702, %v690
  %v967 = vpack.c.b16 %v703, %v691
  %v968 = vpack.c.b16 %v704, %v692
  %v969 = vpack.c.b16 %v705, %v693
  %v970 = vpack.c.b16 %v706, %v694
  %v971 = vpack.c.b16 %v707, %v695
  %v972 = vpack.c.b16 %v708, %v696
  %v973 = vpack.c.b16 %v709, %v697
  %v974 = vpack.c.b16 %v710, %v698
  %v975 = vpack.c.b16 %v711, %v699
  %v976 = vpack.c.b16 %v712, %v700
  %v977 = vpack.c.b16 %v713, %v701
  %v978 = vpack.c.b16 %v726, %v714
  %v979 = vpack.c.b16 %v727, %v715
  %v980 = vpack.c.b16 %v728, %v716
  %v981 = vpack.c.b16 %v729, %v717
  %v982 = vpack.c.b16 %v730, %v718
  %v983 = vpack.c.b16 %v731, %v719
  %v984 = vpack.c.b16 %v732, %v720
  %v985 = vpack.c.b16 %v733, %v721
  %v986 = vpack.c.b16 %v734, %v722
  %v987 = vpack.c.b16 %v735, %v723
  %v988 = vpack.c.b16 %v736, %v724
  %v989 = vpack.c.b16 %v737, %v725
  %v990 = vpack.c.b16 %v750, %v738
  %v991 = vpack.c.b16 %v751, %v739
  %v992 = vpack.c.b16 %v752, %v740
  %v993 = vpack.c.b16 %v753, %v741
  %v994 = vpack.c.b16 %v754, %v742
  %v995 = vpack.c.b16 %v755, %v743
  %v996 = vpack.c.b16 %v756, %v744
  %v997 = vpack.c.b16 %v757, %v745
  %v998 = vpack.c.b16 %v758, %v746
  %v999 = vpack.c.b16 %v759, %v747
  %v1000 = vpack.c.b16 %v760, %v748
  %v1001 = vpack.c.b16 %v761, %v749
  %v1002 = vpack.c.b16 %v774, %v762
  %v1003 = vpack.c.b16 %v775, %v763
  %v1004 = vpack.c.b16 %v776, %v764
  %v1005 = vpack.c.b16 %v777, %v765
  %v1006 = vpack.c.b16 %v778, %v766
  %v1007 = vpack.c.b16 %v779, %v767
  %v1008 = vpack.c.b16 %v780, %v768
  %v1009 = vpack.c.b16 %v781, %v769
  %v1010 = vpack.c.b16 %v782, %v770
  %v1011 = vpack.c.b16 %v783, %v771
  %v1012 = vpack.c.b16 %v784, %v772
  %v1013 = vpack.c.b16 %v785, %v773
  %v1014 = vpack.c.b16 %v798, %v786
  %v1015 = vpack.c.b16 %v799, %v787
  %v1016 = vpack.c.b16 %v800, %v788
  %v1017 = vpack.c.b16 %v801, %v789
  %v1018 = vpack.c.b16 %v802, %v790
  %v1019 = vpack.c.b16 %v803, %v791
  %v1020 = vpack.c.b16 %v804, %v792
  %v1021 = vpack.c.b16 %v805, %v793
  %v1022 = vpack.c.b16 %v806, %v794
  %v1023 = vpack.c.b16 %v807, %v795
  %v1024 = vpack.c.b16 %v808, %v796
  %v1025 = vpack.c.b16 %v809, %v797
  %v1026 = vpack.c.b16 %v822, %v810
  %v1027 = vpack.c.b16 %v823, %v811
  %v1028 = vpack.c.b16 %v824, %v812
  %v1029 = vpack.c.b16 %v825, %v813
  %v1030 = vpack.c.b16 %v826, %v814
  %v1031 = vpack.c.b16 %v827, %v815
  %v1032 = vpack.c.b16 %v828, %v816
  %v1033 = vpack.c.b16 %v829, %v817
  %v1034 = vpack.c.b16 %v830, %v818
  %v1035 = vpack.c.b16 %v831, %v819
  %v1036 = vpack.c.b16 %v832, %v820
  %v1037 = vpack.c.b16 %v833, %v821
  %v1038 = vpack.c.b16 %v846, %v834
  %v1039 = vpack.c.b16 %v847, %v835
  %v1040 = vpack.c.b16 %v848, %v836
  %v1041 = vpack.c.b16 %v849, %v837
  %v1042 = vpack.c.b16 %v850, %v838
  %v1043 = vpack.c.b16 %v851, %v839
  %v1044 = vpack.c.b16 %v852, %v840
  %v1045 = vpack.c.b16 %v853, %v841
  %v1046 = vpack.c.b16 %v854, %v842
  %v1047 = vpack.c.b16 %v855, %v843
  %v1048 = vpack.c.b16 %v856, %v844
  %v1049 = vpack.c.b16 %v857, %v845
  %1242 = vmatprep.subr.bf16.mxu0 %v943
  %1243 = vmatpush1.bf16.msra.mxu0 %v942
  %1244 = vmatprep.subr.bf16.mxu0 %v931
  %1245 = vmatpush1.bf16.msra.mxu0 %v930
  %1246 = vmatprep.subr.bf16.mxu0 %v919
  %1247 = vmatpush1.bf16.msra.mxu0 %v918
  %1248 = vmatprep.subr.bf16.mxu0 %v907
  %1249 = vmatpush1.bf16.msra.mxu0 %v906
  %1250 = vmatprep.subr.bf16.mxu0 %v895
  %1251 = vmatpush1.bf16.msra.mxu0 %v894
  %1252 = vmatprep.subr.bf16.mxu0 %v883
  %1253 = vmatpush1.bf16.msra.mxu0 %v882
  %1254 = vmatprep.subr.bf16.mxu0 %v871
  %1255 = vmatpush1.bf16.msra.mxu0 %v870
  %1256 = vmatprep.subr.bf16.mxu0 %v859
  %1257 = vmatpush1.bf16.msra.mxu0 %v858
  %1258 = vmatprep.subr.bf16.mxu0 %v1039
  %1259 = vmatpush2.bf16.msra.mxu0 %v1038
  %1260 = vmatprep.subr.bf16.mxu0 %v1027
  %1261 = vmatpush2.bf16.msra.mxu0 %v1026
  %1262 = vmatprep.subr.bf16.mxu0 %v1015
  %1263 = vmatpush2.bf16.msra.mxu0 %v1014
  %1264 = vmatprep.subr.bf16.mxu0 %v1003
  %1265 = vmatpush2.bf16.msra.mxu0 %v1002
  %1266 = vmatprep.subr.bf16.mxu0 %v991
  %1267 = vmatpush2.bf16.msra.mxu0 %v990
  %1268 = vmatprep.subr.bf16.mxu0 %v979
  %1269 = vmatpush2.bf16.msra.mxu0 %v978
  %1270 = vmatprep.subr.bf16.mxu0 %v967
  %1271 = vmatpush2.bf16.msra.mxu0 %v966
  %1272 = vmatprep.subr.bf16.mxu0 %v955
  %1273 = vmatpush2.bf16.msra.mxu0 %v954
  %1274 = vmatprep.mubr.bf16.mxu0 %v279
  %1275 = vmatmul.mubr.bf16.gmra.mxu0 %v278
  %v1276 = vpop.f32.mrf.mxu0
  %v1277 = vadd.f32 %v215, %v1276
  %v1278 = vpop.f32.mrf.mxu0
  %v1279 = vadd.f32 %v219, %v1278
  %v1280 = vpop.f32.mrf.mxu0
  %v1281 = vadd.f32 %v215, %v1280
  %v1282 = vpop.f32.mrf.mxu0
  %v1283 = vadd.f32 %v219, %v1282
  %1284 = vdwg.mxu0
  %1285 = vmatprep.subr.bf16.mxu0 %v945
  %1286 = vmatpush1.bf16.msra.mxu0 %v944
  %1287 = vmatprep.subr.bf16.mxu0 %v933
  %1288 = vmatpush1.bf16.msra.mxu0 %v932
  %1289 = vmatprep.subr.bf16.mxu0 %v921
  %1290 = vmatpush1.bf16.msra.mxu0 %v920
  %1291 = vmatprep.subr.bf16.mxu0 %v909
  %1292 = vmatpush1.bf16.msra.mxu0 %v908
  %1293 = vmatprep.subr.bf16.mxu0 %v897
  %1294 = vmatpush1.bf16.msra.mxu0 %v896
  %1295 = vmatprep.subr.bf16.mxu0 %v885
  %1296 = vmatpush1.bf16.msra.mxu0 %v884
  %1297 = vmatprep.subr.bf16.mxu0 %v873
  %1298 = vmatpush1.bf16.msra.mxu0 %v872
  %1299 = vmatprep.subr.bf16.mxu0 %v861
  %1300 = vmatpush1.bf16.msra.mxu0 %v860
  %1301 = vmatprep.subr.bf16.mxu0 %v1041
  %1302 = vmatpush2.bf16.msra.mxu0 %v1040
  %1303 = vmatprep.subr.bf16.mxu0 %v1029
  %1304 = vmatpush2.bf16.msra.mxu0 %v1028
  %1305 = vmatprep.subr.bf16.mxu0 %v1017
  %1306 = vmatpush2.bf16.msra.mxu0 %v1016
  %1307 = vmatprep.subr.bf16.mxu0 %v1005
  %1308 = vmatpush2.bf16.msra.mxu0 %v1004
  %1309 = vmatprep.subr.bf16.mxu0 %v993
  %1310 = vmatpush2.bf16.msra.mxu0 %v992
  %1311 = vmatprep.subr.bf16.mxu0 %v981
  %1312 = vmatpush2.bf16.msra.mxu0 %v980
  %1313 = vmatprep.subr.bf16.mxu0 %v969
  %1314 = vmatpush2.bf16.msra.mxu0 %v968
  %1315 = vmatprep.subr.bf16.mxu0 %v957
  %1316 = vmatpush2.bf16.msra.mxu0 %v956
  %1317 = vmatprep.mubr.bf16.mxu0 %v279
  %1318 = vmatmul.mubr.bf16.gmra.mxu0 %v278
  %v1319 = vpop.f32.mrf.mxu0
  %v1320 = vadd.f32 %v223, %v1319
  %v1321 = vpop.f32.mrf.mxu0
  %v1322 = vadd.f32 %v227, %v1321
  %v1323 = vpop.f32.mrf.mxu0
  %v1324 = vadd.f32 %v223, %v1323
  %v1325 = vpop.f32.mrf.mxu0
  %v1326 = vadd.f32 %v227, %v1325
  %1327 = vdwg.mxu0
  %1328 = vmatprep.subr.bf16.mxu0 %v947
  %1329 = vmatpush1.bf16.msra.mxu0 %v946
  %1330 = vmatprep.subr.bf16.mxu0 %v935
  %1331 = vmatpush1.bf16.msra.mxu0 %v934
  %1332 = vmatprep.subr.bf16.mxu0 %v923
  %1333 = vmatpush1.bf16.msra.mxu0 %v922
  %1334 = vmatprep.subr.bf16.mxu0 %v911
  %1335 = vmatpush1.bf16.msra.mxu0 %v910
  %1336 = vmatprep.subr.bf16.mxu0 %v899
  %1337 = vmatpush1.bf16.msra.mxu0 %v898
  %1338 = vmatprep.subr.bf16.mxu0 %v887
  %1339 = vmatpush1.bf16.msra.mxu0 %v886
  %1340 = vmatprep.subr.bf16.mxu0 %v875
  %1341 = vmatpush1.bf16.msra.mxu0 %v874
  %1342 = vmatprep.subr.bf16.mxu0 %v863
  %1343 = vmatpush1.bf16.msra.mxu0 %v862
  %1344 = vmatprep.subr.bf16.mxu0 %v1043
  %1345 = vmatpush2.bf16.msra.mxu0 %v1042
  %1346 = vmatprep.subr.bf16.mxu0 %v1031
  %1347 = vmatpush2.bf16.msra.mxu0 %v1030
  %1348 = vmatprep.subr.bf16.mxu0 %v1019
  %1349 = vmatpush2.bf16.msra.mxu0 %v1018
  %1350 = vmatprep.subr.bf16.mxu0 %v1007
  %1351 = vmatpush2.bf16.msra.mxu0 %v1006
  %1352 = vmatprep.subr.bf16.mxu0 %v995
  %1353 = vmatpush2.bf16.msra.mxu0 %v994
  %1354 = vmatprep.subr.bf16.mxu0 %v983
  %1355 = vmatpush2.bf16.msra.mxu0 %v982
  %1356 = vmatprep.subr.bf16.mxu0 %v971
  %1357 = vmatpush2.bf16.msra.mxu0 %v970
  %1358 = vmatprep.subr.bf16.mxu0 %v959
  %1359 = vmatpush2.bf16.msra.mxu0 %v958
  %1360 = vmatprep.mubr.bf16.mxu0 %v279
  %1361 = vmatmul.mubr.bf16.gmra.mxu0 %v278
  %v1362 = vpop.f32.mrf.mxu0
  %v1363 = vadd.f32 %v231, %v1362
  %v1364 = vpop.f32.mrf.mxu0
  %v1365 = vadd.f32 %v235, %v1364
  %v1366 = vpop.f32.mrf.mxu0
  %v1367 = vadd.f32 %v231, %v1366
  %v1368 = vpop.f32.mrf.mxu0
  %v1369 = vadd.f32 %v235, %v1368
  %1370 = vdwg.mxu0
  %1371 = vmatprep.subr.bf16.mxu0 %v949
  %1372 = vmatpush1.bf16.msra.mxu0 %v948
  %1373 = vmatprep.subr.bf16.mxu0 %v937
  %1374 = vmatpush1.bf16.msra.mxu0 %v936
  %1375 = vmatprep.subr.bf16.mxu0 %v925
  %1376 = vmatpush1.bf16.msra.mxu0 %v924
  %1377 = vmatprep.subr.bf16.mxu0 %v913
  %1378 = vmatpush1.bf16.msra.mxu0 %v912
  %1379 = vmatprep.subr.bf16.mxu0 %v901
  %1380 = vmatpush1.bf16.msra.mxu0 %v900
  %1381 = vmatprep.subr.bf16.mxu0 %v889
  %1382 = vmatpush1.bf16.msra.mxu0 %v888
  %1383 = vmatprep.subr.bf16.mxu0 %v877
  %1384 = vmatpush1.bf16.msra.mxu0 %v876
  %1385 = vmatprep.subr.bf16.mxu0 %v865
  %1386 = vmatpush1.bf16.msra.mxu0 %v864
  %1387 = vmatprep.subr.bf16.mxu0 %v1045
  %1388 = vmatpush2.bf16.msra.mxu0 %v1044
  %1389 = vmatprep.subr.bf16.mxu0 %v1033
  %1390 = vmatpush2.bf16.msra.mxu0 %v1032
  %1391 = vmatprep.subr.bf16.mxu0 %v1021
  %1392 = vmatpush2.bf16.msra.mxu0 %v1020
  %1393 = vmatprep.subr.bf16.mxu0 %v1009
  %1394 = vmatpush2.bf16.msra.mxu0 %v1008
  %1395 = vmatprep.subr.bf16.mxu0 %v997
  %1396 = vmatpush2.bf16.msra.mxu0 %v996
  %1397 = vmatprep.subr.bf16.mxu0 %v985
  %1398 = vmatpush2.bf16.msra.mxu0 %v984
  %1399 = vmatprep.subr.bf16.mxu0 %v973
  %1400 = vmatpush2.bf16.msra.mxu0 %v972
  %1401 = vmatprep.subr.bf16.mxu0 %v961
  %1402 = vmatpush2.bf16.msra.mxu0 %v960
  %1403 = vmatprep.mubr.bf16.mxu0 %v279
  %1404 = vmatmul.mubr.bf16.gmra.mxu0 %v278
  %v1405 = vpop.f32.mrf.mxu0
  %v1406 = vadd.f32 %v239, %v1405
  %v1407 = vpop.f32.mrf.mxu0
  %v1408 = vadd.f32 %v243, %v1407
  %v1409 = vpop.f32.mrf.mxu0
  %v1410 = vadd.f32 %v239, %v1409
  %v1411 = vpop.f32.mrf.mxu0
  %v1412 = vadd.f32 %v243, %v1411
  %1413 = vdwg.mxu0
  %1414 = vmatprep.subr.bf16.mxu0 %v951
  %1415 = vmatpush1.bf16.msra.mxu0 %v950
  %1416 = vmatprep.subr.bf16.mxu0 %v939
  %1417 = vmatpush1.bf16.msra.mxu0 %v938
  %1418 = vmatprep.subr.bf16.mxu0 %v927
  %1419 = vmatpush1.bf16.msra.mxu0 %v926
  %1420 = vmatprep.subr.bf16.mxu0 %v915
  %1421 = vmatpush1.bf16.msra.mxu0 %v914
  %1422 = vmatprep.subr.bf16.mxu0 %v903
  %1423 = vmatpush1.bf16.msra.mxu0 %v902
  %1424 = vmatprep.subr.bf16.mxu0 %v891
  %1425 = vmatpush1.bf16.msra.mxu0 %v890
  %1426 = vmatprep.subr.bf16.mxu0 %v879
  %1427 = vmatpush1.bf16.msra.mxu0 %v878
  %1428 = vmatprep.subr.bf16.mxu0 %v867
  %1429 = vmatpush1.bf16.msra.mxu0 %v866
  %1430 = vmatprep.subr.bf16.mxu0 %v1047
  %1431 = vmatpush2.bf16.msra.mxu0 %v1046
  %1432 = vmatprep.subr.bf16.mxu0 %v1035
  %1433 = vmatpush2.bf16.msra.mxu0 %v1034
  %1434 = vmatprep.subr.bf16.mxu0 %v1023
  %1435 = vmatpush2.bf16.msra.mxu0 %v1022
  %1436 = vmatprep.subr.bf16.mxu0 %v1011
  %1437 = vmatpush2.bf16.msra.mxu0 %v1010
  %1438 = vmatprep.subr.bf16.mxu0 %v999
  %1439 = vmatpush2.bf16.msra.mxu0 %v998
  %1440 = vmatprep.subr.bf16.mxu0 %v987
  %1441 = vmatpush2.bf16.msra.mxu0 %v986
  %1442 = vmatprep.subr.bf16.mxu0 %v975
  %1443 = vmatpush2.bf16.msra.mxu0 %v974
  %1444 = vmatprep.subr.bf16.mxu0 %v963
  %1445 = vmatpush2.bf16.msra.mxu0 %v962
  %1446 = vmatprep.mubr.bf16.mxu0 %v279
  %1447 = vmatmul.mubr.bf16.gmra.mxu0 %v278
  %v1448 = vpop.f32.mrf.mxu0
  %v1449 = vadd.f32 %v247, %v1448
  %v1450 = vpop.f32.mrf.mxu0
  %v1451 = vadd.f32 %v251, %v1450
  %v1452 = vpop.f32.mrf.mxu0
  %v1453 = vadd.f32 %v247, %v1452
  %v1454 = vpop.f32.mrf.mxu0
  %v1455 = vadd.f32 %v251, %v1454
  %1456 = vdwg.mxu0
  %1457 = vmatprep.subr.bf16.mxu0 %v953
  %1458 = vmatpush1.bf16.msra.mxu0 %v952
  %1459 = vmatprep.subr.bf16.mxu0 %v941
  %1460 = vmatpush1.bf16.msra.mxu0 %v940
  %1461 = vmatprep.subr.bf16.mxu0 %v929
  %1462 = vmatpush1.bf16.msra.mxu0 %v928
  %1463 = vmatprep.subr.bf16.mxu0 %v917
  %1464 = vmatpush1.bf16.msra.mxu0 %v916
  %1465 = vmatprep.subr.bf16.mxu0 %v905
  %1466 = vmatpush1.bf16.msra.mxu0 %v904
  %1467 = vmatprep.subr.bf16.mxu0 %v893
  %1468 = vmatpush1.bf16.msra.mxu0 %v892
  %1469 = vmatprep.subr.bf16.mxu0 %v881
  %1470 = vmatpush1.bf16.msra.mxu0 %v880
  %1471 = vmatprep.subr.bf16.mxu0 %v869
  %1472 = vmatpush1.bf16.msra.mxu0 %v868
  %1473 = vmatprep.subr.bf16.mxu0 %v1049
  %1474 = vmatpush2.bf16.msra.mxu0 %v1048
  %1475 = vmatprep.subr.bf16.mxu0 %v1037
  %1476 = vmatpush2.bf16.msra.mxu0 %v1036
  %1477 = vmatprep.subr.bf16.mxu0 %v1025
  %1478 = vmatpush2.bf16.msra.mxu0 %v1024
  %1479 = vmatprep.subr.bf16.mxu0 %v1013
  %1480 = vmatpush2.bf16.msra.mxu0 %v1012
  %1481 = vmatprep.subr.bf16.mxu0 %v1001
  %1482 = vmatpush2.bf16.msra.mxu0 %v1000
  %1483 = vmatprep.subr.bf16.mxu0 %v989
  %1484 = vmatpush2.bf16.msra.mxu0 %v988
  %1485 = vmatprep.subr.bf16.mxu0 %v977
  %1486 = vmatpush2.bf16.msra.mxu0 %v976
  %1487 = vmatprep.subr.bf16.mxu0 %v965
  %1488 = vmatpush2.bf16.msra.mxu0 %v964
  %1489 = vmatprep.mubr.bf16.mxu0 %v279
  %1490 = vmatmul.mubr.bf16.gmra.mxu0 %v278
  %v1491 = vpop.f32.mrf.mxu0
  %v1492 = vadd.f32 %v255, %v1491
  %v1493 = vpop.f32.mrf.mxu0
  %v1494 = vadd.f32 %v259, %v1493
  %v1495 = vpop.f32.mrf.mxu0
  %v1496 = vadd.f32 %v255, %v1495
  %v1497 = vpop.f32.mrf.mxu0
  %v1498 = vadd.f32 %v259, %v1497
  %1499 = vdwg.mxu0
  %1500 = vst [vmem:[%s3] sm:$0xff] %v1277
  %1501 = vst [vmem:[%s3 + $0x8] sm:$0xff] %v1279
  %1502 = vst [vmem:[%s3 + $0x10] sm:$0xff] %v1320
  %1503 = vst [vmem:[%s3 + $0x18] sm:$0xff] %v1322
  %1504 = vst [vmem:[%s3 + $0x20] sm:$0xff] %v1363
  %1505 = vst [vmem:[%s3 + $0x28] sm:$0xff] %v1365
  %1506 = vst [vmem:[%s3 + $0x30] sm:$0xff] %v1406
  %1507 = vst [vmem:[%s3 + $0x38] sm:$0xff] %v1408
  %1508 = vst [vmem:[%s3 + $0x40] sm:$0xff] %v1449
  %1509 = vst [vmem:[%s3 + $0x48] sm:$0xff] %v1451
  %1510 = vst [vmem:[%s3 + $0x50] sm:$0xff] %v1492
  %1511 = vst [vmem:[%s3 + $0x58] sm:$0xff] %v1494
  %1512 = vst [vmem:[%s3 + $0x60] sm:$0xff] %v1281
  %1513 = vst [vmem:[%s3 + $0x68] sm:$0xff] %v1283
  %1514 = vst [vmem:[%s3 + $0x70] sm:$0xff] %v1324
  %1515 = vst [vmem:[%s3 + $0x78] sm:$0xff] %v1326
  %1516 = vst [vmem:[%s3 + $0x80] sm:$0xff] %v1367
  %1517 = vst [vmem:[%s3 + $0x88] sm:$0xff] %v1369
  %1518 = vst [vmem:[%s3 + $0x90] sm:$0xff] %v1410
  %1519 = vst [vmem:[%s3 + $0x98] sm:$0xff] %v1412
  %1520 = vst [vmem:[%s3 + $0xa0] sm:$0xff] %v1453
  %1521 = vst [vmem:[%s3 + $0xa8] sm:$0xff] %v1455
  %1522 = vst [vmem:[%s3 + $0xb0] sm:$0xff] %v1496
  %1523 = vst [vmem:[%s3 + $0xb8] sm:$0xff] %v1498
  // Predicated region
  $region14: #{forward.27} parent=0 // pred_check
    _
  $region15: #{forward.27} parent=0 // pred_check_branch
    %1525 = sbr.rel (0) target = $region17
  $region16: #{forward.27} parent=0 // pred_region
    _
  $region17: #{forward.27} parent=0 // pred_fallthru
    _
  // Predicated region
  $region18: #{forward.27} parent=0 // pred_check
    _
  $region19: #{forward.27} parent=0 // pred_check_branch
    %1527 = sbr.rel (0) target = $region21
  $region20: #{forward.27} parent=0 // pred_region
    _
  $region21: #{forward.27} parent=0 // pred_fallthru
    _

</llo_original>
